<compile_context>
chip_gen: v6e
topology: v6e:2x2x1
jax: 0.10.0
libtpu: 0.0.40
codegen_flags: <defaults>
</compile_context>

<pallas_src>
import math

import jax
import jax.numpy as jnp
from jax.experimental import pallas as pl
from jax.experimental.pallas import tpu as pltpu


def _make_gru_kernel(num_layers: int, hidden: int, seq_len: int, batch: int):
    """Builds the kernel body.  Ref order:
       [x_flat, (w_ih_cat, w_hh_cat, b_x, b_hn) * num_layers, fc_w, fc_b]   (inputs)
       [out_flat]                                                           (output)
    """
    H = hidden
    T = seq_len
    B = batch
    L = num_layers

    def kernel(*refs):
        x_ref = refs[0]                                    # (T*B, D)
        layer_refs = [refs[1 + 4 * l: 1 + 4 * (l + 1)] for l in range(L)]
        fc_w_ref = refs[1 + 4 * L]                         # (H, O)
        fc_b_ref = refs[2 + 4 * L]                         # (1, O)
        out_ref = refs[3 + 4 * L]                          # (T*B, O)

        # Hoist every weight / bias load out of the (fully unrolled) loops.
        w_ih = [lr[0][...] for lr in layer_refs]           # (D_in, 3H)
        w_hh = [lr[1][...] for lr in layer_refs]           # (H, 3H)
        b_x = [lr[2][...] for lr in layer_refs]            # (1, 3H): [b_ir+b_hr | b_iz+b_hz | b_in]
        b_hn = [lr[3][...] for lr in layer_refs]           # (1, H)
        fc_w = fc_w_ref[...]
        fc_b = fc_b_ref[...]

        # Layer-0 input-to-hidden projection for the WHOLE sequence, one (T*B, D)x(D, 3H)
        # matmul with the input biases already folded in.
        xp0 = jnp.dot(x_ref[...], w_ih[0],
                      preferred_element_type=jnp.float32) + b_x[0]   # (T*B, 3H)

        def gate_step(gx, gh, h_prev, bhn):
            # gx / gh: (B, 3H) with columns [r | z | n]; PyTorch GRU gate math.
            r = jax.nn.sigmoid(gx[:, :H] + gh[:, :H])
            z = jax.nn.sigmoid(gx[:, H:2 * H] + gh[:, H:2 * H])
            n = jnp.tanh(gx[:, 2 * H:] + r * (gh[:, 2 * H:] + bhn))
            return (1.0 - z) * n + z * h_prev

        h = [jnp.zeros((B, H), jnp.float32) for _ in range(L)]

        # Fully unrolled time x layer loops.  Written time-major / layer-inner, but the
        # dependence DAG is a wavefront: h(l, t) depends only on h(l, t-1) and h(l-1, t),
        # so the serial critical path is T + L - 1 steps, not L * T.
        for t in range(T):
            inp = None
            for l in range(L):
                if l == 0:
                    gx = xp0[t * B:(t + 1) * B, :]                    # static slice
                else:
                    gx = jnp.dot(inp, w_ih[l],
                                 preferred_element_type=jnp.float32) + b_x[l]
                gh = jnp.dot(h[l], w_hh[l], preferred_element_type=jnp.float32)
                h[l] = gate_step(gx, gh, h[l], b_hn[l])
                inp = h[l]
            # Linear head: depends only on the last layer's h at this t -> off the
            # recurrent critical path.  Static-offset slab store.
            out_ref[t * B:(t + 1) * B, :] = (
                jnp.dot(inp, fc_w, preferred_element_type=jnp.float32) + fc_b
            ).astype(out_ref.dtype)

    return kernel


def gru_model_forward(x, params, hidden: int, num_layers: int):
    """Pallas equivalent of GRUModel.forward.  x: (B, T, D) batch-first; returns (B, T, O)."""
    B, T, D = x.shape
    O = params["fc_w"].shape[1]

    # Time-major, then flatten (T, B) -> T*B rows (cheap wrapper-side layout plumbing).
    x_flat = jnp.transpose(x, (1, 0, 2)).reshape(T * B, D).astype(jnp.float32)

    inputs = [x_flat]
    for (w_ih, w_hh, b_ih, b_hh) in params["layers"]:
        # Fuse the three gate matrices into one (D_in, 3H) / (H, 3H) matrix and pre-sum the
        # r/z biases; b_hn stays separate because PyTorch keeps it inside r * (...).
        w_ih_cat = jnp.concatenate([w_ih[0], w_ih[1], w_ih[2]], axis=1)           # (D_in, 3H)
        w_hh_cat = jnp.concatenate([w_hh[0], w_hh[1], w_hh[2]], axis=1)           # (H, 3H)
        b_x = jnp.concatenate([b_ih[0] + b_hh[0], b_ih[1] + b_hh[1], b_ih[2]], axis=1)  # (1, 3H)
        b_hn = b_hh[2]                                                            # (1, H)
        inputs += [w_ih_cat, w_hh_cat, b_x, b_hn]
    inputs += [params["fc_w"], params["fc_b"]]

    out_flat = pl.pallas_call(
        _make_gru_kernel(num_layers, hidden, T, B),
        out_shape=jax.ShapeDtypeStruct((T * B, O), jnp.float32),
        in_specs=[pl.BlockSpec(memory_space=pltpu.MemorySpace.VMEM)] * len(inputs),
        out_specs=pl.BlockSpec(memory_space=pltpu.MemorySpace.VMEM),
    )(*inputs)

    return jnp.transpose(out_flat.reshape(T, B, O), (1, 0, 2))       # (B, T, O)


# ----------------------------- pure-JAX reference -----------------------------

def gru_model_ref(x, params, hidden: int):
    B, T, D = x.shape
    hi = jax.lax.Precision.HIGHEST
    layer_in = x.astype(jnp.float32)
    for (w_ih, w_hh, b_ih, b_hh) in params["layers"]:
        h = jnp.zeros((B, hidden), jnp.float32)
        outs = []
        for t in range(T):
            x_t = layer_in[:, t, :]
            r = jax.nn.sigmoid(jnp.dot(x_t, w_ih[0], precision=hi) + b_ih[0]
                               + jnp.dot(h, w_hh[0], precision=hi) + b_hh[0])
            z = jax.nn.sigmoid(jnp.dot(x_t, w_ih[1], precision=hi) + b_ih[1]
                               + jnp.dot(h, w_hh[1], precision=hi) + b_hh[1])
            n = jnp.tanh(jnp.dot(x_t, w_ih[2], precision=hi) + b_ih[2]
                         + r * (jnp.dot(h, w_hh[2], precision=hi) + b_hh[2]))
            h = (1.0 - z) * n + z * h
            outs.append(h)
        layer_in = jnp.stack(outs, axis=1)
    return jnp.dot(layer_in, params["fc_w"], precision=hi) + params["fc_b"]


def init_params(key, input_size: int, hidden: int, num_layers: int, out_size: int):
    k = 1.0 / math.sqrt(hidden)
    keys = jax.random.split(key, num_layers * 4 + 2)
    i = 0
    layers = []
    for l in range(num_layers):
        d_in = input_size if l == 0 else hidden
        w_ih = jax.random.uniform(keys[i], (3, d_in, hidden), jnp.float32, -k, k); i += 1
        w_hh = jax.random.uniform(keys[i], (3, hidden, hidden), jnp.float32, -k, k); i += 1
        b_ih = jax.random.uniform(keys[i], (3, 1, hidden), jnp.float32, -k, k); i += 1
        b_hh = jax.random.uniform(keys[i], (3, 1, hidden), jnp.float32, -k, k); i += 1
        layers.append((w_ih, w_hh, b_ih, b_hh))
    fc_w = jax.random.uniform(keys[i], (hidden, out_size), jnp.float32, -k, k); i += 1
    fc_b = jax.random.uniform(keys[i], (1, out_size), jnp.float32, -k, k)
    return {"layers": layers, "fc_w": fc_w, "fc_b": fc_b}


if __name__ == "__main__":
    key = jax.random.PRNGKey(0)
    k_param, k_x = jax.random.split(key)

    num_country = 7            # -> input/output feature size = num_country + 1 = 8
    D = num_country + 1
    hidden = 16                # nn.GRU default from the module
    num_layers = 4             # nn.GRU default from the module
    B, T = 2, 8

    params = init_params(k_param, D, hidden, num_layers, D)
    x = jax.random.normal(k_x, (B, T, D), dtype=jnp.float32)

    out = gru_model_forward(x, params, hidden, num_layers)
    out = jax.block_until_ready(out)

    ref = gru_model_ref(x, params, hidden)

    assert out.shape == (B, T, D), out.shape
    assert jnp.allclose(out, ref, rtol=5e-3, atol=5e-3), (
        float(jnp.max(jnp.abs(out - ref))))

    print("KERNEL_OK")
</pallas_src>

<mosaic_0001>
module attributes {stable_mosaic.version = 11 : i64} {
  func.func @kernel(%arg0: memref<16x8xf32, #tpu.memory_space<vmem>>, %arg1: memref<8x48xf32, #tpu.memory_space<vmem>>, %arg2: memref<16x48xf32, #tpu.memory_space<vmem>>, %arg3: memref<1x48xf32, #tpu.memory_space<vmem>>, %arg4: memref<1x16xf32, #tpu.memory_space<vmem>>, %arg5: memref<16x48xf32, #tpu.memory_space<vmem>>, %arg6: memref<16x48xf32, #tpu.memory_space<vmem>>, %arg7: memref<1x48xf32, #tpu.memory_space<vmem>>, %arg8: memref<1x16xf32, #tpu.memory_space<vmem>>, %arg9: memref<16x48xf32, #tpu.memory_space<vmem>>, %arg10: memref<16x48xf32, #tpu.memory_space<vmem>>, %arg11: memref<1x48xf32, #tpu.memory_space<vmem>>, %arg12: memref<1x16xf32, #tpu.memory_space<vmem>>, %arg13: memref<16x48xf32, #tpu.memory_space<vmem>>, %arg14: memref<16x48xf32, #tpu.memory_space<vmem>>, %arg15: memref<1x48xf32, #tpu.memory_space<vmem>>, %arg16: memref<1x16xf32, #tpu.memory_space<vmem>>, %arg17: memref<16x8xf32, #tpu.memory_space<vmem>>, %arg18: memref<1x8xf32, #tpu.memory_space<vmem>>, %arg19: memref<16x8xf32, #tpu.memory_space<vmem>>) attributes {dimension_semantics = [], scalar_prefetch = 0 : i64, scratch_operands = 0 : i64, tpu.core_type = #tpu.core_type<tc>} {
    %c0 = arith.constant 0 : index
    %c0_0 = arith.constant 0 : index
    %0 = vector.load %arg1[%c0, %c0_0] : memref<8x48xf32, #tpu.memory_space<vmem>>, vector<8x48xf32>
    %c0_1 = arith.constant 0 : index
    %c0_2 = arith.constant 0 : index
    %1 = vector.load %arg5[%c0_1, %c0_2] : memref<16x48xf32, #tpu.memory_space<vmem>>, vector<16x48xf32>
    %c0_3 = arith.constant 0 : index
    %c0_4 = arith.constant 0 : index
    %2 = vector.load %arg9[%c0_3, %c0_4] : memref<16x48xf32, #tpu.memory_space<vmem>>, vector<16x48xf32>
    %c0_5 = arith.constant 0 : index
    %c0_6 = arith.constant 0 : index
    %3 = vector.load %arg13[%c0_5, %c0_6] : memref<16x48xf32, #tpu.memory_space<vmem>>, vector<16x48xf32>
    %c0_7 = arith.constant 0 : index
    %c0_8 = arith.constant 0 : index
    %4 = vector.load %arg2[%c0_7, %c0_8] : memref<16x48xf32, #tpu.memory_space<vmem>>, vector<16x48xf32>
    %c0_9 = arith.constant 0 : index
    %c0_10 = arith.constant 0 : index
    %5 = vector.load %arg6[%c0_9, %c0_10] : memref<16x48xf32, #tpu.memory_space<vmem>>, vector<16x48xf32>
    %c0_11 = arith.constant 0 : index
    %c0_12 = arith.constant 0 : index
    %6 = vector.load %arg10[%c0_11, %c0_12] : memref<16x48xf32, #tpu.memory_space<vmem>>, vector<16x48xf32>
    %c0_13 = arith.constant 0 : index
    %c0_14 = arith.constant 0 : index
    %7 = vector.load %arg14[%c0_13, %c0_14] : memref<16x48xf32, #tpu.memory_space<vmem>>, vector<16x48xf32>
    %c0_15 = arith.constant 0 : index
    %c0_16 = arith.constant 0 : index
    %8 = vector.load %arg3[%c0_15, %c0_16] : memref<1x48xf32, #tpu.memory_space<vmem>>, vector<1x48xf32>
    %c0_17 = arith.constant 0 : index
    %c0_18 = arith.constant 0 : index
    %9 = vector.load %arg7[%c0_17, %c0_18] : memref<1x48xf32, #tpu.memory_space<vmem>>, vector<1x48xf32>
    %c0_19 = arith.constant 0 : index
    %c0_20 = arith.constant 0 : index
    %10 = vector.load %arg11[%c0_19, %c0_20] : memref<1x48xf32, #tpu.memory_space<vmem>>, vector<1x48xf32>
    %c0_21 = arith.constant 0 : index
    %c0_22 = arith.constant 0 : index
    %11 = vector.load %arg15[%c0_21, %c0_22] : memref<1x48xf32, #tpu.memory_space<vmem>>, vector<1x48xf32>
    %c0_23 = arith.constant 0 : index
    %c0_24 = arith.constant 0 : index
    %12 = vector.load %arg4[%c0_23, %c0_24] : memref<1x16xf32, #tpu.memory_space<vmem>>, vector<1x16xf32>
    %c0_25 = arith.constant 0 : index
    %c0_26 = arith.constant 0 : index
    %13 = vector.load %arg8[%c0_25, %c0_26] : memref<1x16xf32, #tpu.memory_space<vmem>>, vector<1x16xf32>
    %c0_27 = arith.constant 0 : index
    %c0_28 = arith.constant 0 : index
    %14 = vector.load %arg12[%c0_27, %c0_28] : memref<1x16xf32, #tpu.memory_space<vmem>>, vector<1x16xf32>
    %c0_29 = arith.constant 0 : index
    %c0_30 = arith.constant 0 : index
    %15 = vector.load %arg16[%c0_29, %c0_30] : memref<1x16xf32, #tpu.memory_space<vmem>>, vector<1x16xf32>
    %c0_31 = arith.constant 0 : index
    %c0_32 = arith.constant 0 : index
    %16 = vector.load %arg17[%c0_31, %c0_32] : memref<16x8xf32, #tpu.memory_space<vmem>>, vector<16x8xf32>
    %c0_33 = arith.constant 0 : index
    %c0_34 = arith.constant 0 : index
    %17 = vector.load %arg18[%c0_33, %c0_34] : memref<1x8xf32, #tpu.memory_space<vmem>>, vector<1x8xf32>
    %c0_35 = arith.constant 0 : index
    %c0_36 = arith.constant 0 : index
    %18 = vector.load %arg0[%c0_35, %c0_36] : memref<16x8xf32, #tpu.memory_space<vmem>>, vector<16x8xf32>
    %cst = arith.constant dense<0.000000e+00> : vector<16x48xf32>
    %19 = tpu.matmul %18, %0, %cst {dimension_numbers = #tpu.dot_dimension_numbers<[1], [0], [0], [1], [0, 0, 1, 1], [], []>} : vector<16x8xf32>, vector<8x48xf32>, vector<16x48xf32> -> vector<16x48xf32>
    %20 = vector.broadcast %8 : vector<1x48xf32> to vector<16x48xf32>
    %21 = arith.addf %19, %20 : vector<16x48xf32>
    %cst_37 = arith.constant 0.000000e+00 : f32
    %22 = vector.broadcast %cst_37 : f32 to vector<2x16xf32>
    %cst_38 = arith.constant 0.000000e+00 : f32
    %23 = vector.broadcast %cst_38 : f32 to vector<2x16xf32>
    %cst_39 = arith.constant 0.000000e+00 : f32
    %24 = vector.broadcast %cst_39 : f32 to vector<2x16xf32>
    %cst_40 = arith.constant 0.000000e+00 : f32
    %25 = vector.broadcast %cst_40 : f32 to vector<2x16xf32>
    %26 = vector.extract_strided_slice %21 {offsets = [0, 0], sizes = [2, 48], strides = [1, 1]} : vector<16x48xf32> to vector<2x48xf32>
    %cst_41 = arith.constant dense<0.000000e+00> : vector<2x48xf32>
    %27 = tpu.matmul %22, %4, %cst_41 {dimension_numbers = #tpu.dot_dimension_numbers<[1], [0], [0], [1], [0, 0, 1, 1], [], []>} : vector<2x16xf32>, vector<16x48xf32>, vector<2x48xf32> -> vector<2x48xf32>
    %28 = vector.extract_strided_slice %26 {offsets = [0, 0], sizes = [2, 16], strides = [1, 1]} : vector<2x48xf32> to vector<2x16xf32>
    %29 = vector.extract_strided_slice %27 {offsets = [0, 0], sizes = [2, 16], strides = [1, 1]} : vector<2x48xf32> to vector<2x16xf32>
    %30 = arith.addf %28, %29 : vector<2x16xf32>
    %31 = arith.negf %30 : vector<2x16xf32>
    %32 = math.exp %31 : vector<2x16xf32>
    %cst_42 = arith.constant 1.000000e+00 : f32
    %33 = vector.broadcast %cst_42 : f32 to vector<2x16xf32>
    %34 = arith.addf %33, %32 : vector<2x16xf32>
    %35 = arith.divf %33, %34 : vector<2x16xf32>
    %36 = vector.extract_strided_slice %26 {offsets = [0, 16], sizes = [2, 16], strides = [1, 1]} : vector<2x48xf32> to vector<2x16xf32>
    %37 = vector.extract_strided_slice %27 {offsets = [0, 16], sizes = [2, 16], strides = [1, 1]} : vector<2x48xf32> to vector<2x16xf32>
    %38 = arith.addf %36, %37 : vector<2x16xf32>
    %39 = arith.negf %38 : vector<2x16xf32>
    %40 = math.exp %39 : vector<2x16xf32>
    %cst_43 = arith.constant 1.000000e+00 : f32
    %41 = vector.broadcast %cst_43 : f32 to vector<2x16xf32>
    %42 = arith.addf %41, %40 : vector<2x16xf32>
    %43 = arith.divf %41, %42 : vector<2x16xf32>
    %44 = vector.extract_strided_slice %26 {offsets = [0, 32], sizes = [2, 16], strides = [1, 1]} : vector<2x48xf32> to vector<2x16xf32>
    %45 = vector.extract_strided_slice %27 {offsets = [0, 32], sizes = [2, 16], strides = [1, 1]} : vector<2x48xf32> to vector<2x16xf32>
    %46 = vector.broadcast %12 : vector<1x16xf32> to vector<2x16xf32>
    %47 = arith.addf %45, %46 : vector<2x16xf32>
    %48 = arith.mulf %35, %47 : vector<2x16xf32>
    %49 = arith.addf %44, %48 : vector<2x16xf32>
    %50 = math.tanh %49 : vector<2x16xf32>
    %cst_44 = arith.constant 1.000000e+00 : f32
    %51 = vector.broadcast %cst_44 : f32 to vector<2x16xf32>
    %52 = arith.subf %51, %43 : vector<2x16xf32>
    %53 = arith.mulf %52, %50 : vector<2x16xf32>
    %54 = arith.mulf %43, %22 : vector<2x16xf32>
    %55 = arith.addf %53, %54 : vector<2x16xf32>
    %cst_45 = arith.constant dense<0.000000e+00> : vector<2x48xf32>
    %56 = tpu.matmul %55, %1, %cst_45 {dimension_numbers = #tpu.dot_dimension_numbers<[1], [0], [0], [1], [0, 0, 1, 1], [], []>} : vector<2x16xf32>, vector<16x48xf32>, vector<2x48xf32> -> vector<2x48xf32>
    %57 = vector.broadcast %9 : vector<1x48xf32> to vector<2x48xf32>
    %58 = arith.addf %56, %57 : vector<2x48xf32>
    %cst_46 = arith.constant dense<0.000000e+00> : vector<2x48xf32>
    %59 = tpu.matmul %23, %5, %cst_46 {dimension_numbers = #tpu.dot_dimension_numbers<[1], [0], [0], [1], [0, 0, 1, 1], [], []>} : vector<2x16xf32>, vector<16x48xf32>, vector<2x48xf32> -> vector<2x48xf32>
    %60 = vector.extract_strided_slice %58 {offsets = [0, 0], sizes = [2, 16], strides = [1, 1]} : vector<2x48xf32> to vector<2x16xf32>
    %61 = vector.extract_strided_slice %59 {offsets = [0, 0], sizes = [2, 16], strides = [1, 1]} : vector<2x48xf32> to vector<2x16xf32>
    %62 = arith.addf %60, %61 : vector<2x16xf32>
    %63 = arith.negf %62 : vector<2x16xf32>
    %64 = math.exp %63 : vector<2x16xf32>
    %cst_47 = arith.constant 1.000000e+00 : f32
    %65 = vector.broadcast %cst_47 : f32 to vector<2x16xf32>
    %66 = arith.addf %65, %64 : vector<2x16xf32>
    %67 = arith.divf %65, %66 : vector<2x16xf32>
    %68 = vector.extract_strided_slice %58 {offsets = [0, 16], sizes = [2, 16], strides = [1, 1]} : vector<2x48xf32> to vector<2x16xf32>
    %69 = vector.extract_strided_slice %59 {offsets = [0, 16], sizes = [2, 16], strides = [1, 1]} : vector<2x48xf32> to vector<2x16xf32>
    %70 = arith.addf %68, %69 : vector<2x16xf32>
    %71 = arith.negf %70 : vector<2x16xf32>
    %72 = math.exp %71 : vector<2x16xf32>
    %cst_48 = arith.constant 1.000000e+00 : f32
    %73 = vector.broadcast %cst_48 : f32 to vector<2x16xf32>
    %74 = arith.addf %73, %72 : vector<2x16xf32>
    %75 = arith.divf %73, %74 : vector<2x16xf32>
    %76 = vector.extract_strided_slice %58 {offsets = [0, 32], sizes = [2, 16], strides = [1, 1]} : vector<2x48xf32> to vector<2x16xf32>
    %77 = vector.extract_strided_slice %59 {offsets = [0, 32], sizes = [2, 16], strides = [1, 1]} : vector<2x48xf32> to vector<2x16xf32>
    %78 = vector.broadcast %13 : vector<1x16xf32> to vector<2x16xf32>
    %79 = arith.addf %77, %78 : vector<2x16xf32>
    %80 = arith.mulf %67, %79 : vector<2x16xf32>
    %81 = arith.addf %76, %80 : vector<2x16xf32>
    %82 = math.tanh %81 : vector<2x16xf32>
    %cst_49 = arith.constant 1.000000e+00 : f32
    %83 = vector.broadcast %cst_49 : f32 to vector<2x16xf32>
    %84 = arith.subf %83, %75 : vector<2x16xf32>
    %85 = arith.mulf %84, %82 : vector<2x16xf32>
    %86 = arith.mulf %75, %23 : vector<2x16xf32>
    %87 = arith.addf %85, %86 : vector<2x16xf32>
    %cst_50 = arith.constant dense<0.000000e+00> : vector<2x48xf32>
    %88 = tpu.matmul %87, %2, %cst_50 {dimension_numbers = #tpu.dot_dimension_numbers<[1], [0], [0], [1], [0, 0, 1, 1], [], []>} : vector<2x16xf32>, vector<16x48xf32>, vector<2x48xf32> -> vector<2x48xf32>
    %89 = vector.broadcast %10 : vector<1x48xf32> to vector<2x48xf32>
    %90 = arith.addf %88, %89 : vector<2x48xf32>
    %cst_51 = arith.constant dense<0.000000e+00> : vector<2x48xf32>
    %91 = tpu.matmul %24, %6, %cst_51 {dimension_numbers = #tpu.dot_dimension_numbers<[1], [0], [0], [1], [0, 0, 1, 1], [], []>} : vector<2x16xf32>, vector<16x48xf32>, vector<2x48xf32> -> vector<2x48xf32>
    %92 = vector.extract_strided_slice %90 {offsets = [0, 0], sizes = [2, 16], strides = [1, 1]} : vector<2x48xf32> to vector<2x16xf32>
    %93 = vector.extract_strided_slice %91 {offsets = [0, 0], sizes = [2, 16], strides = [1, 1]} : vector<2x48xf32> to vector<2x16xf32>
    %94 = arith.addf %92, %93 : vector<2x16xf32>
    %95 = arith.negf %94 : vector<2x16xf32>
    %96 = math.exp %95 : vector<2x16xf32>
    %cst_52 = arith.constant 1.000000e+00 : f32
    %97 = vector.broadcast %cst_52 : f32 to vector<2x16xf32>
    %98 = arith.addf %97, %96 : vector<2x16xf32>
    %99 = arith.divf %97, %98 : vector<2x16xf32>
    %100 = vector.extract_strided_slice %90 {offsets = [0, 16], sizes = [2, 16], strides = [1, 1]} : vector<2x48xf32> to vector<2x16xf32>
    %101 = vector.extract_strided_slice %91 {offsets = [0, 16], sizes = [2, 16], strides = [1, 1]} : vector<2x48xf32> to vector<2x16xf32>
    %102 = arith.addf %100, %101 : vector<2x16xf32>
    %103 = arith.negf %102 : vector<2x16xf32>
    %104 = math.exp %103 : vector<2x16xf32>
    %cst_53 = arith.constant 1.000000e+00 : f32
    %105 = vector.broadcast %cst_53 : f32 to vector<2x16xf32>
    %106 = arith.addf %105, %104 : vector<2x16xf32>
    %107 = arith.divf %105, %106 : vector<2x16xf32>
    %108 = vector.extract_strided_slice %90 {offsets = [0, 32], sizes = [2, 16], strides = [1, 1]} : vector<2x48xf32> to vector<2x16xf32>
    %109 = vector.extract_strided_slice %91 {offsets = [0, 32], sizes = [2, 16], strides = [1, 1]} : vector<2x48xf32> to vector<2x16xf32>
    %110 = vector.broadcast %14 : vector<1x16xf32> to vector<2x16xf32>
    %111 = arith.addf %109, %110 : vector<2x16xf32>
    %112 = arith.mulf %99, %111 : vector<2x16xf32>
    %113 = arith.addf %108, %112 : vector<2x16xf32>
    %114 = math.tanh %113 : vector<2x16xf32>
    %cst_54 = arith.constant 1.000000e+00 : f32
    %115 = vector.broadcast %cst_54 : f32 to vector<2x16xf32>
    %116 = arith.subf %115, %107 : vector<2x16xf32>
    %117 = arith.mulf %116, %114 : vector<2x16xf32>
    %118 = arith.mulf %107, %24 : vector<2x16xf32>
    %119 = arith.addf %117, %118 : vector<2x16xf32>
    %cst_55 = arith.constant dense<0.000000e+00> : vector<2x48xf32>
    %120 = tpu.matmul %119, %3, %cst_55 {dimension_numbers = #tpu.dot_dimension_numbers<[1], [0], [0], [1], [0, 0, 1, 1], [], []>} : vector<2x16xf32>, vector<16x48xf32>, vector<2x48xf32> -> vector<2x48xf32>
    %121 = vector.broadcast %11 : vector<1x48xf32> to vector<2x48xf32>
    %122 = arith.addf %120, %121 : vector<2x48xf32>
    %cst_56 = arith.constant dense<0.000000e+00> : vector<2x48xf32>
    %123 = tpu.matmul %25, %7, %cst_56 {dimension_numbers = #tpu.dot_dimension_numbers<[1], [0], [0], [1], [0, 0, 1, 1], [], []>} : vector<2x16xf32>, vector<16x48xf32>, vector<2x48xf32> -> vector<2x48xf32>
    %124 = vector.extract_strided_slice %122 {offsets = [0, 0], sizes = [2, 16], strides = [1, 1]} : vector<2x48xf32> to vector<2x16xf32>
    %125 = vector.extract_strided_slice %123 {offsets = [0, 0], sizes = [2, 16], strides = [1, 1]} : vector<2x48xf32> to vector<2x16xf32>
    %126 = arith.addf %124, %125 : vector<2x16xf32>
    %127 = arith.negf %126 : vector<2x16xf32>
    %128 = math.exp %127 : vector<2x16xf32>
    %cst_57 = arith.constant 1.000000e+00 : f32
    %129 = vector.broadcast %cst_57 : f32 to vector<2x16xf32>
    %130 = arith.addf %129, %128 : vector<2x16xf32>
    %131 = arith.divf %129, %130 : vector<2x16xf32>
    %132 = vector.extract_strided_slice %122 {offsets = [0, 16], sizes = [2, 16], strides = [1, 1]} : vector<2x48xf32> to vector<2x16xf32>
    %133 = vector.extract_strided_slice %123 {offsets = [0, 16], sizes = [2, 16], strides = [1, 1]} : vector<2x48xf32> to vector<2x16xf32>
    %134 = arith.addf %132, %133 : vector<2x16xf32>
    %135 = arith.negf %134 : vector<2x16xf32>
    %136 = math.exp %135 : vector<2x16xf32>
    %cst_58 = arith.constant 1.000000e+00 : f32
    %137 = vector.broadcast %cst_58 : f32 to vector<2x16xf32>
    %138 = arith.addf %137, %136 : vector<2x16xf32>
    %139 = arith.divf %137, %138 : vector<2x16xf32>
    %140 = vector.extract_strided_slice %122 {offsets = [0, 32], sizes = [2, 16], strides = [1, 1]} : vector<2x48xf32> to vector<2x16xf32>
    %141 = vector.extract_strided_slice %123 {offsets = [0, 32], sizes = [2, 16], strides = [1, 1]} : vector<2x48xf32> to vector<2x16xf32>
    %142 = vector.broadcast %15 : vector<1x16xf32> to vector<2x16xf32>
    %143 = arith.addf %141, %142 : vector<2x16xf32>
    %144 = arith.mulf %131, %143 : vector<2x16xf32>
    %145 = arith.addf %140, %144 : vector<2x16xf32>
    %146 = math.tanh %145 : vector<2x16xf32>
    %cst_59 = arith.constant 1.000000e+00 : f32
    %147 = vector.broadcast %cst_59 : f32 to vector<2x16xf32>
    %148 = arith.subf %147, %139 : vector<2x16xf32>
    %149 = arith.mulf %148, %146 : vector<2x16xf32>
    %150 = arith.mulf %139, %25 : vector<2x16xf32>
    %151 = arith.addf %149, %150 : vector<2x16xf32>
    %cst_60 = arith.constant dense<0.000000e+00> : vector<2x8xf32>
    %152 = tpu.matmul %151, %16, %cst_60 {dimension_numbers = #tpu.dot_dimension_numbers<[1], [0], [0], [1], [0, 0, 1, 1], [], []>} : vector<2x16xf32>, vector<16x8xf32>, vector<2x8xf32> -> vector<2x8xf32>
    %153 = vector.broadcast %17 : vector<1x8xf32> to vector<2x8xf32>
    %154 = arith.addf %152, %153 : vector<2x8xf32>
    %c0_61 = arith.constant 0 : index
    %c0_62 = arith.constant 0 : index
    %155 = vector.load %arg19[%c0_61, %c0_62] : memref<16x8xf32, #tpu.memory_space<vmem>>, vector<2x8xf32>
    tpu.vector_store %arg19[%c0_61, %c0_62], %154 {strides = array<i32>} : memref<16x8xf32, #tpu.memory_space<vmem>>, vector<2x8xf32>,
    %156 = vector.extract_strided_slice %21 {offsets = [2, 0], sizes = [2, 48], strides = [1, 1]} : vector<16x48xf32> to vector<2x48xf32>
    %cst_63 = arith.constant dense<0.000000e+00> : vector<2x48xf32>
    %157 = tpu.matmul %55, %4, %cst_63 {dimension_numbers = #tpu.dot_dimension_numbers<[1], [0], [0], [1], [0, 0, 1, 1], [], []>} : vector<2x16xf32>, vector<16x48xf32>, vector<2x48xf32> -> vector<2x48xf32>
    %158 = vector.extract_strided_slice %156 {offsets = [0, 0], sizes = [2, 16], strides = [1, 1]} : vector<2x48xf32> to vector<2x16xf32>
    %159 = vector.extract_strided_slice %157 {offsets = [0, 0], sizes = [2, 16], strides = [1, 1]} : vector<2x48xf32> to vector<2x16xf32>
    %160 = arith.addf %158, %159 : vector<2x16xf32>
    %161 = arith.negf %160 : vector<2x16xf32>
    %162 = math.exp %161 : vector<2x16xf32>
    %cst_64 = arith.constant 1.000000e+00 : f32
    %163 = vector.broadcast %cst_64 : f32 to vector<2x16xf32>
    %164 = arith.addf %163, %162 : vector<2x16xf32>
    %165 = arith.divf %163, %164 : vector<2x16xf32>
    %166 = vector.extract_strided_slice %156 {offsets = [0, 16], sizes = [2, 16], strides = [1, 1]} : vector<2x48xf32> to vector<2x16xf32>
    %167 = vector.extract_strided_slice %157 {offsets = [0, 16], sizes = [2, 16], strides = [1, 1]} : vector<2x48xf32> to vector<2x16xf32>
    %168 = arith.addf %166, %167 : vector<2x16xf32>
    %169 = arith.negf %168 : vector<2x16xf32>
    %170 = math.exp %169 : vector<2x16xf32>
    %cst_65 = arith.constant 1.000000e+00 : f32
    %171 = vector.broadcast %cst_65 : f32 to vector<2x16xf32>
    %172 = arith.addf %171, %170 : vector<2x16xf32>
    %173 = arith.divf %171, %172 : vector<2x16xf32>
    %174 = vector.extract_strided_slice %156 {offsets = [0, 32], sizes = [2, 16], strides = [1, 1]} : vector<2x48xf32> to vector<2x16xf32>
    %175 = vector.extract_strided_slice %157 {offsets = [0, 32], sizes = [2, 16], strides = [1, 1]} : vector<2x48xf32> to vector<2x16xf32>
    %176 = vector.broadcast %12 : vector<1x16xf32> to vector<2x16xf32>
    %177 = arith.addf %175, %176 : vector<2x16xf32>
    %178 = arith.mulf %165, %177 : vector<2x16xf32>
    %179 = arith.addf %174, %178 : vector<2x16xf32>
    %180 = math.tanh %179 : vector<2x16xf32>
    %cst_66 = arith.constant 1.000000e+00 : f32
    %181 = vector.broadcast %cst_66 : f32 to vector<2x16xf32>
    %182 = arith.subf %181, %173 : vector<2x16xf32>
    %183 = arith.mulf %182, %180 : vector<2x16xf32>
    %184 = arith.mulf %173, %55 : vector<2x16xf32>
    %185 = arith.addf %183, %184 : vector<2x16xf32>
    %cst_67 = arith.constant dense<0.000000e+00> : vector<2x48xf32>
    %186 = tpu.matmul %185, %1, %cst_67 {dimension_numbers = #tpu.dot_dimension_numbers<[1], [0], [0], [1], [0, 0, 1, 1], [], []>} : vector<2x16xf32>, vector<16x48xf32>, vector<2x48xf32> -> vector<2x48xf32>
    %187 = vector.broadcast %9 : vector<1x48xf32> to vector<2x48xf32>
    %188 = arith.addf %186, %187 : vector<2x48xf32>
    %cst_68 = arith.constant dense<0.000000e+00> : vector<2x48xf32>
    %189 = tpu.matmul %87, %5, %cst_68 {dimension_numbers = #tpu.dot_dimension_numbers<[1], [0], [0], [1], [0, 0, 1, 1], [], []>} : vector<2x16xf32>, vector<16x48xf32>, vector<2x48xf32> -> vector<2x48xf32>
    %190 = vector.extract_strided_slice %188 {offsets = [0, 0], sizes = [2, 16], strides = [1, 1]} : vector<2x48xf32> to vector<2x16xf32>
    %191 = vector.extract_strided_slice %189 {offsets = [0, 0], sizes = [2, 16], strides = [1, 1]} : vector<2x48xf32> to vector<2x16xf32>
    %192 = arith.addf %190, %191 : vector<2x16xf32>
    %193 = arith.negf %192 : vector<2x16xf32>
    %194 = math.exp %193 : vector<2x16xf32>
    %cst_69 = arith.constant 1.000000e+00 : f32
    %195 = vector.broadcast %cst_69 : f32 to vector<2x16xf32>
    %196 = arith.addf %195, %194 : vector<2x16xf32>
    %197 = arith.divf %195, %196 : vector<2x16xf32>
    %198 = vector.extract_strided_slice %188 {offsets = [0, 16], sizes = [2, 16], strides = [1, 1]} : vector<2x48xf32> to vector<2x16xf32>
    %199 = vector.extract_strided_slice %189 {offsets = [0, 16], sizes = [2, 16], strides = [1, 1]} : vector<2x48xf32> to vector<2x16xf32>
    %200 = arith.addf %198, %199 : vector<2x16xf32>
    %201 = arith.negf %200 : vector<2x16xf32>
    %202 = math.exp %201 : vector<2x16xf32>
    %cst_70 = arith.constant 1.000000e+00 : f32
    %203 = vector.broadcast %cst_70 : f32 to vector<2x16xf32>
    %204 = arith.addf %203, %202 : vector<2x16xf32>
    %205 = arith.divf %203, %204 : vector<2x16xf32>
    %206 = vector.extract_strided_slice %188 {offsets = [0, 32], sizes = [2, 16], strides = [1, 1]} : vector<2x48xf32> to vector<2x16xf32>
    %207 = vector.extract_strided_slice %189 {offsets = [0, 32], sizes = [2, 16], strides = [1, 1]} : vector<2x48xf32> to vector<2x16xf32>
    %208 = vector.broadcast %13 : vector<1x16xf32> to vector<2x16xf32>
    %209 = arith.addf %207, %208 : vector<2x16xf32>
    %210 = arith.mulf %197, %209 : vector<2x16xf32>
    %211 = arith.addf %206, %210 : vector<2x16xf32>
    %212 = math.tanh %211 : vector<2x16xf32>
    %cst_71 = arith.constant 1.000000e+00 : f32
    %213 = vector.broadcast %cst_71 : f32 to vector<2x16xf32>
    %214 = arith.subf %213, %205 : vector<2x16xf32>
    %215 = arith.mulf %214, %212 : vector<2x16xf32>
    %216 = arith.mulf %205, %87 : vector<2x16xf32>
    %217 = arith.addf %215, %216 : vector<2x16xf32>
    %cst_72 = arith.constant dense<0.000000e+00> : vector<2x48xf32>
    %218 = tpu.matmul %217, %2, %cst_72 {dimension_numbers = #tpu.dot_dimension_numbers<[1], [0], [0], [1], [0, 0, 1, 1], [], []>} : vector<2x16xf32>, vector<16x48xf32>, vector<2x48xf32> -> vector<2x48xf32>
    %219 = vector.broadcast %10 : vector<1x48xf32> to vector<2x48xf32>
    %220 = arith.addf %218, %219 : vector<2x48xf32>
    %cst_73 = arith.constant dense<0.000000e+00> : vector<2x48xf32>
    %221 = tpu.matmul %119, %6, %cst_73 {dimension_numbers = #tpu.dot_dimension_numbers<[1], [0], [0], [1], [0, 0, 1, 1], [], []>} : vector<2x16xf32>, vector<16x48xf32>, vector<2x48xf32> -> vector<2x48xf32>
    %222 = vector.extract_strided_slice %220 {offsets = [0, 0], sizes = [2, 16], strides = [1, 1]} : vector<2x48xf32> to vector<2x16xf32>
    %223 = vector.extract_strided_slice %221 {offsets = [0, 0], sizes = [2, 16], strides = [1, 1]} : vector<2x48xf32> to vector<2x16xf32>
    %224 = arith.addf %222, %223 : vector<2x16xf32>
    %225 = arith.negf %224 : vector<2x16xf32>
    %226 = math.exp %225 : vector<2x16xf32>
    %cst_74 = arith.constant 1.000000e+00 : f32
    %227 = vector.broadcast %cst_74 : f32 to vector<2x16xf32>
    %228 = arith.addf %227, %226 : vector<2x16xf32>
    %229 = arith.divf %227, %228 : vector<2x16xf32>
    %230 = vector.extract_strided_slice %220 {offsets = [0, 16], sizes = [2, 16], strides = [1, 1]} : vector<2x48xf32> to vector<2x16xf32>
    %231 = vector.extract_strided_slice %221 {offsets = [0, 16], sizes = [2, 16], strides = [1, 1]} : vector<2x48xf32> to vector<2x16xf32>
    %232 = arith.addf %230, %231 : vector<2x16xf32>
    %233 = arith.negf %232 : vector<2x16xf32>
    %234 = math.exp %233 : vector<2x16xf32>
    %cst_75 = arith.constant 1.000000e+00 : f32
    %235 = vector.broadcast %cst_75 : f32 to vector<2x16xf32>
    %236 = arith.addf %235, %234 : vector<2x16xf32>
    %237 = arith.divf %235, %236 : vector<2x16xf32>
    %238 = vector.extract_strided_slice %220 {offsets = [0, 32], sizes = [2, 16], strides = [1, 1]} : vector<2x48xf32> to vector<2x16xf32>
    %239 = vector.extract_strided_slice %221 {offsets = [0, 32], sizes = [2, 16], strides = [1, 1]} : vector<2x48xf32> to vector<2x16xf32>
    %240 = vector.broadcast %14 : vector<1x16xf32> to vector<2x16xf32>
    %241 = arith.addf %239, %240 : vector<2x16xf32>
    %242 = arith.mulf %229, %241 : vector<2x16xf32>
    %243 = arith.addf %238, %242 : vector<2x16xf32>
    %244 = math.tanh %243 : vector<2x16xf32>
    %cst_76 = arith.constant 1.000000e+00 : f32
    %245 = vector.broadcast %cst_76 : f32 to vector<2x16xf32>
    %246 = arith.subf %245, %237 : vector<2x16xf32>
    %247 = arith.mulf %246, %244 : vector<2x16xf32>
    %248 = arith.mulf %237, %119 : vector<2x16xf32>
    %249 = arith.addf %247, %248 : vector<2x16xf32>
    %cst_77 = arith.constant dense<0.000000e+00> : vector<2x48xf32>
    %250 = tpu.matmul %249, %3, %cst_77 {dimension_numbers = #tpu.dot_dimension_numbers<[1], [0], [0], [1], [0, 0, 1, 1], [], []>} : vector<2x16xf32>, vector<16x48xf32>, vector<2x48xf32> -> vector<2x48xf32>
    %251 = vector.broadcast %11 : vector<1x48xf32> to vector<2x48xf32>
    %252 = arith.addf %250, %251 : vector<2x48xf32>
    %cst_78 = arith.constant dense<0.000000e+00> : vector<2x48xf32>
    %253 = tpu.matmul %151, %7, %cst_78 {dimension_numbers = #tpu.dot_dimension_numbers<[1], [0], [0], [1], [0, 0, 1, 1], [], []>} : vector<2x16xf32>, vector<16x48xf32>, vector<2x48xf32> -> vector<2x48xf32>
    %254 = vector.extract_strided_slice %252 {offsets = [0, 0], sizes = [2, 16], strides = [1, 1]} : vector<2x48xf32> to vector<2x16xf32>
    %255 = vector.extract_strided_slice %253 {offsets = [0, 0], sizes = [2, 16], strides = [1, 1]} : vector<2x48xf32> to vector<2x16xf32>
    %256 = arith.addf %254, %255 : vector<2x16xf32>
    %257 = arith.negf %256 : vector<2x16xf32>
    %258 = math.exp %257 : vector<2x16xf32>
    %cst_79 = arith.constant 1.000000e+00 : f32
    %259 = vector.broadcast %cst_79 : f32 to vector<2x16xf32>
    %260 = arith.addf %259, %258 : vector<2x16xf32>
    %261 = arith.divf %259, %260 : vector<2x16xf32>
    %262 = vector.extract_strided_slice %252 {offsets = [0, 16], sizes = [2, 16], strides = [1, 1]} : vector<2x48xf32> to vector<2x16xf32>
    %263 = vector.extract_strided_slice %253 {offsets = [0, 16], sizes = [2, 16], strides = [1, 1]} : vector<2x48xf32> to vector<2x16xf32>
    %264 = arith.addf %262, %263 : vector<2x16xf32>
    %265 = arith.negf %264 : vector<2x16xf32>
    %266 = math.exp %265 : vector<2x16xf32>
    %cst_80 = arith.constant 1.000000e+00 : f32
    %267 = vector.broadcast %cst_80 : f32 to vector<2x16xf32>
    %268 = arith.addf %267, %266 : vector<2x16xf32>
    %269 = arith.divf %267, %268 : vector<2x16xf32>
    %270 = vector.extract_strided_slice %252 {offsets = [0, 32], sizes = [2, 16], strides = [1, 1]} : vector<2x48xf32> to vector<2x16xf32>
    %271 = vector.extract_strided_slice %253 {offsets = [0, 32], sizes = [2, 16], strides = [1, 1]} : vector<2x48xf32> to vector<2x16xf32>
    %272 = vector.broadcast %15 : vector<1x16xf32> to vector<2x16xf32>
    %273 = arith.addf %271, %272 : vector<2x16xf32>
    %274 = arith.mulf %261, %273 : vector<2x16xf32>
    %275 = arith.addf %270, %274 : vector<2x16xf32>
    %276 = math.tanh %275 : vector<2x16xf32>
    %cst_81 = arith.constant 1.000000e+00 : f32
    %277 = vector.broadcast %cst_81 : f32 to vector<2x16xf32>
    %278 = arith.subf %277, %269 : vector<2x16xf32>
    %279 = arith.mulf %278, %276 : vector<2x16xf32>
    %280 = arith.mulf %269, %151 : vector<2x16xf32>
    %281 = arith.addf %279, %280 : vector<2x16xf32>
    %cst_82 = arith.constant dense<0.000000e+00> : vector<2x8xf32>
    %282 = tpu.matmul %281, %16, %cst_82 {dimension_numbers = #tpu.dot_dimension_numbers<[1], [0], [0], [1], [0, 0, 1, 1], [], []>} : vector<2x16xf32>, vector<16x8xf32>, vector<2x8xf32> -> vector<2x8xf32>
    %283 = vector.broadcast %17 : vector<1x8xf32> to vector<2x8xf32>
    %284 = arith.addf %282, %283 : vector<2x8xf32>
    %c2 = arith.constant 2 : index
    %c0_83 = arith.constant 0 : index
    %285 = vector.load %arg19[%c2, %c0_83] : memref<16x8xf32, #tpu.memory_space<vmem>>, vector<2x8xf32>
    tpu.vector_store %arg19[%c2, %c0_83], %284 {strides = array<i32>} : memref<16x8xf32, #tpu.memory_space<vmem>>, vector<2x8xf32>,
    %286 = vector.extract_strided_slice %21 {offsets = [4, 0], sizes = [2, 48], strides = [1, 1]} : vector<16x48xf32> to vector<2x48xf32>
    %cst_84 = arith.constant dense<0.000000e+00> : vector<2x48xf32>
    %287 = tpu.matmul %185, %4, %cst_84 {dimension_numbers = #tpu.dot_dimension_numbers<[1], [0], [0], [1], [0, 0, 1, 1], [], []>} : vector<2x16xf32>, vector<16x48xf32>, vector<2x48xf32> -> vector<2x48xf32>
    %288 = vector.extract_strided_slice %286 {offsets = [0, 0], sizes = [2, 16], strides = [1, 1]} : vector<2x48xf32> to vector<2x16xf32>
    %289 = vector.extract_strided_slice %287 {offsets = [0, 0], sizes = [2, 16], strides = [1, 1]} : vector<2x48xf32> to vector<2x16xf32>
    %290 = arith.addf %288, %289 : vector<2x16xf32>
    %291 = arith.negf %290 : vector<2x16xf32>
    %292 = math.exp %291 : vector<2x16xf32>
    %cst_85 = arith.constant 1.000000e+00 : f32
    %293 = vector.broadcast %cst_85 : f32 to vector<2x16xf32>
    %294 = arith.addf %293, %292 : vector<2x16xf32>
    %295 = arith.divf %293, %294 : vector<2x16xf32>
    %296 = vector.extract_strided_slice %286 {offsets = [0, 16], sizes = [2, 16], strides = [1, 1]} : vector<2x48xf32> to vector<2x16xf32>
    %297 = vector.extract_strided_slice %287 {offsets = [0, 16], sizes = [2, 16], strides = [1, 1]} : vector<2x48xf32> to vector<2x16xf32>
    %298 = arith.addf %296, %297 : vector<2x16xf32>
    %299 = arith.negf %298 : vector<2x16xf32>
    %300 = math.exp %299 : vector<2x16xf32>
    %cst_86 = arith.constant 1.000000e+00 : f32
    %301 = vector.broadcast %cst_86 : f32 to vector<2x16xf32>
    %302 = arith.addf %301, %300 : vector<2x16xf32>
    %303 = arith.divf %301, %302 : vector<2x16xf32>
    %304 = vector.extract_strided_slice %286 {offsets = [0, 32], sizes = [2, 16], strides = [1, 1]} : vector<2x48xf32> to vector<2x16xf32>
    %305 = vector.extract_strided_slice %287 {offsets = [0, 32], sizes = [2, 16], strides = [1, 1]} : vector<2x48xf32> to vector<2x16xf32>
    %306 = vector.broadcast %12 : vector<1x16xf32> to vector<2x16xf32>
    %307 = arith.addf %305, %306 : vector<2x16xf32>
    %308 = arith.mulf %295, %307 : vector<2x16xf32>
    %309 = arith.addf %304, %308 : vector<2x16xf32>
    %310 = math.tanh %309 : vector<2x16xf32>
    %cst_87 = arith.constant 1.000000e+00 : f32
    %311 = vector.broadcast %cst_87 : f32 to vector<2x16xf32>
    %312 = arith.subf %311, %303 : vector<2x16xf32>
    %313 = arith.mulf %312, %310 : vector<2x16xf32>
    %314 = arith.mulf %303, %185 : vector<2x16xf32>
    %315 = arith.addf %313, %314 : vector<2x16xf32>
    %cst_88 = arith.constant dense<0.000000e+00> : vector<2x48xf32>
    %316 = tpu.matmul %315, %1, %cst_88 {dimension_numbers = #tpu.dot_dimension_numbers<[1], [0], [0], [1], [0, 0, 1, 1], [], []>} : vector<2x16xf32>, vector<16x48xf32>, vector<2x48xf32> -> vector<2x48xf32>
    %317 = vector.broadcast %9 : vector<1x48xf32> to vector<2x48xf32>
    %318 = arith.addf %316, %317 : vector<2x48xf32>
    %cst_89 = arith.constant dense<0.000000e+00> : vector<2x48xf32>
    %319 = tpu.matmul %217, %5, %cst_89 {dimension_numbers = #tpu.dot_dimension_numbers<[1], [0], [0], [1], [0, 0, 1, 1], [], []>} : vector<2x16xf32>, vector<16x48xf32>, vector<2x48xf32> -> vector<2x48xf32>
    %320 = vector.extract_strided_slice %318 {offsets = [0, 0], sizes = [2, 16], strides = [1, 1]} : vector<2x48xf32> to vector<2x16xf32>
    %321 = vector.extract_strided_slice %319 {offsets = [0, 0], sizes = [2, 16], strides = [1, 1]} : vector<2x48xf32> to vector<2x16xf32>
    %322 = arith.addf %320, %321 : vector<2x16xf32>
    %323 = arith.negf %322 : vector<2x16xf32>
    %324 = math.exp %323 : vector<2x16xf32>
    %cst_90 = arith.constant 1.000000e+00 : f32
    %325 = vector.broadcast %cst_90 : f32 to vector<2x16xf32>
    %326 = arith.addf %325, %324 : vector<2x16xf32>
    %327 = arith.divf %325, %326 : vector<2x16xf32>
    %328 = vector.extract_strided_slice %318 {offsets = [0, 16], sizes = [2, 16], strides = [1, 1]} : vector<2x48xf32> to vector<2x16xf32>
    %329 = vector.extract_strided_slice %319 {offsets = [0, 16], sizes = [2, 16], strides = [1, 1]} : vector<2x48xf32> to vector<2x16xf32>
    %330 = arith.addf %328, %329 : vector<2x16xf32>
    %331 = arith.negf %330 : vector<2x16xf32>
    %332 = math.exp %331 : vector<2x16xf32>
    %cst_91 = arith.constant 1.000000e+00 : f32
    %333 = vector.broadcast %cst_91 : f32 to vector<2x16xf32>
    %334 = arith.addf %333, %332 : vector<2x16xf32>
    %335 = arith.divf %333, %334 : vector<2x16xf32>
    %336 = vector.extract_strided_slice %318 {offsets = [0, 32], sizes = [2, 16], strides = [1, 1]} : vector<2x48xf32> to vector<2x16xf32>
    %337 = vector.extract_strided_slice %319 {offsets = [0, 32], sizes = [2, 16], strides = [1, 1]} : vector<2x48xf32> to vector<2x16xf32>
    %338 = vector.broadcast %13 : vector<1x16xf32> to vector<2x16xf32>
    %339 = arith.addf %337, %338 : vector<2x16xf32>
    %340 = arith.mulf %327, %339 : vector<2x16xf32>
    %341 = arith.addf %336, %340 : vector<2x16xf32>
    %342 = math.tanh %341 : vector<2x16xf32>
    %cst_92 = arith.constant 1.000000e+00 : f32
    %343 = vector.broadcast %cst_92 : f32 to vector<2x16xf32>
    %344 = arith.subf %343, %335 : vector<2x16xf32>
    %345 = arith.mulf %344, %342 : vector<2x16xf32>
    %346 = arith.mulf %335, %217 : vector<2x16xf32>
    %347 = arith.addf %345, %346 : vector<2x16xf32>
    %cst_93 = arith.constant dense<0.000000e+00> : vector<2x48xf32>
    %348 = tpu.matmul %347, %2, %cst_93 {dimension_numbers = #tpu.dot_dimension_numbers<[1], [0], [0], [1], [0, 0, 1, 1], [], []>} : vector<2x16xf32>, vector<16x48xf32>, vector<2x48xf32> -> vector<2x48xf32>
    %349 = vector.broadcast %10 : vector<1x48xf32> to vector<2x48xf32>
    %350 = arith.addf %348, %349 : vector<2x48xf32>
    %cst_94 = arith.constant dense<0.000000e+00> : vector<2x48xf32>
    %351 = tpu.matmul %249, %6, %cst_94 {dimension_numbers = #tpu.dot_dimension_numbers<[1], [0], [0], [1], [0, 0, 1, 1], [], []>} : vector<2x16xf32>, vector<16x48xf32>, vector<2x48xf32> -> vector<2x48xf32>
    %352 = vector.extract_strided_slice %350 {offsets = [0, 0], sizes = [2, 16], strides = [1, 1]} : vector<2x48xf32> to vector<2x16xf32>
    %353 = vector.extract_strided_slice %351 {offsets = [0, 0], sizes = [2, 16], strides = [1, 1]} : vector<2x48xf32> to vector<2x16xf32>
    %354 = arith.addf %352, %353 : vector<2x16xf32>
    %355 = arith.negf %354 : vector<2x16xf32>
    %356 = math.exp %355 : vector<2x16xf32>
    %cst_95 = arith.constant 1.000000e+00 : f32
    %357 = vector.broadcast %cst_95 : f32 to vector<2x16xf32>
    %358 = arith.addf %357, %356 : vector<2x16xf32>
    %359 = arith.divf %357, %358 : vector<2x16xf32>
    %360 = vector.extract_strided_slice %350 {offsets = [0, 16], sizes = [2, 16], strides = [1, 1]} : vector<2x48xf32> to vector<2x16xf32>
    %361 = vector.extract_strided_slice %351 {offsets = [0, 16], sizes = [2, 16], strides = [1, 1]} : vector<2x48xf32> to vector<2x16xf32>
    %362 = arith.addf %360, %361 : vector<2x16xf32>
    %363 = arith.negf %362 : vector<2x16xf32>
    %364 = math.exp %363 : vector<2x16xf32>
    %cst_96 = arith.constant 1.000000e+00 : f32
    %365 = vector.broadcast %cst_96 : f32 to vector<2x16xf32>
    %366 = arith.addf %365, %364 : vector<2x16xf32>
    %367 = arith.divf %365, %366 : vector<2x16xf32>
    %368 = vector.extract_strided_slice %350 {offsets = [0, 32], sizes = [2, 16], strides = [1, 1]} : vector<2x48xf32> to vector<2x16xf32>
    %369 = vector.extract_strided_slice %351 {offsets = [0, 32], sizes = [2, 16], strides = [1, 1]} : vector<2x48xf32> to vector<2x16xf32>
    %370 = vector.broadcast %14 : vector<1x16xf32> to vector<2x16xf32>
    %371 = arith.addf %369, %370 : vector<2x16xf32>
    %372 = arith.mulf %359, %371 : vector<2x16xf32>
    %373 = arith.addf %368, %372 : vector<2x16xf32>
    %374 = math.tanh %373 : vector<2x16xf32>
    %cst_97 = arith.constant 1.000000e+00 : f32
    %375 = vector.broadcast %cst_97 : f32 to vector<2x16xf32>
    %376 = arith.subf %375, %367 : vector<2x16xf32>
    %377 = arith.mulf %376, %374 : vector<2x16xf32>
    %378 = arith.mulf %367, %249 : vector<2x16xf32>
    %379 = arith.addf %377, %378 : vector<2x16xf32>
    %cst_98 = arith.constant dense<0.000000e+00> : vector<2x48xf32>
    %380 = tpu.matmul %379, %3, %cst_98 {dimension_numbers = #tpu.dot_dimension_numbers<[1], [0], [0], [1], [0, 0, 1, 1], [], []>} : vector<2x16xf32>, vector<16x48xf32>, vector<2x48xf32> -> vector<2x48xf32>
    %381 = vector.broadcast %11 : vector<1x48xf32> to vector<2x48xf32>
    %382 = arith.addf %380, %381 : vector<2x48xf32>
    %cst_99 = arith.constant dense<0.000000e+00> : vector<2x48xf32>
    %383 = tpu.matmul %281, %7, %cst_99 {dimension_numbers = #tpu.dot_dimension_numbers<[1], [0], [0], [1], [0, 0, 1, 1], [], []>} : vector<2x16xf32>, vector<16x48xf32>, vector<2x48xf32> -> vector<2x48xf32>
    %384 = vector.extract_strided_slice %382 {offsets = [0, 0], sizes = [2, 16], strides = [1, 1]} : vector<2x48xf32> to vector<2x16xf32>
    %385 = vector.extract_strided_slice %383 {offsets = [0, 0], sizes = [2, 16], strides = [1, 1]} : vector<2x48xf32> to vector<2x16xf32>
    %386 = arith.addf %384, %385 : vector<2x16xf32>
    %387 = arith.negf %386 : vector<2x16xf32>
    %388 = math.exp %387 : vector<2x16xf32>
    %cst_100 = arith.constant 1.000000e+00 : f32
    %389 = vector.broadcast %cst_100 : f32 to vector<2x16xf32>
    %390 = arith.addf %389, %388 : vector<2x16xf32>
    %391 = arith.divf %389, %390 : vector<2x16xf32>
    %392 = vector.extract_strided_slice %382 {offsets = [0, 16], sizes = [2, 16], strides = [1, 1]} : vector<2x48xf32> to vector<2x16xf32>
    %393 = vector.extract_strided_slice %383 {offsets = [0, 16], sizes = [2, 16], strides = [1, 1]} : vector<2x48xf32> to vector<2x16xf32>
    %394 = arith.addf %392, %393 : vector<2x16xf32>
    %395 = arith.negf %394 : vector<2x16xf32>
    %396 = math.exp %395 : vector<2x16xf32>
    %cst_101 = arith.constant 1.000000e+00 : f32
    %397 = vector.broadcast %cst_101 : f32 to vector<2x16xf32>
    %398 = arith.addf %397, %396 : vector<2x16xf32>
    %399 = arith.divf %397, %398 : vector<2x16xf32>
    %400 = vector.extract_strided_slice %382 {offsets = [0, 32], sizes = [2, 16], strides = [1, 1]} : vector<2x48xf32> to vector<2x16xf32>
    %401 = vector.extract_strided_slice %383 {offsets = [0, 32], sizes = [2, 16], strides = [1, 1]} : vector<2x48xf32> to vector<2x16xf32>
    %402 = vector.broadcast %15 : vector<1x16xf32> to vector<2x16xf32>
    %403 = arith.addf %401, %402 : vector<2x16xf32>
    %404 = arith.mulf %391, %403 : vector<2x16xf32>
    %405 = arith.addf %400, %404 : vector<2x16xf32>
    %406 = math.tanh %405 : vector<2x16xf32>
    %cst_102 = arith.constant 1.000000e+00 : f32
    %407 = vector.broadcast %cst_102 : f32 to vector<2x16xf32>
    %408 = arith.subf %407, %399 : vector<2x16xf32>
    %409 = arith.mulf %408, %406 : vector<2x16xf32>
    %410 = arith.mulf %399, %281 : vector<2x16xf32>
    %411 = arith.addf %409, %410 : vector<2x16xf32>
    %cst_103 = arith.constant dense<0.000000e+00> : vector<2x8xf32>
    %412 = tpu.matmul %411, %16, %cst_103 {dimension_numbers = #tpu.dot_dimension_numbers<[1], [0], [0], [1], [0, 0, 1, 1], [], []>} : vector<2x16xf32>, vector<16x8xf32>, vector<2x8xf32> -> vector<2x8xf32>
    %413 = vector.broadcast %17 : vector<1x8xf32> to vector<2x8xf32>
    %414 = arith.addf %412, %413 : vector<2x8xf32>
    %c4 = arith.constant 4 : index
    %c0_104 = arith.constant 0 : index
    %415 = vector.load %arg19[%c4, %c0_104] : memref<16x8xf32, #tpu.memory_space<vmem>>, vector<2x8xf32>
    tpu.vector_store %arg19[%c4, %c0_104], %414 {strides = array<i32>} : memref<16x8xf32, #tpu.memory_space<vmem>>, vector<2x8xf32>,
    %416 = vector.extract_strided_slice %21 {offsets = [6, 0], sizes = [2, 48], strides = [1, 1]} : vector<16x48xf32> to vector<2x48xf32>
    %cst_105 = arith.constant dense<0.000000e+00> : vector<2x48xf32>
    %417 = tpu.matmul %315, %4, %cst_105 {dimension_numbers = #tpu.dot_dimension_numbers<[1], [0], [0], [1], [0, 0, 1, 1], [], []>} : vector<2x16xf32>, vector<16x48xf32>, vector<2x48xf32> -> vector<2x48xf32>
    %418 = vector.extract_strided_slice %416 {offsets = [0, 0], sizes = [2, 16], strides = [1, 1]} : vector<2x48xf32> to vector<2x16xf32>
    %419 = vector.extract_strided_slice %417 {offsets = [0, 0], sizes = [2, 16], strides = [1, 1]} : vector<2x48xf32> to vector<2x16xf32>
    %420 = arith.addf %418, %419 : vector<2x16xf32>
    %421 = arith.negf %420 : vector<2x16xf32>
    %422 = math.exp %421 : vector<2x16xf32>
    %cst_106 = arith.constant 1.000000e+00 : f32
    %423 = vector.broadcast %cst_106 : f32 to vector<2x16xf32>
    %424 = arith.addf %423, %422 : vector<2x16xf32>
    %425 = arith.divf %423, %424 : vector<2x16xf32>
    %426 = vector.extract_strided_slice %416 {offsets = [0, 16], sizes = [2, 16], strides = [1, 1]} : vector<2x48xf32> to vector<2x16xf32>
    %427 = vector.extract_strided_slice %417 {offsets = [0, 16], sizes = [2, 16], strides = [1, 1]} : vector<2x48xf32> to vector<2x16xf32>
    %428 = arith.addf %426, %427 : vector<2x16xf32>
    %429 = arith.negf %428 : vector<2x16xf32>
    %430 = math.exp %429 : vector<2x16xf32>
    %cst_107 = arith.constant 1.000000e+00 : f32
    %431 = vector.broadcast %cst_107 : f32 to vector<2x16xf32>
    %432 = arith.addf %431, %430 : vector<2x16xf32>
    %433 = arith.divf %431, %432 : vector<2x16xf32>
    %434 = vector.extract_strided_slice %416 {offsets = [0, 32], sizes = [2, 16], strides = [1, 1]} : vector<2x48xf32> to vector<2x16xf32>
    %435 = vector.extract_strided_slice %417 {offsets = [0, 32], sizes = [2, 16], strides = [1, 1]} : vector<2x48xf32> to vector<2x16xf32>
    %436 = vector.broadcast %12 : vector<1x16xf32> to vector<2x16xf32>
    %437 = arith.addf %435, %436 : vector<2x16xf32>
    %438 = arith.mulf %425, %437 : vector<2x16xf32>
    %439 = arith.addf %434, %438 : vector<2x16xf32>
    %440 = math.tanh %439 : vector<2x16xf32>
    %cst_108 = arith.constant 1.000000e+00 : f32
    %441 = vector.broadcast %cst_108 : f32 to vector<2x16xf32>
    %442 = arith.subf %441, %433 : vector<2x16xf32>
    %443 = arith.mulf %442, %440 : vector<2x16xf32>
    %444 = arith.mulf %433, %315 : vector<2x16xf32>
    %445 = arith.addf %443, %444 : vector<2x16xf32>
    %cst_109 = arith.constant dense<0.000000e+00> : vector<2x48xf32>
    %446 = tpu.matmul %445, %1, %cst_109 {dimension_numbers = #tpu.dot_dimension_numbers<[1], [0], [0], [1], [0, 0, 1, 1], [], []>} : vector<2x16xf32>, vector<16x48xf32>, vector<2x48xf32> -> vector<2x48xf32>
    %447 = vector.broadcast %9 : vector<1x48xf32> to vector<2x48xf32>
    %448 = arith.addf %446, %447 : vector<2x48xf32>
    %cst_110 = arith.constant dense<0.000000e+00> : vector<2x48xf32>
    %449 = tpu.matmul %347, %5, %cst_110 {dimension_numbers = #tpu.dot_dimension_numbers<[1], [0], [0], [1], [0, 0, 1, 1], [], []>} : vector<2x16xf32>, vector<16x48xf32>, vector<2x48xf32> -> vector<2x48xf32>
    %450 = vector.extract_strided_slice %448 {offsets = [0, 0], sizes = [2, 16], strides = [1, 1]} : vector<2x48xf32> to vector<2x16xf32>
    %451 = vector.extract_strided_slice %449 {offsets = [0, 0], sizes = [2, 16], strides = [1, 1]} : vector<2x48xf32> to vector<2x16xf32>
    %452 = arith.addf %450, %451 : vector<2x16xf32>
    %453 = arith.negf %452 : vector<2x16xf32>
    %454 = math.exp %453 : vector<2x16xf32>
    %cst_111 = arith.constant 1.000000e+00 : f32
    %455 = vector.broadcast %cst_111 : f32 to vector<2x16xf32>
    %456 = arith.addf %455, %454 : vector<2x16xf32>
    %457 = arith.divf %455, %456 : vector<2x16xf32>
    %458 = vector.extract_strided_slice %448 {offsets = [0, 16], sizes = [2, 16], strides = [1, 1]} : vector<2x48xf32> to vector<2x16xf32>
    %459 = vector.extract_strided_slice %449 {offsets = [0, 16], sizes = [2, 16], strides = [1, 1]} : vector<2x48xf32> to vector<2x16xf32>
    %460 = arith.addf %458, %459 : vector<2x16xf32>
    %461 = arith.negf %460 : vector<2x16xf32>
    %462 = math.exp %461 : vector<2x16xf32>
    %cst_112 = arith.constant 1.000000e+00 : f32
    %463 = vector.broadcast %cst_112 : f32 to vector<2x16xf32>
    %464 = arith.addf %463, %462 : vector<2x16xf32>
    %465 = arith.divf %463, %464 : vector<2x16xf32>
    %466 = vector.extract_strided_slice %448 {offsets = [0, 32], sizes = [2, 16], strides = [1, 1]} : vector<2x48xf32> to vector<2x16xf32>
    %467 = vector.extract_strided_slice %449 {offsets = [0, 32], sizes = [2, 16], strides = [1, 1]} : vector<2x48xf32> to vector<2x16xf32>
    %468 = vector.broadcast %13 : vector<1x16xf32> to vector<2x16xf32>
    %469 = arith.addf %467, %468 : vector<2x16xf32>
    %470 = arith.mulf %457, %469 : vector<2x16xf32>
    %471 = arith.addf %466, %470 : vector<2x16xf32>
    %472 = math.tanh %471 : vector<2x16xf32>
    %cst_113 = arith.constant 1.000000e+00 : f32
    %473 = vector.broadcast %cst_113 : f32 to vector<2x16xf32>
    %474 = arith.subf %473, %465 : vector<2x16xf32>
    %475 = arith.mulf %474, %472 : vector<2x16xf32>
    %476 = arith.mulf %465, %347 : vector<2x16xf32>
    %477 = arith.addf %475, %476 : vector<2x16xf32>
    %cst_114 = arith.constant dense<0.000000e+00> : vector<2x48xf32>
    %478 = tpu.matmul %477, %2, %cst_114 {dimension_numbers = #tpu.dot_dimension_numbers<[1], [0], [0], [1], [0, 0, 1, 1], [], []>} : vector<2x16xf32>, vector<16x48xf32>, vector<2x48xf32> -> vector<2x48xf32>
    %479 = vector.broadcast %10 : vector<1x48xf32> to vector<2x48xf32>
    %480 = arith.addf %478, %479 : vector<2x48xf32>
    %cst_115 = arith.constant dense<0.000000e+00> : vector<2x48xf32>
    %481 = tpu.matmul %379, %6, %cst_115 {dimension_numbers = #tpu.dot_dimension_numbers<[1], [0], [0], [1], [0, 0, 1, 1], [], []>} : vector<2x16xf32>, vector<16x48xf32>, vector<2x48xf32> -> vector<2x48xf32>
    %482 = vector.extract_strided_slice %480 {offsets = [0, 0], sizes = [2, 16], strides = [1, 1]} : vector<2x48xf32> to vector<2x16xf32>
    %483 = vector.extract_strided_slice %481 {offsets = [0, 0], sizes = [2, 16], strides = [1, 1]} : vector<2x48xf32> to vector<2x16xf32>
    %484 = arith.addf %482, %483 : vector<2x16xf32>
    %485 = arith.negf %484 : vector<2x16xf32>
    %486 = math.exp %485 : vector<2x16xf32>
    %cst_116 = arith.constant 1.000000e+00 : f32
    %487 = vector.broadcast %cst_116 : f32 to vector<2x16xf32>
    %488 = arith.addf %487, %486 : vector<2x16xf32>
    %489 = arith.divf %487, %488 : vector<2x16xf32>
    %490 = vector.extract_strided_slice %480 {offsets = [0, 16], sizes = [2, 16], strides = [1, 1]} : vector<2x48xf32> to vector<2x16xf32>
    %491 = vector.extract_strided_slice %481 {offsets = [0, 16], sizes = [2, 16], strides = [1, 1]} : vector<2x48xf32> to vector<2x16xf32>
    %492 = arith.addf %490, %491 : vector<2x16xf32>
    %493 = arith.negf %492 : vector<2x16xf32>
    %494 = math.exp %493 : vector<2x16xf32>
    %cst_117 = arith.constant 1.000000e+00 : f32
    %495 = vector.broadcast %cst_117 : f32 to vector<2x16xf32>
    %496 = arith.addf %495, %494 : vector<2x16xf32>
    %497 = arith.divf %495, %496 : vector<2x16xf32>
    %498 = vector.extract_strided_slice %480 {offsets = [0, 32], sizes = [2, 16], strides = [1, 1]} : vector<2x48xf32> to vector<2x16xf32>
    %499 = vector.extract_strided_slice %481 {offsets = [0, 32], sizes = [2, 16], strides = [1, 1]} : vector<2x48xf32> to vector<2x16xf32>
    %500 = vector.broadcast %14 : vector<1x16xf32> to vector<2x16xf32>
    %501 = arith.addf %499, %500 : vector<2x16xf32>
    %502 = arith.mulf %489, %501 : vector<2x16xf32>
    %503 = arith.addf %498, %502 : vector<2x16xf32>
    %504 = math.tanh %503 : vector<2x16xf32>
    %cst_118 = arith.constant 1.000000e+00 : f32
    %505 = vector.broadcast %cst_118 : f32 to vector<2x16xf32>
    %506 = arith.subf %505, %497 : vector<2x16xf32>
    %507 = arith.mulf %506, %504 : vector<2x16xf32>
    %508 = arith.mulf %497, %379 : vector<2x16xf32>
    %509 = arith.addf %507, %508 : vector<2x16xf32>
    %cst_119 = arith.constant dense<0.000000e+00> : vector<2x48xf32>
    %510 = tpu.matmul %509, %3, %cst_119 {dimension_numbers = #tpu.dot_dimension_numbers<[1], [0], [0], [1], [0, 0, 1, 1], [], []>} : vector<2x16xf32>, vector<16x48xf32>, vector<2x48xf32> -> vector<2x48xf32>
    %511 = vector.broadcast %11 : vector<1x48xf32> to vector<2x48xf32>
    %512 = arith.addf %510, %511 : vector<2x48xf32>
    %cst_120 = arith.constant dense<0.000000e+00> : vector<2x48xf32>
    %513 = tpu.matmul %411, %7, %cst_120 {dimension_numbers = #tpu.dot_dimension_numbers<[1], [0], [0], [1], [0, 0, 1, 1], [], []>} : vector<2x16xf32>, vector<16x48xf32>, vector<2x48xf32> -> vector<2x48xf32>
    %514 = vector.extract_strided_slice %512 {offsets = [0, 0], sizes = [2, 16], strides = [1, 1]} : vector<2x48xf32> to vector<2x16xf32>
    %515 = vector.extract_strided_slice %513 {offsets = [0, 0], sizes = [2, 16], strides = [1, 1]} : vector<2x48xf32> to vector<2x16xf32>
    %516 = arith.addf %514, %515 : vector<2x16xf32>
    %517 = arith.negf %516 : vector<2x16xf32>
    %518 = math.exp %517 : vector<2x16xf32>
    %cst_121 = arith.constant 1.000000e+00 : f32
    %519 = vector.broadcast %cst_121 : f32 to vector<2x16xf32>
    %520 = arith.addf %519, %518 : vector<2x16xf32>
    %521 = arith.divf %519, %520 : vector<2x16xf32>
    %522 = vector.extract_strided_slice %512 {offsets = [0, 16], sizes = [2, 16], strides = [1, 1]} : vector<2x48xf32> to vector<2x16xf32>
    %523 = vector.extract_strided_slice %513 {offsets = [0, 16], sizes = [2, 16], strides = [1, 1]} : vector<2x48xf32> to vector<2x16xf32>
    %524 = arith.addf %522, %523 : vector<2x16xf32>
    %525 = arith.negf %524 : vector<2x16xf32>
    %526 = math.exp %525 : vector<2x16xf32>
    %cst_122 = arith.constant 1.000000e+00 : f32
    %527 = vector.broadcast %cst_122 : f32 to vector<2x16xf32>
    %528 = arith.addf %527, %526 : vector<2x16xf32>
    %529 = arith.divf %527, %528 : vector<2x16xf32>
    %530 = vector.extract_strided_slice %512 {offsets = [0, 32], sizes = [2, 16], strides = [1, 1]} : vector<2x48xf32> to vector<2x16xf32>
    %531 = vector.extract_strided_slice %513 {offsets = [0, 32], sizes = [2, 16], strides = [1, 1]} : vector<2x48xf32> to vector<2x16xf32>
    %532 = vector.broadcast %15 : vector<1x16xf32> to vector<2x16xf32>
    %533 = arith.addf %531, %532 : vector<2x16xf32>
    %534 = arith.mulf %521, %533 : vector<2x16xf32>
    %535 = arith.addf %530, %534 : vector<2x16xf32>
    %536 = math.tanh %535 : vector<2x16xf32>
    %cst_123 = arith.constant 1.000000e+00 : f32
    %537 = vector.broadcast %cst_123 : f32 to vector<2x16xf32>
    %538 = arith.subf %537, %529 : vector<2x16xf32>
    %539 = arith.mulf %538, %536 : vector<2x16xf32>
    %540 = arith.mulf %529, %411 : vector<2x16xf32>
    %541 = arith.addf %539, %540 : vector<2x16xf32>
    %cst_124 = arith.constant dense<0.000000e+00> : vector<2x8xf32>
    %542 = tpu.matmul %541, %16, %cst_124 {dimension_numbers = #tpu.dot_dimension_numbers<[1], [0], [0], [1], [0, 0, 1, 1], [], []>} : vector<2x16xf32>, vector<16x8xf32>, vector<2x8xf32> -> vector<2x8xf32>
    %543 = vector.broadcast %17 : vector<1x8xf32> to vector<2x8xf32>
    %544 = arith.addf %542, %543 : vector<2x8xf32>
    %c6 = arith.constant 6 : index
    %c0_125 = arith.constant 0 : index
    %545 = vector.load %arg19[%c6, %c0_125] : memref<16x8xf32, #tpu.memory_space<vmem>>, vector<2x8xf32>
    tpu.vector_store %arg19[%c6, %c0_125], %544 {strides = array<i32>} : memref<16x8xf32, #tpu.memory_space<vmem>>, vector<2x8xf32>,
    %546 = vector.extract_strided_slice %21 {offsets = [8, 0], sizes = [2, 48], strides = [1, 1]} : vector<16x48xf32> to vector<2x48xf32>
    %cst_126 = arith.constant dense<0.000000e+00> : vector<2x48xf32>
    %547 = tpu.matmul %445, %4, %cst_126 {dimension_numbers = #tpu.dot_dimension_numbers<[1], [0], [0], [1], [0, 0, 1, 1], [], []>} : vector<2x16xf32>, vector<16x48xf32>, vector<2x48xf32> -> vector<2x48xf32>
    %548 = vector.extract_strided_slice %546 {offsets = [0, 0], sizes = [2, 16], strides = [1, 1]} : vector<2x48xf32> to vector<2x16xf32>
    %549 = vector.extract_strided_slice %547 {offsets = [0, 0], sizes = [2, 16], strides = [1, 1]} : vector<2x48xf32> to vector<2x16xf32>
    %550 = arith.addf %548, %549 : vector<2x16xf32>
    %551 = arith.negf %550 : vector<2x16xf32>
    %552 = math.exp %551 : vector<2x16xf32>
    %cst_127 = arith.constant 1.000000e+00 : f32
    %553 = vector.broadcast %cst_127 : f32 to vector<2x16xf32>
    %554 = arith.addf %553, %552 : vector<2x16xf32>
    %555 = arith.divf %553, %554 : vector<2x16xf32>
    %556 = vector.extract_strided_slice %546 {offsets = [0, 16], sizes = [2, 16], strides = [1, 1]} : vector<2x48xf32> to vector<2x16xf32>
    %557 = vector.extract_strided_slice %547 {offsets = [0, 16], sizes = [2, 16], strides = [1, 1]} : vector<2x48xf32> to vector<2x16xf32>
    %558 = arith.addf %556, %557 : vector<2x16xf32>
    %559 = arith.negf %558 : vector<2x16xf32>
    %560 = math.exp %559 : vector<2x16xf32>
    %cst_128 = arith.constant 1.000000e+00 : f32
    %561 = vector.broadcast %cst_128 : f32 to vector<2x16xf32>
    %562 = arith.addf %561, %560 : vector<2x16xf32>
    %563 = arith.divf %561, %562 : vector<2x16xf32>
    %564 = vector.extract_strided_slice %546 {offsets = [0, 32], sizes = [2, 16], strides = [1, 1]} : vector<2x48xf32> to vector<2x16xf32>
    %565 = vector.extract_strided_slice %547 {offsets = [0, 32], sizes = [2, 16], strides = [1, 1]} : vector<2x48xf32> to vector<2x16xf32>
    %566 = vector.broadcast %12 : vector<1x16xf32> to vector<2x16xf32>
    %567 = arith.addf %565, %566 : vector<2x16xf32>
    %568 = arith.mulf %555, %567 : vector<2x16xf32>
    %569 = arith.addf %564, %568 : vector<2x16xf32>
    %570 = math.tanh %569 : vector<2x16xf32>
    %cst_129 = arith.constant 1.000000e+00 : f32
    %571 = vector.broadcast %cst_129 : f32 to vector<2x16xf32>
    %572 = arith.subf %571, %563 : vector<2x16xf32>
    %573 = arith.mulf %572, %570 : vector<2x16xf32>
    %574 = arith.mulf %563, %445 : vector<2x16xf32>
    %575 = arith.addf %573, %574 : vector<2x16xf32>
    %cst_130 = arith.constant dense<0.000000e+00> : vector<2x48xf32>
    %576 = tpu.matmul %575, %1, %cst_130 {dimension_numbers = #tpu.dot_dimension_numbers<[1], [0], [0], [1], [0, 0, 1, 1], [], []>} : vector<2x16xf32>, vector<16x48xf32>, vector<2x48xf32> -> vector<2x48xf32>
    %577 = vector.broadcast %9 : vector<1x48xf32> to vector<2x48xf32>
    %578 = arith.addf %576, %577 : vector<2x48xf32>
    %cst_131 = arith.constant dense<0.000000e+00> : vector<2x48xf32>
    %579 = tpu.matmul %477, %5, %cst_131 {dimension_numbers = #tpu.dot_dimension_numbers<[1], [0], [0], [1], [0, 0, 1, 1], [], []>} : vector<2x16xf32>, vector<16x48xf32>, vector<2x48xf32> -> vector<2x48xf32>
    %580 = vector.extract_strided_slice %578 {offsets = [0, 0], sizes = [2, 16], strides = [1, 1]} : vector<2x48xf32> to vector<2x16xf32>
    %581 = vector.extract_strided_slice %579 {offsets = [0, 0], sizes = [2, 16], strides = [1, 1]} : vector<2x48xf32> to vector<2x16xf32>
    %582 = arith.addf %580, %581 : vector<2x16xf32>
    %583 = arith.negf %582 : vector<2x16xf32>
    %584 = math.exp %583 : vector<2x16xf32>
    %cst_132 = arith.constant 1.000000e+00 : f32
    %585 = vector.broadcast %cst_132 : f32 to vector<2x16xf32>
    %586 = arith.addf %585, %584 : vector<2x16xf32>
    %587 = arith.divf %585, %586 : vector<2x16xf32>
    %588 = vector.extract_strided_slice %578 {offsets = [0, 16], sizes = [2, 16], strides = [1, 1]} : vector<2x48xf32> to vector<2x16xf32>
    %589 = vector.extract_strided_slice %579 {offsets = [0, 16], sizes = [2, 16], strides = [1, 1]} : vector<2x48xf32> to vector<2x16xf32>
    %590 = arith.addf %588, %589 : vector<2x16xf32>
    %591 = arith.negf %590 : vector<2x16xf32>
    %592 = math.exp %591 : vector<2x16xf32>
    %cst_133 = arith.constant 1.000000e+00 : f32
    %593 = vector.broadcast %cst_133 : f32 to vector<2x16xf32>
    %594 = arith.addf %593, %592 : vector<2x16xf32>
    %595 = arith.divf %593, %594 : vector<2x16xf32>
    %596 = vector.extract_strided_slice %578 {offsets = [0, 32], sizes = [2, 16], strides = [1, 1]} : vector<2x48xf32> to vector<2x16xf32>
    %597 = vector.extract_strided_slice %579 {offsets = [0, 32], sizes = [2, 16], strides = [1, 1]} : vector<2x48xf32> to vector<2x16xf32>
    %598 = vector.broadcast %13 : vector<1x16xf32> to vector<2x16xf32>
    %599 = arith.addf %597, %598 : vector<2x16xf32>
    %600 = arith.mulf %587, %599 : vector<2x16xf32>
    %601 = arith.addf %596, %600 : vector<2x16xf32>
    %602 = math.tanh %601 : vector<2x16xf32>
    %cst_134 = arith.constant 1.000000e+00 : f32
    %603 = vector.broadcast %cst_134 : f32 to vector<2x16xf32>
    %604 = arith.subf %603, %595 : vector<2x16xf32>
    %605 = arith.mulf %604, %602 : vector<2x16xf32>
    %606 = arith.mulf %595, %477 : vector<2x16xf32>
    %607 = arith.addf %605, %606 : vector<2x16xf32>
    %cst_135 = arith.constant dense<0.000000e+00> : vector<2x48xf32>
    %608 = tpu.matmul %607, %2, %cst_135 {dimension_numbers = #tpu.dot_dimension_numbers<[1], [0], [0], [1], [0, 0, 1, 1], [], []>} : vector<2x16xf32>, vector<16x48xf32>, vector<2x48xf32> -> vector<2x48xf32>
    %609 = vector.broadcast %10 : vector<1x48xf32> to vector<2x48xf32>
    %610 = arith.addf %608, %609 : vector<2x48xf32>
    %cst_136 = arith.constant dense<0.000000e+00> : vector<2x48xf32>
    %611 = tpu.matmul %509, %6, %cst_136 {dimension_numbers = #tpu.dot_dimension_numbers<[1], [0], [0], [1], [0, 0, 1, 1], [], []>} : vector<2x16xf32>, vector<16x48xf32>, vector<2x48xf32> -> vector<2x48xf32>
    %612 = vector.extract_strided_slice %610 {offsets = [0, 0], sizes = [2, 16], strides = [1, 1]} : vector<2x48xf32> to vector<2x16xf32>
    %613 = vector.extract_strided_slice %611 {offsets = [0, 0], sizes = [2, 16], strides = [1, 1]} : vector<2x48xf32> to vector<2x16xf32>
    %614 = arith.addf %612, %613 : vector<2x16xf32>
    %615 = arith.negf %614 : vector<2x16xf32>
    %616 = math.exp %615 : vector<2x16xf32>
    %cst_137 = arith.constant 1.000000e+00 : f32
    %617 = vector.broadcast %cst_137 : f32 to vector<2x16xf32>
    %618 = arith.addf %617, %616 : vector<2x16xf32>
    %619 = arith.divf %617, %618 : vector<2x16xf32>
    %620 = vector.extract_strided_slice %610 {offsets = [0, 16], sizes = [2, 16], strides = [1, 1]} : vector<2x48xf32> to vector<2x16xf32>
    %621 = vector.extract_strided_slice %611 {offsets = [0, 16], sizes = [2, 16], strides = [1, 1]} : vector<2x48xf32> to vector<2x16xf32>
    %622 = arith.addf %620, %621 : vector<2x16xf32>
    %623 = arith.negf %622 : vector<2x16xf32>
    %624 = math.exp %623 : vector<2x16xf32>
    %cst_138 = arith.constant 1.000000e+00 : f32
    %625 = vector.broadcast %cst_138 : f32 to vector<2x16xf32>
    %626 = arith.addf %625, %624 : vector<2x16xf32>
    %627 = arith.divf %625, %626 : vector<2x16xf32>
    %628 = vector.extract_strided_slice %610 {offsets = [0, 32], sizes = [2, 16], strides = [1, 1]} : vector<2x48xf32> to vector<2x16xf32>
    %629 = vector.extract_strided_slice %611 {offsets = [0, 32], sizes = [2, 16], strides = [1, 1]} : vector<2x48xf32> to vector<2x16xf32>
    %630 = vector.broadcast %14 : vector<1x16xf32> to vector<2x16xf32>
    %631 = arith.addf %629, %630 : vector<2x16xf32>
    %632 = arith.mulf %619, %631 : vector<2x16xf32>
    %633 = arith.addf %628, %632 : vector<2x16xf32>
    %634 = math.tanh %633 : vector<2x16xf32>
    %cst_139 = arith.constant 1.000000e+00 : f32
    %635 = vector.broadcast %cst_139 : f32 to vector<2x16xf32>
    %636 = arith.subf %635, %627 : vector<2x16xf32>
    %637 = arith.mulf %636, %634 : vector<2x16xf32>
    %638 = arith.mulf %627, %509 : vector<2x16xf32>
    %639 = arith.addf %637, %638 : vector<2x16xf32>
    %cst_140 = arith.constant dense<0.000000e+00> : vector<2x48xf32>
    %640 = tpu.matmul %639, %3, %cst_140 {dimension_numbers = #tpu.dot_dimension_numbers<[1], [0], [0], [1], [0, 0, 1, 1], [], []>} : vector<2x16xf32>, vector<16x48xf32>, vector<2x48xf32> -> vector<2x48xf32>
    %641 = vector.broadcast %11 : vector<1x48xf32> to vector<2x48xf32>
    %642 = arith.addf %640, %641 : vector<2x48xf32>
    %cst_141 = arith.constant dense<0.000000e+00> : vector<2x48xf32>
    %643 = tpu.matmul %541, %7, %cst_141 {dimension_numbers = #tpu.dot_dimension_numbers<[1], [0], [0], [1], [0, 0, 1, 1], [], []>} : vector<2x16xf32>, vector<16x48xf32>, vector<2x48xf32> -> vector<2x48xf32>
    %644 = vector.extract_strided_slice %642 {offsets = [0, 0], sizes = [2, 16], strides = [1, 1]} : vector<2x48xf32> to vector<2x16xf32>
    %645 = vector.extract_strided_slice %643 {offsets = [0, 0], sizes = [2, 16], strides = [1, 1]} : vector<2x48xf32> to vector<2x16xf32>
    %646 = arith.addf %644, %645 : vector<2x16xf32>
    %647 = arith.negf %646 : vector<2x16xf32>
    %648 = math.exp %647 : vector<2x16xf32>
    %cst_142 = arith.constant 1.000000e+00 : f32
    %649 = vector.broadcast %cst_142 : f32 to vector<2x16xf32>
    %650 = arith.addf %649, %648 : vector<2x16xf32>
    %651 = arith.divf %649, %650 : vector<2x16xf32>
    %652 = vector.extract_strided_slice %642 {offsets = [0, 16], sizes = [2, 16], strides = [1, 1]} : vector<2x48xf32> to vector<2x16xf32>
    %653 = vector.extract_strided_slice %643 {offsets = [0, 16], sizes = [2, 16], strides = [1, 1]} : vector<2x48xf32> to vector<2x16xf32>
    %654 = arith.addf %652, %653 : vector<2x16xf32>
    %655 = arith.negf %654 : vector<2x16xf32>
    %656 = math.exp %655 : vector<2x16xf32>
    %cst_143 = arith.constant 1.000000e+00 : f32
    %657 = vector.broadcast %cst_143 : f32 to vector<2x16xf32>
    %658 = arith.addf %657, %656 : vector<2x16xf32>
    %659 = arith.divf %657, %658 : vector<2x16xf32>
    %660 = vector.extract_strided_slice %642 {offsets = [0, 32], sizes = [2, 16], strides = [1, 1]} : vector<2x48xf32> to vector<2x16xf32>
    %661 = vector.extract_strided_slice %643 {offsets = [0, 32], sizes = [2, 16], strides = [1, 1]} : vector<2x48xf32> to vector<2x16xf32>
    %662 = vector.broadcast %15 : vector<1x16xf32> to vector<2x16xf32>
    %663 = arith.addf %661, %662 : vector<2x16xf32>
    %664 = arith.mulf %651, %663 : vector<2x16xf32>
    %665 = arith.addf %660, %664 : vector<2x16xf32>
    %666 = math.tanh %665 : vector<2x16xf32>
    %cst_144 = arith.constant 1.000000e+00 : f32
    %667 = vector.broadcast %cst_144 : f32 to vector<2x16xf32>
    %668 = arith.subf %667, %659 : vector<2x16xf32>
    %669 = arith.mulf %668, %666 : vector<2x16xf32>
    %670 = arith.mulf %659, %541 : vector<2x16xf32>
    %671 = arith.addf %669, %670 : vector<2x16xf32>
    %cst_145 = arith.constant dense<0.000000e+00> : vector<2x8xf32>
    %672 = tpu.matmul %671, %16, %cst_145 {dimension_numbers = #tpu.dot_dimension_numbers<[1], [0], [0], [1], [0, 0, 1, 1], [], []>} : vector<2x16xf32>, vector<16x8xf32>, vector<2x8xf32> -> vector<2x8xf32>
    %673 = vector.broadcast %17 : vector<1x8xf32> to vector<2x8xf32>
    %674 = arith.addf %672, %673 : vector<2x8xf32>
    %c8 = arith.constant 8 : index
    %c0_146 = arith.constant 0 : index
    %675 = vector.load %arg19[%c8, %c0_146] : memref<16x8xf32, #tpu.memory_space<vmem>>, vector<2x8xf32>
    tpu.vector_store %arg19[%c8, %c0_146], %674 {strides = array<i32>} : memref<16x8xf32, #tpu.memory_space<vmem>>, vector<2x8xf32>,
    %676 = vector.extract_strided_slice %21 {offsets = [10, 0], sizes = [2, 48], strides = [1, 1]} : vector<16x48xf32> to vector<2x48xf32>
    %cst_147 = arith.constant dense<0.000000e+00> : vector<2x48xf32>
    %677 = tpu.matmul %575, %4, %cst_147 {dimension_numbers = #tpu.dot_dimension_numbers<[1], [0], [0], [1], [0, 0, 1, 1], [], []>} : vector<2x16xf32>, vector<16x48xf32>, vector<2x48xf32> -> vector<2x48xf32>
    %678 = vector.extract_strided_slice %676 {offsets = [0, 0], sizes = [2, 16], strides = [1, 1]} : vector<2x48xf32> to vector<2x16xf32>
    %679 = vector.extract_strided_slice %677 {offsets = [0, 0], sizes = [2, 16], strides = [1, 1]} : vector<2x48xf32> to vector<2x16xf32>
    %680 = arith.addf %678, %679 : vector<2x16xf32>
    %681 = arith.negf %680 : vector<2x16xf32>
    %682 = math.exp %681 : vector<2x16xf32>
    %cst_148 = arith.constant 1.000000e+00 : f32
    %683 = vector.broadcast %cst_148 : f32 to vector<2x16xf32>
    %684 = arith.addf %683, %682 : vector<2x16xf32>
    %685 = arith.divf %683, %684 : vector<2x16xf32>
    %686 = vector.extract_strided_slice %676 {offsets = [0, 16], sizes = [2, 16], strides = [1, 1]} : vector<2x48xf32> to vector<2x16xf32>
    %687 = vector.extract_strided_slice %677 {offsets = [0, 16], sizes = [2, 16], strides = [1, 1]} : vector<2x48xf32> to vector<2x16xf32>
    %688 = arith.addf %686, %687 : vector<2x16xf32>
    %689 = arith.negf %688 : vector<2x16xf32>
    %690 = math.exp %689 : vector<2x16xf32>
    %cst_149 = arith.constant 1.000000e+00 : f32
    %691 = vector.broadcast %cst_149 : f32 to vector<2x16xf32>
    %692 = arith.addf %691, %690 : vector<2x16xf32>
    %693 = arith.divf %691, %692 : vector<2x16xf32>
    %694 = vector.extract_strided_slice %676 {offsets = [0, 32], sizes = [2, 16], strides = [1, 1]} : vector<2x48xf32> to vector<2x16xf32>
    %695 = vector.extract_strided_slice %677 {offsets = [0, 32], sizes = [2, 16], strides = [1, 1]} : vector<2x48xf32> to vector<2x16xf32>
    %696 = vector.broadcast %12 : vector<1x16xf32> to vector<2x16xf32>
    %697 = arith.addf %695, %696 : vector<2x16xf32>
    %698 = arith.mulf %685, %697 : vector<2x16xf32>
    %699 = arith.addf %694, %698 : vector<2x16xf32>
    %700 = math.tanh %699 : vector<2x16xf32>
    %cst_150 = arith.constant 1.000000e+00 : f32
    %701 = vector.broadcast %cst_150 : f32 to vector<2x16xf32>
    %702 = arith.subf %701, %693 : vector<2x16xf32>
    %703 = arith.mulf %702, %700 : vector<2x16xf32>
    %704 = arith.mulf %693, %575 : vector<2x16xf32>
    %705 = arith.addf %703, %704 : vector<2x16xf32>
    %cst_151 = arith.constant dense<0.000000e+00> : vector<2x48xf32>
    %706 = tpu.matmul %705, %1, %cst_151 {dimension_numbers = #tpu.dot_dimension_numbers<[1], [0], [0], [1], [0, 0, 1, 1], [], []>} : vector<2x16xf32>, vector<16x48xf32>, vector<2x48xf32> -> vector<2x48xf32>
    %707 = vector.broadcast %9 : vector<1x48xf32> to vector<2x48xf32>
    %708 = arith.addf %706, %707 : vector<2x48xf32>
    %cst_152 = arith.constant dense<0.000000e+00> : vector<2x48xf32>
    %709 = tpu.matmul %607, %5, %cst_152 {dimension_numbers = #tpu.dot_dimension_numbers<[1], [0], [0], [1], [0, 0, 1, 1], [], []>} : vector<2x16xf32>, vector<16x48xf32>, vector<2x48xf32> -> vector<2x48xf32>
    %710 = vector.extract_strided_slice %708 {offsets = [0, 0], sizes = [2, 16], strides = [1, 1]} : vector<2x48xf32> to vector<2x16xf32>
    %711 = vector.extract_strided_slice %709 {offsets = [0, 0], sizes = [2, 16], strides = [1, 1]} : vector<2x48xf32> to vector<2x16xf32>
    %712 = arith.addf %710, %711 : vector<2x16xf32>
    %713 = arith.negf %712 : vector<2x16xf32>
    %714 = math.exp %713 : vector<2x16xf32>
    %cst_153 = arith.constant 1.000000e+00 : f32
    %715 = vector.broadcast %cst_153 : f32 to vector<2x16xf32>
    %716 = arith.addf %715, %714 : vector<2x16xf32>
    %717 = arith.divf %715, %716 : vector<2x16xf32>
    %718 = vector.extract_strided_slice %708 {offsets = [0, 16], sizes = [2, 16], strides = [1, 1]} : vector<2x48xf32> to vector<2x16xf32>
    %719 = vector.extract_strided_slice %709 {offsets = [0, 16], sizes = [2, 16], strides = [1, 1]} : vector<2x48xf32> to vector<2x16xf32>
    %720 = arith.addf %718, %719 : vector<2x16xf32>
    %721 = arith.negf %720 : vector<2x16xf32>
    %722 = math.exp %721 : vector<2x16xf32>
    %cst_154 = arith.constant 1.000000e+00 : f32
    %723 = vector.broadcast %cst_154 : f32 to vector<2x16xf32>
    %724 = arith.addf %723, %722 : vector<2x16xf32>
    %725 = arith.divf %723, %724 : vector<2x16xf32>
    %726 = vector.extract_strided_slice %708 {offsets = [0, 32], sizes = [2, 16], strides = [1, 1]} : vector<2x48xf32> to vector<2x16xf32>
    %727 = vector.extract_strided_slice %709 {offsets = [0, 32], sizes = [2, 16], strides = [1, 1]} : vector<2x48xf32> to vector<2x16xf32>
    %728 = vector.broadcast %13 : vector<1x16xf32> to vector<2x16xf32>
    %729 = arith.addf %727, %728 : vector<2x16xf32>
    %730 = arith.mulf %717, %729 : vector<2x16xf32>
    %731 = arith.addf %726, %730 : vector<2x16xf32>
    %732 = math.tanh %731 : vector<2x16xf32>
    %cst_155 = arith.constant 1.000000e+00 : f32
    %733 = vector.broadcast %cst_155 : f32 to vector<2x16xf32>
    %734 = arith.subf %733, %725 : vector<2x16xf32>
    %735 = arith.mulf %734, %732 : vector<2x16xf32>
    %736 = arith.mulf %725, %607 : vector<2x16xf32>
    %737 = arith.addf %735, %736 : vector<2x16xf32>
    %cst_156 = arith.constant dense<0.000000e+00> : vector<2x48xf32>
    %738 = tpu.matmul %737, %2, %cst_156 {dimension_numbers = #tpu.dot_dimension_numbers<[1], [0], [0], [1], [0, 0, 1, 1], [], []>} : vector<2x16xf32>, vector<16x48xf32>, vector<2x48xf32> -> vector<2x48xf32>
    %739 = vector.broadcast %10 : vector<1x48xf32> to vector<2x48xf32>
    %740 = arith.addf %738, %739 : vector<2x48xf32>
    %cst_157 = arith.constant dense<0.000000e+00> : vector<2x48xf32>
    %741 = tpu.matmul %639, %6, %cst_157 {dimension_numbers = #tpu.dot_dimension_numbers<[1], [0], [0], [1], [0, 0, 1, 1], [], []>} : vector<2x16xf32>, vector<16x48xf32>, vector<2x48xf32> -> vector<2x48xf32>
    %742 = vector.extract_strided_slice %740 {offsets = [0, 0], sizes = [2, 16], strides = [1, 1]} : vector<2x48xf32> to vector<2x16xf32>
    %743 = vector.extract_strided_slice %741 {offsets = [0, 0], sizes = [2, 16], strides = [1, 1]} : vector<2x48xf32> to vector<2x16xf32>
    %744 = arith.addf %742, %743 : vector<2x16xf32>
    %745 = arith.negf %744 : vector<2x16xf32>
    %746 = math.exp %745 : vector<2x16xf32>
    %cst_158 = arith.constant 1.000000e+00 : f32
    %747 = vector.broadcast %cst_158 : f32 to vector<2x16xf32>
    %748 = arith.addf %747, %746 : vector<2x16xf32>
    %749 = arith.divf %747, %748 : vector<2x16xf32>
    %750 = vector.extract_strided_slice %740 {offsets = [0, 16], sizes = [2, 16], strides = [1, 1]} : vector<2x48xf32> to vector<2x16xf32>
    %751 = vector.extract_strided_slice %741 {offsets = [0, 16], sizes = [2, 16], strides = [1, 1]} : vector<2x48xf32> to vector<2x16xf32>
    %752 = arith.addf %750, %751 : vector<2x16xf32>
    %753 = arith.negf %752 : vector<2x16xf32>
    %754 = math.exp %753 : vector<2x16xf32>
    %cst_159 = arith.constant 1.000000e+00 : f32
    %755 = vector.broadcast %cst_159 : f32 to vector<2x16xf32>
    %756 = arith.addf %755, %754 : vector<2x16xf32>
    %757 = arith.divf %755, %756 : vector<2x16xf32>
    %758 = vector.extract_strided_slice %740 {offsets = [0, 32], sizes = [2, 16], strides = [1, 1]} : vector<2x48xf32> to vector<2x16xf32>
    %759 = vector.extract_strided_slice %741 {offsets = [0, 32], sizes = [2, 16], strides = [1, 1]} : vector<2x48xf32> to vector<2x16xf32>
    %760 = vector.broadcast %14 : vector<1x16xf32> to vector<2x16xf32>
    %761 = arith.addf %759, %760 : vector<2x16xf32>
    %762 = arith.mulf %749, %761 : vector<2x16xf32>
    %763 = arith.addf %758, %762 : vector<2x16xf32>
    %764 = math.tanh %763 : vector<2x16xf32>
    %cst_160 = arith.constant 1.000000e+00 : f32
    %765 = vector.broadcast %cst_160 : f32 to vector<2x16xf32>
    %766 = arith.subf %765, %757 : vector<2x16xf32>
    %767 = arith.mulf %766, %764 : vector<2x16xf32>
    %768 = arith.mulf %757, %639 : vector<2x16xf32>
    %769 = arith.addf %767, %768 : vector<2x16xf32>
    %cst_161 = arith.constant dense<0.000000e+00> : vector<2x48xf32>
    %770 = tpu.matmul %769, %3, %cst_161 {dimension_numbers = #tpu.dot_dimension_numbers<[1], [0], [0], [1], [0, 0, 1, 1], [], []>} : vector<2x16xf32>, vector<16x48xf32>, vector<2x48xf32> -> vector<2x48xf32>
    %771 = vector.broadcast %11 : vector<1x48xf32> to vector<2x48xf32>
    %772 = arith.addf %770, %771 : vector<2x48xf32>
    %cst_162 = arith.constant dense<0.000000e+00> : vector<2x48xf32>
    %773 = tpu.matmul %671, %7, %cst_162 {dimension_numbers = #tpu.dot_dimension_numbers<[1], [0], [0], [1], [0, 0, 1, 1], [], []>} : vector<2x16xf32>, vector<16x48xf32>, vector<2x48xf32> -> vector<2x48xf32>
    %774 = vector.extract_strided_slice %772 {offsets = [0, 0], sizes = [2, 16], strides = [1, 1]} : vector<2x48xf32> to vector<2x16xf32>
    %775 = vector.extract_strided_slice %773 {offsets = [0, 0], sizes = [2, 16], strides = [1, 1]} : vector<2x48xf32> to vector<2x16xf32>
    %776 = arith.addf %774, %775 : vector<2x16xf32>
    %777 = arith.negf %776 : vector<2x16xf32>
    %778 = math.exp %777 : vector<2x16xf32>
    %cst_163 = arith.constant 1.000000e+00 : f32
    %779 = vector.broadcast %cst_163 : f32 to vector<2x16xf32>
    %780 = arith.addf %779, %778 : vector<2x16xf32>
    %781 = arith.divf %779, %780 : vector<2x16xf32>
    %782 = vector.extract_strided_slice %772 {offsets = [0, 16], sizes = [2, 16], strides = [1, 1]} : vector<2x48xf32> to vector<2x16xf32>
    %783 = vector.extract_strided_slice %773 {offsets = [0, 16], sizes = [2, 16], strides = [1, 1]} : vector<2x48xf32> to vector<2x16xf32>
    %784 = arith.addf %782, %783 : vector<2x16xf32>
    %785 = arith.negf %784 : vector<2x16xf32>
    %786 = math.exp %785 : vector<2x16xf32>
    %cst_164 = arith.constant 1.000000e+00 : f32
    %787 = vector.broadcast %cst_164 : f32 to vector<2x16xf32>
    %788 = arith.addf %787, %786 : vector<2x16xf32>
    %789 = arith.divf %787, %788 : vector<2x16xf32>
    %790 = vector.extract_strided_slice %772 {offsets = [0, 32], sizes = [2, 16], strides = [1, 1]} : vector<2x48xf32> to vector<2x16xf32>
    %791 = vector.extract_strided_slice %773 {offsets = [0, 32], sizes = [2, 16], strides = [1, 1]} : vector<2x48xf32> to vector<2x16xf32>
    %792 = vector.broadcast %15 : vector<1x16xf32> to vector<2x16xf32>
    %793 = arith.addf %791, %792 : vector<2x16xf32>
    %794 = arith.mulf %781, %793 : vector<2x16xf32>
    %795 = arith.addf %790, %794 : vector<2x16xf32>
    %796 = math.tanh %795 : vector<2x16xf32>
    %cst_165 = arith.constant 1.000000e+00 : f32
    %797 = vector.broadcast %cst_165 : f32 to vector<2x16xf32>
    %798 = arith.subf %797, %789 : vector<2x16xf32>
    %799 = arith.mulf %798, %796 : vector<2x16xf32>
    %800 = arith.mulf %789, %671 : vector<2x16xf32>
    %801 = arith.addf %799, %800 : vector<2x16xf32>
    %cst_166 = arith.constant dense<0.000000e+00> : vector<2x8xf32>
    %802 = tpu.matmul %801, %16, %cst_166 {dimension_numbers = #tpu.dot_dimension_numbers<[1], [0], [0], [1], [0, 0, 1, 1], [], []>} : vector<2x16xf32>, vector<16x8xf32>, vector<2x8xf32> -> vector<2x8xf32>
    %803 = vector.broadcast %17 : vector<1x8xf32> to vector<2x8xf32>
    %804 = arith.addf %802, %803 : vector<2x8xf32>
    %c10 = arith.constant 10 : index
    %c0_167 = arith.constant 0 : index
    %805 = vector.load %arg19[%c10, %c0_167] : memref<16x8xf32, #tpu.memory_space<vmem>>, vector<2x8xf32>
    tpu.vector_store %arg19[%c10, %c0_167], %804 {strides = array<i32>} : memref<16x8xf32, #tpu.memory_space<vmem>>, vector<2x8xf32>,
    %806 = vector.extract_strided_slice %21 {offsets = [12, 0], sizes = [2, 48], strides = [1, 1]} : vector<16x48xf32> to vector<2x48xf32>
    %cst_168 = arith.constant dense<0.000000e+00> : vector<2x48xf32>
    %807 = tpu.matmul %705, %4, %cst_168 {dimension_numbers = #tpu.dot_dimension_numbers<[1], [0], [0], [1], [0, 0, 1, 1], [], []>} : vector<2x16xf32>, vector<16x48xf32>, vector<2x48xf32> -> vector<2x48xf32>
    %808 = vector.extract_strided_slice %806 {offsets = [0, 0], sizes = [2, 16], strides = [1, 1]} : vector<2x48xf32> to vector<2x16xf32>
    %809 = vector.extract_strided_slice %807 {offsets = [0, 0], sizes = [2, 16], strides = [1, 1]} : vector<2x48xf32> to vector<2x16xf32>
    %810 = arith.addf %808, %809 : vector<2x16xf32>
    %811 = arith.negf %810 : vector<2x16xf32>
    %812 = math.exp %811 : vector<2x16xf32>
    %cst_169 = arith.constant 1.000000e+00 : f32
    %813 = vector.broadcast %cst_169 : f32 to vector<2x16xf32>
    %814 = arith.addf %813, %812 : vector<2x16xf32>
    %815 = arith.divf %813, %814 : vector<2x16xf32>
    %816 = vector.extract_strided_slice %806 {offsets = [0, 16], sizes = [2, 16], strides = [1, 1]} : vector<2x48xf32> to vector<2x16xf32>
    %817 = vector.extract_strided_slice %807 {offsets = [0, 16], sizes = [2, 16], strides = [1, 1]} : vector<2x48xf32> to vector<2x16xf32>
    %818 = arith.addf %816, %817 : vector<2x16xf32>
    %819 = arith.negf %818 : vector<2x16xf32>
    %820 = math.exp %819 : vector<2x16xf32>
    %cst_170 = arith.constant 1.000000e+00 : f32
    %821 = vector.broadcast %cst_170 : f32 to vector<2x16xf32>
    %822 = arith.addf %821, %820 : vector<2x16xf32>
    %823 = arith.divf %821, %822 : vector<2x16xf32>
    %824 = vector.extract_strided_slice %806 {offsets = [0, 32], sizes = [2, 16], strides = [1, 1]} : vector<2x48xf32> to vector<2x16xf32>
    %825 = vector.extract_strided_slice %807 {offsets = [0, 32], sizes = [2, 16], strides = [1, 1]} : vector<2x48xf32> to vector<2x16xf32>
    %826 = vector.broadcast %12 : vector<1x16xf32> to vector<2x16xf32>
    %827 = arith.addf %825, %826 : vector<2x16xf32>
    %828 = arith.mulf %815, %827 : vector<2x16xf32>
    %829 = arith.addf %824, %828 : vector<2x16xf32>
    %830 = math.tanh %829 : vector<2x16xf32>
    %cst_171 = arith.constant 1.000000e+00 : f32
    %831 = vector.broadcast %cst_171 : f32 to vector<2x16xf32>
    %832 = arith.subf %831, %823 : vector<2x16xf32>
    %833 = arith.mulf %832, %830 : vector<2x16xf32>
    %834 = arith.mulf %823, %705 : vector<2x16xf32>
    %835 = arith.addf %833, %834 : vector<2x16xf32>
    %cst_172 = arith.constant dense<0.000000e+00> : vector<2x48xf32>
    %836 = tpu.matmul %835, %1, %cst_172 {dimension_numbers = #tpu.dot_dimension_numbers<[1], [0], [0], [1], [0, 0, 1, 1], [], []>} : vector<2x16xf32>, vector<16x48xf32>, vector<2x48xf32> -> vector<2x48xf32>
    %837 = vector.broadcast %9 : vector<1x48xf32> to vector<2x48xf32>
    %838 = arith.addf %836, %837 : vector<2x48xf32>
    %cst_173 = arith.constant dense<0.000000e+00> : vector<2x48xf32>
    %839 = tpu.matmul %737, %5, %cst_173 {dimension_numbers = #tpu.dot_dimension_numbers<[1], [0], [0], [1], [0, 0, 1, 1], [], []>} : vector<2x16xf32>, vector<16x48xf32>, vector<2x48xf32> -> vector<2x48xf32>
    %840 = vector.extract_strided_slice %838 {offsets = [0, 0], sizes = [2, 16], strides = [1, 1]} : vector<2x48xf32> to vector<2x16xf32>
    %841 = vector.extract_strided_slice %839 {offsets = [0, 0], sizes = [2, 16], strides = [1, 1]} : vector<2x48xf32> to vector<2x16xf32>
    %842 = arith.addf %840, %841 : vector<2x16xf32>
    %843 = arith.negf %842 : vector<2x16xf32>
    %844 = math.exp %843 : vector<2x16xf32>
    %cst_174 = arith.constant 1.000000e+00 : f32
    %845 = vector.broadcast %cst_174 : f32 to vector<2x16xf32>
    %846 = arith.addf %845, %844 : vector<2x16xf32>
    %847 = arith.divf %845, %846 : vector<2x16xf32>
    %848 = vector.extract_strided_slice %838 {offsets = [0, 16], sizes = [2, 16], strides = [1, 1]} : vector<2x48xf32> to vector<2x16xf32>
    %849 = vector.extract_strided_slice %839 {offsets = [0, 16], sizes = [2, 16], strides = [1, 1]} : vector<2x48xf32> to vector<2x16xf32>
    %850 = arith.addf %848, %849 : vector<2x16xf32>
    %851 = arith.negf %850 : vector<2x16xf32>
    %852 = math.exp %851 : vector<2x16xf32>
    %cst_175 = arith.constant 1.000000e+00 : f32
    %853 = vector.broadcast %cst_175 : f32 to vector<2x16xf32>
    %854 = arith.addf %853, %852 : vector<2x16xf32>
    %855 = arith.divf %853, %854 : vector<2x16xf32>
    %856 = vector.extract_strided_slice %838 {offsets = [0, 32], sizes = [2, 16], strides = [1, 1]} : vector<2x48xf32> to vector<2x16xf32>
    %857 = vector.extract_strided_slice %839 {offsets = [0, 32], sizes = [2, 16], strides = [1, 1]} : vector<2x48xf32> to vector<2x16xf32>
    %858 = vector.broadcast %13 : vector<1x16xf32> to vector<2x16xf32>
    %859 = arith.addf %857, %858 : vector<2x16xf32>
    %860 = arith.mulf %847, %859 : vector<2x16xf32>
    %861 = arith.addf %856, %860 : vector<2x16xf32>
    %862 = math.tanh %861 : vector<2x16xf32>
    %cst_176 = arith.constant 1.000000e+00 : f32
    %863 = vector.broadcast %cst_176 : f32 to vector<2x16xf32>
    %864 = arith.subf %863, %855 : vector<2x16xf32>
    %865 = arith.mulf %864, %862 : vector<2x16xf32>
    %866 = arith.mulf %855, %737 : vector<2x16xf32>
    %867 = arith.addf %865, %866 : vector<2x16xf32>
    %cst_177 = arith.constant dense<0.000000e+00> : vector<2x48xf32>
    %868 = tpu.matmul %867, %2, %cst_177 {dimension_numbers = #tpu.dot_dimension_numbers<[1], [0], [0], [1], [0, 0, 1, 1], [], []>} : vector<2x16xf32>, vector<16x48xf32>, vector<2x48xf32> -> vector<2x48xf32>
    %869 = vector.broadcast %10 : vector<1x48xf32> to vector<2x48xf32>
    %870 = arith.addf %868, %869 : vector<2x48xf32>
    %cst_178 = arith.constant dense<0.000000e+00> : vector<2x48xf32>
    %871 = tpu.matmul %769, %6, %cst_178 {dimension_numbers = #tpu.dot_dimension_numbers<[1], [0], [0], [1], [0, 0, 1, 1], [], []>} : vector<2x16xf32>, vector<16x48xf32>, vector<2x48xf32> -> vector<2x48xf32>
    %872 = vector.extract_strided_slice %870 {offsets = [0, 0], sizes = [2, 16], strides = [1, 1]} : vector<2x48xf32> to vector<2x16xf32>
    %873 = vector.extract_strided_slice %871 {offsets = [0, 0], sizes = [2, 16], strides = [1, 1]} : vector<2x48xf32> to vector<2x16xf32>
    %874 = arith.addf %872, %873 : vector<2x16xf32>
    %875 = arith.negf %874 : vector<2x16xf32>
    %876 = math.exp %875 : vector<2x16xf32>
    %cst_179 = arith.constant 1.000000e+00 : f32
    %877 = vector.broadcast %cst_179 : f32 to vector<2x16xf32>
    %878 = arith.addf %877, %876 : vector<2x16xf32>
    %879 = arith.divf %877, %878 : vector<2x16xf32>
    %880 = vector.extract_strided_slice %870 {offsets = [0, 16], sizes = [2, 16], strides = [1, 1]} : vector<2x48xf32> to vector<2x16xf32>
    %881 = vector.extract_strided_slice %871 {offsets = [0, 16], sizes = [2, 16], strides = [1, 1]} : vector<2x48xf32> to vector<2x16xf32>
    %882 = arith.addf %880, %881 : vector<2x16xf32>
    %883 = arith.negf %882 : vector<2x16xf32>
    %884 = math.exp %883 : vector<2x16xf32>
    %cst_180 = arith.constant 1.000000e+00 : f32
    %885 = vector.broadcast %cst_180 : f32 to vector<2x16xf32>
    %886 = arith.addf %885, %884 : vector<2x16xf32>
    %887 = arith.divf %885, %886 : vector<2x16xf32>
    %888 = vector.extract_strided_slice %870 {offsets = [0, 32], sizes = [2, 16], strides = [1, 1]} : vector<2x48xf32> to vector<2x16xf32>
    %889 = vector.extract_strided_slice %871 {offsets = [0, 32], sizes = [2, 16], strides = [1, 1]} : vector<2x48xf32> to vector<2x16xf32>
    %890 = vector.broadcast %14 : vector<1x16xf32> to vector<2x16xf32>
    %891 = arith.addf %889, %890 : vector<2x16xf32>
    %892 = arith.mulf %879, %891 : vector<2x16xf32>
    %893 = arith.addf %888, %892 : vector<2x16xf32>
    %894 = math.tanh %893 : vector<2x16xf32>
    %cst_181 = arith.constant 1.000000e+00 : f32
    %895 = vector.broadcast %cst_181 : f32 to vector<2x16xf32>
    %896 = arith.subf %895, %887 : vector<2x16xf32>
    %897 = arith.mulf %896, %894 : vector<2x16xf32>
    %898 = arith.mulf %887, %769 : vector<2x16xf32>
    %899 = arith.addf %897, %898 : vector<2x16xf32>
    %cst_182 = arith.constant dense<0.000000e+00> : vector<2x48xf32>
    %900 = tpu.matmul %899, %3, %cst_182 {dimension_numbers = #tpu.dot_dimension_numbers<[1], [0], [0], [1], [0, 0, 1, 1], [], []>} : vector<2x16xf32>, vector<16x48xf32>, vector<2x48xf32> -> vector<2x48xf32>
    %901 = vector.broadcast %11 : vector<1x48xf32> to vector<2x48xf32>
    %902 = arith.addf %900, %901 : vector<2x48xf32>
    %cst_183 = arith.constant dense<0.000000e+00> : vector<2x48xf32>
    %903 = tpu.matmul %801, %7, %cst_183 {dimension_numbers = #tpu.dot_dimension_numbers<[1], [0], [0], [1], [0, 0, 1, 1], [], []>} : vector<2x16xf32>, vector<16x48xf32>, vector<2x48xf32> -> vector<2x48xf32>
    %904 = vector.extract_strided_slice %902 {offsets = [0, 0], sizes = [2, 16], strides = [1, 1]} : vector<2x48xf32> to vector<2x16xf32>
    %905 = vector.extract_strided_slice %903 {offsets = [0, 0], sizes = [2, 16], strides = [1, 1]} : vector<2x48xf32> to vector<2x16xf32>
    %906 = arith.addf %904, %905 : vector<2x16xf32>
    %907 = arith.negf %906 : vector<2x16xf32>
    %908 = math.exp %907 : vector<2x16xf32>
    %cst_184 = arith.constant 1.000000e+00 : f32
    %909 = vector.broadcast %cst_184 : f32 to vector<2x16xf32>
    %910 = arith.addf %909, %908 : vector<2x16xf32>
    %911 = arith.divf %909, %910 : vector<2x16xf32>
    %912 = vector.extract_strided_slice %902 {offsets = [0, 16], sizes = [2, 16], strides = [1, 1]} : vector<2x48xf32> to vector<2x16xf32>
    %913 = vector.extract_strided_slice %903 {offsets = [0, 16], sizes = [2, 16], strides = [1, 1]} : vector<2x48xf32> to vector<2x16xf32>
    %914 = arith.addf %912, %913 : vector<2x16xf32>
    %915 = arith.negf %914 : vector<2x16xf32>
    %916 = math.exp %915 : vector<2x16xf32>
    %cst_185 = arith.constant 1.000000e+00 : f32
    %917 = vector.broadcast %cst_185 : f32 to vector<2x16xf32>
    %918 = arith.addf %917, %916 : vector<2x16xf32>
    %919 = arith.divf %917, %918 : vector<2x16xf32>
    %920 = vector.extract_strided_slice %902 {offsets = [0, 32], sizes = [2, 16], strides = [1, 1]} : vector<2x48xf32> to vector<2x16xf32>
    %921 = vector.extract_strided_slice %903 {offsets = [0, 32], sizes = [2, 16], strides = [1, 1]} : vector<2x48xf32> to vector<2x16xf32>
    %922 = vector.broadcast %15 : vector<1x16xf32> to vector<2x16xf32>
    %923 = arith.addf %921, %922 : vector<2x16xf32>
    %924 = arith.mulf %911, %923 : vector<2x16xf32>
    %925 = arith.addf %920, %924 : vector<2x16xf32>
    %926 = math.tanh %925 : vector<2x16xf32>
    %cst_186 = arith.constant 1.000000e+00 : f32
    %927 = vector.broadcast %cst_186 : f32 to vector<2x16xf32>
    %928 = arith.subf %927, %919 : vector<2x16xf32>
    %929 = arith.mulf %928, %926 : vector<2x16xf32>
    %930 = arith.mulf %919, %801 : vector<2x16xf32>
    %931 = arith.addf %929, %930 : vector<2x16xf32>
    %cst_187 = arith.constant dense<0.000000e+00> : vector<2x8xf32>
    %932 = tpu.matmul %931, %16, %cst_187 {dimension_numbers = #tpu.dot_dimension_numbers<[1], [0], [0], [1], [0, 0, 1, 1], [], []>} : vector<2x16xf32>, vector<16x8xf32>, vector<2x8xf32> -> vector<2x8xf32>
    %933 = vector.broadcast %17 : vector<1x8xf32> to vector<2x8xf32>
    %934 = arith.addf %932, %933 : vector<2x8xf32>
    %c12 = arith.constant 12 : index
    %c0_188 = arith.constant 0 : index
    %935 = vector.load %arg19[%c12, %c0_188] : memref<16x8xf32, #tpu.memory_space<vmem>>, vector<2x8xf32>
    tpu.vector_store %arg19[%c12, %c0_188], %934 {strides = array<i32>} : memref<16x8xf32, #tpu.memory_space<vmem>>, vector<2x8xf32>,
    %936 = vector.extract_strided_slice %21 {offsets = [14, 0], sizes = [2, 48], strides = [1, 1]} : vector<16x48xf32> to vector<2x48xf32>
    %cst_189 = arith.constant dense<0.000000e+00> : vector<2x48xf32>
    %937 = tpu.matmul %835, %4, %cst_189 {dimension_numbers = #tpu.dot_dimension_numbers<[1], [0], [0], [1], [0, 0, 1, 1], [], []>} : vector<2x16xf32>, vector<16x48xf32>, vector<2x48xf32> -> vector<2x48xf32>
    %938 = vector.extract_strided_slice %936 {offsets = [0, 0], sizes = [2, 16], strides = [1, 1]} : vector<2x48xf32> to vector<2x16xf32>
    %939 = vector.extract_strided_slice %937 {offsets = [0, 0], sizes = [2, 16], strides = [1, 1]} : vector<2x48xf32> to vector<2x16xf32>
    %940 = arith.addf %938, %939 : vector<2x16xf32>
    %941 = arith.negf %940 : vector<2x16xf32>
    %942 = math.exp %941 : vector<2x16xf32>
    %cst_190 = arith.constant 1.000000e+00 : f32
    %943 = vector.broadcast %cst_190 : f32 to vector<2x16xf32>
    %944 = arith.addf %943, %942 : vector<2x16xf32>
    %945 = arith.divf %943, %944 : vector<2x16xf32>
    %946 = vector.extract_strided_slice %936 {offsets = [0, 16], sizes = [2, 16], strides = [1, 1]} : vector<2x48xf32> to vector<2x16xf32>
    %947 = vector.extract_strided_slice %937 {offsets = [0, 16], sizes = [2, 16], strides = [1, 1]} : vector<2x48xf32> to vector<2x16xf32>
    %948 = arith.addf %946, %947 : vector<2x16xf32>
    %949 = arith.negf %948 : vector<2x16xf32>
    %950 = math.exp %949 : vector<2x16xf32>
    %cst_191 = arith.constant 1.000000e+00 : f32
    %951 = vector.broadcast %cst_191 : f32 to vector<2x16xf32>
    %952 = arith.addf %951, %950 : vector<2x16xf32>
    %953 = arith.divf %951, %952 : vector<2x16xf32>
    %954 = vector.extract_strided_slice %936 {offsets = [0, 32], sizes = [2, 16], strides = [1, 1]} : vector<2x48xf32> to vector<2x16xf32>
    %955 = vector.extract_strided_slice %937 {offsets = [0, 32], sizes = [2, 16], strides = [1, 1]} : vector<2x48xf32> to vector<2x16xf32>
    %956 = vector.broadcast %12 : vector<1x16xf32> to vector<2x16xf32>
    %957 = arith.addf %955, %956 : vector<2x16xf32>
    %958 = arith.mulf %945, %957 : vector<2x16xf32>
    %959 = arith.addf %954, %958 : vector<2x16xf32>
    %960 = math.tanh %959 : vector<2x16xf32>
    %cst_192 = arith.constant 1.000000e+00 : f32
    %961 = vector.broadcast %cst_192 : f32 to vector<2x16xf32>
    %962 = arith.subf %961, %953 : vector<2x16xf32>
    %963 = arith.mulf %962, %960 : vector<2x16xf32>
    %964 = arith.mulf %953, %835 : vector<2x16xf32>
    %965 = arith.addf %963, %964 : vector<2x16xf32>
    %cst_193 = arith.constant dense<0.000000e+00> : vector<2x48xf32>
    %966 = tpu.matmul %965, %1, %cst_193 {dimension_numbers = #tpu.dot_dimension_numbers<[1], [0], [0], [1], [0, 0, 1, 1], [], []>} : vector<2x16xf32>, vector<16x48xf32>, vector<2x48xf32> -> vector<2x48xf32>
    %967 = vector.broadcast %9 : vector<1x48xf32> to vector<2x48xf32>
    %968 = arith.addf %966, %967 : vector<2x48xf32>
    %cst_194 = arith.constant dense<0.000000e+00> : vector<2x48xf32>
    %969 = tpu.matmul %867, %5, %cst_194 {dimension_numbers = #tpu.dot_dimension_numbers<[1], [0], [0], [1], [0, 0, 1, 1], [], []>} : vector<2x16xf32>, vector<16x48xf32>, vector<2x48xf32> -> vector<2x48xf32>
    %970 = vector.extract_strided_slice %968 {offsets = [0, 0], sizes = [2, 16], strides = [1, 1]} : vector<2x48xf32> to vector<2x16xf32>
    %971 = vector.extract_strided_slice %969 {offsets = [0, 0], sizes = [2, 16], strides = [1, 1]} : vector<2x48xf32> to vector<2x16xf32>
    %972 = arith.addf %970, %971 : vector<2x16xf32>
    %973 = arith.negf %972 : vector<2x16xf32>
    %974 = math.exp %973 : vector<2x16xf32>
    %cst_195 = arith.constant 1.000000e+00 : f32
    %975 = vector.broadcast %cst_195 : f32 to vector<2x16xf32>
    %976 = arith.addf %975, %974 : vector<2x16xf32>
    %977 = arith.divf %975, %976 : vector<2x16xf32>
    %978 = vector.extract_strided_slice %968 {offsets = [0, 16], sizes = [2, 16], strides = [1, 1]} : vector<2x48xf32> to vector<2x16xf32>
    %979 = vector.extract_strided_slice %969 {offsets = [0, 16], sizes = [2, 16], strides = [1, 1]} : vector<2x48xf32> to vector<2x16xf32>
    %980 = arith.addf %978, %979 : vector<2x16xf32>
    %981 = arith.negf %980 : vector<2x16xf32>
    %982 = math.exp %981 : vector<2x16xf32>
    %cst_196 = arith.constant 1.000000e+00 : f32
    %983 = vector.broadcast %cst_196 : f32 to vector<2x16xf32>
    %984 = arith.addf %983, %982 : vector<2x16xf32>
    %985 = arith.divf %983, %984 : vector<2x16xf32>
    %986 = vector.extract_strided_slice %968 {offsets = [0, 32], sizes = [2, 16], strides = [1, 1]} : vector<2x48xf32> to vector<2x16xf32>
    %987 = vector.extract_strided_slice %969 {offsets = [0, 32], sizes = [2, 16], strides = [1, 1]} : vector<2x48xf32> to vector<2x16xf32>
    %988 = vector.broadcast %13 : vector<1x16xf32> to vector<2x16xf32>
    %989 = arith.addf %987, %988 : vector<2x16xf32>
    %990 = arith.mulf %977, %989 : vector<2x16xf32>
    %991 = arith.addf %986, %990 : vector<2x16xf32>
    %992 = math.tanh %991 : vector<2x16xf32>
    %cst_197 = arith.constant 1.000000e+00 : f32
    %993 = vector.broadcast %cst_197 : f32 to vector<2x16xf32>
    %994 = arith.subf %993, %985 : vector<2x16xf32>
    %995 = arith.mulf %994, %992 : vector<2x16xf32>
    %996 = arith.mulf %985, %867 : vector<2x16xf32>
    %997 = arith.addf %995, %996 : vector<2x16xf32>
    %cst_198 = arith.constant dense<0.000000e+00> : vector<2x48xf32>
    %998 = tpu.matmul %997, %2, %cst_198 {dimension_numbers = #tpu.dot_dimension_numbers<[1], [0], [0], [1], [0, 0, 1, 1], [], []>} : vector<2x16xf32>, vector<16x48xf32>, vector<2x48xf32> -> vector<2x48xf32>
    %999 = vector.broadcast %10 : vector<1x48xf32> to vector<2x48xf32>
    %1000 = arith.addf %998, %999 : vector<2x48xf32>
    %cst_199 = arith.constant dense<0.000000e+00> : vector<2x48xf32>
    %1001 = tpu.matmul %899, %6, %cst_199 {dimension_numbers = #tpu.dot_dimension_numbers<[1], [0], [0], [1], [0, 0, 1, 1], [], []>} : vector<2x16xf32>, vector<16x48xf32>, vector<2x48xf32> -> vector<2x48xf32>
    %1002 = vector.extract_strided_slice %1000 {offsets = [0, 0], sizes = [2, 16], strides = [1, 1]} : vector<2x48xf32> to vector<2x16xf32>
    %1003 = vector.extract_strided_slice %1001 {offsets = [0, 0], sizes = [2, 16], strides = [1, 1]} : vector<2x48xf32> to vector<2x16xf32>
    %1004 = arith.addf %1002, %1003 : vector<2x16xf32>
    %1005 = arith.negf %1004 : vector<2x16xf32>
    %1006 = math.exp %1005 : vector<2x16xf32>
    %cst_200 = arith.constant 1.000000e+00 : f32
    %1007 = vector.broadcast %cst_200 : f32 to vector<2x16xf32>
    %1008 = arith.addf %1007, %1006 : vector<2x16xf32>
    %1009 = arith.divf %1007, %1008 : vector<2x16xf32>
    %1010 = vector.extract_strided_slice %1000 {offsets = [0, 16], sizes = [2, 16], strides = [1, 1]} : vector<2x48xf32> to vector<2x16xf32>
    %1011 = vector.extract_strided_slice %1001 {offsets = [0, 16], sizes = [2, 16], strides = [1, 1]} : vector<2x48xf32> to vector<2x16xf32>
    %1012 = arith.addf %1010, %1011 : vector<2x16xf32>
    %1013 = arith.negf %1012 : vector<2x16xf32>
    %1014 = math.exp %1013 : vector<2x16xf32>
    %cst_201 = arith.constant 1.000000e+00 : f32
    %1015 = vector.broadcast %cst_201 : f32 to vector<2x16xf32>
    %1016 = arith.addf %1015, %1014 : vector<2x16xf32>
    %1017 = arith.divf %1015, %1016 : vector<2x16xf32>
    %1018 = vector.extract_strided_slice %1000 {offsets = [0, 32], sizes = [2, 16], strides = [1, 1]} : vector<2x48xf32> to vector<2x16xf32>
    %1019 = vector.extract_strided_slice %1001 {offsets = [0, 32], sizes = [2, 16], strides = [1, 1]} : vector<2x48xf32> to vector<2x16xf32>
    %1020 = vector.broadcast %14 : vector<1x16xf32> to vector<2x16xf32>
    %1021 = arith.addf %1019, %1020 : vector<2x16xf32>
    %1022 = arith.mulf %1009, %1021 : vector<2x16xf32>
    %1023 = arith.addf %1018, %1022 : vector<2x16xf32>
    %1024 = math.tanh %1023 : vector<2x16xf32>
    %cst_202 = arith.constant 1.000000e+00 : f32
    %1025 = vector.broadcast %cst_202 : f32 to vector<2x16xf32>
    %1026 = arith.subf %1025, %1017 : vector<2x16xf32>
    %1027 = arith.mulf %1026, %1024 : vector<2x16xf32>
    %1028 = arith.mulf %1017, %899 : vector<2x16xf32>
    %1029 = arith.addf %1027, %1028 : vector<2x16xf32>
    %cst_203 = arith.constant dense<0.000000e+00> : vector<2x48xf32>
    %1030 = tpu.matmul %1029, %3, %cst_203 {dimension_numbers = #tpu.dot_dimension_numbers<[1], [0], [0], [1], [0, 0, 1, 1], [], []>} : vector<2x16xf32>, vector<16x48xf32>, vector<2x48xf32> -> vector<2x48xf32>
    %1031 = vector.broadcast %11 : vector<1x48xf32> to vector<2x48xf32>
    %1032 = arith.addf %1030, %1031 : vector<2x48xf32>
    %cst_204 = arith.constant dense<0.000000e+00> : vector<2x48xf32>
    %1033 = tpu.matmul %931, %7, %cst_204 {dimension_numbers = #tpu.dot_dimension_numbers<[1], [0], [0], [1], [0, 0, 1, 1], [], []>} : vector<2x16xf32>, vector<16x48xf32>, vector<2x48xf32> -> vector<2x48xf32>
    %1034 = vector.extract_strided_slice %1032 {offsets = [0, 0], sizes = [2, 16], strides = [1, 1]} : vector<2x48xf32> to vector<2x16xf32>
    %1035 = vector.extract_strided_slice %1033 {offsets = [0, 0], sizes = [2, 16], strides = [1, 1]} : vector<2x48xf32> to vector<2x16xf32>
    %1036 = arith.addf %1034, %1035 : vector<2x16xf32>
    %1037 = arith.negf %1036 : vector<2x16xf32>
    %1038 = math.exp %1037 : vector<2x16xf32>
    %cst_205 = arith.constant 1.000000e+00 : f32
    %1039 = vector.broadcast %cst_205 : f32 to vector<2x16xf32>
    %1040 = arith.addf %1039, %1038 : vector<2x16xf32>
    %1041 = arith.divf %1039, %1040 : vector<2x16xf32>
    %1042 = vector.extract_strided_slice %1032 {offsets = [0, 16], sizes = [2, 16], strides = [1, 1]} : vector<2x48xf32> to vector<2x16xf32>
    %1043 = vector.extract_strided_slice %1033 {offsets = [0, 16], sizes = [2, 16], strides = [1, 1]} : vector<2x48xf32> to vector<2x16xf32>
    %1044 = arith.addf %1042, %1043 : vector<2x16xf32>
    %1045 = arith.negf %1044 : vector<2x16xf32>
    %1046 = math.exp %1045 : vector<2x16xf32>
    %cst_206 = arith.constant 1.000000e+00 : f32
    %1047 = vector.broadcast %cst_206 : f32 to vector<2x16xf32>
    %1048 = arith.addf %1047, %1046 : vector<2x16xf32>
    %1049 = arith.divf %1047, %1048 : vector<2x16xf32>
    %1050 = vector.extract_strided_slice %1032 {offsets = [0, 32], sizes = [2, 16], strides = [1, 1]} : vector<2x48xf32> to vector<2x16xf32>
    %1051 = vector.extract_strided_slice %1033 {offsets = [0, 32], sizes = [2, 16], strides = [1, 1]} : vector<2x48xf32> to vector<2x16xf32>
    %1052 = vector.broadcast %15 : vector<1x16xf32> to vector<2x16xf32>
    %1053 = arith.addf %1051, %1052 : vector<2x16xf32>
    %1054 = arith.mulf %1041, %1053 : vector<2x16xf32>
    %1055 = arith.addf %1050, %1054 : vector<2x16xf32>
    %1056 = math.tanh %1055 : vector<2x16xf32>
    %cst_207 = arith.constant 1.000000e+00 : f32
    %1057 = vector.broadcast %cst_207 : f32 to vector<2x16xf32>
    %1058 = arith.subf %1057, %1049 : vector<2x16xf32>
    %1059 = arith.mulf %1058, %1056 : vector<2x16xf32>
    %1060 = arith.mulf %1049, %931 : vector<2x16xf32>
    %1061 = arith.addf %1059, %1060 : vector<2x16xf32>
    %cst_208 = arith.constant dense<0.000000e+00> : vector<2x8xf32>
    %1062 = tpu.matmul %1061, %16, %cst_208 {dimension_numbers = #tpu.dot_dimension_numbers<[1], [0], [0], [1], [0, 0, 1, 1], [], []>} : vector<2x16xf32>, vector<16x8xf32>, vector<2x8xf32> -> vector<2x8xf32>
    %1063 = vector.broadcast %17 : vector<1x8xf32> to vector<2x8xf32>
    %1064 = arith.addf %1062, %1063 : vector<2x8xf32>
    %c14 = arith.constant 14 : index
    %c0_209 = arith.constant 0 : index
    %1065 = vector.load %arg19[%c14, %c0_209] : memref<16x8xf32, #tpu.memory_space<vmem>>, vector<2x8xf32>
    tpu.vector_store %arg19[%c14, %c0_209], %1064 {strides = array<i32>} : memref<16x8xf32, #tpu.memory_space<vmem>>, vector<2x8xf32>,
    return
  }
}

</mosaic_0001>

<llo_original>
// kernel: tpu_custom_call.1
$region0: #{tpu_custom_call.1}
  #allocation0 [shape = 'u32[]', space=smem, size = 0x4, offset = 0x4, fixed_abs, tag = 'smem constant byte address 0x4 - core index']
  #allocation1 [shape = 'u32[144,128]{1,0:T(1,128)}', space=vmem, size = 0x12000, scoped, tag = 'internal scratch']
  %s0 = inlined_call_operand.vmem [shape: f32[16,8], index: 0, kind: input, shape index: {}]
  %s1 = inlined_call_operand.hbm [shape: f32[8,48], index: 1, kind: input, shape index: {}]
  %s2 = inlined_call_operand.vmem [shape: f32[16,48], index: 2, kind: input, shape index: {}]
  %s3 = inlined_call_operand.hbm [shape: f32[1,48], index: 3, kind: input, shape index: {}]
  %s4 = inlined_call_operand.hbm [shape: f32[1,16], index: 4, kind: input, shape index: {}]
  %s5 = inlined_call_operand.vmem [shape: f32[16,48], index: 5, kind: input, shape index: {}]
  %s6 = inlined_call_operand.vmem [shape: f32[16,48], index: 6, kind: input, shape index: {}]
  %s7 = inlined_call_operand.hbm [shape: f32[1,48], index: 7, kind: input, shape index: {}]
  %s8 = inlined_call_operand.hbm [shape: f32[1,16], index: 8, kind: input, shape index: {}]
  %s9 = inlined_call_operand.vmem [shape: f32[16,48], index: 9, kind: input, shape index: {}]
  %s10 = inlined_call_operand.hbm [shape: f32[16,48], index: 10, kind: input, shape index: {}]
  %s11 = inlined_call_operand.vmem [shape: f32[1,48], index: 11, kind: input, shape index: {}]
  %s12 = inlined_call_operand.hbm [shape: f32[1,16], index: 12, kind: input, shape index: {}]
  %s13 = inlined_call_operand.hbm [shape: f32[16,48], index: 13, kind: input, shape index: {}]
  %s14 = inlined_call_operand.hbm [shape: f32[16,48], index: 14, kind: input, shape index: {}]
  %s15 = inlined_call_operand.vmem [shape: f32[1,48], index: 15, kind: input, shape index: {}]
  %s16 = inlined_call_operand.vmem [shape: f32[1,16], index: 16, kind: input, shape index: {}]
  %s17 = inlined_call_operand.vmem [shape: f32[16,8], index: 17, kind: input, shape index: {}]
  %s18 = inlined_call_operand.vmem [shape: f32[1,8], index: 18, kind: input, shape index: {}]
  %s19 = inlined_call_operand.vmem [shape: f32[16,8], index: 19, kind: output, shape index: {}]
  %s20 = sld [smem:[#allocation0]]
  $region122: #{tpu_custom_call.1} parent=0
    _
  %s22 = ssub.s32 1, %s20
  %s23 = scalar_select 0, %s22, %s20
  $region1: #{tpu_custom_call.1} parent=0
    #allocation2 [shape = 'u8[4096]{0}', space=vmem, size = 0x1000, scoped, tag = 'input window, operand 1, single buffered']
    #allocation3 [shape = 's32[1]{0}', space=sflag, size = 0x4, scoped, tag = 'scoped memory for tpu_custom_call.1']
    #allocation4 [shape = 'u8[512]{0}', space=vmem, size = 0x400, scoped, tag = 'input window, operand 3, single buffered']
    #allocation5 [shape = 's32[1]{0}', space=sflag, size = 0x4, scoped, tag = 'scoped memory for tpu_custom_call.1']
    #allocation6 [shape = 'u8[512]{0}', space=vmem, size = 0x400, scoped, tag = 'input window, operand 4, single buffered']
    #allocation7 [shape = 'u8[512]{0}', space=vmem, size = 0x400, scoped, tag = 'input window, operand 7, single buffered']
    #allocation8 [shape = 's32[1]{0}', space=sflag, size = 0x4, scoped, tag = 'scoped memory for tpu_custom_call.1']
    #allocation9 [shape = 'u8[512]{0}', space=vmem, size = 0x400, scoped, tag = 'input window, operand 8, single buffered']
    #allocation10 [shape = 'u8[8192]{0}', space=vmem, size = 0x2000, scoped, tag = 'input window, operand 10, single buffered']
    #allocation11 [shape = 's32[1]{0}', space=sflag, size = 0x4, scoped, tag = 'scoped memory for tpu_custom_call.1']
    #allocation12 [shape = 'u8[512]{0}', space=vmem, size = 0x400, scoped, tag = 'input window, operand 12, single buffered']
    #allocation13 [shape = 'u8[8192]{0}', space=vmem, size = 0x2000, scoped, tag = 'input window, operand 13, single buffered']
    #allocation14 [shape = 's32[1]{0}', space=sflag, size = 0x4, scoped, tag = 'scoped memory for tpu_custom_call.1']
    #allocation15 [shape = 'u8[8192]{0}', space=vmem, size = 0x2000, scoped, tag = 'input window, operand 14, single buffered']
    %24 = vsyncpa [#allocation3], 0
    %25 = vsyncpa [#allocation5], 0
    %26 = vsyncpa [#allocation8], 0
    %27 = vsyncpa [#allocation11], 0
    %28 = vsyncpa [#allocation14], 0
    // Predicated region
    $region2: #{tpu_custom_call.1} parent=1 // pred_check
      _
    $region3: #{tpu_custom_call.1} parent=1 // pred_check_branch
      %30 = sbr.rel (0) target = $region5
    $region4: #{tpu_custom_call.1} parent=1 // pred_region
      _
    $region5: #{tpu_custom_call.1} parent=1 // pred_fallthru
      _
    // Predicated region
    $region6: #{tpu_custom_call.1} parent=1 // pred_check
      _
    $region7: #{tpu_custom_call.1} parent=1 // pred_check_branch
      %32 = sbr.rel (0) target = $region9
    $region8: #{tpu_custom_call.1} parent=1 // pred_region
      %s34 = ssub.s32 128, 128
      %35 = vsyncadd [#allocation3], %s34
      %s37 = sshll.u32 [#allocation2], 4
      %s38 = int_to_ptr.vmem [resolvable:$true] %s37
      %40 = dma.hbm_to_vmem [thread:$0]  %s1, 128, %s38, [#allocation3]
    $region9: #{tpu_custom_call.1} parent=1 // pred_fallthru
      _
    // Predicated region
    $region10: #{tpu_custom_call.1} parent=1 // pred_check
      _
    $region11: #{tpu_custom_call.1} parent=1 // pred_check_branch
      %42 = sbr.rel (0) target = $region13
    $region12: #{tpu_custom_call.1} parent=1 // pred_region
      _
    $region13: #{tpu_custom_call.1} parent=1 // pred_fallthru
      _
    // Predicated region
    $region14: #{tpu_custom_call.1} parent=1 // pred_check
      _
    $region15: #{tpu_custom_call.1} parent=1 // pred_check_branch
      %44 = sbr.rel (0) target = $region17
    $region16: #{tpu_custom_call.1} parent=1 // pred_region
      %s46 = ssub.s32 16, 16
      %47 = vsyncadd [#allocation5], %s46
      %s49 = sshll.u32 [#allocation4], 4
      %s50 = int_to_ptr.vmem [resolvable:$true] %s49
      %52 = dma.hbm_to_vmem [thread:$0]  %s3, 16, %s50, [#allocation5]
    $region17: #{tpu_custom_call.1} parent=1 // pred_fallthru
      _
    // Predicated region
    $region18: #{tpu_custom_call.1} parent=1 // pred_check
      _
    $region19: #{tpu_custom_call.1} parent=1 // pred_check_branch
      %54 = sbr.rel (0) target = $region21
    $region20: #{tpu_custom_call.1} parent=1 // pred_region
      %s56 = ssub.s32 16, 16
      %57 = vsyncadd [#allocation5], %s56
      %s59 = sshll.u32 [#allocation6], 4
      %s60 = int_to_ptr.vmem [resolvable:$true] %s59
      %62 = dma.hbm_to_vmem [thread:$0]  %s4, 16, %s60, [#allocation5]
    $region21: #{tpu_custom_call.1} parent=1 // pred_fallthru
      _
    // Predicated region
    $region22: #{tpu_custom_call.1} parent=1 // pred_check
      _
    $region23: #{tpu_custom_call.1} parent=1 // pred_check_branch
      %64 = sbr.rel (0) target = $region25
    $region24: #{tpu_custom_call.1} parent=1 // pred_region
      _
    $region25: #{tpu_custom_call.1} parent=1 // pred_fallthru
      _
    // Predicated region
    $region26: #{tpu_custom_call.1} parent=1 // pred_check
      _
    $region27: #{tpu_custom_call.1} parent=1 // pred_check_branch
      %66 = sbr.rel (0) target = $region29
    $region28: #{tpu_custom_call.1} parent=1 // pred_region
      _
    $region29: #{tpu_custom_call.1} parent=1 // pred_fallthru
      _
    // Predicated region
    $region30: #{tpu_custom_call.1} parent=1 // pred_check
      _
    $region31: #{tpu_custom_call.1} parent=1 // pred_check_branch
      %68 = sbr.rel (0) target = $region33
    $region32: #{tpu_custom_call.1} parent=1 // pred_region
      %s70 = ssub.s32 16, 16
      %71 = vsyncadd [#allocation8], %s70
      %s73 = sshll.u32 [#allocation7], 4
      %s74 = int_to_ptr.vmem [resolvable:$true] %s73
      %76 = dma.hbm_to_vmem [thread:$0]  %s7, 16, %s74, [#allocation8]
    $region33: #{tpu_custom_call.1} parent=1 // pred_fallthru
      _
    // Predicated region
    $region34: #{tpu_custom_call.1} parent=1 // pred_check
      _
    $region35: #{tpu_custom_call.1} parent=1 // pred_check_branch
      %78 = sbr.rel (0) target = $region37
    $region36: #{tpu_custom_call.1} parent=1 // pred_region
      %s80 = ssub.s32 16, 16
      %81 = vsyncadd [#allocation8], %s80
      %s83 = sshll.u32 [#allocation9], 4
      %s84 = int_to_ptr.vmem [resolvable:$true] %s83
      %86 = dma.hbm_to_vmem [thread:$0]  %s8, 16, %s84, [#allocation8]
    $region37: #{tpu_custom_call.1} parent=1 // pred_fallthru
      _
    // Predicated region
    $region38: #{tpu_custom_call.1} parent=1 // pred_check
      _
    $region39: #{tpu_custom_call.1} parent=1 // pred_check_branch
      %88 = sbr.rel (0) target = $region41
    $region40: #{tpu_custom_call.1} parent=1 // pred_region
      _
    $region41: #{tpu_custom_call.1} parent=1 // pred_fallthru
      _
    // Predicated region
    $region42: #{tpu_custom_call.1} parent=1 // pred_check
      _
    $region43: #{tpu_custom_call.1} parent=1 // pred_check_branch
      %90 = sbr.rel (0) target = $region45
    $region44: #{tpu_custom_call.1} parent=1 // pred_region
      %s92 = ssub.s32 256, 256
      %93 = vsyncadd [#allocation11], %s92
      %s94 = sshll.u32 [#allocation10], 4
      %s95 = int_to_ptr.vmem [resolvable:$true] %s94
      %100 = dma.hbm_to_vmem [thread:$0]  %s10, 256, %s95, [#allocation11], 128, 128, 8
    $region45: #{tpu_custom_call.1} parent=1 // pred_fallthru
      _
    // Predicated region
    $region46: #{tpu_custom_call.1} parent=1 // pred_check
      _
    $region47: #{tpu_custom_call.1} parent=1 // pred_check_branch
      %102 = sbr.rel (0) target = $region49
    $region48: #{tpu_custom_call.1} parent=1 // pred_region
      _
    $region49: #{tpu_custom_call.1} parent=1 // pred_fallthru
      _
    // Predicated region
    $region50: #{tpu_custom_call.1} parent=1 // pred_check
      _
    $region51: #{tpu_custom_call.1} parent=1 // pred_check_branch
      %104 = sbr.rel (0) target = $region53
    $region52: #{tpu_custom_call.1} parent=1 // pred_region
      %s106 = ssub.s32 16, 16
      %107 = vsyncadd [#allocation11], %s106
      %s109 = sshll.u32 [#allocation12], 4
      %s110 = int_to_ptr.vmem [resolvable:$true] %s109
      %112 = dma.hbm_to_vmem [thread:$0]  %s12, 16, %s110, [#allocation11]
    $region53: #{tpu_custom_call.1} parent=1 // pred_fallthru
      _
    // Predicated region
    $region54: #{tpu_custom_call.1} parent=1 // pred_check
      _
    $region55: #{tpu_custom_call.1} parent=1 // pred_check_branch
      %114 = sbr.rel (0) target = $region57
    $region56: #{tpu_custom_call.1} parent=1 // pred_region
      %s116 = ssub.s32 256, 256
      %117 = vsyncadd [#allocation14], %s116
      %s118 = sshll.u32 [#allocation13], 4
      %s119 = int_to_ptr.vmem [resolvable:$true] %s118
      %124 = dma.hbm_to_vmem [thread:$0]  %s13, 256, %s119, [#allocation14], 128, 128, 8
    $region57: #{tpu_custom_call.1} parent=1 // pred_fallthru
      _
    // Predicated region
    $region58: #{tpu_custom_call.1} parent=1 // pred_check
      _
    $region59: #{tpu_custom_call.1} parent=1 // pred_check_branch
      %126 = sbr.rel (0) target = $region61
    $region60: #{tpu_custom_call.1} parent=1 // pred_region
      %s128 = ssub.s32 256, 256
      %129 = vsyncadd [#allocation14], %s128
      %s130 = sshll.u32 [#allocation15], 4
      %s131 = int_to_ptr.vmem [resolvable:$true] %s130
      %136 = dma.hbm_to_vmem [thread:$0]  %s14, 256, %s131, [#allocation14], 128, 128, 8
    $region61: #{tpu_custom_call.1} parent=1 // pred_fallthru
      _
    // Predicated region
    $region62: #{tpu_custom_call.1} parent=1 // pred_check
      _
    $region63: #{tpu_custom_call.1} parent=1 // pred_check_branch
      %138 = sbr.rel (0) target = $region65
    $region64: #{tpu_custom_call.1} parent=1 // pred_region
      _
    $region65: #{tpu_custom_call.1} parent=1 // pred_fallthru
      _
    // Predicated region
    $region66: #{tpu_custom_call.1} parent=1 // pred_check
      _
    $region67: #{tpu_custom_call.1} parent=1 // pred_check_branch
      %140 = sbr.rel (0) target = $region69
    $region68: #{tpu_custom_call.1} parent=1 // pred_region
      _
    $region69: #{tpu_custom_call.1} parent=1 // pred_fallthru
      _
    // Predicated region
    $region70: #{tpu_custom_call.1} parent=1 // pred_check
      _
    $region71: #{tpu_custom_call.1} parent=1 // pred_check_branch
      %142 = sbr.rel (0) target = $region73
    $region72: #{tpu_custom_call.1} parent=1 // pred_region
      _
    $region73: #{tpu_custom_call.1} parent=1 // pred_fallthru
      _
    // Predicated region
    $region74: #{tpu_custom_call.1} parent=1 // pred_check
      _
    $region75: #{tpu_custom_call.1} parent=1 // pred_check_branch
      %144 = sbr.rel (0) target = $region77
    $region76: #{tpu_custom_call.1} parent=1 // pred_region
      _
    $region77: #{tpu_custom_call.1} parent=1 // pred_fallthru
      _
    // Predicated region
    $region78: #{tpu_custom_call.1} parent=1 // pred_check
      _
    $region79: #{tpu_custom_call.1} parent=1 // pred_check_branch
      %146 = sbr.rel (0) target = $region81
    $region80: #{tpu_custom_call.1} parent=1 // pred_region
      %147 = dma.done [#allocation3], 128
    $region81: #{tpu_custom_call.1} parent=1 // pred_fallthru
      _
    // Predicated region
    $region82: #{tpu_custom_call.1} parent=1 // pred_check
      _
    $region83: #{tpu_custom_call.1} parent=1 // pred_check_branch
      %149 = sbr.rel (0) target = $region85
    $region84: #{tpu_custom_call.1} parent=1 // pred_region
      %150 = dma.done [#allocation5], 16
    $region85: #{tpu_custom_call.1} parent=1 // pred_fallthru
      _
    // Predicated region
    $region86: #{tpu_custom_call.1} parent=1 // pred_check
      _
    $region87: #{tpu_custom_call.1} parent=1 // pred_check_branch
      %152 = sbr.rel (0) target = $region89
    $region88: #{tpu_custom_call.1} parent=1 // pred_region
      %153 = dma.done [#allocation5], 16
    $region89: #{tpu_custom_call.1} parent=1 // pred_fallthru
      _
    // Predicated region
    $region90: #{tpu_custom_call.1} parent=1 // pred_check
      _
    $region91: #{tpu_custom_call.1} parent=1 // pred_check_branch
      %155 = sbr.rel (0) target = $region93
    $region92: #{tpu_custom_call.1} parent=1 // pred_region
      %156 = dma.done [#allocation8], 16
    $region93: #{tpu_custom_call.1} parent=1 // pred_fallthru
      _
    // Predicated region
    $region94: #{tpu_custom_call.1} parent=1 // pred_check
      _
    $region95: #{tpu_custom_call.1} parent=1 // pred_check_branch
      %158 = sbr.rel (0) target = $region97
    $region96: #{tpu_custom_call.1} parent=1 // pred_region
      %159 = dma.done [#allocation8], 16
    $region97: #{tpu_custom_call.1} parent=1 // pred_fallthru
      _
    // Predicated region
    $region98: #{tpu_custom_call.1} parent=1 // pred_check
      _
    $region99: #{tpu_custom_call.1} parent=1 // pred_check_branch
      %161 = sbr.rel (0) target = $region101
    $region100: #{tpu_custom_call.1} parent=1 // pred_region
      %162 = dma.done [#allocation11], 256
    $region101: #{tpu_custom_call.1} parent=1 // pred_fallthru
      _
    // Predicated region
    $region102: #{tpu_custom_call.1} parent=1 // pred_check
      _
    $region103: #{tpu_custom_call.1} parent=1 // pred_check_branch
      %164 = sbr.rel (0) target = $region105
    $region104: #{tpu_custom_call.1} parent=1 // pred_region
      %165 = dma.done [#allocation11], 16
    $region105: #{tpu_custom_call.1} parent=1 // pred_fallthru
      _
    // Predicated region
    $region106: #{tpu_custom_call.1} parent=1 // pred_check
      _
    $region107: #{tpu_custom_call.1} parent=1 // pred_check_branch
      %167 = sbr.rel (0) target = $region109
    $region108: #{tpu_custom_call.1} parent=1 // pred_region
      %168 = dma.done [#allocation14], 256
    $region109: #{tpu_custom_call.1} parent=1 // pred_fallthru
      _
    // Predicated region
    $region110: #{tpu_custom_call.1} parent=1 // pred_check
      _
    $region111: #{tpu_custom_call.1} parent=1 // pred_check_branch
      %170 = sbr.rel (0) target = $region113
    $region112: #{tpu_custom_call.1} parent=1 // pred_region
      %171 = dma.done [#allocation14], 256
    $region113: #{tpu_custom_call.1} parent=1 // pred_fallthru
      _
    %v172 = vld [vmem:[#allocation2] sm:$0xff]
    %v173 = vld [vmem:[%s5] sm:$0xff]
    %v174 = vld [vmem:[%s5 + $0x8] sm:$0xff]
    %v175 = vld [vmem:[%s9] sm:$0xff]
    %v176 = vld [vmem:[%s9 + $0x8] sm:$0xff]
    %v177 = vld [vmem:[#allocation13] sm:$0xff]
    %v178 = vld [vmem:[#allocation13 + $0x8] sm:$0xff]
    %v179 = vld [vmem:[%s2] sm:$0xff]
    %v180 = vld [vmem:[%s2 + $0x8] sm:$0xff]
    %v181 = vld [vmem:[%s6] sm:$0xff]
    %v182 = vld [vmem:[%s6 + $0x8] sm:$0xff]
    %v183 = vld [vmem:[#allocation10] sm:$0xff]
    %v184 = vld [vmem:[#allocation10 + $0x8] sm:$0xff]
    %v185 = vld [vmem:[#allocation15] sm:$0xff]
    %v186 = vld [vmem:[#allocation15 + $0x8] sm:$0xff]
    %v187 = vld [vmem:[#allocation4] sm:$0x1]
    %v188 = vld [vmem:[#allocation7] sm:$0x1]
    %v189 = vld [vmem:[%s11] sm:$0x1]
    %v190 = vld [vmem:[%s15] sm:$0x1]
    %v191 = vld [vmem:[#allocation6] sm:$0x1]
    %v192 = vld [vmem:[#allocation9] sm:$0x1]
    %v193 = vld [vmem:[#allocation12] sm:$0x1]
    %v194 = vld [vmem:[%s16] sm:$0x1]
    %v195 = vld [vmem:[%s17] sm:$0xff]
    %v196 = vld [vmem:[%s17 + $0x8] sm:$0xff]
    %v197 = vld [vmem:[%s18] sm:$0x1]
    %v198 = vld [vmem:[%s0] sm:$0xff]
    %v199 = vld [vmem:[%s0 + $0x8] sm:$0xff]
    %v201 = vlaneseq
    %v202 = vshrl.u32 %v201, 7
    %v203 = vsub.s32 0, %v202
    %v204 = vrot.slane %v187, %v203
    %vm206 = vcmask 64512
    %v208 = vsel %vm206, %v198, 0
    %v211 = vsel %vm206, %v199, 0
    %213 = vmatprep.subr.mxu0 0.0
    %214 = vmatpush1.msra.mxu0 0.0
    %215 = vmatprep.subr.mxu0 0.0
    %216 = vmatpush1.msra.mxu0 0.0
    %217 = vmatprep.subr.mxu0 0.0
    %218 = vmatpush1.msra.mxu0 0.0
    %219 = vmatprep.subr.mxu0 0.0
    %220 = vmatpush1.msra.mxu0 0.0
    %221 = vmatprep.subr.mxu0 0.0
    %222 = vmatpush1.msra.mxu0 0.0
    %223 = vmatprep.subr.mxu0 0.0
    %224 = vmatpush1.msra.mxu0 0.0
    %225 = vmatprep.subr.mxu0 0.0
    %226 = vmatpush1.msra.mxu0 0.0
    %227 = vmatprep.subr.mxu0 0.0
    %228 = vmatpush1.msra.mxu0 0.0
    %229 = vmatprep.subr.mxu0 0.0
    %230 = vmatpush1.msra.mxu0 0.0
    %231 = vmatprep.subr.mxu0 0.0
    %232 = vmatpush1.msra.mxu0 0.0
    %233 = vmatprep.subr.mxu0 0.0
    %234 = vmatpush1.msra.mxu0 0.0
    %235 = vmatprep.subr.mxu0 0.0
    %236 = vmatpush1.msra.mxu0 0.0
    %237 = vmatprep.subr.mxu0 0.0
    %238 = vmatpush1.msra.mxu0 0.0
    %239 = vmatprep.subr.mxu0 0.0
    %240 = vmatpush1.msra.mxu0 0.0
    %241 = vmatprep.subr.mxu0 0.0
    %242 = vmatpush1.msra.mxu0 0.0
    %243 = vmatprep.subr.mxu0 0.0
    %244 = vmatpush1.msra.mxu0 %v172
    %245 = vmatprep.subr.mxu0 0.0
    %246 = vmatpush2.msra.mxu0 0.0
    %247 = vmatprep.subr.mxu0 0.0
    %248 = vmatpush2.msra.mxu0 0.0
    %249 = vmatprep.subr.mxu0 0.0
    %250 = vmatpush2.msra.mxu0 0.0
    %251 = vmatprep.subr.mxu0 0.0
    %252 = vmatpush2.msra.mxu0 0.0
    %253 = vmatprep.subr.mxu0 0.0
    %254 = vmatpush2.msra.mxu0 0.0
    %255 = vmatprep.subr.mxu0 0.0
    %256 = vmatpush2.msra.mxu0 0.0
    %257 = vmatprep.subr.mxu0 0.0
    %258 = vmatpush2.msra.mxu0 0.0
    %259 = vmatprep.subr.mxu0 0.0
    %260 = vmatpush2.msra.mxu0 0.0
    %261 = vmatprep.subr.mxu0 0.0
    %262 = vmatpush2.msra.mxu0 0.0
    %263 = vmatprep.subr.mxu0 0.0
    %264 = vmatpush2.msra.mxu0 0.0
    %265 = vmatprep.subr.mxu0 0.0
    %266 = vmatpush2.msra.mxu0 0.0
    %267 = vmatprep.subr.mxu0 0.0
    %268 = vmatpush2.msra.mxu0 0.0
    %269 = vmatprep.subr.mxu0 0.0
    %270 = vmatpush2.msra.mxu0 0.0
    %271 = vmatprep.subr.mxu0 0.0
    %272 = vmatpush2.msra.mxu0 0.0
    %273 = vmatprep.subr.mxu0 0.0
    %274 = vmatpush2.msra.mxu0 0.0
    %275 = vmatprep.subr.mxu0 0.0
    %276 = vmatpush2.msra.mxu0 0.0
    %277 = vmatprep.mubr.f32.mxu0 0.0
    %278 = vmatmul.mubr.f32.gmra.mxu0 %v208
    %v279 = vpop.f32.mrf.mxu0
    %v280 = vadd.f32 %v204, %v279
    %v281 = vpop.f32.mrf.mxu0
    %282 = vmatprep.mubr.f32.mxu0 0.0
    %283 = vmatmul.mubr.f32.gmra.mxu0 %v211
    %v284 = vpop.f32.mrf.mxu0
    %v285 = vadd.f32 %v204, %v284
    %v286 = vpop.f32.mrf.mxu0
    %287 = vdwg.mxu0
    %vm288 = vcmask 130048
    %v290 = vsel %vm288, 0.0, 0
    %292 = vmatprep.subr.mxu0 0.0
    %293 = vmatpush1.msra.mxu0 0.0
    %294 = vmatprep.subr.mxu0 0.0
    %295 = vmatpush1.msra.mxu0 0.0
    %296 = vmatprep.subr.mxu0 0.0
    %297 = vmatpush1.msra.mxu0 0.0
    %298 = vmatprep.subr.mxu0 0.0
    %299 = vmatpush1.msra.mxu0 0.0
    %300 = vmatprep.subr.mxu0 0.0
    %301 = vmatpush1.msra.mxu0 0.0
    %302 = vmatprep.subr.mxu0 0.0
    %303 = vmatpush1.msra.mxu0 0.0
    %304 = vmatprep.subr.mxu0 0.0
    %305 = vmatpush1.msra.mxu0 0.0
    %306 = vmatprep.subr.mxu0 0.0
    %307 = vmatpush1.msra.mxu0 0.0
    %308 = vmatprep.subr.mxu0 0.0
    %309 = vmatpush1.msra.mxu0 0.0
    %310 = vmatprep.subr.mxu0 0.0
    %311 = vmatpush1.msra.mxu0 0.0
    %312 = vmatprep.subr.mxu0 0.0
    %313 = vmatpush1.msra.mxu0 0.0
    %314 = vmatprep.subr.mxu0 0.0
    %315 = vmatpush1.msra.mxu0 0.0
    %316 = vmatprep.subr.mxu0 0.0
    %317 = vmatpush1.msra.mxu0 0.0
    %318 = vmatprep.subr.mxu0 0.0
    %319 = vmatpush1.msra.mxu0 0.0
    %320 = vmatprep.subr.mxu0 0.0
    %321 = vmatpush1.msra.mxu0 %v180
    %322 = vmatprep.subr.mxu0 0.0
    %323 = vmatpush1.msra.mxu0 %v179
    %324 = vmatprep.subr.mxu0 0.0
    %325 = vmatpush2.msra.mxu0 0.0
    %326 = vmatprep.subr.mxu0 0.0
    %327 = vmatpush2.msra.mxu0 0.0
    %328 = vmatprep.subr.mxu0 0.0
    %329 = vmatpush2.msra.mxu0 0.0
    %330 = vmatprep.subr.mxu0 0.0
    %331 = vmatpush2.msra.mxu0 0.0
    %332 = vmatprep.subr.mxu0 0.0
    %333 = vmatpush2.msra.mxu0 0.0
    %334 = vmatprep.subr.mxu0 0.0
    %335 = vmatpush2.msra.mxu0 0.0
    %336 = vmatprep.subr.mxu0 0.0
    %337 = vmatpush2.msra.mxu0 0.0
    %338 = vmatprep.subr.mxu0 0.0
    %339 = vmatpush2.msra.mxu0 0.0
    %340 = vmatprep.subr.mxu0 0.0
    %341 = vmatpush2.msra.mxu0 0.0
    %342 = vmatprep.subr.mxu0 0.0
    %343 = vmatpush2.msra.mxu0 0.0
    %344 = vmatprep.subr.mxu0 0.0
    %345 = vmatpush2.msra.mxu0 0.0
    %346 = vmatprep.subr.mxu0 0.0
    %347 = vmatpush2.msra.mxu0 0.0
    %348 = vmatprep.subr.mxu0 0.0
    %349 = vmatpush2.msra.mxu0 0.0
    %350 = vmatprep.subr.mxu0 0.0
    %351 = vmatpush2.msra.mxu0 0.0
    %352 = vmatprep.subr.mxu0 0.0
    %353 = vmatpush2.msra.mxu0 0.0
    %354 = vmatprep.subr.mxu0 0.0
    %355 = vmatpush2.msra.mxu0 0.0
    %356 = vmatprep.mubr.f32.mxu0 0.0
    %357 = vmatmul.mubr.f32.gmra.mxu0 %v290
    %v358 = vpop.f32.mrf.mxu0
    %v359 = vadd.f32 0.0, %v358
    %v360 = vpop.f32.mrf.mxu0
    %361 = vdwg.mxu0
    %v362 = vadd.f32 %v280, %v359
    %v363 = vxor.u32 %v362, 2147483648
    %v364 = vmul.f32 %v363, 1.442695
    %v365 = vpow.pop %v364
    %v366 = vadd.f32 %v365, 1.0
    %v367 = vrcp.pop %v366
    %v368 = vmul.f32 1.0, %v367
    %v370 = vlaneseq
    %v371 = vshrl.u32 %v370, 7
    %v372 = vsub.s32 0, %v371
    %v373 = vrot.slane %v191, %v372
    %374 = vrot.lane.b32.xlu0 %v373, 32
    %v375 = vpop.permute.xlu0 %374
    %v377 = vadd.f32 %v359, %v375
    %379 = vrot.lane.b32.xlu0 %v377, 96
    %v380 = vpop.permute.xlu0 %379
    %v382 = vmul.f32 %v368, %v380
    %384 = vrot.lane.b32.xlu0 %v382, 32
    %v385 = vpop.permute.xlu0 %384
    %v387 = vadd.f32 %v280, %v385
    %v388 = vtanh.pop %v387
    %v389 = vsub.f32 1.0, %v368
    %391 = vrot.lane.b32.xlu0 %v388, 112
    %v392 = vpop.permute.xlu0 %391
    %v394 = vmul.f32 %v389, %v392
    %v395 = vmul.f32 %v368, 0.0
    %v396 = vadd.f32 %v394, %v395
    %v398 = vlaneseq
    %v399 = vshrl.u32 %v398, 7
    %v400 = vsub.s32 0, %v399
    %v401 = vrot.slane %v188, %v400
    %404 = vrot.lane.b32.xlu0 %v396, 112
    %v405 = vpop.permute.xlu0 %404
    %v406 = vsel %vm288, %v405, 0
    %408 = vmatprep.subr.mxu0 0.0
    %409 = vmatpush1.msra.mxu0 0.0
    %410 = vmatprep.subr.mxu0 0.0
    %411 = vmatpush1.msra.mxu0 0.0
    %412 = vmatprep.subr.mxu0 0.0
    %413 = vmatpush1.msra.mxu0 0.0
    %414 = vmatprep.subr.mxu0 0.0
    %415 = vmatpush1.msra.mxu0 0.0
    %416 = vmatprep.subr.mxu0 0.0
    %417 = vmatpush1.msra.mxu0 0.0
    %418 = vmatprep.subr.mxu0 0.0
    %419 = vmatpush1.msra.mxu0 0.0
    %420 = vmatprep.subr.mxu0 0.0
    %421 = vmatpush1.msra.mxu0 0.0
    %422 = vmatprep.subr.mxu0 0.0
    %423 = vmatpush1.msra.mxu0 0.0
    %424 = vmatprep.subr.mxu0 0.0
    %425 = vmatpush1.msra.mxu0 0.0
    %426 = vmatprep.subr.mxu0 0.0
    %427 = vmatpush1.msra.mxu0 0.0
    %428 = vmatprep.subr.mxu0 0.0
    %429 = vmatpush1.msra.mxu0 0.0
    %430 = vmatprep.subr.mxu0 0.0
    %431 = vmatpush1.msra.mxu0 0.0
    %432 = vmatprep.subr.mxu0 0.0
    %433 = vmatpush1.msra.mxu0 0.0
    %434 = vmatprep.subr.mxu0 0.0
    %435 = vmatpush1.msra.mxu0 0.0
    %436 = vmatprep.subr.mxu0 0.0
    %437 = vmatpush1.msra.mxu0 %v174
    %438 = vmatprep.subr.mxu0 0.0
    %439 = vmatpush1.msra.mxu0 %v173
    %440 = vmatprep.subr.mxu0 0.0
    %441 = vmatpush2.msra.mxu0 0.0
    %442 = vmatprep.subr.mxu0 0.0
    %443 = vmatpush2.msra.mxu0 0.0
    %444 = vmatprep.subr.mxu0 0.0
    %445 = vmatpush2.msra.mxu0 0.0
    %446 = vmatprep.subr.mxu0 0.0
    %447 = vmatpush2.msra.mxu0 0.0
    %448 = vmatprep.subr.mxu0 0.0
    %449 = vmatpush2.msra.mxu0 0.0
    %450 = vmatprep.subr.mxu0 0.0
    %451 = vmatpush2.msra.mxu0 0.0
    %452 = vmatprep.subr.mxu0 0.0
    %453 = vmatpush2.msra.mxu0 0.0
    %454 = vmatprep.subr.mxu0 0.0
    %455 = vmatpush2.msra.mxu0 0.0
    %456 = vmatprep.subr.mxu0 0.0
    %457 = vmatpush2.msra.mxu0 0.0
    %458 = vmatprep.subr.mxu0 0.0
    %459 = vmatpush2.msra.mxu0 0.0
    %460 = vmatprep.subr.mxu0 0.0
    %461 = vmatpush2.msra.mxu0 0.0
    %462 = vmatprep.subr.mxu0 0.0
    %463 = vmatpush2.msra.mxu0 0.0
    %464 = vmatprep.subr.mxu0 0.0
    %465 = vmatpush2.msra.mxu0 0.0
    %466 = vmatprep.subr.mxu0 0.0
    %467 = vmatpush2.msra.mxu0 0.0
    %468 = vmatprep.subr.mxu0 0.0
    %469 = vmatpush2.msra.mxu0 0.0
    %470 = vmatprep.subr.mxu0 0.0
    %471 = vmatpush2.msra.mxu0 0.0
    %472 = vmatprep.mubr.f32.mxu0 0.0
    %473 = vmatmul.mubr.f32.gmra.mxu0 %v406
    %v474 = vpop.f32.mrf.mxu0
    %v475 = vadd.f32 %v401, %v474
    %v476 = vpop.f32.mrf.mxu0
    %477 = vdwg.mxu0
    %478 = vmatprep.subr.mxu0 0.0
    %479 = vmatpush1.msra.mxu0 0.0
    %480 = vmatprep.subr.mxu0 0.0
    %481 = vmatpush1.msra.mxu0 0.0
    %482 = vmatprep.subr.mxu0 0.0
    %483 = vmatpush1.msra.mxu0 0.0
    %484 = vmatprep.subr.mxu0 0.0
    %485 = vmatpush1.msra.mxu0 0.0
    %486 = vmatprep.subr.mxu0 0.0
    %487 = vmatpush1.msra.mxu0 0.0
    %488 = vmatprep.subr.mxu0 0.0
    %489 = vmatpush1.msra.mxu0 0.0
    %490 = vmatprep.subr.mxu0 0.0
    %491 = vmatpush1.msra.mxu0 0.0
    %492 = vmatprep.subr.mxu0 0.0
    %493 = vmatpush1.msra.mxu0 0.0
    %494 = vmatprep.subr.mxu0 0.0
    %495 = vmatpush1.msra.mxu0 0.0
    %496 = vmatprep.subr.mxu0 0.0
    %497 = vmatpush1.msra.mxu0 0.0
    %498 = vmatprep.subr.mxu0 0.0
    %499 = vmatpush1.msra.mxu0 0.0
    %500 = vmatprep.subr.mxu0 0.0
    %501 = vmatpush1.msra.mxu0 0.0
    %502 = vmatprep.subr.mxu0 0.0
    %503 = vmatpush1.msra.mxu0 0.0
    %504 = vmatprep.subr.mxu0 0.0
    %505 = vmatpush1.msra.mxu0 0.0
    %506 = vmatprep.subr.mxu0 0.0
    %507 = vmatpush1.msra.mxu0 %v182
    %508 = vmatprep.subr.mxu0 0.0
    %509 = vmatpush1.msra.mxu0 %v181
    %510 = vmatprep.subr.mxu0 0.0
    %511 = vmatpush2.msra.mxu0 0.0
    %512 = vmatprep.subr.mxu0 0.0
    %513 = vmatpush2.msra.mxu0 0.0
    %514 = vmatprep.subr.mxu0 0.0
    %515 = vmatpush2.msra.mxu0 0.0
    %516 = vmatprep.subr.mxu0 0.0
    %517 = vmatpush2.msra.mxu0 0.0
    %518 = vmatprep.subr.mxu0 0.0
    %519 = vmatpush2.msra.mxu0 0.0
    %520 = vmatprep.subr.mxu0 0.0
    %521 = vmatpush2.msra.mxu0 0.0
    %522 = vmatprep.subr.mxu0 0.0
    %523 = vmatpush2.msra.mxu0 0.0
    %524 = vmatprep.subr.mxu0 0.0
    %525 = vmatpush2.msra.mxu0 0.0
    %526 = vmatprep.subr.mxu0 0.0
    %527 = vmatpush2.msra.mxu0 0.0
    %528 = vmatprep.subr.mxu0 0.0
    %529 = vmatpush2.msra.mxu0 0.0
    %530 = vmatprep.subr.mxu0 0.0
    %531 = vmatpush2.msra.mxu0 0.0
    %532 = vmatprep.subr.mxu0 0.0
    %533 = vmatpush2.msra.mxu0 0.0
    %534 = vmatprep.subr.mxu0 0.0
    %535 = vmatpush2.msra.mxu0 0.0
    %536 = vmatprep.subr.mxu0 0.0
    %537 = vmatpush2.msra.mxu0 0.0
    %538 = vmatprep.subr.mxu0 0.0
    %539 = vmatpush2.msra.mxu0 0.0
    %540 = vmatprep.subr.mxu0 0.0
    %541 = vmatpush2.msra.mxu0 0.0
    %542 = vmatprep.mubr.f32.mxu0 0.0
    %543 = vmatmul.mubr.f32.gmra.mxu0 %v290
    %v544 = vpop.f32.mrf.mxu0
    %v545 = vadd.f32 0.0, %v544
    %v546 = vpop.f32.mrf.mxu0
    %547 = vdwg.mxu0
    %v548 = vadd.f32 %v475, %v545
    %v549 = vxor.u32 %v548, 2147483648
    %v550 = vmul.f32 %v549, 1.442695
    %v551 = vpow.pop %v550
    %v552 = vadd.f32 %v551, 1.0
    %v553 = vrcp.pop %v552
    %v554 = vmul.f32 1.0, %v553
    %v556 = vlaneseq
    %v557 = vshrl.u32 %v556, 7
    %v558 = vsub.s32 0, %v557
    %v559 = vrot.slane %v192, %v558
    %560 = vrot.lane.b32.xlu0 %v559, 32
    %v561 = vpop.permute.xlu0 %560
    %v563 = vadd.f32 %v545, %v561
    %565 = vrot.lane.b32.xlu0 %v563, 96
    %v566 = vpop.permute.xlu0 %565
    %v568 = vmul.f32 %v554, %v566
    %570 = vrot.lane.b32.xlu0 %v568, 32
    %v571 = vpop.permute.xlu0 %570
    %v573 = vadd.f32 %v475, %v571
    %v574 = vtanh.pop %v573
    %v575 = vsub.f32 1.0, %v554
    %577 = vrot.lane.b32.xlu0 %v574, 112
    %v578 = vpop.permute.xlu0 %577
    %v580 = vmul.f32 %v575, %v578
    %v581 = vmul.f32 %v554, 0.0
    %v582 = vadd.f32 %v580, %v581
    %v584 = vlaneseq
    %v585 = vshrl.u32 %v584, 7
    %v586 = vsub.s32 0, %v585
    %v587 = vrot.slane %v189, %v586
    %590 = vrot.lane.b32.xlu0 %v582, 112
    %v591 = vpop.permute.xlu0 %590
    %v592 = vsel %vm288, %v591, 0
    %594 = vmatprep.subr.mxu0 0.0
    %595 = vmatpush1.msra.mxu0 0.0
    %596 = vmatprep.subr.mxu0 0.0
    %597 = vmatpush1.msra.mxu0 0.0
    %598 = vmatprep.subr.mxu0 0.0
    %599 = vmatpush1.msra.mxu0 0.0
    %600 = vmatprep.subr.mxu0 0.0
    %601 = vmatpush1.msra.mxu0 0.0
    %602 = vmatprep.subr.mxu0 0.0
    %603 = vmatpush1.msra.mxu0 0.0
    %604 = vmatprep.subr.mxu0 0.0
    %605 = vmatpush1.msra.mxu0 0.0
    %606 = vmatprep.subr.mxu0 0.0
    %607 = vmatpush1.msra.mxu0 0.0
    %608 = vmatprep.subr.mxu0 0.0
    %609 = vmatpush1.msra.mxu0 0.0
    %610 = vmatprep.subr.mxu0 0.0
    %611 = vmatpush1.msra.mxu0 0.0
    %612 = vmatprep.subr.mxu0 0.0
    %613 = vmatpush1.msra.mxu0 0.0
    %614 = vmatprep.subr.mxu0 0.0
    %615 = vmatpush1.msra.mxu0 0.0
    %616 = vmatprep.subr.mxu0 0.0
    %617 = vmatpush1.msra.mxu0 0.0
    %618 = vmatprep.subr.mxu0 0.0
    %619 = vmatpush1.msra.mxu0 0.0
    %620 = vmatprep.subr.mxu0 0.0
    %621 = vmatpush1.msra.mxu0 0.0
    %622 = vmatprep.subr.mxu0 0.0
    %623 = vmatpush1.msra.mxu0 %v176
    %624 = vmatprep.subr.mxu0 0.0
    %625 = vmatpush1.msra.mxu0 %v175
    %626 = vmatprep.subr.mxu0 0.0
    %627 = vmatpush2.msra.mxu0 0.0
    %628 = vmatprep.subr.mxu0 0.0
    %629 = vmatpush2.msra.mxu0 0.0
    %630 = vmatprep.subr.mxu0 0.0
    %631 = vmatpush2.msra.mxu0 0.0
    %632 = vmatprep.subr.mxu0 0.0
    %633 = vmatpush2.msra.mxu0 0.0
    %634 = vmatprep.subr.mxu0 0.0
    %635 = vmatpush2.msra.mxu0 0.0
    %636 = vmatprep.subr.mxu0 0.0
    %637 = vmatpush2.msra.mxu0 0.0
    %638 = vmatprep.subr.mxu0 0.0
    %639 = vmatpush2.msra.mxu0 0.0
    %640 = vmatprep.subr.mxu0 0.0
    %641 = vmatpush2.msra.mxu0 0.0
    %642 = vmatprep.subr.mxu0 0.0
    %643 = vmatpush2.msra.mxu0 0.0
    %644 = vmatprep.subr.mxu0 0.0
    %645 = vmatpush2.msra.mxu0 0.0
    %646 = vmatprep.subr.mxu0 0.0
    %647 = vmatpush2.msra.mxu0 0.0
    %648 = vmatprep.subr.mxu0 0.0
    %649 = vmatpush2.msra.mxu0 0.0
    %650 = vmatprep.subr.mxu0 0.0
    %651 = vmatpush2.msra.mxu0 0.0
    %652 = vmatprep.subr.mxu0 0.0
    %653 = vmatpush2.msra.mxu0 0.0
    %654 = vmatprep.subr.mxu0 0.0
    %655 = vmatpush2.msra.mxu0 0.0
    %656 = vmatprep.subr.mxu0 0.0
    %657 = vmatpush2.msra.mxu0 0.0
    %658 = vmatprep.mubr.f32.mxu0 0.0
    %659 = vmatmul.mubr.f32.gmra.mxu0 %v592
    %v660 = vpop.f32.mrf.mxu0
    %v661 = vadd.f32 %v587, %v660
    %v662 = vpop.f32.mrf.mxu0
    %663 = vdwg.mxu0
    %664 = vmatprep.subr.mxu0 0.0
    %665 = vmatpush1.msra.mxu0 0.0
    %666 = vmatprep.subr.mxu0 0.0
    %667 = vmatpush1.msra.mxu0 0.0
    %668 = vmatprep.subr.mxu0 0.0
    %669 = vmatpush1.msra.mxu0 0.0
    %670 = vmatprep.subr.mxu0 0.0
    %671 = vmatpush1.msra.mxu0 0.0
    %672 = vmatprep.subr.mxu0 0.0
    %673 = vmatpush1.msra.mxu0 0.0
    %674 = vmatprep.subr.mxu0 0.0
    %675 = vmatpush1.msra.mxu0 0.0
    %676 = vmatprep.subr.mxu0 0.0
    %677 = vmatpush1.msra.mxu0 0.0
    %678 = vmatprep.subr.mxu0 0.0
    %679 = vmatpush1.msra.mxu0 0.0
    %680 = vmatprep.subr.mxu0 0.0
    %681 = vmatpush1.msra.mxu0 0.0
    %682 = vmatprep.subr.mxu0 0.0
    %683 = vmatpush1.msra.mxu0 0.0
    %684 = vmatprep.subr.mxu0 0.0
    %685 = vmatpush1.msra.mxu0 0.0
    %686 = vmatprep.subr.mxu0 0.0
    %687 = vmatpush1.msra.mxu0 0.0
    %688 = vmatprep.subr.mxu0 0.0
    %689 = vmatpush1.msra.mxu0 0.0
    %690 = vmatprep.subr.mxu0 0.0
    %691 = vmatpush1.msra.mxu0 0.0
    %692 = vmatprep.subr.mxu0 0.0
    %693 = vmatpush1.msra.mxu0 %v184
    %694 = vmatprep.subr.mxu0 0.0
    %695 = vmatpush1.msra.mxu0 %v183
    %696 = vmatprep.subr.mxu0 0.0
    %697 = vmatpush2.msra.mxu0 0.0
    %698 = vmatprep.subr.mxu0 0.0
    %699 = vmatpush2.msra.mxu0 0.0
    %700 = vmatprep.subr.mxu0 0.0
    %701 = vmatpush2.msra.mxu0 0.0
    %702 = vmatprep.subr.mxu0 0.0
    %703 = vmatpush2.msra.mxu0 0.0
    %704 = vmatprep.subr.mxu0 0.0
    %705 = vmatpush2.msra.mxu0 0.0
    %706 = vmatprep.subr.mxu0 0.0
    %707 = vmatpush2.msra.mxu0 0.0
    %708 = vmatprep.subr.mxu0 0.0
    %709 = vmatpush2.msra.mxu0 0.0
    %710 = vmatprep.subr.mxu0 0.0
    %711 = vmatpush2.msra.mxu0 0.0
    %712 = vmatprep.subr.mxu0 0.0
    %713 = vmatpush2.msra.mxu0 0.0
    %714 = vmatprep.subr.mxu0 0.0
    %715 = vmatpush2.msra.mxu0 0.0
    %716 = vmatprep.subr.mxu0 0.0
    %717 = vmatpush2.msra.mxu0 0.0
    %718 = vmatprep.subr.mxu0 0.0
    %719 = vmatpush2.msra.mxu0 0.0
    %720 = vmatprep.subr.mxu0 0.0
    %721 = vmatpush2.msra.mxu0 0.0
    %722 = vmatprep.subr.mxu0 0.0
    %723 = vmatpush2.msra.mxu0 0.0
    %724 = vmatprep.subr.mxu0 0.0
    %725 = vmatpush2.msra.mxu0 0.0
    %726 = vmatprep.subr.mxu0 0.0
    %727 = vmatpush2.msra.mxu0 0.0
    %728 = vmatprep.mubr.f32.mxu0 0.0
    %729 = vmatmul.mubr.f32.gmra.mxu0 %v290
    %v730 = vpop.f32.mrf.mxu0
    %v731 = vadd.f32 0.0, %v730
    %v732 = vpop.f32.mrf.mxu0
    %733 = vdwg.mxu0
    %v734 = vadd.f32 %v661, %v731
    %v735 = vxor.u32 %v734, 2147483648
    %v736 = vmul.f32 %v735, 1.442695
    %v737 = vpow.pop %v736
    %v738 = vadd.f32 %v737, 1.0
    %v739 = vrcp.pop %v738
    %v740 = vmul.f32 1.0, %v739
    %v742 = vlaneseq
    %v743 = vshrl.u32 %v742, 7
    %v744 = vsub.s32 0, %v743
    %v745 = vrot.slane %v193, %v744
    %746 = vrot.lane.b32.xlu0 %v745, 32
    %v747 = vpop.permute.xlu0 %746
    %v749 = vadd.f32 %v731, %v747
    %751 = vrot.lane.b32.xlu0 %v749, 96
    %v752 = vpop.permute.xlu0 %751
    %v754 = vmul.f32 %v740, %v752
    %756 = vrot.lane.b32.xlu0 %v754, 32
    %v757 = vpop.permute.xlu0 %756
    %v759 = vadd.f32 %v661, %v757
    %v760 = vtanh.pop %v759
    %v761 = vsub.f32 1.0, %v740
    %763 = vrot.lane.b32.xlu0 %v760, 112
    %v764 = vpop.permute.xlu0 %763
    %v766 = vmul.f32 %v761, %v764
    %v767 = vmul.f32 %v740, 0.0
    %v768 = vadd.f32 %v766, %v767
    %v770 = vlaneseq
    %v771 = vshrl.u32 %v770, 7
    %v772 = vsub.s32 0, %v771
    %v773 = vrot.slane %v190, %v772
    %776 = vrot.lane.b32.xlu0 %v768, 112
    %v777 = vpop.permute.xlu0 %776
    %v778 = vsel %vm288, %v777, 0
    %780 = vmatprep.subr.mxu0 0.0
    %781 = vmatpush1.msra.mxu0 0.0
    %782 = vmatprep.subr.mxu0 0.0
    %783 = vmatpush1.msra.mxu0 0.0
    %784 = vmatprep.subr.mxu0 0.0
    %785 = vmatpush1.msra.mxu0 0.0
    %786 = vmatprep.subr.mxu0 0.0
    %787 = vmatpush1.msra.mxu0 0.0
    %788 = vmatprep.subr.mxu0 0.0
    %789 = vmatpush1.msra.mxu0 0.0
    %790 = vmatprep.subr.mxu0 0.0
    %791 = vmatpush1.msra.mxu0 0.0
    %792 = vmatprep.subr.mxu0 0.0
    %793 = vmatpush1.msra.mxu0 0.0
    %794 = vmatprep.subr.mxu0 0.0
    %795 = vmatpush1.msra.mxu0 0.0
    %796 = vmatprep.subr.mxu0 0.0
    %797 = vmatpush1.msra.mxu0 0.0
    %798 = vmatprep.subr.mxu0 0.0
    %799 = vmatpush1.msra.mxu0 0.0
    %800 = vmatprep.subr.mxu0 0.0
    %801 = vmatpush1.msra.mxu0 0.0
    %802 = vmatprep.subr.mxu0 0.0
    %803 = vmatpush1.msra.mxu0 0.0
    %804 = vmatprep.subr.mxu0 0.0
    %805 = vmatpush1.msra.mxu0 0.0
    %806 = vmatprep.subr.mxu0 0.0
    %807 = vmatpush1.msra.mxu0 0.0
    %808 = vmatprep.subr.mxu0 0.0
    %809 = vmatpush1.msra.mxu0 %v178
    %810 = vmatprep.subr.mxu0 0.0
    %811 = vmatpush1.msra.mxu0 %v177
    %812 = vmatprep.subr.mxu0 0.0
    %813 = vmatpush2.msra.mxu0 0.0
    %814 = vmatprep.subr.mxu0 0.0
    %815 = vmatpush2.msra.mxu0 0.0
    %816 = vmatprep.subr.mxu0 0.0
    %817 = vmatpush2.msra.mxu0 0.0
    %818 = vmatprep.subr.mxu0 0.0
    %819 = vmatpush2.msra.mxu0 0.0
    %820 = vmatprep.subr.mxu0 0.0
    %821 = vmatpush2.msra.mxu0 0.0
    %822 = vmatprep.subr.mxu0 0.0
    %823 = vmatpush2.msra.mxu0 0.0
    %824 = vmatprep.subr.mxu0 0.0
    %825 = vmatpush2.msra.mxu0 0.0
    %826 = vmatprep.subr.mxu0 0.0
    %827 = vmatpush2.msra.mxu0 0.0
    %828 = vmatprep.subr.mxu0 0.0
    %829 = vmatpush2.msra.mxu0 0.0
    %830 = vmatprep.subr.mxu0 0.0
    %831 = vmatpush2.msra.mxu0 0.0
    %832 = vmatprep.subr.mxu0 0.0
    %833 = vmatpush2.msra.mxu0 0.0
    %834 = vmatprep.subr.mxu0 0.0
    %835 = vmatpush2.msra.mxu0 0.0
    %836 = vmatprep.subr.mxu0 0.0
    %837 = vmatpush2.msra.mxu0 0.0
    %838 = vmatprep.subr.mxu0 0.0
    %839 = vmatpush2.msra.mxu0 0.0
    %840 = vmatprep.subr.mxu0 0.0
    %841 = vmatpush2.msra.mxu0 0.0
    %842 = vmatprep.subr.mxu0 0.0
    %843 = vmatpush2.msra.mxu0 0.0
    %844 = vmatprep.mubr.f32.mxu0 0.0
    %845 = vmatmul.mubr.f32.gmra.mxu0 %v778
    %v846 = vpop.f32.mrf.mxu0
    %v847 = vadd.f32 %v773, %v846
    %v848 = vpop.f32.mrf.mxu0
    %849 = vdwg.mxu0
    %850 = vmatprep.subr.mxu0 0.0
    %851 = vmatpush1.msra.mxu0 0.0
    %852 = vmatprep.subr.mxu0 0.0
    %853 = vmatpush1.msra.mxu0 0.0
    %854 = vmatprep.subr.mxu0 0.0
    %855 = vmatpush1.msra.mxu0 0.0
    %856 = vmatprep.subr.mxu0 0.0
    %857 = vmatpush1.msra.mxu0 0.0
    %858 = vmatprep.subr.mxu0 0.0
    %859 = vmatpush1.msra.mxu0 0.0
    %860 = vmatprep.subr.mxu0 0.0
    %861 = vmatpush1.msra.mxu0 0.0
    %862 = vmatprep.subr.mxu0 0.0
    %863 = vmatpush1.msra.mxu0 0.0
    %864 = vmatprep.subr.mxu0 0.0
    %865 = vmatpush1.msra.mxu0 0.0
    %866 = vmatprep.subr.mxu0 0.0
    %867 = vmatpush1.msra.mxu0 0.0
    %868 = vmatprep.subr.mxu0 0.0
    %869 = vmatpush1.msra.mxu0 0.0
    %870 = vmatprep.subr.mxu0 0.0
    %871 = vmatpush1.msra.mxu0 0.0
    %872 = vmatprep.subr.mxu0 0.0
    %873 = vmatpush1.msra.mxu0 0.0
    %874 = vmatprep.subr.mxu0 0.0
    %875 = vmatpush1.msra.mxu0 0.0
    %876 = vmatprep.subr.mxu0 0.0
    %877 = vmatpush1.msra.mxu0 0.0
    %878 = vmatprep.subr.mxu0 0.0
    %879 = vmatpush1.msra.mxu0 %v186
    %880 = vmatprep.subr.mxu0 0.0
    %881 = vmatpush1.msra.mxu0 %v185
    %882 = vmatprep.subr.mxu0 0.0
    %883 = vmatpush2.msra.mxu0 0.0
    %884 = vmatprep.subr.mxu0 0.0
    %885 = vmatpush2.msra.mxu0 0.0
    %886 = vmatprep.subr.mxu0 0.0
    %887 = vmatpush2.msra.mxu0 0.0
    %888 = vmatprep.subr.mxu0 0.0
    %889 = vmatpush2.msra.mxu0 0.0
    %890 = vmatprep.subr.mxu0 0.0
    %891 = vmatpush2.msra.mxu0 0.0
    %892 = vmatprep.subr.mxu0 0.0
    %893 = vmatpush2.msra.mxu0 0.0
    %894 = vmatprep.subr.mxu0 0.0
    %895 = vmatpush2.msra.mxu0 0.0
    %896 = vmatprep.subr.mxu0 0.0
    %897 = vmatpush2.msra.mxu0 0.0
    %898 = vmatprep.subr.mxu0 0.0
    %899 = vmatpush2.msra.mxu0 0.0
    %900 = vmatprep.subr.mxu0 0.0
    %901 = vmatpush2.msra.mxu0 0.0
    %902 = vmatprep.subr.mxu0 0.0
    %903 = vmatpush2.msra.mxu0 0.0
    %904 = vmatprep.subr.mxu0 0.0
    %905 = vmatpush2.msra.mxu0 0.0
    %906 = vmatprep.subr.mxu0 0.0
    %907 = vmatpush2.msra.mxu0 0.0
    %908 = vmatprep.subr.mxu0 0.0
    %909 = vmatpush2.msra.mxu0 0.0
    %910 = vmatprep.subr.mxu0 0.0
    %911 = vmatpush2.msra.mxu0 0.0
    %912 = vmatprep.subr.mxu0 0.0
    %913 = vmatpush2.msra.mxu0 0.0
    %914 = vmatprep.mubr.f32.mxu0 0.0
    %915 = vmatmul.mubr.f32.gmra.mxu0 %v290
    %v916 = vpop.f32.mrf.mxu0
    %v917 = vadd.f32 0.0, %v916
    %v918 = vpop.f32.mrf.mxu0
    %919 = vdwg.mxu0
    %v920 = vadd.f32 %v847, %v917
    %v921 = vxor.u32 %v920, 2147483648
    %v922 = vmul.f32 %v921, 1.442695
    %v923 = vpow.pop %v922
    %v924 = vadd.f32 %v923, 1.0
    %v925 = vrcp.pop %v924
    %v926 = vmul.f32 1.0, %v925
    %v928 = vlaneseq
    %v929 = vshrl.u32 %v928, 7
    %v930 = vsub.s32 0, %v929
    %v931 = vrot.slane %v194, %v930
    %932 = vrot.lane.b32.xlu0 %v931, 32
    %v933 = vpop.permute.xlu0 %932
    %v935 = vadd.f32 %v917, %v933
    %937 = vrot.lane.b32.xlu0 %v935, 96
    %v938 = vpop.permute.xlu0 %937
    %v940 = vmul.f32 %v926, %v938
    %942 = vrot.lane.b32.xlu0 %v940, 32
    %v943 = vpop.permute.xlu0 %942
    %v945 = vadd.f32 %v847, %v943
    %v946 = vtanh.pop %v945
    %v947 = vsub.f32 1.0, %v926
    %949 = vrot.lane.b32.xlu0 %v946, 112
    %v950 = vpop.permute.xlu0 %949
    %v952 = vmul.f32 %v947, %v950
    %v953 = vmul.f32 %v926, 0.0
    %v954 = vadd.f32 %v952, %v953
    %v956 = vlaneseq
    %v957 = vshrl.u32 %v956, 7
    %v958 = vsub.s32 0, %v957
    %v959 = vrot.slane %v197, %v958
    %962 = vrot.lane.b32.xlu0 %v954, 112
    %v963 = vpop.permute.xlu0 %962
    %v964 = vsel %vm288, %v963, 0
    %966 = vmatprep.subr.mxu0 0.0
    %967 = vmatpush1.msra.mxu0 0.0
    %968 = vmatprep.subr.mxu0 0.0
    %969 = vmatpush1.msra.mxu0 0.0
    %970 = vmatprep.subr.mxu0 0.0
    %971 = vmatpush1.msra.mxu0 0.0
    %972 = vmatprep.subr.mxu0 0.0
    %973 = vmatpush1.msra.mxu0 0.0
    %974 = vmatprep.subr.mxu0 0.0
    %975 = vmatpush1.msra.mxu0 0.0
    %976 = vmatprep.subr.mxu0 0.0
    %977 = vmatpush1.msra.mxu0 0.0
    %978 = vmatprep.subr.mxu0 0.0
    %979 = vmatpush1.msra.mxu0 0.0
    %980 = vmatprep.subr.mxu0 0.0
    %981 = vmatpush1.msra.mxu0 0.0
    %982 = vmatprep.subr.mxu0 0.0
    %983 = vmatpush1.msra.mxu0 0.0
    %984 = vmatprep.subr.mxu0 0.0
    %985 = vmatpush1.msra.mxu0 0.0
    %986 = vmatprep.subr.mxu0 0.0
    %987 = vmatpush1.msra.mxu0 0.0
    %988 = vmatprep.subr.mxu0 0.0
    %989 = vmatpush1.msra.mxu0 0.0
    %990 = vmatprep.subr.mxu0 0.0
    %991 = vmatpush1.msra.mxu0 0.0
    %992 = vmatprep.subr.mxu0 0.0
    %993 = vmatpush1.msra.mxu0 0.0
    %994 = vmatprep.subr.mxu0 0.0
    %995 = vmatpush1.msra.mxu0 %v196
    %996 = vmatprep.subr.mxu0 0.0
    %997 = vmatpush1.msra.mxu0 %v195
    %998 = vmatprep.subr.mxu0 0.0
    %999 = vmatpush2.msra.mxu0 0.0
    %1000 = vmatprep.subr.mxu0 0.0
    %1001 = vmatpush2.msra.mxu0 0.0
    %1002 = vmatprep.subr.mxu0 0.0
    %1003 = vmatpush2.msra.mxu0 0.0
    %1004 = vmatprep.subr.mxu0 0.0
    %1005 = vmatpush2.msra.mxu0 0.0
    %1006 = vmatprep.subr.mxu0 0.0
    %1007 = vmatpush2.msra.mxu0 0.0
    %1008 = vmatprep.subr.mxu0 0.0
    %1009 = vmatpush2.msra.mxu0 0.0
    %1010 = vmatprep.subr.mxu0 0.0
    %1011 = vmatpush2.msra.mxu0 0.0
    %1012 = vmatprep.subr.mxu0 0.0
    %1013 = vmatpush2.msra.mxu0 0.0
    %1014 = vmatprep.subr.mxu0 0.0
    %1015 = vmatpush2.msra.mxu0 0.0
    %1016 = vmatprep.subr.mxu0 0.0
    %1017 = vmatpush2.msra.mxu0 0.0
    %1018 = vmatprep.subr.mxu0 0.0
    %1019 = vmatpush2.msra.mxu0 0.0
    %1020 = vmatprep.subr.mxu0 0.0
    %1021 = vmatpush2.msra.mxu0 0.0
    %1022 = vmatprep.subr.mxu0 0.0
    %1023 = vmatpush2.msra.mxu0 0.0
    %1024 = vmatprep.subr.mxu0 0.0
    %1025 = vmatpush2.msra.mxu0 0.0
    %1026 = vmatprep.subr.mxu0 0.0
    %1027 = vmatpush2.msra.mxu0 0.0
    %1028 = vmatprep.subr.mxu0 0.0
    %1029 = vmatpush2.msra.mxu0 0.0
    %1030 = vmatprep.mubr.f32.mxu0 0.0
    %1031 = vmatmul.mubr.f32.gmra.mxu0 %v964
    %v1032 = vpop.f32.mrf.mxu0
    %v1033 = vadd.f32 %v959, %v1032
    %v1034 = vpop.f32.mrf.mxu0
    %1035 = vdwg.mxu0
    %vm1036 = vcmask 58368
    %1037 = vst.msk [vmem:[%s19] sm:$0x3] %vm1036, %v1033
    %1038 = vmatprep.subr.mxu0 0.0
    %1039 = vmatpush1.msra.mxu0 0.0
    %1040 = vmatprep.subr.mxu0 0.0
    %1041 = vmatpush1.msra.mxu0 0.0
    %1042 = vmatprep.subr.mxu0 0.0
    %1043 = vmatpush1.msra.mxu0 0.0
    %1044 = vmatprep.subr.mxu0 0.0
    %1045 = vmatpush1.msra.mxu0 0.0
    %1046 = vmatprep.subr.mxu0 0.0
    %1047 = vmatpush1.msra.mxu0 0.0
    %1048 = vmatprep.subr.mxu0 0.0
    %1049 = vmatpush1.msra.mxu0 0.0
    %1050 = vmatprep.subr.mxu0 0.0
    %1051 = vmatpush1.msra.mxu0 0.0
    %1052 = vmatprep.subr.mxu0 0.0
    %1053 = vmatpush1.msra.mxu0 0.0
    %1054 = vmatprep.subr.mxu0 0.0
    %1055 = vmatpush1.msra.mxu0 0.0
    %1056 = vmatprep.subr.mxu0 0.0
    %1057 = vmatpush1.msra.mxu0 0.0
    %1058 = vmatprep.subr.mxu0 0.0
    %1059 = vmatpush1.msra.mxu0 0.0
    %1060 = vmatprep.subr.mxu0 0.0
    %1061 = vmatpush1.msra.mxu0 0.0
    %1062 = vmatprep.subr.mxu0 0.0
    %1063 = vmatpush1.msra.mxu0 0.0
    %1064 = vmatprep.subr.mxu0 0.0
    %1065 = vmatpush1.msra.mxu0 0.0
    %1066 = vmatprep.subr.mxu0 0.0
    %1067 = vmatpush1.msra.mxu0 %v180
    %1068 = vmatprep.subr.mxu0 0.0
    %1069 = vmatpush1.msra.mxu0 %v179
    %1070 = vmatprep.subr.mxu0 0.0
    %1071 = vmatpush2.msra.mxu0 0.0
    %1072 = vmatprep.subr.mxu0 0.0
    %1073 = vmatpush2.msra.mxu0 0.0
    %1074 = vmatprep.subr.mxu0 0.0
    %1075 = vmatpush2.msra.mxu0 0.0
    %1076 = vmatprep.subr.mxu0 0.0
    %1077 = vmatpush2.msra.mxu0 0.0
    %1078 = vmatprep.subr.mxu0 0.0
    %1079 = vmatpush2.msra.mxu0 0.0
    %1080 = vmatprep.subr.mxu0 0.0
    %1081 = vmatpush2.msra.mxu0 0.0
    %1082 = vmatprep.subr.mxu0 0.0
    %1083 = vmatpush2.msra.mxu0 0.0
    %1084 = vmatprep.subr.mxu0 0.0
    %1085 = vmatpush2.msra.mxu0 0.0
    %1086 = vmatprep.subr.mxu0 0.0
    %1087 = vmatpush2.msra.mxu0 0.0
    %1088 = vmatprep.subr.mxu0 0.0
    %1089 = vmatpush2.msra.mxu0 0.0
    %1090 = vmatprep.subr.mxu0 0.0
    %1091 = vmatpush2.msra.mxu0 0.0
    %1092 = vmatprep.subr.mxu0 0.0
    %1093 = vmatpush2.msra.mxu0 0.0
    %1094 = vmatprep.subr.mxu0 0.0
    %1095 = vmatpush2.msra.mxu0 0.0
    %1096 = vmatprep.subr.mxu0 0.0
    %1097 = vmatpush2.msra.mxu0 0.0
    %1098 = vmatprep.subr.mxu0 0.0
    %1099 = vmatpush2.msra.mxu0 0.0
    %1100 = vmatprep.subr.mxu0 0.0
    %1101 = vmatpush2.msra.mxu0 0.0
    %1102 = vmatprep.mubr.f32.mxu0 0.0
    %1103 = vmatmul.mubr.f32.gmra.mxu0 %v406
    %v1104 = vpop.f32.mrf.mxu0
    %v1105 = vadd.f32 0.0, %v1104
    %v1106 = vpop.f32.mrf.mxu0
    %1107 = vdwg.mxu0
    %v1109 = vrot.slane %v1105, 6
    %v1111 = vadd.f32 %v280, %v1109
    %v1112 = vxor.u32 %v1111, 2147483648
    %v1113 = vmul.f32 %v1112, 1.442695
    %v1114 = vpow.pop %v1113
    %v1115 = vadd.f32 %v1114, 1.0
    %v1116 = vrcp.pop %v1115
    %v1117 = vmul.f32 1.0, %v1116
    %v1118 = vadd.f32 %v1105, %v375
    %v1120 = vrot.slane %v1118, 6
    %1121 = vrot.lane.b32.xlu0 %v1120, 96
    %v1122 = vpop.permute.xlu0 %1121
    %v1124 = vmul.f32 %v1117, %v1122
    %1126 = vrot.lane.b32.xlu0 %v1124, 32
    %v1127 = vpop.permute.xlu0 %1126
    %v1129 = vadd.f32 %v280, %v1127
    %v1130 = vtanh.pop %v1129
    %v1131 = vsub.f32 1.0, %v1117
    %1133 = vrot.lane.b32.xlu0 %v1130, 112
    %v1134 = vpop.permute.xlu0 %1133
    %v1136 = vmul.f32 %v1131, %v1134
    %v1137 = vrot.slane %v396, 6
    %v1139 = vmul.f32 %v1117, %v1137
    %v1140 = vadd.f32 %v1136, %v1139
    %v1142 = vrot.slane %v1140, 2
    %1143 = vrot.lane.b32.xlu0 %v1142, 112
    %v1144 = vpop.permute.xlu0 %1143
    %v1145 = vsel %vm288, %v1144, 0
    %1147 = vmatprep.subr.mxu0 0.0
    %1148 = vmatpush1.msra.mxu0 0.0
    %1149 = vmatprep.subr.mxu0 0.0
    %1150 = vmatpush1.msra.mxu0 0.0
    %1151 = vmatprep.subr.mxu0 0.0
    %1152 = vmatpush1.msra.mxu0 0.0
    %1153 = vmatprep.subr.mxu0 0.0
    %1154 = vmatpush1.msra.mxu0 0.0
    %1155 = vmatprep.subr.mxu0 0.0
    %1156 = vmatpush1.msra.mxu0 0.0
    %1157 = vmatprep.subr.mxu0 0.0
    %1158 = vmatpush1.msra.mxu0 0.0
    %1159 = vmatprep.subr.mxu0 0.0
    %1160 = vmatpush1.msra.mxu0 0.0
    %1161 = vmatprep.subr.mxu0 0.0
    %1162 = vmatpush1.msra.mxu0 0.0
    %1163 = vmatprep.subr.mxu0 0.0
    %1164 = vmatpush1.msra.mxu0 0.0
    %1165 = vmatprep.subr.mxu0 0.0
    %1166 = vmatpush1.msra.mxu0 0.0
    %1167 = vmatprep.subr.mxu0 0.0
    %1168 = vmatpush1.msra.mxu0 0.0
    %1169 = vmatprep.subr.mxu0 0.0
    %1170 = vmatpush1.msra.mxu0 0.0
    %1171 = vmatprep.subr.mxu0 0.0
    %1172 = vmatpush1.msra.mxu0 0.0
    %1173 = vmatprep.subr.mxu0 0.0
    %1174 = vmatpush1.msra.mxu0 0.0
    %1175 = vmatprep.subr.mxu0 0.0
    %1176 = vmatpush1.msra.mxu0 %v174
    %1177 = vmatprep.subr.mxu0 0.0
    %1178 = vmatpush1.msra.mxu0 %v173
    %1179 = vmatprep.subr.mxu0 0.0
    %1180 = vmatpush2.msra.mxu0 0.0
    %1181 = vmatprep.subr.mxu0 0.0
    %1182 = vmatpush2.msra.mxu0 0.0
    %1183 = vmatprep.subr.mxu0 0.0
    %1184 = vmatpush2.msra.mxu0 0.0
    %1185 = vmatprep.subr.mxu0 0.0
    %1186 = vmatpush2.msra.mxu0 0.0
    %1187 = vmatprep.subr.mxu0 0.0
    %1188 = vmatpush2.msra.mxu0 0.0
    %1189 = vmatprep.subr.mxu0 0.0
    %1190 = vmatpush2.msra.mxu0 0.0
    %1191 = vmatprep.subr.mxu0 0.0
    %1192 = vmatpush2.msra.mxu0 0.0
    %1193 = vmatprep.subr.mxu0 0.0
    %1194 = vmatpush2.msra.mxu0 0.0
    %1195 = vmatprep.subr.mxu0 0.0
    %1196 = vmatpush2.msra.mxu0 0.0
    %1197 = vmatprep.subr.mxu0 0.0
    %1198 = vmatpush2.msra.mxu0 0.0
    %1199 = vmatprep.subr.mxu0 0.0
    %1200 = vmatpush2.msra.mxu0 0.0
    %1201 = vmatprep.subr.mxu0 0.0
    %1202 = vmatpush2.msra.mxu0 0.0
    %1203 = vmatprep.subr.mxu0 0.0
    %1204 = vmatpush2.msra.mxu0 0.0
    %1205 = vmatprep.subr.mxu0 0.0
    %1206 = vmatpush2.msra.mxu0 0.0
    %1207 = vmatprep.subr.mxu0 0.0
    %1208 = vmatpush2.msra.mxu0 0.0
    %1209 = vmatprep.subr.mxu0 0.0
    %1210 = vmatpush2.msra.mxu0 0.0
    %1211 = vmatprep.mubr.f32.mxu0 0.0
    %1212 = vmatmul.mubr.f32.gmra.mxu0 %v1145
    %v1213 = vpop.f32.mrf.mxu0
    %v1214 = vadd.f32 %v401, %v1213
    %v1215 = vpop.f32.mrf.mxu0
    %1216 = vdwg.mxu0
    %1217 = vmatprep.subr.mxu0 0.0
    %1218 = vmatpush1.msra.mxu0 0.0
    %1219 = vmatprep.subr.mxu0 0.0
    %1220 = vmatpush1.msra.mxu0 0.0
    %1221 = vmatprep.subr.mxu0 0.0
    %1222 = vmatpush1.msra.mxu0 0.0
    %1223 = vmatprep.subr.mxu0 0.0
    %1224 = vmatpush1.msra.mxu0 0.0
    %1225 = vmatprep.subr.mxu0 0.0
    %1226 = vmatpush1.msra.mxu0 0.0
    %1227 = vmatprep.subr.mxu0 0.0
    %1228 = vmatpush1.msra.mxu0 0.0
    %1229 = vmatprep.subr.mxu0 0.0
    %1230 = vmatpush1.msra.mxu0 0.0
    %1231 = vmatprep.subr.mxu0 0.0
    %1232 = vmatpush1.msra.mxu0 0.0
    %1233 = vmatprep.subr.mxu0 0.0
    %1234 = vmatpush1.msra.mxu0 0.0
    %1235 = vmatprep.subr.mxu0 0.0
    %1236 = vmatpush1.msra.mxu0 0.0
    %1237 = vmatprep.subr.mxu0 0.0
    %1238 = vmatpush1.msra.mxu0 0.0
    %1239 = vmatprep.subr.mxu0 0.0
    %1240 = vmatpush1.msra.mxu0 0.0
    %1241 = vmatprep.subr.mxu0 0.0
    %1242 = vmatpush1.msra.mxu0 0.0
    %1243 = vmatprep.subr.mxu0 0.0
    %1244 = vmatpush1.msra.mxu0 0.0
    %1245 = vmatprep.subr.mxu0 0.0
    %1246 = vmatpush1.msra.mxu0 %v182
    %1247 = vmatprep.subr.mxu0 0.0
    %1248 = vmatpush1.msra.mxu0 %v181
    %1249 = vmatprep.subr.mxu0 0.0
    %1250 = vmatpush2.msra.mxu0 0.0
    %1251 = vmatprep.subr.mxu0 0.0
    %1252 = vmatpush2.msra.mxu0 0.0
    %1253 = vmatprep.subr.mxu0 0.0
    %1254 = vmatpush2.msra.mxu0 0.0
    %1255 = vmatprep.subr.mxu0 0.0
    %1256 = vmatpush2.msra.mxu0 0.0
    %1257 = vmatprep.subr.mxu0 0.0
    %1258 = vmatpush2.msra.mxu0 0.0
    %1259 = vmatprep.subr.mxu0 0.0
    %1260 = vmatpush2.msra.mxu0 0.0
    %1261 = vmatprep.subr.mxu0 0.0
    %1262 = vmatpush2.msra.mxu0 0.0
    %1263 = vmatprep.subr.mxu0 0.0
    %1264 = vmatpush2.msra.mxu0 0.0
    %1265 = vmatprep.subr.mxu0 0.0
    %1266 = vmatpush2.msra.mxu0 0.0
    %1267 = vmatprep.subr.mxu0 0.0
    %1268 = vmatpush2.msra.mxu0 0.0
    %1269 = vmatprep.subr.mxu0 0.0
    %1270 = vmatpush2.msra.mxu0 0.0
    %1271 = vmatprep.subr.mxu0 0.0
    %1272 = vmatpush2.msra.mxu0 0.0
    %1273 = vmatprep.subr.mxu0 0.0
    %1274 = vmatpush2.msra.mxu0 0.0
    %1275 = vmatprep.subr.mxu0 0.0
    %1276 = vmatpush2.msra.mxu0 0.0
    %1277 = vmatprep.subr.mxu0 0.0
    %1278 = vmatpush2.msra.mxu0 0.0
    %1279 = vmatprep.subr.mxu0 0.0
    %1280 = vmatpush2.msra.mxu0 0.0
    %1281 = vmatprep.mubr.f32.mxu0 0.0
    %1282 = vmatmul.mubr.f32.gmra.mxu0 %v592
    %v1283 = vpop.f32.mrf.mxu0
    %v1284 = vadd.f32 0.0, %v1283
    %v1285 = vpop.f32.mrf.mxu0
    %1286 = vdwg.mxu0
    %v1287 = vadd.f32 %v1214, %v1284
    %v1288 = vxor.u32 %v1287, 2147483648
    %v1289 = vmul.f32 %v1288, 1.442695
    %v1290 = vpow.pop %v1289
    %v1291 = vadd.f32 %v1290, 1.0
    %v1292 = vrcp.pop %v1291
    %v1293 = vmul.f32 1.0, %v1292
    %v1294 = vadd.f32 %v1284, %v561
    %1296 = vrot.lane.b32.xlu0 %v1294, 96
    %v1297 = vpop.permute.xlu0 %1296
    %v1299 = vmul.f32 %v1293, %v1297
    %1301 = vrot.lane.b32.xlu0 %v1299, 32
    %v1302 = vpop.permute.xlu0 %1301
    %v1304 = vadd.f32 %v1214, %v1302
    %v1305 = vtanh.pop %v1304
    %v1306 = vsub.f32 1.0, %v1293
    %1308 = vrot.lane.b32.xlu0 %v1305, 112
    %v1309 = vpop.permute.xlu0 %1308
    %v1311 = vmul.f32 %v1306, %v1309
    %v1312 = vmul.f32 %v1293, %v582
    %v1313 = vadd.f32 %v1311, %v1312
    %1315 = vrot.lane.b32.xlu0 %v1313, 112
    %v1316 = vpop.permute.xlu0 %1315
    %v1317 = vsel %vm288, %v1316, 0
    %1319 = vmatprep.subr.mxu0 0.0
    %1320 = vmatpush1.msra.mxu0 0.0
    %1321 = vmatprep.subr.mxu0 0.0
    %1322 = vmatpush1.msra.mxu0 0.0
    %1323 = vmatprep.subr.mxu0 0.0
    %1324 = vmatpush1.msra.mxu0 0.0
    %1325 = vmatprep.subr.mxu0 0.0
    %1326 = vmatpush1.msra.mxu0 0.0
    %1327 = vmatprep.subr.mxu0 0.0
    %1328 = vmatpush1.msra.mxu0 0.0
    %1329 = vmatprep.subr.mxu0 0.0
    %1330 = vmatpush1.msra.mxu0 0.0
    %1331 = vmatprep.subr.mxu0 0.0
    %1332 = vmatpush1.msra.mxu0 0.0
    %1333 = vmatprep.subr.mxu0 0.0
    %1334 = vmatpush1.msra.mxu0 0.0
    %1335 = vmatprep.subr.mxu0 0.0
    %1336 = vmatpush1.msra.mxu0 0.0
    %1337 = vmatprep.subr.mxu0 0.0
    %1338 = vmatpush1.msra.mxu0 0.0
    %1339 = vmatprep.subr.mxu0 0.0
    %1340 = vmatpush1.msra.mxu0 0.0
    %1341 = vmatprep.subr.mxu0 0.0
    %1342 = vmatpush1.msra.mxu0 0.0
    %1343 = vmatprep.subr.mxu0 0.0
    %1344 = vmatpush1.msra.mxu0 0.0
    %1345 = vmatprep.subr.mxu0 0.0
    %1346 = vmatpush1.msra.mxu0 0.0
    %1347 = vmatprep.subr.mxu0 0.0
    %1348 = vmatpush1.msra.mxu0 %v176
    %1349 = vmatprep.subr.mxu0 0.0
    %1350 = vmatpush1.msra.mxu0 %v175
    %1351 = vmatprep.subr.mxu0 0.0
    %1352 = vmatpush2.msra.mxu0 0.0
    %1353 = vmatprep.subr.mxu0 0.0
    %1354 = vmatpush2.msra.mxu0 0.0
    %1355 = vmatprep.subr.mxu0 0.0
    %1356 = vmatpush2.msra.mxu0 0.0
    %1357 = vmatprep.subr.mxu0 0.0
    %1358 = vmatpush2.msra.mxu0 0.0
    %1359 = vmatprep.subr.mxu0 0.0
    %1360 = vmatpush2.msra.mxu0 0.0
    %1361 = vmatprep.subr.mxu0 0.0
    %1362 = vmatpush2.msra.mxu0 0.0
    %1363 = vmatprep.subr.mxu0 0.0
    %1364 = vmatpush2.msra.mxu0 0.0
    %1365 = vmatprep.subr.mxu0 0.0
    %1366 = vmatpush2.msra.mxu0 0.0
    %1367 = vmatprep.subr.mxu0 0.0
    %1368 = vmatpush2.msra.mxu0 0.0
    %1369 = vmatprep.subr.mxu0 0.0
    %1370 = vmatpush2.msra.mxu0 0.0
    %1371 = vmatprep.subr.mxu0 0.0
    %1372 = vmatpush2.msra.mxu0 0.0
    %1373 = vmatprep.subr.mxu0 0.0
    %1374 = vmatpush2.msra.mxu0 0.0
    %1375 = vmatprep.subr.mxu0 0.0
    %1376 = vmatpush2.msra.mxu0 0.0
    %1377 = vmatprep.subr.mxu0 0.0
    %1378 = vmatpush2.msra.mxu0 0.0
    %1379 = vmatprep.subr.mxu0 0.0
    %1380 = vmatpush2.msra.mxu0 0.0
    %1381 = vmatprep.subr.mxu0 0.0
    %1382 = vmatpush2.msra.mxu0 0.0
    %1383 = vmatprep.mubr.f32.mxu0 0.0
    %1384 = vmatmul.mubr.f32.gmra.mxu0 %v1317
    %v1385 = vpop.f32.mrf.mxu0
    %v1386 = vadd.f32 %v587, %v1385
    %v1387 = vpop.f32.mrf.mxu0
    %1388 = vdwg.mxu0
    %1389 = vmatprep.subr.mxu0 0.0
    %1390 = vmatpush1.msra.mxu0 0.0
    %1391 = vmatprep.subr.mxu0 0.0
    %1392 = vmatpush1.msra.mxu0 0.0
    %1393 = vmatprep.subr.mxu0 0.0
    %1394 = vmatpush1.msra.mxu0 0.0
    %1395 = vmatprep.subr.mxu0 0.0
    %1396 = vmatpush1.msra.mxu0 0.0
    %1397 = vmatprep.subr.mxu0 0.0
    %1398 = vmatpush1.msra.mxu0 0.0
    %1399 = vmatprep.subr.mxu0 0.0
    %1400 = vmatpush1.msra.mxu0 0.0
    %1401 = vmatprep.subr.mxu0 0.0
    %1402 = vmatpush1.msra.mxu0 0.0
    %1403 = vmatprep.subr.mxu0 0.0
    %1404 = vmatpush1.msra.mxu0 0.0
    %1405 = vmatprep.subr.mxu0 0.0
    %1406 = vmatpush1.msra.mxu0 0.0
    %1407 = vmatprep.subr.mxu0 0.0
    %1408 = vmatpush1.msra.mxu0 0.0
    %1409 = vmatprep.subr.mxu0 0.0
    %1410 = vmatpush1.msra.mxu0 0.0
    %1411 = vmatprep.subr.mxu0 0.0
    %1412 = vmatpush1.msra.mxu0 0.0
    %1413 = vmatprep.subr.mxu0 0.0
    %1414 = vmatpush1.msra.mxu0 0.0
    %1415 = vmatprep.subr.mxu0 0.0
    %1416 = vmatpush1.msra.mxu0 0.0
    %1417 = vmatprep.subr.mxu0 0.0
    %1418 = vmatpush1.msra.mxu0 %v184
    %1419 = vmatprep.subr.mxu0 0.0
    %1420 = vmatpush1.msra.mxu0 %v183
    %1421 = vmatprep.subr.mxu0 0.0
    %1422 = vmatpush2.msra.mxu0 0.0
    %1423 = vmatprep.subr.mxu0 0.0
    %1424 = vmatpush2.msra.mxu0 0.0
    %1425 = vmatprep.subr.mxu0 0.0
    %1426 = vmatpush2.msra.mxu0 0.0
    %1427 = vmatprep.subr.mxu0 0.0
    %1428 = vmatpush2.msra.mxu0 0.0
    %1429 = vmatprep.subr.mxu0 0.0
    %1430 = vmatpush2.msra.mxu0 0.0
    %1431 = vmatprep.subr.mxu0 0.0
    %1432 = vmatpush2.msra.mxu0 0.0
    %1433 = vmatprep.subr.mxu0 0.0
    %1434 = vmatpush2.msra.mxu0 0.0
    %1435 = vmatprep.subr.mxu0 0.0
    %1436 = vmatpush2.msra.mxu0 0.0
    %1437 = vmatprep.subr.mxu0 0.0
    %1438 = vmatpush2.msra.mxu0 0.0
    %1439 = vmatprep.subr.mxu0 0.0
    %1440 = vmatpush2.msra.mxu0 0.0
    %1441 = vmatprep.subr.mxu0 0.0
    %1442 = vmatpush2.msra.mxu0 0.0
    %1443 = vmatprep.subr.mxu0 0.0
    %1444 = vmatpush2.msra.mxu0 0.0
    %1445 = vmatprep.subr.mxu0 0.0
    %1446 = vmatpush2.msra.mxu0 0.0
    %1447 = vmatprep.subr.mxu0 0.0
    %1448 = vmatpush2.msra.mxu0 0.0
    %1449 = vmatprep.subr.mxu0 0.0
    %1450 = vmatpush2.msra.mxu0 0.0
    %1451 = vmatprep.subr.mxu0 0.0
    %1452 = vmatpush2.msra.mxu0 0.0
    %1453 = vmatprep.mubr.f32.mxu0 0.0
    %1454 = vmatmul.mubr.f32.gmra.mxu0 %v778
    %v1455 = vpop.f32.mrf.mxu0
    %v1456 = vadd.f32 0.0, %v1455
    %v1457 = vpop.f32.mrf.mxu0
    %1458 = vdwg.mxu0
    %v1459 = vadd.f32 %v1386, %v1456
    %v1460 = vxor.u32 %v1459, 2147483648
    %v1461 = vmul.f32 %v1460, 1.442695
    %v1462 = vpow.pop %v1461
    %v1463 = vadd.f32 %v1462, 1.0
    %v1464 = vrcp.pop %v1463
    %v1465 = vmul.f32 1.0, %v1464
    %v1466 = vadd.f32 %v1456, %v747
    %1468 = vrot.lane.b32.xlu0 %v1466, 96
    %v1469 = vpop.permute.xlu0 %1468
    %v1471 = vmul.f32 %v1465, %v1469
    %1473 = vrot.lane.b32.xlu0 %v1471, 32
    %v1474 = vpop.permute.xlu0 %1473
    %v1476 = vadd.f32 %v1386, %v1474
    %v1477 = vtanh.pop %v1476
    %v1478 = vsub.f32 1.0, %v1465
    %1480 = vrot.lane.b32.xlu0 %v1477, 112
    %v1481 = vpop.permute.xlu0 %1480
    %v1483 = vmul.f32 %v1478, %v1481
    %v1484 = vmul.f32 %v1465, %v768
    %v1485 = vadd.f32 %v1483, %v1484
    %1487 = vrot.lane.b32.xlu0 %v1485, 112
    %v1488 = vpop.permute.xlu0 %1487
    %v1489 = vsel %vm288, %v1488, 0
    %1491 = vmatprep.subr.mxu0 0.0
    %1492 = vmatpush1.msra.mxu0 0.0
    %1493 = vmatprep.subr.mxu0 0.0
    %1494 = vmatpush1.msra.mxu0 0.0
    %1495 = vmatprep.subr.mxu0 0.0
    %1496 = vmatpush1.msra.mxu0 0.0
    %1497 = vmatprep.subr.mxu0 0.0
    %1498 = vmatpush1.msra.mxu0 0.0
    %1499 = vmatprep.subr.mxu0 0.0
    %1500 = vmatpush1.msra.mxu0 0.0
    %1501 = vmatprep.subr.mxu0 0.0
    %1502 = vmatpush1.msra.mxu0 0.0
    %1503 = vmatprep.subr.mxu0 0.0
    %1504 = vmatpush1.msra.mxu0 0.0
    %1505 = vmatprep.subr.mxu0 0.0
    %1506 = vmatpush1.msra.mxu0 0.0
    %1507 = vmatprep.subr.mxu0 0.0
    %1508 = vmatpush1.msra.mxu0 0.0
    %1509 = vmatprep.subr.mxu0 0.0
    %1510 = vmatpush1.msra.mxu0 0.0
    %1511 = vmatprep.subr.mxu0 0.0
    %1512 = vmatpush1.msra.mxu0 0.0
    %1513 = vmatprep.subr.mxu0 0.0
    %1514 = vmatpush1.msra.mxu0 0.0
    %1515 = vmatprep.subr.mxu0 0.0
    %1516 = vmatpush1.msra.mxu0 0.0
    %1517 = vmatprep.subr.mxu0 0.0
    %1518 = vmatpush1.msra.mxu0 0.0
    %1519 = vmatprep.subr.mxu0 0.0
    %1520 = vmatpush1.msra.mxu0 %v178
    %1521 = vmatprep.subr.mxu0 0.0
    %1522 = vmatpush1.msra.mxu0 %v177
    %1523 = vmatprep.subr.mxu0 0.0
    %1524 = vmatpush2.msra.mxu0 0.0
    %1525 = vmatprep.subr.mxu0 0.0
    %1526 = vmatpush2.msra.mxu0 0.0
    %1527 = vmatprep.subr.mxu0 0.0
    %1528 = vmatpush2.msra.mxu0 0.0
    %1529 = vmatprep.subr.mxu0 0.0
    %1530 = vmatpush2.msra.mxu0 0.0
    %1531 = vmatprep.subr.mxu0 0.0
    %1532 = vmatpush2.msra.mxu0 0.0
    %1533 = vmatprep.subr.mxu0 0.0
    %1534 = vmatpush2.msra.mxu0 0.0
    %1535 = vmatprep.subr.mxu0 0.0
    %1536 = vmatpush2.msra.mxu0 0.0
    %1537 = vmatprep.subr.mxu0 0.0
    %1538 = vmatpush2.msra.mxu0 0.0
    %1539 = vmatprep.subr.mxu0 0.0
    %1540 = vmatpush2.msra.mxu0 0.0
    %1541 = vmatprep.subr.mxu0 0.0
    %1542 = vmatpush2.msra.mxu0 0.0
    %1543 = vmatprep.subr.mxu0 0.0
    %1544 = vmatpush2.msra.mxu0 0.0
    %1545 = vmatprep.subr.mxu0 0.0
    %1546 = vmatpush2.msra.mxu0 0.0
    %1547 = vmatprep.subr.mxu0 0.0
    %1548 = vmatpush2.msra.mxu0 0.0
    %1549 = vmatprep.subr.mxu0 0.0
    %1550 = vmatpush2.msra.mxu0 0.0
    %1551 = vmatprep.subr.mxu0 0.0
    %1552 = vmatpush2.msra.mxu0 0.0
    %1553 = vmatprep.subr.mxu0 0.0
    %1554 = vmatpush2.msra.mxu0 0.0
    %1555 = vmatprep.mubr.f32.mxu0 0.0
    %1556 = vmatmul.mubr.f32.gmra.mxu0 %v1489
    %v1557 = vpop.f32.mrf.mxu0
    %v1558 = vadd.f32 %v773, %v1557
    %v1559 = vpop.f32.mrf.mxu0
    %1560 = vdwg.mxu0
    %1561 = vmatprep.subr.mxu0 0.0
    %1562 = vmatpush1.msra.mxu0 0.0
    %1563 = vmatprep.subr.mxu0 0.0
    %1564 = vmatpush1.msra.mxu0 0.0
    %1565 = vmatprep.subr.mxu0 0.0
    %1566 = vmatpush1.msra.mxu0 0.0
    %1567 = vmatprep.subr.mxu0 0.0
    %1568 = vmatpush1.msra.mxu0 0.0
    %1569 = vmatprep.subr.mxu0 0.0
    %1570 = vmatpush1.msra.mxu0 0.0
    %1571 = vmatprep.subr.mxu0 0.0
    %1572 = vmatpush1.msra.mxu0 0.0
    %1573 = vmatprep.subr.mxu0 0.0
    %1574 = vmatpush1.msra.mxu0 0.0
    %1575 = vmatprep.subr.mxu0 0.0
    %1576 = vmatpush1.msra.mxu0 0.0
    %1577 = vmatprep.subr.mxu0 0.0
    %1578 = vmatpush1.msra.mxu0 0.0
    %1579 = vmatprep.subr.mxu0 0.0
    %1580 = vmatpush1.msra.mxu0 0.0
    %1581 = vmatprep.subr.mxu0 0.0
    %1582 = vmatpush1.msra.mxu0 0.0
    %1583 = vmatprep.subr.mxu0 0.0
    %1584 = vmatpush1.msra.mxu0 0.0
    %1585 = vmatprep.subr.mxu0 0.0
    %1586 = vmatpush1.msra.mxu0 0.0
    %1587 = vmatprep.subr.mxu0 0.0
    %1588 = vmatpush1.msra.mxu0 0.0
    %1589 = vmatprep.subr.mxu0 0.0
    %1590 = vmatpush1.msra.mxu0 %v186
    %1591 = vmatprep.subr.mxu0 0.0
    %1592 = vmatpush1.msra.mxu0 %v185
    %1593 = vmatprep.subr.mxu0 0.0
    %1594 = vmatpush2.msra.mxu0 0.0
    %1595 = vmatprep.subr.mxu0 0.0
    %1596 = vmatpush2.msra.mxu0 0.0
    %1597 = vmatprep.subr.mxu0 0.0
    %1598 = vmatpush2.msra.mxu0 0.0
    %1599 = vmatprep.subr.mxu0 0.0
    %1600 = vmatpush2.msra.mxu0 0.0
    %1601 = vmatprep.subr.mxu0 0.0
    %1602 = vmatpush2.msra.mxu0 0.0
    %1603 = vmatprep.subr.mxu0 0.0
    %1604 = vmatpush2.msra.mxu0 0.0
    %1605 = vmatprep.subr.mxu0 0.0
    %1606 = vmatpush2.msra.mxu0 0.0
    %1607 = vmatprep.subr.mxu0 0.0
    %1608 = vmatpush2.msra.mxu0 0.0
    %1609 = vmatprep.subr.mxu0 0.0
    %1610 = vmatpush2.msra.mxu0 0.0
    %1611 = vmatprep.subr.mxu0 0.0
    %1612 = vmatpush2.msra.mxu0 0.0
    %1613 = vmatprep.subr.mxu0 0.0
    %1614 = vmatpush2.msra.mxu0 0.0
    %1615 = vmatprep.subr.mxu0 0.0
    %1616 = vmatpush2.msra.mxu0 0.0
    %1617 = vmatprep.subr.mxu0 0.0
    %1618 = vmatpush2.msra.mxu0 0.0
    %1619 = vmatprep.subr.mxu0 0.0
    %1620 = vmatpush2.msra.mxu0 0.0
    %1621 = vmatprep.subr.mxu0 0.0
    %1622 = vmatpush2.msra.mxu0 0.0
    %1623 = vmatprep.subr.mxu0 0.0
    %1624 = vmatpush2.msra.mxu0 0.0
    %1625 = vmatprep.mubr.f32.mxu0 0.0
    %1626 = vmatmul.mubr.f32.gmra.mxu0 %v964
    %v1627 = vpop.f32.mrf.mxu0
    %v1628 = vadd.f32 0.0, %v1627
    %v1629 = vpop.f32.mrf.mxu0
    %1630 = vdwg.mxu0
    %v1631 = vadd.f32 %v1558, %v1628
    %v1632 = vxor.u32 %v1631, 2147483648
    %v1633 = vmul.f32 %v1632, 1.442695
    %v1634 = vpow.pop %v1633
    %v1635 = vadd.f32 %v1634, 1.0
    %v1636 = vrcp.pop %v1635
    %v1637 = vmul.f32 1.0, %v1636
    %v1638 = vadd.f32 %v1628, %v933
    %1640 = vrot.lane.b32.xlu0 %v1638, 96
    %v1641 = vpop.permute.xlu0 %1640
    %v1643 = vmul.f32 %v1637, %v1641
    %1645 = vrot.lane.b32.xlu0 %v1643, 32
    %v1646 = vpop.permute.xlu0 %1645
    %v1648 = vadd.f32 %v1558, %v1646
    %v1649 = vtanh.pop %v1648
    %v1650 = vsub.f32 1.0, %v1637
    %1652 = vrot.lane.b32.xlu0 %v1649, 112
    %v1653 = vpop.permute.xlu0 %1652
    %v1655 = vmul.f32 %v1650, %v1653
    %v1656 = vmul.f32 %v1637, %v954
    %v1657 = vadd.f32 %v1655, %v1656
    %1659 = vrot.lane.b32.xlu0 %v1657, 112
    %v1660 = vpop.permute.xlu0 %1659
    %v1661 = vsel %vm288, %v1660, 0
    %1663 = vmatprep.subr.mxu0 0.0
    %1664 = vmatpush1.msra.mxu0 0.0
    %1665 = vmatprep.subr.mxu0 0.0
    %1666 = vmatpush1.msra.mxu0 0.0
    %1667 = vmatprep.subr.mxu0 0.0
    %1668 = vmatpush1.msra.mxu0 0.0
    %1669 = vmatprep.subr.mxu0 0.0
    %1670 = vmatpush1.msra.mxu0 0.0
    %1671 = vmatprep.subr.mxu0 0.0
    %1672 = vmatpush1.msra.mxu0 0.0
    %1673 = vmatprep.subr.mxu0 0.0
    %1674 = vmatpush1.msra.mxu0 0.0
    %1675 = vmatprep.subr.mxu0 0.0
    %1676 = vmatpush1.msra.mxu0 0.0
    %1677 = vmatprep.subr.mxu0 0.0
    %1678 = vmatpush1.msra.mxu0 0.0
    %1679 = vmatprep.subr.mxu0 0.0
    %1680 = vmatpush1.msra.mxu0 0.0
    %1681 = vmatprep.subr.mxu0 0.0
    %1682 = vmatpush1.msra.mxu0 0.0
    %1683 = vmatprep.subr.mxu0 0.0
    %1684 = vmatpush1.msra.mxu0 0.0
    %1685 = vmatprep.subr.mxu0 0.0
    %1686 = vmatpush1.msra.mxu0 0.0
    %1687 = vmatprep.subr.mxu0 0.0
    %1688 = vmatpush1.msra.mxu0 0.0
    %1689 = vmatprep.subr.mxu0 0.0
    %1690 = vmatpush1.msra.mxu0 0.0
    %1691 = vmatprep.subr.mxu0 0.0
    %1692 = vmatpush1.msra.mxu0 %v196
    %1693 = vmatprep.subr.mxu0 0.0
    %1694 = vmatpush1.msra.mxu0 %v195
    %1695 = vmatprep.subr.mxu0 0.0
    %1696 = vmatpush2.msra.mxu0 0.0
    %1697 = vmatprep.subr.mxu0 0.0
    %1698 = vmatpush2.msra.mxu0 0.0
    %1699 = vmatprep.subr.mxu0 0.0
    %1700 = vmatpush2.msra.mxu0 0.0
    %1701 = vmatprep.subr.mxu0 0.0
    %1702 = vmatpush2.msra.mxu0 0.0
    %1703 = vmatprep.subr.mxu0 0.0
    %1704 = vmatpush2.msra.mxu0 0.0
    %1705 = vmatprep.subr.mxu0 0.0
    %1706 = vmatpush2.msra.mxu0 0.0
    %1707 = vmatprep.subr.mxu0 0.0
    %1708 = vmatpush2.msra.mxu0 0.0
    %1709 = vmatprep.subr.mxu0 0.0
    %1710 = vmatpush2.msra.mxu0 0.0
    %1711 = vmatprep.subr.mxu0 0.0
    %1712 = vmatpush2.msra.mxu0 0.0
    %1713 = vmatprep.subr.mxu0 0.0
    %1714 = vmatpush2.msra.mxu0 0.0
    %1715 = vmatprep.subr.mxu0 0.0
    %1716 = vmatpush2.msra.mxu0 0.0
    %1717 = vmatprep.subr.mxu0 0.0
    %1718 = vmatpush2.msra.mxu0 0.0
    %1719 = vmatprep.subr.mxu0 0.0
    %1720 = vmatpush2.msra.mxu0 0.0
    %1721 = vmatprep.subr.mxu0 0.0
    %1722 = vmatpush2.msra.mxu0 0.0
    %1723 = vmatprep.subr.mxu0 0.0
    %1724 = vmatpush2.msra.mxu0 0.0
    %1725 = vmatprep.subr.mxu0 0.0
    %1726 = vmatpush2.msra.mxu0 0.0
    %1727 = vmatprep.mubr.f32.mxu0 0.0
    %1728 = vmatmul.mubr.f32.gmra.mxu0 %v1661
    %v1729 = vpop.f32.mrf.mxu0
    %v1730 = vadd.f32 %v959, %v1729
    %v1731 = vpop.f32.mrf.mxu0
    %1732 = vdwg.mxu0
    %1733 = vst.msk [vmem:[%s19 + $0x2] sm:$0x3] %vm1036, %v1730
    %1734 = vmatprep.subr.mxu0 0.0
    %1735 = vmatpush1.msra.mxu0 0.0
    %1736 = vmatprep.subr.mxu0 0.0
    %1737 = vmatpush1.msra.mxu0 0.0
    %1738 = vmatprep.subr.mxu0 0.0
    %1739 = vmatpush1.msra.mxu0 0.0
    %1740 = vmatprep.subr.mxu0 0.0
    %1741 = vmatpush1.msra.mxu0 0.0
    %1742 = vmatprep.subr.mxu0 0.0
    %1743 = vmatpush1.msra.mxu0 0.0
    %1744 = vmatprep.subr.mxu0 0.0
    %1745 = vmatpush1.msra.mxu0 0.0
    %1746 = vmatprep.subr.mxu0 0.0
    %1747 = vmatpush1.msra.mxu0 0.0
    %1748 = vmatprep.subr.mxu0 0.0
    %1749 = vmatpush1.msra.mxu0 0.0
    %1750 = vmatprep.subr.mxu0 0.0
    %1751 = vmatpush1.msra.mxu0 0.0
    %1752 = vmatprep.subr.mxu0 0.0
    %1753 = vmatpush1.msra.mxu0 0.0
    %1754 = vmatprep.subr.mxu0 0.0
    %1755 = vmatpush1.msra.mxu0 0.0
    %1756 = vmatprep.subr.mxu0 0.0
    %1757 = vmatpush1.msra.mxu0 0.0
    %1758 = vmatprep.subr.mxu0 0.0
    %1759 = vmatpush1.msra.mxu0 0.0
    %1760 = vmatprep.subr.mxu0 0.0
    %1761 = vmatpush1.msra.mxu0 0.0
    %1762 = vmatprep.subr.mxu0 0.0
    %1763 = vmatpush1.msra.mxu0 %v180
    %1764 = vmatprep.subr.mxu0 0.0
    %1765 = vmatpush1.msra.mxu0 %v179
    %1766 = vmatprep.subr.mxu0 0.0
    %1767 = vmatpush2.msra.mxu0 0.0
    %1768 = vmatprep.subr.mxu0 0.0
    %1769 = vmatpush2.msra.mxu0 0.0
    %1770 = vmatprep.subr.mxu0 0.0
    %1771 = vmatpush2.msra.mxu0 0.0
    %1772 = vmatprep.subr.mxu0 0.0
    %1773 = vmatpush2.msra.mxu0 0.0
    %1774 = vmatprep.subr.mxu0 0.0
    %1775 = vmatpush2.msra.mxu0 0.0
    %1776 = vmatprep.subr.mxu0 0.0
    %1777 = vmatpush2.msra.mxu0 0.0
    %1778 = vmatprep.subr.mxu0 0.0
    %1779 = vmatpush2.msra.mxu0 0.0
    %1780 = vmatprep.subr.mxu0 0.0
    %1781 = vmatpush2.msra.mxu0 0.0
    %1782 = vmatprep.subr.mxu0 0.0
    %1783 = vmatpush2.msra.mxu0 0.0
    %1784 = vmatprep.subr.mxu0 0.0
    %1785 = vmatpush2.msra.mxu0 0.0
    %1786 = vmatprep.subr.mxu0 0.0
    %1787 = vmatpush2.msra.mxu0 0.0
    %1788 = vmatprep.subr.mxu0 0.0
    %1789 = vmatpush2.msra.mxu0 0.0
    %1790 = vmatprep.subr.mxu0 0.0
    %1791 = vmatpush2.msra.mxu0 0.0
    %1792 = vmatprep.subr.mxu0 0.0
    %1793 = vmatpush2.msra.mxu0 0.0
    %1794 = vmatprep.subr.mxu0 0.0
    %1795 = vmatpush2.msra.mxu0 0.0
    %1796 = vmatprep.subr.mxu0 0.0
    %1797 = vmatpush2.msra.mxu0 0.0
    %1798 = vmatprep.mubr.f32.mxu0 0.0
    %1799 = vmatmul.mubr.f32.gmra.mxu0 %v1145
    %v1800 = vpop.f32.mrf.mxu0
    %v1801 = vadd.f32 0.0, %v1800
    %v1802 = vpop.f32.mrf.mxu0
    %1803 = vdwg.mxu0
    %v1805 = vrot.slane %v1801, 4
    %v1807 = vadd.f32 %v280, %v1805
    %v1808 = vxor.u32 %v1807, 2147483648
    %v1809 = vmul.f32 %v1808, 1.442695
    %v1810 = vpow.pop %v1809
    %v1811 = vadd.f32 %v1810, 1.0
    %v1812 = vrcp.pop %v1811
    %v1813 = vmul.f32 1.0, %v1812
    %v1814 = vadd.f32 %v1801, %v375
    %v1816 = vrot.slane %v1814, 4
    %1817 = vrot.lane.b32.xlu0 %v1816, 96
    %v1818 = vpop.permute.xlu0 %1817
    %v1820 = vmul.f32 %v1813, %v1818
    %1822 = vrot.lane.b32.xlu0 %v1820, 32
    %v1823 = vpop.permute.xlu0 %1822
    %v1825 = vadd.f32 %v280, %v1823
    %v1826 = vtanh.pop %v1825
    %v1827 = vsub.f32 1.0, %v1813
    %1829 = vrot.lane.b32.xlu0 %v1826, 112
    %v1830 = vpop.permute.xlu0 %1829
    %v1832 = vmul.f32 %v1827, %v1830
    %v1833 = vrot.slane %v1140, 6
    %v1835 = vmul.f32 %v1813, %v1833
    %v1836 = vadd.f32 %v1832, %v1835
    %v1838 = vrot.slane %v1836, 4
    %1839 = vrot.lane.b32.xlu0 %v1838, 112
    %v1840 = vpop.permute.xlu0 %1839
    %v1841 = vsel %vm288, %v1840, 0
    %1843 = vmatprep.subr.mxu0 0.0
    %1844 = vmatpush1.msra.mxu0 0.0
    %1845 = vmatprep.subr.mxu0 0.0
    %1846 = vmatpush1.msra.mxu0 0.0
    %1847 = vmatprep.subr.mxu0 0.0
    %1848 = vmatpush1.msra.mxu0 0.0
    %1849 = vmatprep.subr.mxu0 0.0
    %1850 = vmatpush1.msra.mxu0 0.0
    %1851 = vmatprep.subr.mxu0 0.0
    %1852 = vmatpush1.msra.mxu0 0.0
    %1853 = vmatprep.subr.mxu0 0.0
    %1854 = vmatpush1.msra.mxu0 0.0
    %1855 = vmatprep.subr.mxu0 0.0
    %1856 = vmatpush1.msra.mxu0 0.0
    %1857 = vmatprep.subr.mxu0 0.0
    %1858 = vmatpush1.msra.mxu0 0.0
    %1859 = vmatprep.subr.mxu0 0.0
    %1860 = vmatpush1.msra.mxu0 0.0
    %1861 = vmatprep.subr.mxu0 0.0
    %1862 = vmatpush1.msra.mxu0 0.0
    %1863 = vmatprep.subr.mxu0 0.0
    %1864 = vmatpush1.msra.mxu0 0.0
    %1865 = vmatprep.subr.mxu0 0.0
    %1866 = vmatpush1.msra.mxu0 0.0
    %1867 = vmatprep.subr.mxu0 0.0
    %1868 = vmatpush1.msra.mxu0 0.0
    %1869 = vmatprep.subr.mxu0 0.0
    %1870 = vmatpush1.msra.mxu0 0.0
    %1871 = vmatprep.subr.mxu0 0.0
    %1872 = vmatpush1.msra.mxu0 %v174
    %1873 = vmatprep.subr.mxu0 0.0
    %1874 = vmatpush1.msra.mxu0 %v173
    %1875 = vmatprep.subr.mxu0 0.0
    %1876 = vmatpush2.msra.mxu0 0.0
    %1877 = vmatprep.subr.mxu0 0.0
    %1878 = vmatpush2.msra.mxu0 0.0
    %1879 = vmatprep.subr.mxu0 0.0
    %1880 = vmatpush2.msra.mxu0 0.0
    %1881 = vmatprep.subr.mxu0 0.0
    %1882 = vmatpush2.msra.mxu0 0.0
    %1883 = vmatprep.subr.mxu0 0.0
    %1884 = vmatpush2.msra.mxu0 0.0
    %1885 = vmatprep.subr.mxu0 0.0
    %1886 = vmatpush2.msra.mxu0 0.0
    %1887 = vmatprep.subr.mxu0 0.0
    %1888 = vmatpush2.msra.mxu0 0.0
    %1889 = vmatprep.subr.mxu0 0.0
    %1890 = vmatpush2.msra.mxu0 0.0
    %1891 = vmatprep.subr.mxu0 0.0
    %1892 = vmatpush2.msra.mxu0 0.0
    %1893 = vmatprep.subr.mxu0 0.0
    %1894 = vmatpush2.msra.mxu0 0.0
    %1895 = vmatprep.subr.mxu0 0.0
    %1896 = vmatpush2.msra.mxu0 0.0
    %1897 = vmatprep.subr.mxu0 0.0
    %1898 = vmatpush2.msra.mxu0 0.0
    %1899 = vmatprep.subr.mxu0 0.0
    %1900 = vmatpush2.msra.mxu0 0.0
    %1901 = vmatprep.subr.mxu0 0.0
    %1902 = vmatpush2.msra.mxu0 0.0
    %1903 = vmatprep.subr.mxu0 0.0
    %1904 = vmatpush2.msra.mxu0 0.0
    %1905 = vmatprep.subr.mxu0 0.0
    %1906 = vmatpush2.msra.mxu0 0.0
    %1907 = vmatprep.mubr.f32.mxu0 0.0
    %1908 = vmatmul.mubr.f32.gmra.mxu0 %v1841
    %v1909 = vpop.f32.mrf.mxu0
    %v1910 = vadd.f32 %v401, %v1909
    %v1911 = vpop.f32.mrf.mxu0
    %1912 = vdwg.mxu0
    %1913 = vmatprep.subr.mxu0 0.0
    %1914 = vmatpush1.msra.mxu0 0.0
    %1915 = vmatprep.subr.mxu0 0.0
    %1916 = vmatpush1.msra.mxu0 0.0
    %1917 = vmatprep.subr.mxu0 0.0
    %1918 = vmatpush1.msra.mxu0 0.0
    %1919 = vmatprep.subr.mxu0 0.0
    %1920 = vmatpush1.msra.mxu0 0.0
    %1921 = vmatprep.subr.mxu0 0.0
    %1922 = vmatpush1.msra.mxu0 0.0
    %1923 = vmatprep.subr.mxu0 0.0
    %1924 = vmatpush1.msra.mxu0 0.0
    %1925 = vmatprep.subr.mxu0 0.0
    %1926 = vmatpush1.msra.mxu0 0.0
    %1927 = vmatprep.subr.mxu0 0.0
    %1928 = vmatpush1.msra.mxu0 0.0
    %1929 = vmatprep.subr.mxu0 0.0
    %1930 = vmatpush1.msra.mxu0 0.0
    %1931 = vmatprep.subr.mxu0 0.0
    %1932 = vmatpush1.msra.mxu0 0.0
    %1933 = vmatprep.subr.mxu0 0.0
    %1934 = vmatpush1.msra.mxu0 0.0
    %1935 = vmatprep.subr.mxu0 0.0
    %1936 = vmatpush1.msra.mxu0 0.0
    %1937 = vmatprep.subr.mxu0 0.0
    %1938 = vmatpush1.msra.mxu0 0.0
    %1939 = vmatprep.subr.mxu0 0.0
    %1940 = vmatpush1.msra.mxu0 0.0
    %1941 = vmatprep.subr.mxu0 0.0
    %1942 = vmatpush1.msra.mxu0 %v182
    %1943 = vmatprep.subr.mxu0 0.0
    %1944 = vmatpush1.msra.mxu0 %v181
    %1945 = vmatprep.subr.mxu0 0.0
    %1946 = vmatpush2.msra.mxu0 0.0
    %1947 = vmatprep.subr.mxu0 0.0
    %1948 = vmatpush2.msra.mxu0 0.0
    %1949 = vmatprep.subr.mxu0 0.0
    %1950 = vmatpush2.msra.mxu0 0.0
    %1951 = vmatprep.subr.mxu0 0.0
    %1952 = vmatpush2.msra.mxu0 0.0
    %1953 = vmatprep.subr.mxu0 0.0
    %1954 = vmatpush2.msra.mxu0 0.0
    %1955 = vmatprep.subr.mxu0 0.0
    %1956 = vmatpush2.msra.mxu0 0.0
    %1957 = vmatprep.subr.mxu0 0.0
    %1958 = vmatpush2.msra.mxu0 0.0
    %1959 = vmatprep.subr.mxu0 0.0
    %1960 = vmatpush2.msra.mxu0 0.0
    %1961 = vmatprep.subr.mxu0 0.0
    %1962 = vmatpush2.msra.mxu0 0.0
    %1963 = vmatprep.subr.mxu0 0.0
    %1964 = vmatpush2.msra.mxu0 0.0
    %1965 = vmatprep.subr.mxu0 0.0
    %1966 = vmatpush2.msra.mxu0 0.0
    %1967 = vmatprep.subr.mxu0 0.0
    %1968 = vmatpush2.msra.mxu0 0.0
    %1969 = vmatprep.subr.mxu0 0.0
    %1970 = vmatpush2.msra.mxu0 0.0
    %1971 = vmatprep.subr.mxu0 0.0
    %1972 = vmatpush2.msra.mxu0 0.0
    %1973 = vmatprep.subr.mxu0 0.0
    %1974 = vmatpush2.msra.mxu0 0.0
    %1975 = vmatprep.subr.mxu0 0.0
    %1976 = vmatpush2.msra.mxu0 0.0
    %1977 = vmatprep.mubr.f32.mxu0 0.0
    %1978 = vmatmul.mubr.f32.gmra.mxu0 %v1317
    %v1979 = vpop.f32.mrf.mxu0
    %v1980 = vadd.f32 0.0, %v1979
    %v1981 = vpop.f32.mrf.mxu0
    %1982 = vdwg.mxu0
    %v1983 = vadd.f32 %v1910, %v1980
    %v1984 = vxor.u32 %v1983, 2147483648
    %v1985 = vmul.f32 %v1984, 1.442695
    %v1986 = vpow.pop %v1985
    %v1987 = vadd.f32 %v1986, 1.0
    %v1988 = vrcp.pop %v1987
    %v1989 = vmul.f32 1.0, %v1988
    %v1990 = vadd.f32 %v1980, %v561
    %1992 = vrot.lane.b32.xlu0 %v1990, 96
    %v1993 = vpop.permute.xlu0 %1992
    %v1995 = vmul.f32 %v1989, %v1993
    %1997 = vrot.lane.b32.xlu0 %v1995, 32
    %v1998 = vpop.permute.xlu0 %1997
    %v2000 = vadd.f32 %v1910, %v1998
    %v2001 = vtanh.pop %v2000
    %v2002 = vsub.f32 1.0, %v1989
    %2004 = vrot.lane.b32.xlu0 %v2001, 112
    %v2005 = vpop.permute.xlu0 %2004
    %v2007 = vmul.f32 %v2002, %v2005
    %v2008 = vmul.f32 %v1989, %v1313
    %v2009 = vadd.f32 %v2007, %v2008
    %2011 = vrot.lane.b32.xlu0 %v2009, 112
    %v2012 = vpop.permute.xlu0 %2011
    %v2013 = vsel %vm288, %v2012, 0
    %2015 = vmatprep.subr.mxu0 0.0
    %2016 = vmatpush1.msra.mxu0 0.0
    %2017 = vmatprep.subr.mxu0 0.0
    %2018 = vmatpush1.msra.mxu0 0.0
    %2019 = vmatprep.subr.mxu0 0.0
    %2020 = vmatpush1.msra.mxu0 0.0
    %2021 = vmatprep.subr.mxu0 0.0
    %2022 = vmatpush1.msra.mxu0 0.0
    %2023 = vmatprep.subr.mxu0 0.0
    %2024 = vmatpush1.msra.mxu0 0.0
    %2025 = vmatprep.subr.mxu0 0.0
    %2026 = vmatpush1.msra.mxu0 0.0
    %2027 = vmatprep.subr.mxu0 0.0
    %2028 = vmatpush1.msra.mxu0 0.0
    %2029 = vmatprep.subr.mxu0 0.0
    %2030 = vmatpush1.msra.mxu0 0.0
    %2031 = vmatprep.subr.mxu0 0.0
    %2032 = vmatpush1.msra.mxu0 0.0
    %2033 = vmatprep.subr.mxu0 0.0
    %2034 = vmatpush1.msra.mxu0 0.0
    %2035 = vmatprep.subr.mxu0 0.0
    %2036 = vmatpush1.msra.mxu0 0.0
    %2037 = vmatprep.subr.mxu0 0.0
    %2038 = vmatpush1.msra.mxu0 0.0
    %2039 = vmatprep.subr.mxu0 0.0
    %2040 = vmatpush1.msra.mxu0 0.0
    %2041 = vmatprep.subr.mxu0 0.0
    %2042 = vmatpush1.msra.mxu0 0.0
    %2043 = vmatprep.subr.mxu0 0.0
    %2044 = vmatpush1.msra.mxu0 %v176
    %2045 = vmatprep.subr.mxu0 0.0
    %2046 = vmatpush1.msra.mxu0 %v175
    %2047 = vmatprep.subr.mxu0 0.0
    %2048 = vmatpush2.msra.mxu0 0.0
    %2049 = vmatprep.subr.mxu0 0.0
    %2050 = vmatpush2.msra.mxu0 0.0
    %2051 = vmatprep.subr.mxu0 0.0
    %2052 = vmatpush2.msra.mxu0 0.0
    %2053 = vmatprep.subr.mxu0 0.0
    %2054 = vmatpush2.msra.mxu0 0.0
    %2055 = vmatprep.subr.mxu0 0.0
    %2056 = vmatpush2.msra.mxu0 0.0
    %2057 = vmatprep.subr.mxu0 0.0
    %2058 = vmatpush2.msra.mxu0 0.0
    %2059 = vmatprep.subr.mxu0 0.0
    %2060 = vmatpush2.msra.mxu0 0.0
    %2061 = vmatprep.subr.mxu0 0.0
    %2062 = vmatpush2.msra.mxu0 0.0
    %2063 = vmatprep.subr.mxu0 0.0
    %2064 = vmatpush2.msra.mxu0 0.0
    %2065 = vmatprep.subr.mxu0 0.0
    %2066 = vmatpush2.msra.mxu0 0.0
    %2067 = vmatprep.subr.mxu0 0.0
    %2068 = vmatpush2.msra.mxu0 0.0
    %2069 = vmatprep.subr.mxu0 0.0
    %2070 = vmatpush2.msra.mxu0 0.0
    %2071 = vmatprep.subr.mxu0 0.0
    %2072 = vmatpush2.msra.mxu0 0.0
    %2073 = vmatprep.subr.mxu0 0.0
    %2074 = vmatpush2.msra.mxu0 0.0
    %2075 = vmatprep.subr.mxu0 0.0
    %2076 = vmatpush2.msra.mxu0 0.0
    %2077 = vmatprep.subr.mxu0 0.0
    %2078 = vmatpush2.msra.mxu0 0.0
    %2079 = vmatprep.mubr.f32.mxu0 0.0
    %2080 = vmatmul.mubr.f32.gmra.mxu0 %v2013
    %v2081 = vpop.f32.mrf.mxu0
    %v2082 = vadd.f32 %v587, %v2081
    %v2083 = vpop.f32.mrf.mxu0
    %2084 = vdwg.mxu0
    %2085 = vmatprep.subr.mxu0 0.0
    %2086 = vmatpush1.msra.mxu0 0.0
    %2087 = vmatprep.subr.mxu0 0.0
    %2088 = vmatpush1.msra.mxu0 0.0
    %2089 = vmatprep.subr.mxu0 0.0
    %2090 = vmatpush1.msra.mxu0 0.0
    %2091 = vmatprep.subr.mxu0 0.0
    %2092 = vmatpush1.msra.mxu0 0.0
    %2093 = vmatprep.subr.mxu0 0.0
    %2094 = vmatpush1.msra.mxu0 0.0
    %2095 = vmatprep.subr.mxu0 0.0
    %2096 = vmatpush1.msra.mxu0 0.0
    %2097 = vmatprep.subr.mxu0 0.0
    %2098 = vmatpush1.msra.mxu0 0.0
    %2099 = vmatprep.subr.mxu0 0.0
    %2100 = vmatpush1.msra.mxu0 0.0
    %2101 = vmatprep.subr.mxu0 0.0
    %2102 = vmatpush1.msra.mxu0 0.0
    %2103 = vmatprep.subr.mxu0 0.0
    %2104 = vmatpush1.msra.mxu0 0.0
    %2105 = vmatprep.subr.mxu0 0.0
    %2106 = vmatpush1.msra.mxu0 0.0
    %2107 = vmatprep.subr.mxu0 0.0
    %2108 = vmatpush1.msra.mxu0 0.0
    %2109 = vmatprep.subr.mxu0 0.0
    %2110 = vmatpush1.msra.mxu0 0.0
    %2111 = vmatprep.subr.mxu0 0.0
    %2112 = vmatpush1.msra.mxu0 0.0
    %2113 = vmatprep.subr.mxu0 0.0
    %2114 = vmatpush1.msra.mxu0 %v184
    %2115 = vmatprep.subr.mxu0 0.0
    %2116 = vmatpush1.msra.mxu0 %v183
    %2117 = vmatprep.subr.mxu0 0.0
    %2118 = vmatpush2.msra.mxu0 0.0
    %2119 = vmatprep.subr.mxu0 0.0
    %2120 = vmatpush2.msra.mxu0 0.0
    %2121 = vmatprep.subr.mxu0 0.0
    %2122 = vmatpush2.msra.mxu0 0.0
    %2123 = vmatprep.subr.mxu0 0.0
    %2124 = vmatpush2.msra.mxu0 0.0
    %2125 = vmatprep.subr.mxu0 0.0
    %2126 = vmatpush2.msra.mxu0 0.0
    %2127 = vmatprep.subr.mxu0 0.0
    %2128 = vmatpush2.msra.mxu0 0.0
    %2129 = vmatprep.subr.mxu0 0.0
    %2130 = vmatpush2.msra.mxu0 0.0
    %2131 = vmatprep.subr.mxu0 0.0
    %2132 = vmatpush2.msra.mxu0 0.0
    %2133 = vmatprep.subr.mxu0 0.0
    %2134 = vmatpush2.msra.mxu0 0.0
    %2135 = vmatprep.subr.mxu0 0.0
    %2136 = vmatpush2.msra.mxu0 0.0
    %2137 = vmatprep.subr.mxu0 0.0
    %2138 = vmatpush2.msra.mxu0 0.0
    %2139 = vmatprep.subr.mxu0 0.0
    %2140 = vmatpush2.msra.mxu0 0.0
    %2141 = vmatprep.subr.mxu0 0.0
    %2142 = vmatpush2.msra.mxu0 0.0
    %2143 = vmatprep.subr.mxu0 0.0
    %2144 = vmatpush2.msra.mxu0 0.0
    %2145 = vmatprep.subr.mxu0 0.0
    %2146 = vmatpush2.msra.mxu0 0.0
    %2147 = vmatprep.subr.mxu0 0.0
    %2148 = vmatpush2.msra.mxu0 0.0
    %2149 = vmatprep.mubr.f32.mxu0 0.0
    %2150 = vmatmul.mubr.f32.gmra.mxu0 %v1489
    %v2151 = vpop.f32.mrf.mxu0
    %v2152 = vadd.f32 0.0, %v2151
    %v2153 = vpop.f32.mrf.mxu0
    %2154 = vdwg.mxu0
    %v2155 = vadd.f32 %v2082, %v2152
    %v2156 = vxor.u32 %v2155, 2147483648
    %v2157 = vmul.f32 %v2156, 1.442695
    %v2158 = vpow.pop %v2157
    %v2159 = vadd.f32 %v2158, 1.0
    %v2160 = vrcp.pop %v2159
    %v2161 = vmul.f32 1.0, %v2160
    %v2162 = vadd.f32 %v2152, %v747
    %2164 = vrot.lane.b32.xlu0 %v2162, 96
    %v2165 = vpop.permute.xlu0 %2164
    %v2167 = vmul.f32 %v2161, %v2165
    %2169 = vrot.lane.b32.xlu0 %v2167, 32
    %v2170 = vpop.permute.xlu0 %2169
    %v2172 = vadd.f32 %v2082, %v2170
    %v2173 = vtanh.pop %v2172
    %v2174 = vsub.f32 1.0, %v2161
    %2176 = vrot.lane.b32.xlu0 %v2173, 112
    %v2177 = vpop.permute.xlu0 %2176
    %v2179 = vmul.f32 %v2174, %v2177
    %v2180 = vmul.f32 %v2161, %v1485
    %v2181 = vadd.f32 %v2179, %v2180
    %2183 = vrot.lane.b32.xlu0 %v2181, 112
    %v2184 = vpop.permute.xlu0 %2183
    %v2185 = vsel %vm288, %v2184, 0
    %2187 = vmatprep.subr.mxu0 0.0
    %2188 = vmatpush1.msra.mxu0 0.0
    %2189 = vmatprep.subr.mxu0 0.0
    %2190 = vmatpush1.msra.mxu0 0.0
    %2191 = vmatprep.subr.mxu0 0.0
    %2192 = vmatpush1.msra.mxu0 0.0
    %2193 = vmatprep.subr.mxu0 0.0
    %2194 = vmatpush1.msra.mxu0 0.0
    %2195 = vmatprep.subr.mxu0 0.0
    %2196 = vmatpush1.msra.mxu0 0.0
    %2197 = vmatprep.subr.mxu0 0.0
    %2198 = vmatpush1.msra.mxu0 0.0
    %2199 = vmatprep.subr.mxu0 0.0
    %2200 = vmatpush1.msra.mxu0 0.0
    %2201 = vmatprep.subr.mxu0 0.0
    %2202 = vmatpush1.msra.mxu0 0.0
    %2203 = vmatprep.subr.mxu0 0.0
    %2204 = vmatpush1.msra.mxu0 0.0
    %2205 = vmatprep.subr.mxu0 0.0
    %2206 = vmatpush1.msra.mxu0 0.0
    %2207 = vmatprep.subr.mxu0 0.0
    %2208 = vmatpush1.msra.mxu0 0.0
    %2209 = vmatprep.subr.mxu0 0.0
    %2210 = vmatpush1.msra.mxu0 0.0
    %2211 = vmatprep.subr.mxu0 0.0
    %2212 = vmatpush1.msra.mxu0 0.0
    %2213 = vmatprep.subr.mxu0 0.0
    %2214 = vmatpush1.msra.mxu0 0.0
    %2215 = vmatprep.subr.mxu0 0.0
    %2216 = vmatpush1.msra.mxu0 %v178
    %2217 = vmatprep.subr.mxu0 0.0
    %2218 = vmatpush1.msra.mxu0 %v177
    %2219 = vmatprep.subr.mxu0 0.0
    %2220 = vmatpush2.msra.mxu0 0.0
    %2221 = vmatprep.subr.mxu0 0.0
    %2222 = vmatpush2.msra.mxu0 0.0
    %2223 = vmatprep.subr.mxu0 0.0
    %2224 = vmatpush2.msra.mxu0 0.0
    %2225 = vmatprep.subr.mxu0 0.0
    %2226 = vmatpush2.msra.mxu0 0.0
    %2227 = vmatprep.subr.mxu0 0.0
    %2228 = vmatpush2.msra.mxu0 0.0
    %2229 = vmatprep.subr.mxu0 0.0
    %2230 = vmatpush2.msra.mxu0 0.0
    %2231 = vmatprep.subr.mxu0 0.0
    %2232 = vmatpush2.msra.mxu0 0.0
    %2233 = vmatprep.subr.mxu0 0.0
    %2234 = vmatpush2.msra.mxu0 0.0
    %2235 = vmatprep.subr.mxu0 0.0
    %2236 = vmatpush2.msra.mxu0 0.0
    %2237 = vmatprep.subr.mxu0 0.0
    %2238 = vmatpush2.msra.mxu0 0.0
    %2239 = vmatprep.subr.mxu0 0.0
    %2240 = vmatpush2.msra.mxu0 0.0
    %2241 = vmatprep.subr.mxu0 0.0
    %2242 = vmatpush2.msra.mxu0 0.0
    %2243 = vmatprep.subr.mxu0 0.0
    %2244 = vmatpush2.msra.mxu0 0.0
    %2245 = vmatprep.subr.mxu0 0.0
    %2246 = vmatpush2.msra.mxu0 0.0
    %2247 = vmatprep.subr.mxu0 0.0
    %2248 = vmatpush2.msra.mxu0 0.0
    %2249 = vmatprep.subr.mxu0 0.0
    %2250 = vmatpush2.msra.mxu0 0.0
    %2251 = vmatprep.mubr.f32.mxu0 0.0
    %2252 = vmatmul.mubr.f32.gmra.mxu0 %v2185
    %v2253 = vpop.f32.mrf.mxu0
    %v2254 = vadd.f32 %v773, %v2253
    %v2255 = vpop.f32.mrf.mxu0
    %2256 = vdwg.mxu0
    %2257 = vmatprep.subr.mxu0 0.0
    %2258 = vmatpush1.msra.mxu0 0.0
    %2259 = vmatprep.subr.mxu0 0.0
    %2260 = vmatpush1.msra.mxu0 0.0
    %2261 = vmatprep.subr.mxu0 0.0
    %2262 = vmatpush1.msra.mxu0 0.0
    %2263 = vmatprep.subr.mxu0 0.0
    %2264 = vmatpush1.msra.mxu0 0.0
    %2265 = vmatprep.subr.mxu0 0.0
    %2266 = vmatpush1.msra.mxu0 0.0
    %2267 = vmatprep.subr.mxu0 0.0
    %2268 = vmatpush1.msra.mxu0 0.0
    %2269 = vmatprep.subr.mxu0 0.0
    %2270 = vmatpush1.msra.mxu0 0.0
    %2271 = vmatprep.subr.mxu0 0.0
    %2272 = vmatpush1.msra.mxu0 0.0
    %2273 = vmatprep.subr.mxu0 0.0
    %2274 = vmatpush1.msra.mxu0 0.0
    %2275 = vmatprep.subr.mxu0 0.0
    %2276 = vmatpush1.msra.mxu0 0.0
    %2277 = vmatprep.subr.mxu0 0.0
    %2278 = vmatpush1.msra.mxu0 0.0
    %2279 = vmatprep.subr.mxu0 0.0
    %2280 = vmatpush1.msra.mxu0 0.0
    %2281 = vmatprep.subr.mxu0 0.0
    %2282 = vmatpush1.msra.mxu0 0.0
    %2283 = vmatprep.subr.mxu0 0.0
    %2284 = vmatpush1.msra.mxu0 0.0
    %2285 = vmatprep.subr.mxu0 0.0
    %2286 = vmatpush1.msra.mxu0 %v186
    %2287 = vmatprep.subr.mxu0 0.0
    %2288 = vmatpush1.msra.mxu0 %v185
    %2289 = vmatprep.subr.mxu0 0.0
    %2290 = vmatpush2.msra.mxu0 0.0
    %2291 = vmatprep.subr.mxu0 0.0
    %2292 = vmatpush2.msra.mxu0 0.0
    %2293 = vmatprep.subr.mxu0 0.0
    %2294 = vmatpush2.msra.mxu0 0.0
    %2295 = vmatprep.subr.mxu0 0.0
    %2296 = vmatpush2.msra.mxu0 0.0
    %2297 = vmatprep.subr.mxu0 0.0
    %2298 = vmatpush2.msra.mxu0 0.0
    %2299 = vmatprep.subr.mxu0 0.0
    %2300 = vmatpush2.msra.mxu0 0.0
    %2301 = vmatprep.subr.mxu0 0.0
    %2302 = vmatpush2.msra.mxu0 0.0
    %2303 = vmatprep.subr.mxu0 0.0
    %2304 = vmatpush2.msra.mxu0 0.0
    %2305 = vmatprep.subr.mxu0 0.0
    %2306 = vmatpush2.msra.mxu0 0.0
    %2307 = vmatprep.subr.mxu0 0.0
    %2308 = vmatpush2.msra.mxu0 0.0
    %2309 = vmatprep.subr.mxu0 0.0
    %2310 = vmatpush2.msra.mxu0 0.0
    %2311 = vmatprep.subr.mxu0 0.0
    %2312 = vmatpush2.msra.mxu0 0.0
    %2313 = vmatprep.subr.mxu0 0.0
    %2314 = vmatpush2.msra.mxu0 0.0
    %2315 = vmatprep.subr.mxu0 0.0
    %2316 = vmatpush2.msra.mxu0 0.0
    %2317 = vmatprep.subr.mxu0 0.0
    %2318 = vmatpush2.msra.mxu0 0.0
    %2319 = vmatprep.subr.mxu0 0.0
    %2320 = vmatpush2.msra.mxu0 0.0
    %2321 = vmatprep.mubr.f32.mxu0 0.0
    %2322 = vmatmul.mubr.f32.gmra.mxu0 %v1661
    %v2323 = vpop.f32.mrf.mxu0
    %v2324 = vadd.f32 0.0, %v2323
    %v2325 = vpop.f32.mrf.mxu0
    %2326 = vdwg.mxu0
    %v2327 = vadd.f32 %v2254, %v2324
    %v2328 = vxor.u32 %v2327, 2147483648
    %v2329 = vmul.f32 %v2328, 1.442695
    %v2330 = vpow.pop %v2329
    %v2331 = vadd.f32 %v2330, 1.0
    %v2332 = vrcp.pop %v2331
    %v2333 = vmul.f32 1.0, %v2332
    %v2334 = vadd.f32 %v2324, %v933
    %2336 = vrot.lane.b32.xlu0 %v2334, 96
    %v2337 = vpop.permute.xlu0 %2336
    %v2339 = vmul.f32 %v2333, %v2337
    %2341 = vrot.lane.b32.xlu0 %v2339, 32
    %v2342 = vpop.permute.xlu0 %2341
    %v2344 = vadd.f32 %v2254, %v2342
    %v2345 = vtanh.pop %v2344
    %v2346 = vsub.f32 1.0, %v2333
    %2348 = vrot.lane.b32.xlu0 %v2345, 112
    %v2349 = vpop.permute.xlu0 %2348
    %v2351 = vmul.f32 %v2346, %v2349
    %v2352 = vmul.f32 %v2333, %v1657
    %v2353 = vadd.f32 %v2351, %v2352
    %2355 = vrot.lane.b32.xlu0 %v2353, 112
    %v2356 = vpop.permute.xlu0 %2355
    %v2357 = vsel %vm288, %v2356, 0
    %2359 = vmatprep.subr.mxu0 0.0
    %2360 = vmatpush1.msra.mxu0 0.0
    %2361 = vmatprep.subr.mxu0 0.0
    %2362 = vmatpush1.msra.mxu0 0.0
    %2363 = vmatprep.subr.mxu0 0.0
    %2364 = vmatpush1.msra.mxu0 0.0
    %2365 = vmatprep.subr.mxu0 0.0
    %2366 = vmatpush1.msra.mxu0 0.0
    %2367 = vmatprep.subr.mxu0 0.0
    %2368 = vmatpush1.msra.mxu0 0.0
    %2369 = vmatprep.subr.mxu0 0.0
    %2370 = vmatpush1.msra.mxu0 0.0
    %2371 = vmatprep.subr.mxu0 0.0
    %2372 = vmatpush1.msra.mxu0 0.0
    %2373 = vmatprep.subr.mxu0 0.0
    %2374 = vmatpush1.msra.mxu0 0.0
    %2375 = vmatprep.subr.mxu0 0.0
    %2376 = vmatpush1.msra.mxu0 0.0
    %2377 = vmatprep.subr.mxu0 0.0
    %2378 = vmatpush1.msra.mxu0 0.0
    %2379 = vmatprep.subr.mxu0 0.0
    %2380 = vmatpush1.msra.mxu0 0.0
    %2381 = vmatprep.subr.mxu0 0.0
    %2382 = vmatpush1.msra.mxu0 0.0
    %2383 = vmatprep.subr.mxu0 0.0
    %2384 = vmatpush1.msra.mxu0 0.0
    %2385 = vmatprep.subr.mxu0 0.0
    %2386 = vmatpush1.msra.mxu0 0.0
    %2387 = vmatprep.subr.mxu0 0.0
    %2388 = vmatpush1.msra.mxu0 %v196
    %2389 = vmatprep.subr.mxu0 0.0
    %2390 = vmatpush1.msra.mxu0 %v195
    %2391 = vmatprep.subr.mxu0 0.0
    %2392 = vmatpush2.msra.mxu0 0.0
    %2393 = vmatprep.subr.mxu0 0.0
    %2394 = vmatpush2.msra.mxu0 0.0
    %2395 = vmatprep.subr.mxu0 0.0
    %2396 = vmatpush2.msra.mxu0 0.0
    %2397 = vmatprep.subr.mxu0 0.0
    %2398 = vmatpush2.msra.mxu0 0.0
    %2399 = vmatprep.subr.mxu0 0.0
    %2400 = vmatpush2.msra.mxu0 0.0
    %2401 = vmatprep.subr.mxu0 0.0
    %2402 = vmatpush2.msra.mxu0 0.0
    %2403 = vmatprep.subr.mxu0 0.0
    %2404 = vmatpush2.msra.mxu0 0.0
    %2405 = vmatprep.subr.mxu0 0.0
    %2406 = vmatpush2.msra.mxu0 0.0
    %2407 = vmatprep.subr.mxu0 0.0
    %2408 = vmatpush2.msra.mxu0 0.0
    %2409 = vmatprep.subr.mxu0 0.0
    %2410 = vmatpush2.msra.mxu0 0.0
    %2411 = vmatprep.subr.mxu0 0.0
    %2412 = vmatpush2.msra.mxu0 0.0
    %2413 = vmatprep.subr.mxu0 0.0
    %2414 = vmatpush2.msra.mxu0 0.0
    %2415 = vmatprep.subr.mxu0 0.0
    %2416 = vmatpush2.msra.mxu0 0.0
    %2417 = vmatprep.subr.mxu0 0.0
    %2418 = vmatpush2.msra.mxu0 0.0
    %2419 = vmatprep.subr.mxu0 0.0
    %2420 = vmatpush2.msra.mxu0 0.0
    %2421 = vmatprep.subr.mxu0 0.0
    %2422 = vmatpush2.msra.mxu0 0.0
    %2423 = vmatprep.mubr.f32.mxu0 0.0
    %2424 = vmatmul.mubr.f32.gmra.mxu0 %v2357
    %v2425 = vpop.f32.mrf.mxu0
    %v2426 = vadd.f32 %v959, %v2425
    %v2427 = vpop.f32.mrf.mxu0
    %2428 = vdwg.mxu0
    %2429 = vst.msk [vmem:[%s19 + $0x4] sm:$0x3] %vm1036, %v2426
    %2430 = vmatprep.subr.mxu0 0.0
    %2431 = vmatpush1.msra.mxu0 0.0
    %2432 = vmatprep.subr.mxu0 0.0
    %2433 = vmatpush1.msra.mxu0 0.0
    %2434 = vmatprep.subr.mxu0 0.0
    %2435 = vmatpush1.msra.mxu0 0.0
    %2436 = vmatprep.subr.mxu0 0.0
    %2437 = vmatpush1.msra.mxu0 0.0
    %2438 = vmatprep.subr.mxu0 0.0
    %2439 = vmatpush1.msra.mxu0 0.0
    %2440 = vmatprep.subr.mxu0 0.0
    %2441 = vmatpush1.msra.mxu0 0.0
    %2442 = vmatprep.subr.mxu0 0.0
    %2443 = vmatpush1.msra.mxu0 0.0
    %2444 = vmatprep.subr.mxu0 0.0
    %2445 = vmatpush1.msra.mxu0 0.0
    %2446 = vmatprep.subr.mxu0 0.0
    %2447 = vmatpush1.msra.mxu0 0.0
    %2448 = vmatprep.subr.mxu0 0.0
    %2449 = vmatpush1.msra.mxu0 0.0
    %2450 = vmatprep.subr.mxu0 0.0
    %2451 = vmatpush1.msra.mxu0 0.0
    %2452 = vmatprep.subr.mxu0 0.0
    %2453 = vmatpush1.msra.mxu0 0.0
    %2454 = vmatprep.subr.mxu0 0.0
    %2455 = vmatpush1.msra.mxu0 0.0
    %2456 = vmatprep.subr.mxu0 0.0
    %2457 = vmatpush1.msra.mxu0 0.0
    %2458 = vmatprep.subr.mxu0 0.0
    %2459 = vmatpush1.msra.mxu0 %v180
    %2460 = vmatprep.subr.mxu0 0.0
    %2461 = vmatpush1.msra.mxu0 %v179
    %2462 = vmatprep.subr.mxu0 0.0
    %2463 = vmatpush2.msra.mxu0 0.0
    %2464 = vmatprep.subr.mxu0 0.0
    %2465 = vmatpush2.msra.mxu0 0.0
    %2466 = vmatprep.subr.mxu0 0.0
    %2467 = vmatpush2.msra.mxu0 0.0
    %2468 = vmatprep.subr.mxu0 0.0
    %2469 = vmatpush2.msra.mxu0 0.0
    %2470 = vmatprep.subr.mxu0 0.0
    %2471 = vmatpush2.msra.mxu0 0.0
    %2472 = vmatprep.subr.mxu0 0.0
    %2473 = vmatpush2.msra.mxu0 0.0
    %2474 = vmatprep.subr.mxu0 0.0
    %2475 = vmatpush2.msra.mxu0 0.0
    %2476 = vmatprep.subr.mxu0 0.0
    %2477 = vmatpush2.msra.mxu0 0.0
    %2478 = vmatprep.subr.mxu0 0.0
    %2479 = vmatpush2.msra.mxu0 0.0
    %2480 = vmatprep.subr.mxu0 0.0
    %2481 = vmatpush2.msra.mxu0 0.0
    %2482 = vmatprep.subr.mxu0 0.0
    %2483 = vmatpush2.msra.mxu0 0.0
    %2484 = vmatprep.subr.mxu0 0.0
    %2485 = vmatpush2.msra.mxu0 0.0
    %2486 = vmatprep.subr.mxu0 0.0
    %2487 = vmatpush2.msra.mxu0 0.0
    %2488 = vmatprep.subr.mxu0 0.0
    %2489 = vmatpush2.msra.mxu0 0.0
    %2490 = vmatprep.subr.mxu0 0.0
    %2491 = vmatpush2.msra.mxu0 0.0
    %2492 = vmatprep.subr.mxu0 0.0
    %2493 = vmatpush2.msra.mxu0 0.0
    %2494 = vmatprep.mubr.f32.mxu0 0.0
    %2495 = vmatmul.mubr.f32.gmra.mxu0 %v1841
    %v2496 = vpop.f32.mrf.mxu0
    %v2497 = vadd.f32 0.0, %v2496
    %v2498 = vpop.f32.mrf.mxu0
    %2499 = vdwg.mxu0
    %v2501 = vrot.slane %v2497, 2
    %v2503 = vadd.f32 %v280, %v2501
    %v2504 = vxor.u32 %v2503, 2147483648
    %v2505 = vmul.f32 %v2504, 1.442695
    %v2506 = vpow.pop %v2505
    %v2507 = vadd.f32 %v2506, 1.0
    %v2508 = vrcp.pop %v2507
    %v2509 = vmul.f32 1.0, %v2508
    %v2510 = vadd.f32 %v2497, %v375
    %v2512 = vrot.slane %v2510, 2
    %2513 = vrot.lane.b32.xlu0 %v2512, 96
    %v2514 = vpop.permute.xlu0 %2513
    %v2516 = vmul.f32 %v2509, %v2514
    %2518 = vrot.lane.b32.xlu0 %v2516, 32
    %v2519 = vpop.permute.xlu0 %2518
    %v2521 = vadd.f32 %v280, %v2519
    %v2522 = vtanh.pop %v2521
    %v2523 = vsub.f32 1.0, %v2509
    %2525 = vrot.lane.b32.xlu0 %v2522, 112
    %v2526 = vpop.permute.xlu0 %2525
    %v2528 = vmul.f32 %v2523, %v2526
    %v2529 = vrot.slane %v1836, 6
    %v2531 = vmul.f32 %v2509, %v2529
    %v2532 = vadd.f32 %v2528, %v2531
    %v2534 = vrot.slane %v2532, 6
    %2535 = vrot.lane.b32.xlu0 %v2534, 112
    %v2536 = vpop.permute.xlu0 %2535
    %v2537 = vsel %vm288, %v2536, 0
    %2539 = vmatprep.subr.mxu0 0.0
    %2540 = vmatpush1.msra.mxu0 0.0
    %2541 = vmatprep.subr.mxu0 0.0
    %2542 = vmatpush1.msra.mxu0 0.0
    %2543 = vmatprep.subr.mxu0 0.0
    %2544 = vmatpush1.msra.mxu0 0.0
    %2545 = vmatprep.subr.mxu0 0.0
    %2546 = vmatpush1.msra.mxu0 0.0
    %2547 = vmatprep.subr.mxu0 0.0
    %2548 = vmatpush1.msra.mxu0 0.0
    %2549 = vmatprep.subr.mxu0 0.0
    %2550 = vmatpush1.msra.mxu0 0.0
    %2551 = vmatprep.subr.mxu0 0.0
    %2552 = vmatpush1.msra.mxu0 0.0
    %2553 = vmatprep.subr.mxu0 0.0
    %2554 = vmatpush1.msra.mxu0 0.0
    %2555 = vmatprep.subr.mxu0 0.0
    %2556 = vmatpush1.msra.mxu0 0.0
    %2557 = vmatprep.subr.mxu0 0.0
    %2558 = vmatpush1.msra.mxu0 0.0
    %2559 = vmatprep.subr.mxu0 0.0
    %2560 = vmatpush1.msra.mxu0 0.0
    %2561 = vmatprep.subr.mxu0 0.0
    %2562 = vmatpush1.msra.mxu0 0.0
    %2563 = vmatprep.subr.mxu0 0.0
    %2564 = vmatpush1.msra.mxu0 0.0
    %2565 = vmatprep.subr.mxu0 0.0
    %2566 = vmatpush1.msra.mxu0 0.0
    %2567 = vmatprep.subr.mxu0 0.0
    %2568 = vmatpush1.msra.mxu0 %v174
    %2569 = vmatprep.subr.mxu0 0.0
    %2570 = vmatpush1.msra.mxu0 %v173
    %2571 = vmatprep.subr.mxu0 0.0
    %2572 = vmatpush2.msra.mxu0 0.0
    %2573 = vmatprep.subr.mxu0 0.0
    %2574 = vmatpush2.msra.mxu0 0.0
    %2575 = vmatprep.subr.mxu0 0.0
    %2576 = vmatpush2.msra.mxu0 0.0
    %2577 = vmatprep.subr.mxu0 0.0
    %2578 = vmatpush2.msra.mxu0 0.0
    %2579 = vmatprep.subr.mxu0 0.0
    %2580 = vmatpush2.msra.mxu0 0.0
    %2581 = vmatprep.subr.mxu0 0.0
    %2582 = vmatpush2.msra.mxu0 0.0
    %2583 = vmatprep.subr.mxu0 0.0
    %2584 = vmatpush2.msra.mxu0 0.0
    %2585 = vmatprep.subr.mxu0 0.0
    %2586 = vmatpush2.msra.mxu0 0.0
    %2587 = vmatprep.subr.mxu0 0.0
    %2588 = vmatpush2.msra.mxu0 0.0
    %2589 = vmatprep.subr.mxu0 0.0
    %2590 = vmatpush2.msra.mxu0 0.0
    %2591 = vmatprep.subr.mxu0 0.0
    %2592 = vmatpush2.msra.mxu0 0.0
    %2593 = vmatprep.subr.mxu0 0.0
    %2594 = vmatpush2.msra.mxu0 0.0
    %2595 = vmatprep.subr.mxu0 0.0
    %2596 = vmatpush2.msra.mxu0 0.0
    %2597 = vmatprep.subr.mxu0 0.0
    %2598 = vmatpush2.msra.mxu0 0.0
    %2599 = vmatprep.subr.mxu0 0.0
    %2600 = vmatpush2.msra.mxu0 0.0
    %2601 = vmatprep.subr.mxu0 0.0
    %2602 = vmatpush2.msra.mxu0 0.0
    %2603 = vmatprep.mubr.f32.mxu0 0.0
    %2604 = vmatmul.mubr.f32.gmra.mxu0 %v2537
    %v2605 = vpop.f32.mrf.mxu0
    %v2606 = vadd.f32 %v401, %v2605
    %v2607 = vpop.f32.mrf.mxu0
    %2608 = vdwg.mxu0
    %2609 = vmatprep.subr.mxu0 0.0
    %2610 = vmatpush1.msra.mxu0 0.0
    %2611 = vmatprep.subr.mxu0 0.0
    %2612 = vmatpush1.msra.mxu0 0.0
    %2613 = vmatprep.subr.mxu0 0.0
    %2614 = vmatpush1.msra.mxu0 0.0
    %2615 = vmatprep.subr.mxu0 0.0
    %2616 = vmatpush1.msra.mxu0 0.0
    %2617 = vmatprep.subr.mxu0 0.0
    %2618 = vmatpush1.msra.mxu0 0.0
    %2619 = vmatprep.subr.mxu0 0.0
    %2620 = vmatpush1.msra.mxu0 0.0
    %2621 = vmatprep.subr.mxu0 0.0
    %2622 = vmatpush1.msra.mxu0 0.0
    %2623 = vmatprep.subr.mxu0 0.0
    %2624 = vmatpush1.msra.mxu0 0.0
    %2625 = vmatprep.subr.mxu0 0.0
    %2626 = vmatpush1.msra.mxu0 0.0
    %2627 = vmatprep.subr.mxu0 0.0
    %2628 = vmatpush1.msra.mxu0 0.0
    %2629 = vmatprep.subr.mxu0 0.0
    %2630 = vmatpush1.msra.mxu0 0.0
    %2631 = vmatprep.subr.mxu0 0.0
    %2632 = vmatpush1.msra.mxu0 0.0
    %2633 = vmatprep.subr.mxu0 0.0
    %2634 = vmatpush1.msra.mxu0 0.0
    %2635 = vmatprep.subr.mxu0 0.0
    %2636 = vmatpush1.msra.mxu0 0.0
    %2637 = vmatprep.subr.mxu0 0.0
    %2638 = vmatpush1.msra.mxu0 %v182
    %2639 = vmatprep.subr.mxu0 0.0
    %2640 = vmatpush1.msra.mxu0 %v181
    %2641 = vmatprep.subr.mxu0 0.0
    %2642 = vmatpush2.msra.mxu0 0.0
    %2643 = vmatprep.subr.mxu0 0.0
    %2644 = vmatpush2.msra.mxu0 0.0
    %2645 = vmatprep.subr.mxu0 0.0
    %2646 = vmatpush2.msra.mxu0 0.0
    %2647 = vmatprep.subr.mxu0 0.0
    %2648 = vmatpush2.msra.mxu0 0.0
    %2649 = vmatprep.subr.mxu0 0.0
    %2650 = vmatpush2.msra.mxu0 0.0
    %2651 = vmatprep.subr.mxu0 0.0
    %2652 = vmatpush2.msra.mxu0 0.0
    %2653 = vmatprep.subr.mxu0 0.0
    %2654 = vmatpush2.msra.mxu0 0.0
    %2655 = vmatprep.subr.mxu0 0.0
    %2656 = vmatpush2.msra.mxu0 0.0
    %2657 = vmatprep.subr.mxu0 0.0
    %2658 = vmatpush2.msra.mxu0 0.0
    %2659 = vmatprep.subr.mxu0 0.0
    %2660 = vmatpush2.msra.mxu0 0.0
    %2661 = vmatprep.subr.mxu0 0.0
    %2662 = vmatpush2.msra.mxu0 0.0
    %2663 = vmatprep.subr.mxu0 0.0
    %2664 = vmatpush2.msra.mxu0 0.0
    %2665 = vmatprep.subr.mxu0 0.0
    %2666 = vmatpush2.msra.mxu0 0.0
    %2667 = vmatprep.subr.mxu0 0.0
    %2668 = vmatpush2.msra.mxu0 0.0
    %2669 = vmatprep.subr.mxu0 0.0
    %2670 = vmatpush2.msra.mxu0 0.0
    %2671 = vmatprep.subr.mxu0 0.0
    %2672 = vmatpush2.msra.mxu0 0.0
    %2673 = vmatprep.mubr.f32.mxu0 0.0
    %2674 = vmatmul.mubr.f32.gmra.mxu0 %v2013
    %v2675 = vpop.f32.mrf.mxu0
    %v2676 = vadd.f32 0.0, %v2675
    %v2677 = vpop.f32.mrf.mxu0
    %2678 = vdwg.mxu0
    %v2679 = vadd.f32 %v2606, %v2676
    %v2680 = vxor.u32 %v2679, 2147483648
    %v2681 = vmul.f32 %v2680, 1.442695
    %v2682 = vpow.pop %v2681
    %v2683 = vadd.f32 %v2682, 1.0
    %v2684 = vrcp.pop %v2683
    %v2685 = vmul.f32 1.0, %v2684
    %v2686 = vadd.f32 %v2676, %v561
    %2688 = vrot.lane.b32.xlu0 %v2686, 96
    %v2689 = vpop.permute.xlu0 %2688
    %v2691 = vmul.f32 %v2685, %v2689
    %2693 = vrot.lane.b32.xlu0 %v2691, 32
    %v2694 = vpop.permute.xlu0 %2693
    %v2696 = vadd.f32 %v2606, %v2694
    %v2697 = vtanh.pop %v2696
    %v2698 = vsub.f32 1.0, %v2685
    %2700 = vrot.lane.b32.xlu0 %v2697, 112
    %v2701 = vpop.permute.xlu0 %2700
    %v2703 = vmul.f32 %v2698, %v2701
    %v2704 = vmul.f32 %v2685, %v2009
    %v2705 = vadd.f32 %v2703, %v2704
    %2707 = vrot.lane.b32.xlu0 %v2705, 112
    %v2708 = vpop.permute.xlu0 %2707
    %v2709 = vsel %vm288, %v2708, 0
    %2711 = vmatprep.subr.mxu0 0.0
    %2712 = vmatpush1.msra.mxu0 0.0
    %2713 = vmatprep.subr.mxu0 0.0
    %2714 = vmatpush1.msra.mxu0 0.0
    %2715 = vmatprep.subr.mxu0 0.0
    %2716 = vmatpush1.msra.mxu0 0.0
    %2717 = vmatprep.subr.mxu0 0.0
    %2718 = vmatpush1.msra.mxu0 0.0
    %2719 = vmatprep.subr.mxu0 0.0
    %2720 = vmatpush1.msra.mxu0 0.0
    %2721 = vmatprep.subr.mxu0 0.0
    %2722 = vmatpush1.msra.mxu0 0.0
    %2723 = vmatprep.subr.mxu0 0.0
    %2724 = vmatpush1.msra.mxu0 0.0
    %2725 = vmatprep.subr.mxu0 0.0
    %2726 = vmatpush1.msra.mxu0 0.0
    %2727 = vmatprep.subr.mxu0 0.0
    %2728 = vmatpush1.msra.mxu0 0.0
    %2729 = vmatprep.subr.mxu0 0.0
    %2730 = vmatpush1.msra.mxu0 0.0
    %2731 = vmatprep.subr.mxu0 0.0
    %2732 = vmatpush1.msra.mxu0 0.0
    %2733 = vmatprep.subr.mxu0 0.0
    %2734 = vmatpush1.msra.mxu0 0.0
    %2735 = vmatprep.subr.mxu0 0.0
    %2736 = vmatpush1.msra.mxu0 0.0
    %2737 = vmatprep.subr.mxu0 0.0
    %2738 = vmatpush1.msra.mxu0 0.0
    %2739 = vmatprep.subr.mxu0 0.0
    %2740 = vmatpush1.msra.mxu0 %v176
    %2741 = vmatprep.subr.mxu0 0.0
    %2742 = vmatpush1.msra.mxu0 %v175
    %2743 = vmatprep.subr.mxu0 0.0
    %2744 = vmatpush2.msra.mxu0 0.0
    %2745 = vmatprep.subr.mxu0 0.0
    %2746 = vmatpush2.msra.mxu0 0.0
    %2747 = vmatprep.subr.mxu0 0.0
    %2748 = vmatpush2.msra.mxu0 0.0
    %2749 = vmatprep.subr.mxu0 0.0
    %2750 = vmatpush2.msra.mxu0 0.0
    %2751 = vmatprep.subr.mxu0 0.0
    %2752 = vmatpush2.msra.mxu0 0.0
    %2753 = vmatprep.subr.mxu0 0.0
    %2754 = vmatpush2.msra.mxu0 0.0
    %2755 = vmatprep.subr.mxu0 0.0
    %2756 = vmatpush2.msra.mxu0 0.0
    %2757 = vmatprep.subr.mxu0 0.0
    %2758 = vmatpush2.msra.mxu0 0.0
    %2759 = vmatprep.subr.mxu0 0.0
    %2760 = vmatpush2.msra.mxu0 0.0
    %2761 = vmatprep.subr.mxu0 0.0
    %2762 = vmatpush2.msra.mxu0 0.0
    %2763 = vmatprep.subr.mxu0 0.0
    %2764 = vmatpush2.msra.mxu0 0.0
    %2765 = vmatprep.subr.mxu0 0.0
    %2766 = vmatpush2.msra.mxu0 0.0
    %2767 = vmatprep.subr.mxu0 0.0
    %2768 = vmatpush2.msra.mxu0 0.0
    %2769 = vmatprep.subr.mxu0 0.0
    %2770 = vmatpush2.msra.mxu0 0.0
    %2771 = vmatprep.subr.mxu0 0.0
    %2772 = vmatpush2.msra.mxu0 0.0
    %2773 = vmatprep.subr.mxu0 0.0
    %2774 = vmatpush2.msra.mxu0 0.0
    %2775 = vmatprep.mubr.f32.mxu0 0.0
    %2776 = vmatmul.mubr.f32.gmra.mxu0 %v2709
    %v2777 = vpop.f32.mrf.mxu0
    %v2778 = vadd.f32 %v587, %v2777
    %v2779 = vpop.f32.mrf.mxu0
    %2780 = vdwg.mxu0
    %2781 = vmatprep.subr.mxu0 0.0
    %2782 = vmatpush1.msra.mxu0 0.0
    %2783 = vmatprep.subr.mxu0 0.0
    %2784 = vmatpush1.msra.mxu0 0.0
    %2785 = vmatprep.subr.mxu0 0.0
    %2786 = vmatpush1.msra.mxu0 0.0
    %2787 = vmatprep.subr.mxu0 0.0
    %2788 = vmatpush1.msra.mxu0 0.0
    %2789 = vmatprep.subr.mxu0 0.0
    %2790 = vmatpush1.msra.mxu0 0.0
    %2791 = vmatprep.subr.mxu0 0.0
    %2792 = vmatpush1.msra.mxu0 0.0
    %2793 = vmatprep.subr.mxu0 0.0
    %2794 = vmatpush1.msra.mxu0 0.0
    %2795 = vmatprep.subr.mxu0 0.0
    %2796 = vmatpush1.msra.mxu0 0.0
    %2797 = vmatprep.subr.mxu0 0.0
    %2798 = vmatpush1.msra.mxu0 0.0
    %2799 = vmatprep.subr.mxu0 0.0
    %2800 = vmatpush1.msra.mxu0 0.0
    %2801 = vmatprep.subr.mxu0 0.0
    %2802 = vmatpush1.msra.mxu0 0.0
    %2803 = vmatprep.subr.mxu0 0.0
    %2804 = vmatpush1.msra.mxu0 0.0
    %2805 = vmatprep.subr.mxu0 0.0
    %2806 = vmatpush1.msra.mxu0 0.0
    %2807 = vmatprep.subr.mxu0 0.0
    %2808 = vmatpush1.msra.mxu0 0.0
    %2809 = vmatprep.subr.mxu0 0.0
    %2810 = vmatpush1.msra.mxu0 %v184
    %2811 = vmatprep.subr.mxu0 0.0
    %2812 = vmatpush1.msra.mxu0 %v183
    %2813 = vmatprep.subr.mxu0 0.0
    %2814 = vmatpush2.msra.mxu0 0.0
    %2815 = vmatprep.subr.mxu0 0.0
    %2816 = vmatpush2.msra.mxu0 0.0
    %2817 = vmatprep.subr.mxu0 0.0
    %2818 = vmatpush2.msra.mxu0 0.0
    %2819 = vmatprep.subr.mxu0 0.0
    %2820 = vmatpush2.msra.mxu0 0.0
    %2821 = vmatprep.subr.mxu0 0.0
    %2822 = vmatpush2.msra.mxu0 0.0
    %2823 = vmatprep.subr.mxu0 0.0
    %2824 = vmatpush2.msra.mxu0 0.0
    %2825 = vmatprep.subr.mxu0 0.0
    %2826 = vmatpush2.msra.mxu0 0.0
    %2827 = vmatprep.subr.mxu0 0.0
    %2828 = vmatpush2.msra.mxu0 0.0
    %2829 = vmatprep.subr.mxu0 0.0
    %2830 = vmatpush2.msra.mxu0 0.0
    %2831 = vmatprep.subr.mxu0 0.0
    %2832 = vmatpush2.msra.mxu0 0.0
    %2833 = vmatprep.subr.mxu0 0.0
    %2834 = vmatpush2.msra.mxu0 0.0
    %2835 = vmatprep.subr.mxu0 0.0
    %2836 = vmatpush2.msra.mxu0 0.0
    %2837 = vmatprep.subr.mxu0 0.0
    %2838 = vmatpush2.msra.mxu0 0.0
    %2839 = vmatprep.subr.mxu0 0.0
    %2840 = vmatpush2.msra.mxu0 0.0
    %2841 = vmatprep.subr.mxu0 0.0
    %2842 = vmatpush2.msra.mxu0 0.0
    %2843 = vmatprep.subr.mxu0 0.0
    %2844 = vmatpush2.msra.mxu0 0.0
    %2845 = vmatprep.mubr.f32.mxu0 0.0
    %2846 = vmatmul.mubr.f32.gmra.mxu0 %v2185
    %v2847 = vpop.f32.mrf.mxu0
    %v2848 = vadd.f32 0.0, %v2847
    %v2849 = vpop.f32.mrf.mxu0
    %2850 = vdwg.mxu0
    %v2851 = vadd.f32 %v2778, %v2848
    %v2852 = vxor.u32 %v2851, 2147483648
    %v2853 = vmul.f32 %v2852, 1.442695
    %v2854 = vpow.pop %v2853
    %v2855 = vadd.f32 %v2854, 1.0
    %v2856 = vrcp.pop %v2855
    %v2857 = vmul.f32 1.0, %v2856
    %v2858 = vadd.f32 %v2848, %v747
    %2860 = vrot.lane.b32.xlu0 %v2858, 96
    %v2861 = vpop.permute.xlu0 %2860
    %v2863 = vmul.f32 %v2857, %v2861
    %2865 = vrot.lane.b32.xlu0 %v2863, 32
    %v2866 = vpop.permute.xlu0 %2865
    %v2868 = vadd.f32 %v2778, %v2866
    %v2869 = vtanh.pop %v2868
    %v2870 = vsub.f32 1.0, %v2857
    %2872 = vrot.lane.b32.xlu0 %v2869, 112
    %v2873 = vpop.permute.xlu0 %2872
    %v2875 = vmul.f32 %v2870, %v2873
    %v2876 = vmul.f32 %v2857, %v2181
    %v2877 = vadd.f32 %v2875, %v2876
    %2879 = vrot.lane.b32.xlu0 %v2877, 112
    %v2880 = vpop.permute.xlu0 %2879
    %v2881 = vsel %vm288, %v2880, 0
    %2883 = vmatprep.subr.mxu0 0.0
    %2884 = vmatpush1.msra.mxu0 0.0
    %2885 = vmatprep.subr.mxu0 0.0
    %2886 = vmatpush1.msra.mxu0 0.0
    %2887 = vmatprep.subr.mxu0 0.0
    %2888 = vmatpush1.msra.mxu0 0.0
    %2889 = vmatprep.subr.mxu0 0.0
    %2890 = vmatpush1.msra.mxu0 0.0
    %2891 = vmatprep.subr.mxu0 0.0
    %2892 = vmatpush1.msra.mxu0 0.0
    %2893 = vmatprep.subr.mxu0 0.0
    %2894 = vmatpush1.msra.mxu0 0.0
    %2895 = vmatprep.subr.mxu0 0.0
    %2896 = vmatpush1.msra.mxu0 0.0
    %2897 = vmatprep.subr.mxu0 0.0
    %2898 = vmatpush1.msra.mxu0 0.0
    %2899 = vmatprep.subr.mxu0 0.0
    %2900 = vmatpush1.msra.mxu0 0.0
    %2901 = vmatprep.subr.mxu0 0.0
    %2902 = vmatpush1.msra.mxu0 0.0
    %2903 = vmatprep.subr.mxu0 0.0
    %2904 = vmatpush1.msra.mxu0 0.0
    %2905 = vmatprep.subr.mxu0 0.0
    %2906 = vmatpush1.msra.mxu0 0.0
    %2907 = vmatprep.subr.mxu0 0.0
    %2908 = vmatpush1.msra.mxu0 0.0
    %2909 = vmatprep.subr.mxu0 0.0
    %2910 = vmatpush1.msra.mxu0 0.0
    %2911 = vmatprep.subr.mxu0 0.0
    %2912 = vmatpush1.msra.mxu0 %v178
    %2913 = vmatprep.subr.mxu0 0.0
    %2914 = vmatpush1.msra.mxu0 %v177
    %2915 = vmatprep.subr.mxu0 0.0
    %2916 = vmatpush2.msra.mxu0 0.0
    %2917 = vmatprep.subr.mxu0 0.0
    %2918 = vmatpush2.msra.mxu0 0.0
    %2919 = vmatprep.subr.mxu0 0.0
    %2920 = vmatpush2.msra.mxu0 0.0
    %2921 = vmatprep.subr.mxu0 0.0
    %2922 = vmatpush2.msra.mxu0 0.0
    %2923 = vmatprep.subr.mxu0 0.0
    %2924 = vmatpush2.msra.mxu0 0.0
    %2925 = vmatprep.subr.mxu0 0.0
    %2926 = vmatpush2.msra.mxu0 0.0
    %2927 = vmatprep.subr.mxu0 0.0
    %2928 = vmatpush2.msra.mxu0 0.0
    %2929 = vmatprep.subr.mxu0 0.0
    %2930 = vmatpush2.msra.mxu0 0.0
    %2931 = vmatprep.subr.mxu0 0.0
    %2932 = vmatpush2.msra.mxu0 0.0
    %2933 = vmatprep.subr.mxu0 0.0
    %2934 = vmatpush2.msra.mxu0 0.0
    %2935 = vmatprep.subr.mxu0 0.0
    %2936 = vmatpush2.msra.mxu0 0.0
    %2937 = vmatprep.subr.mxu0 0.0
    %2938 = vmatpush2.msra.mxu0 0.0
    %2939 = vmatprep.subr.mxu0 0.0
    %2940 = vmatpush2.msra.mxu0 0.0
    %2941 = vmatprep.subr.mxu0 0.0
    %2942 = vmatpush2.msra.mxu0 0.0
    %2943 = vmatprep.subr.mxu0 0.0
    %2944 = vmatpush2.msra.mxu0 0.0
    %2945 = vmatprep.subr.mxu0 0.0
    %2946 = vmatpush2.msra.mxu0 0.0
    %2947 = vmatprep.mubr.f32.mxu0 0.0
    %2948 = vmatmul.mubr.f32.gmra.mxu0 %v2881
    %v2949 = vpop.f32.mrf.mxu0
    %v2950 = vadd.f32 %v773, %v2949
    %v2951 = vpop.f32.mrf.mxu0
    %2952 = vdwg.mxu0
    %2953 = vmatprep.subr.mxu0 0.0
    %2954 = vmatpush1.msra.mxu0 0.0
    %2955 = vmatprep.subr.mxu0 0.0
    %2956 = vmatpush1.msra.mxu0 0.0
    %2957 = vmatprep.subr.mxu0 0.0
    %2958 = vmatpush1.msra.mxu0 0.0
    %2959 = vmatprep.subr.mxu0 0.0
    %2960 = vmatpush1.msra.mxu0 0.0
    %2961 = vmatprep.subr.mxu0 0.0
    %2962 = vmatpush1.msra.mxu0 0.0
    %2963 = vmatprep.subr.mxu0 0.0
    %2964 = vmatpush1.msra.mxu0 0.0
    %2965 = vmatprep.subr.mxu0 0.0
    %2966 = vmatpush1.msra.mxu0 0.0
    %2967 = vmatprep.subr.mxu0 0.0
    %2968 = vmatpush1.msra.mxu0 0.0
    %2969 = vmatprep.subr.mxu0 0.0
    %2970 = vmatpush1.msra.mxu0 0.0
    %2971 = vmatprep.subr.mxu0 0.0
    %2972 = vmatpush1.msra.mxu0 0.0
    %2973 = vmatprep.subr.mxu0 0.0
    %2974 = vmatpush1.msra.mxu0 0.0
    %2975 = vmatprep.subr.mxu0 0.0
    %2976 = vmatpush1.msra.mxu0 0.0
    %2977 = vmatprep.subr.mxu0 0.0
    %2978 = vmatpush1.msra.mxu0 0.0
    %2979 = vmatprep.subr.mxu0 0.0
    %2980 = vmatpush1.msra.mxu0 0.0
    %2981 = vmatprep.subr.mxu0 0.0
    %2982 = vmatpush1.msra.mxu0 %v186
    %2983 = vmatprep.subr.mxu0 0.0
    %2984 = vmatpush1.msra.mxu0 %v185
    %2985 = vmatprep.subr.mxu0 0.0
    %2986 = vmatpush2.msra.mxu0 0.0
    %2987 = vmatprep.subr.mxu0 0.0
    %2988 = vmatpush2.msra.mxu0 0.0
    %2989 = vmatprep.subr.mxu0 0.0
    %2990 = vmatpush2.msra.mxu0 0.0
    %2991 = vmatprep.subr.mxu0 0.0
    %2992 = vmatpush2.msra.mxu0 0.0
    %2993 = vmatprep.subr.mxu0 0.0
    %2994 = vmatpush2.msra.mxu0 0.0
    %2995 = vmatprep.subr.mxu0 0.0
    %2996 = vmatpush2.msra.mxu0 0.0
    %2997 = vmatprep.subr.mxu0 0.0
    %2998 = vmatpush2.msra.mxu0 0.0
    %2999 = vmatprep.subr.mxu0 0.0
    %3000 = vmatpush2.msra.mxu0 0.0
    %3001 = vmatprep.subr.mxu0 0.0
    %3002 = vmatpush2.msra.mxu0 0.0
    %3003 = vmatprep.subr.mxu0 0.0
    %3004 = vmatpush2.msra.mxu0 0.0
    %3005 = vmatprep.subr.mxu0 0.0
    %3006 = vmatpush2.msra.mxu0 0.0
    %3007 = vmatprep.subr.mxu0 0.0
    %3008 = vmatpush2.msra.mxu0 0.0
    %3009 = vmatprep.subr.mxu0 0.0
    %3010 = vmatpush2.msra.mxu0 0.0
    %3011 = vmatprep.subr.mxu0 0.0
    %3012 = vmatpush2.msra.mxu0 0.0
    %3013 = vmatprep.subr.mxu0 0.0
    %3014 = vmatpush2.msra.mxu0 0.0
    %3015 = vmatprep.subr.mxu0 0.0
    %3016 = vmatpush2.msra.mxu0 0.0
    %3017 = vmatprep.mubr.f32.mxu0 0.0
    %3018 = vmatmul.mubr.f32.gmra.mxu0 %v2357
    %v3019 = vpop.f32.mrf.mxu0
    %v3020 = vadd.f32 0.0, %v3019
    %v3021 = vpop.f32.mrf.mxu0
    %3022 = vdwg.mxu0
    %v3023 = vadd.f32 %v2950, %v3020
    %v3024 = vxor.u32 %v3023, 2147483648
    %v3025 = vmul.f32 %v3024, 1.442695
    %v3026 = vpow.pop %v3025
    %v3027 = vadd.f32 %v3026, 1.0
    %v3028 = vrcp.pop %v3027
    %v3029 = vmul.f32 1.0, %v3028
    %v3030 = vadd.f32 %v3020, %v933
    %3032 = vrot.lane.b32.xlu0 %v3030, 96
    %v3033 = vpop.permute.xlu0 %3032
    %v3035 = vmul.f32 %v3029, %v3033
    %3037 = vrot.lane.b32.xlu0 %v3035, 32
    %v3038 = vpop.permute.xlu0 %3037
    %v3040 = vadd.f32 %v2950, %v3038
    %v3041 = vtanh.pop %v3040
    %v3042 = vsub.f32 1.0, %v3029
    %3044 = vrot.lane.b32.xlu0 %v3041, 112
    %v3045 = vpop.permute.xlu0 %3044
    %v3047 = vmul.f32 %v3042, %v3045
    %v3048 = vmul.f32 %v3029, %v2353
    %v3049 = vadd.f32 %v3047, %v3048
    %3051 = vrot.lane.b32.xlu0 %v3049, 112
    %v3052 = vpop.permute.xlu0 %3051
    %v3053 = vsel %vm288, %v3052, 0
    %3055 = vmatprep.subr.mxu0 0.0
    %3056 = vmatpush1.msra.mxu0 0.0
    %3057 = vmatprep.subr.mxu0 0.0
    %3058 = vmatpush1.msra.mxu0 0.0
    %3059 = vmatprep.subr.mxu0 0.0
    %3060 = vmatpush1.msra.mxu0 0.0
    %3061 = vmatprep.subr.mxu0 0.0
    %3062 = vmatpush1.msra.mxu0 0.0
    %3063 = vmatprep.subr.mxu0 0.0
    %3064 = vmatpush1.msra.mxu0 0.0
    %3065 = vmatprep.subr.mxu0 0.0
    %3066 = vmatpush1.msra.mxu0 0.0
    %3067 = vmatprep.subr.mxu0 0.0
    %3068 = vmatpush1.msra.mxu0 0.0
    %3069 = vmatprep.subr.mxu0 0.0
    %3070 = vmatpush1.msra.mxu0 0.0
    %3071 = vmatprep.subr.mxu0 0.0
    %3072 = vmatpush1.msra.mxu0 0.0
    %3073 = vmatprep.subr.mxu0 0.0
    %3074 = vmatpush1.msra.mxu0 0.0
    %3075 = vmatprep.subr.mxu0 0.0
    %3076 = vmatpush1.msra.mxu0 0.0
    %3077 = vmatprep.subr.mxu0 0.0
    %3078 = vmatpush1.msra.mxu0 0.0
    %3079 = vmatprep.subr.mxu0 0.0
    %3080 = vmatpush1.msra.mxu0 0.0
    %3081 = vmatprep.subr.mxu0 0.0
    %3082 = vmatpush1.msra.mxu0 0.0
    %3083 = vmatprep.subr.mxu0 0.0
    %3084 = vmatpush1.msra.mxu0 %v196
    %3085 = vmatprep.subr.mxu0 0.0
    %3086 = vmatpush1.msra.mxu0 %v195
    %3087 = vmatprep.subr.mxu0 0.0
    %3088 = vmatpush2.msra.mxu0 0.0
    %3089 = vmatprep.subr.mxu0 0.0
    %3090 = vmatpush2.msra.mxu0 0.0
    %3091 = vmatprep.subr.mxu0 0.0
    %3092 = vmatpush2.msra.mxu0 0.0
    %3093 = vmatprep.subr.mxu0 0.0
    %3094 = vmatpush2.msra.mxu0 0.0
    %3095 = vmatprep.subr.mxu0 0.0
    %3096 = vmatpush2.msra.mxu0 0.0
    %3097 = vmatprep.subr.mxu0 0.0
    %3098 = vmatpush2.msra.mxu0 0.0
    %3099 = vmatprep.subr.mxu0 0.0
    %3100 = vmatpush2.msra.mxu0 0.0
    %3101 = vmatprep.subr.mxu0 0.0
    %3102 = vmatpush2.msra.mxu0 0.0
    %3103 = vmatprep.subr.mxu0 0.0
    %3104 = vmatpush2.msra.mxu0 0.0
    %3105 = vmatprep.subr.mxu0 0.0
    %3106 = vmatpush2.msra.mxu0 0.0
    %3107 = vmatprep.subr.mxu0 0.0
    %3108 = vmatpush2.msra.mxu0 0.0
    %3109 = vmatprep.subr.mxu0 0.0
    %3110 = vmatpush2.msra.mxu0 0.0
    %3111 = vmatprep.subr.mxu0 0.0
    %3112 = vmatpush2.msra.mxu0 0.0
    %3113 = vmatprep.subr.mxu0 0.0
    %3114 = vmatpush2.msra.mxu0 0.0
    %3115 = vmatprep.subr.mxu0 0.0
    %3116 = vmatpush2.msra.mxu0 0.0
    %3117 = vmatprep.subr.mxu0 0.0
    %3118 = vmatpush2.msra.mxu0 0.0
    %3119 = vmatprep.mubr.f32.mxu0 0.0
    %3120 = vmatmul.mubr.f32.gmra.mxu0 %v3053
    %v3121 = vpop.f32.mrf.mxu0
    %v3122 = vadd.f32 %v959, %v3121
    %v3123 = vpop.f32.mrf.mxu0
    %3124 = vdwg.mxu0
    %3125 = vst.msk [vmem:[%s19 + $0x6] sm:$0x3] %vm1036, %v3122
    %3126 = vmatprep.subr.mxu0 0.0
    %3127 = vmatpush1.msra.mxu0 0.0
    %3128 = vmatprep.subr.mxu0 0.0
    %3129 = vmatpush1.msra.mxu0 0.0
    %3130 = vmatprep.subr.mxu0 0.0
    %3131 = vmatpush1.msra.mxu0 0.0
    %3132 = vmatprep.subr.mxu0 0.0
    %3133 = vmatpush1.msra.mxu0 0.0
    %3134 = vmatprep.subr.mxu0 0.0
    %3135 = vmatpush1.msra.mxu0 0.0
    %3136 = vmatprep.subr.mxu0 0.0
    %3137 = vmatpush1.msra.mxu0 0.0
    %3138 = vmatprep.subr.mxu0 0.0
    %3139 = vmatpush1.msra.mxu0 0.0
    %3140 = vmatprep.subr.mxu0 0.0
    %3141 = vmatpush1.msra.mxu0 0.0
    %3142 = vmatprep.subr.mxu0 0.0
    %3143 = vmatpush1.msra.mxu0 0.0
    %3144 = vmatprep.subr.mxu0 0.0
    %3145 = vmatpush1.msra.mxu0 0.0
    %3146 = vmatprep.subr.mxu0 0.0
    %3147 = vmatpush1.msra.mxu0 0.0
    %3148 = vmatprep.subr.mxu0 0.0
    %3149 = vmatpush1.msra.mxu0 0.0
    %3150 = vmatprep.subr.mxu0 0.0
    %3151 = vmatpush1.msra.mxu0 0.0
    %3152 = vmatprep.subr.mxu0 0.0
    %3153 = vmatpush1.msra.mxu0 0.0
    %3154 = vmatprep.subr.mxu0 0.0
    %3155 = vmatpush1.msra.mxu0 %v180
    %3156 = vmatprep.subr.mxu0 0.0
    %3157 = vmatpush1.msra.mxu0 %v179
    %3158 = vmatprep.subr.mxu0 0.0
    %3159 = vmatpush2.msra.mxu0 0.0
    %3160 = vmatprep.subr.mxu0 0.0
    %3161 = vmatpush2.msra.mxu0 0.0
    %3162 = vmatprep.subr.mxu0 0.0
    %3163 = vmatpush2.msra.mxu0 0.0
    %3164 = vmatprep.subr.mxu0 0.0
    %3165 = vmatpush2.msra.mxu0 0.0
    %3166 = vmatprep.subr.mxu0 0.0
    %3167 = vmatpush2.msra.mxu0 0.0
    %3168 = vmatprep.subr.mxu0 0.0
    %3169 = vmatpush2.msra.mxu0 0.0
    %3170 = vmatprep.subr.mxu0 0.0
    %3171 = vmatpush2.msra.mxu0 0.0
    %3172 = vmatprep.subr.mxu0 0.0
    %3173 = vmatpush2.msra.mxu0 0.0
    %3174 = vmatprep.subr.mxu0 0.0
    %3175 = vmatpush2.msra.mxu0 0.0
    %3176 = vmatprep.subr.mxu0 0.0
    %3177 = vmatpush2.msra.mxu0 0.0
    %3178 = vmatprep.subr.mxu0 0.0
    %3179 = vmatpush2.msra.mxu0 0.0
    %3180 = vmatprep.subr.mxu0 0.0
    %3181 = vmatpush2.msra.mxu0 0.0
    %3182 = vmatprep.subr.mxu0 0.0
    %3183 = vmatpush2.msra.mxu0 0.0
    %3184 = vmatprep.subr.mxu0 0.0
    %3185 = vmatpush2.msra.mxu0 0.0
    %3186 = vmatprep.subr.mxu0 0.0
    %3187 = vmatpush2.msra.mxu0 0.0
    %3188 = vmatprep.subr.mxu0 0.0
    %3189 = vmatpush2.msra.mxu0 0.0
    %3190 = vmatprep.mubr.f32.mxu0 0.0
    %3191 = vmatmul.mubr.f32.gmra.mxu0 %v2537
    %v3192 = vpop.f32.mrf.mxu0
    %v3193 = vadd.f32 0.0, %v3192
    %v3194 = vpop.f32.mrf.mxu0
    %3195 = vdwg.mxu0
    %v3196 = vadd.f32 %v285, %v3193
    %v3197 = vxor.u32 %v3196, 2147483648
    %v3198 = vmul.f32 %v3197, 1.442695
    %v3199 = vpow.pop %v3198
    %v3200 = vadd.f32 %v3199, 1.0
    %v3201 = vrcp.pop %v3200
    %v3202 = vmul.f32 1.0, %v3201
    %v3203 = vadd.f32 %v3193, %v375
    %3205 = vrot.lane.b32.xlu0 %v3203, 96
    %v3206 = vpop.permute.xlu0 %3205
    %v3208 = vmul.f32 %v3202, %v3206
    %3210 = vrot.lane.b32.xlu0 %v3208, 32
    %v3211 = vpop.permute.xlu0 %3210
    %v3213 = vadd.f32 %v285, %v3211
    %v3214 = vtanh.pop %v3213
    %v3215 = vsub.f32 1.0, %v3202
    %3217 = vrot.lane.b32.xlu0 %v3214, 112
    %v3218 = vpop.permute.xlu0 %3217
    %v3220 = vmul.f32 %v3215, %v3218
    %v3222 = vmul.f32 %v3202, %v2534
    %v3223 = vadd.f32 %v3220, %v3222
    %3225 = vrot.lane.b32.xlu0 %v3223, 112
    %v3226 = vpop.permute.xlu0 %3225
    %v3227 = vsel %vm288, %v3226, 0
    %3229 = vmatprep.subr.mxu0 0.0
    %3230 = vmatpush1.msra.mxu0 0.0
    %3231 = vmatprep.subr.mxu0 0.0
    %3232 = vmatpush1.msra.mxu0 0.0
    %3233 = vmatprep.subr.mxu0 0.0
    %3234 = vmatpush1.msra.mxu0 0.0
    %3235 = vmatprep.subr.mxu0 0.0
    %3236 = vmatpush1.msra.mxu0 0.0
    %3237 = vmatprep.subr.mxu0 0.0
    %3238 = vmatpush1.msra.mxu0 0.0
    %3239 = vmatprep.subr.mxu0 0.0
    %3240 = vmatpush1.msra.mxu0 0.0
    %3241 = vmatprep.subr.mxu0 0.0
    %3242 = vmatpush1.msra.mxu0 0.0
    %3243 = vmatprep.subr.mxu0 0.0
    %3244 = vmatpush1.msra.mxu0 0.0
    %3245 = vmatprep.subr.mxu0 0.0
    %3246 = vmatpush1.msra.mxu0 0.0
    %3247 = vmatprep.subr.mxu0 0.0
    %3248 = vmatpush1.msra.mxu0 0.0
    %3249 = vmatprep.subr.mxu0 0.0
    %3250 = vmatpush1.msra.mxu0 0.0
    %3251 = vmatprep.subr.mxu0 0.0
    %3252 = vmatpush1.msra.mxu0 0.0
    %3253 = vmatprep.subr.mxu0 0.0
    %3254 = vmatpush1.msra.mxu0 0.0
    %3255 = vmatprep.subr.mxu0 0.0
    %3256 = vmatpush1.msra.mxu0 0.0
    %3257 = vmatprep.subr.mxu0 0.0
    %3258 = vmatpush1.msra.mxu0 %v174
    %3259 = vmatprep.subr.mxu0 0.0
    %3260 = vmatpush1.msra.mxu0 %v173
    %3261 = vmatprep.subr.mxu0 0.0
    %3262 = vmatpush2.msra.mxu0 0.0
    %3263 = vmatprep.subr.mxu0 0.0
    %3264 = vmatpush2.msra.mxu0 0.0
    %3265 = vmatprep.subr.mxu0 0.0
    %3266 = vmatpush2.msra.mxu0 0.0
    %3267 = vmatprep.subr.mxu0 0.0
    %3268 = vmatpush2.msra.mxu0 0.0
    %3269 = vmatprep.subr.mxu0 0.0
    %3270 = vmatpush2.msra.mxu0 0.0
    %3271 = vmatprep.subr.mxu0 0.0
    %3272 = vmatpush2.msra.mxu0 0.0
    %3273 = vmatprep.subr.mxu0 0.0
    %3274 = vmatpush2.msra.mxu0 0.0
    %3275 = vmatprep.subr.mxu0 0.0
    %3276 = vmatpush2.msra.mxu0 0.0
    %3277 = vmatprep.subr.mxu0 0.0
    %3278 = vmatpush2.msra.mxu0 0.0
    %3279 = vmatprep.subr.mxu0 0.0
    %3280 = vmatpush2.msra.mxu0 0.0
    %3281 = vmatprep.subr.mxu0 0.0
    %3282 = vmatpush2.msra.mxu0 0.0
    %3283 = vmatprep.subr.mxu0 0.0
    %3284 = vmatpush2.msra.mxu0 0.0
    %3285 = vmatprep.subr.mxu0 0.0
    %3286 = vmatpush2.msra.mxu0 0.0
    %3287 = vmatprep.subr.mxu0 0.0
    %3288 = vmatpush2.msra.mxu0 0.0
    %3289 = vmatprep.subr.mxu0 0.0
    %3290 = vmatpush2.msra.mxu0 0.0
    %3291 = vmatprep.subr.mxu0 0.0
    %3292 = vmatpush2.msra.mxu0 0.0
    %3293 = vmatprep.mubr.f32.mxu0 0.0
    %3294 = vmatmul.mubr.f32.gmra.mxu0 %v3227
    %v3295 = vpop.f32.mrf.mxu0
    %v3296 = vadd.f32 %v401, %v3295
    %v3297 = vpop.f32.mrf.mxu0
    %3298 = vdwg.mxu0
    %3299 = vmatprep.subr.mxu0 0.0
    %3300 = vmatpush1.msra.mxu0 0.0
    %3301 = vmatprep.subr.mxu0 0.0
    %3302 = vmatpush1.msra.mxu0 0.0
    %3303 = vmatprep.subr.mxu0 0.0
    %3304 = vmatpush1.msra.mxu0 0.0
    %3305 = vmatprep.subr.mxu0 0.0
    %3306 = vmatpush1.msra.mxu0 0.0
    %3307 = vmatprep.subr.mxu0 0.0
    %3308 = vmatpush1.msra.mxu0 0.0
    %3309 = vmatprep.subr.mxu0 0.0
    %3310 = vmatpush1.msra.mxu0 0.0
    %3311 = vmatprep.subr.mxu0 0.0
    %3312 = vmatpush1.msra.mxu0 0.0
    %3313 = vmatprep.subr.mxu0 0.0
    %3314 = vmatpush1.msra.mxu0 0.0
    %3315 = vmatprep.subr.mxu0 0.0
    %3316 = vmatpush1.msra.mxu0 0.0
    %3317 = vmatprep.subr.mxu0 0.0
    %3318 = vmatpush1.msra.mxu0 0.0
    %3319 = vmatprep.subr.mxu0 0.0
    %3320 = vmatpush1.msra.mxu0 0.0
    %3321 = vmatprep.subr.mxu0 0.0
    %3322 = vmatpush1.msra.mxu0 0.0
    %3323 = vmatprep.subr.mxu0 0.0
    %3324 = vmatpush1.msra.mxu0 0.0
    %3325 = vmatprep.subr.mxu0 0.0
    %3326 = vmatpush1.msra.mxu0 0.0
    %3327 = vmatprep.subr.mxu0 0.0
    %3328 = vmatpush1.msra.mxu0 %v182
    %3329 = vmatprep.subr.mxu0 0.0
    %3330 = vmatpush1.msra.mxu0 %v181
    %3331 = vmatprep.subr.mxu0 0.0
    %3332 = vmatpush2.msra.mxu0 0.0
    %3333 = vmatprep.subr.mxu0 0.0
    %3334 = vmatpush2.msra.mxu0 0.0
    %3335 = vmatprep.subr.mxu0 0.0
    %3336 = vmatpush2.msra.mxu0 0.0
    %3337 = vmatprep.subr.mxu0 0.0
    %3338 = vmatpush2.msra.mxu0 0.0
    %3339 = vmatprep.subr.mxu0 0.0
    %3340 = vmatpush2.msra.mxu0 0.0
    %3341 = vmatprep.subr.mxu0 0.0
    %3342 = vmatpush2.msra.mxu0 0.0
    %3343 = vmatprep.subr.mxu0 0.0
    %3344 = vmatpush2.msra.mxu0 0.0
    %3345 = vmatprep.subr.mxu0 0.0
    %3346 = vmatpush2.msra.mxu0 0.0
    %3347 = vmatprep.subr.mxu0 0.0
    %3348 = vmatpush2.msra.mxu0 0.0
    %3349 = vmatprep.subr.mxu0 0.0
    %3350 = vmatpush2.msra.mxu0 0.0
    %3351 = vmatprep.subr.mxu0 0.0
    %3352 = vmatpush2.msra.mxu0 0.0
    %3353 = vmatprep.subr.mxu0 0.0
    %3354 = vmatpush2.msra.mxu0 0.0
    %3355 = vmatprep.subr.mxu0 0.0
    %3356 = vmatpush2.msra.mxu0 0.0
    %3357 = vmatprep.subr.mxu0 0.0
    %3358 = vmatpush2.msra.mxu0 0.0
    %3359 = vmatprep.subr.mxu0 0.0
    %3360 = vmatpush2.msra.mxu0 0.0
    %3361 = vmatprep.subr.mxu0 0.0
    %3362 = vmatpush2.msra.mxu0 0.0
    %3363 = vmatprep.mubr.f32.mxu0 0.0
    %3364 = vmatmul.mubr.f32.gmra.mxu0 %v2709
    %v3365 = vpop.f32.mrf.mxu0
    %v3366 = vadd.f32 0.0, %v3365
    %v3367 = vpop.f32.mrf.mxu0
    %3368 = vdwg.mxu0
    %v3369 = vadd.f32 %v3296, %v3366
    %v3370 = vxor.u32 %v3369, 2147483648
    %v3371 = vmul.f32 %v3370, 1.442695
    %v3372 = vpow.pop %v3371
    %v3373 = vadd.f32 %v3372, 1.0
    %v3374 = vrcp.pop %v3373
    %v3375 = vmul.f32 1.0, %v3374
    %v3376 = vadd.f32 %v3366, %v561
    %3378 = vrot.lane.b32.xlu0 %v3376, 96
    %v3379 = vpop.permute.xlu0 %3378
    %v3381 = vmul.f32 %v3375, %v3379
    %3383 = vrot.lane.b32.xlu0 %v3381, 32
    %v3384 = vpop.permute.xlu0 %3383
    %v3386 = vadd.f32 %v3296, %v3384
    %v3387 = vtanh.pop %v3386
    %v3388 = vsub.f32 1.0, %v3375
    %3390 = vrot.lane.b32.xlu0 %v3387, 112
    %v3391 = vpop.permute.xlu0 %3390
    %v3393 = vmul.f32 %v3388, %v3391
    %v3394 = vmul.f32 %v3375, %v2705
    %v3395 = vadd.f32 %v3393, %v3394
    %3397 = vrot.lane.b32.xlu0 %v3395, 112
    %v3398 = vpop.permute.xlu0 %3397
    %v3399 = vsel %vm288, %v3398, 0
    %3401 = vmatprep.subr.mxu0 0.0
    %3402 = vmatpush1.msra.mxu0 0.0
    %3403 = vmatprep.subr.mxu0 0.0
    %3404 = vmatpush1.msra.mxu0 0.0
    %3405 = vmatprep.subr.mxu0 0.0
    %3406 = vmatpush1.msra.mxu0 0.0
    %3407 = vmatprep.subr.mxu0 0.0
    %3408 = vmatpush1.msra.mxu0 0.0
    %3409 = vmatprep.subr.mxu0 0.0
    %3410 = vmatpush1.msra.mxu0 0.0
    %3411 = vmatprep.subr.mxu0 0.0
    %3412 = vmatpush1.msra.mxu0 0.0
    %3413 = vmatprep.subr.mxu0 0.0
    %3414 = vmatpush1.msra.mxu0 0.0
    %3415 = vmatprep.subr.mxu0 0.0
    %3416 = vmatpush1.msra.mxu0 0.0
    %3417 = vmatprep.subr.mxu0 0.0
    %3418 = vmatpush1.msra.mxu0 0.0
    %3419 = vmatprep.subr.mxu0 0.0
    %3420 = vmatpush1.msra.mxu0 0.0
    %3421 = vmatprep.subr.mxu0 0.0
    %3422 = vmatpush1.msra.mxu0 0.0
    %3423 = vmatprep.subr.mxu0 0.0
    %3424 = vmatpush1.msra.mxu0 0.0
    %3425 = vmatprep.subr.mxu0 0.0
    %3426 = vmatpush1.msra.mxu0 0.0
    %3427 = vmatprep.subr.mxu0 0.0
    %3428 = vmatpush1.msra.mxu0 0.0
    %3429 = vmatprep.subr.mxu0 0.0
    %3430 = vmatpush1.msra.mxu0 %v176
    %3431 = vmatprep.subr.mxu0 0.0
    %3432 = vmatpush1.msra.mxu0 %v175
    %3433 = vmatprep.subr.mxu0 0.0
    %3434 = vmatpush2.msra.mxu0 0.0
    %3435 = vmatprep.subr.mxu0 0.0
    %3436 = vmatpush2.msra.mxu0 0.0
    %3437 = vmatprep.subr.mxu0 0.0
    %3438 = vmatpush2.msra.mxu0 0.0
    %3439 = vmatprep.subr.mxu0 0.0
    %3440 = vmatpush2.msra.mxu0 0.0
    %3441 = vmatprep.subr.mxu0 0.0
    %3442 = vmatpush2.msra.mxu0 0.0
    %3443 = vmatprep.subr.mxu0 0.0
    %3444 = vmatpush2.msra.mxu0 0.0
    %3445 = vmatprep.subr.mxu0 0.0
    %3446 = vmatpush2.msra.mxu0 0.0
    %3447 = vmatprep.subr.mxu0 0.0
    %3448 = vmatpush2.msra.mxu0 0.0
    %3449 = vmatprep.subr.mxu0 0.0
    %3450 = vmatpush2.msra.mxu0 0.0
    %3451 = vmatprep.subr.mxu0 0.0
    %3452 = vmatpush2.msra.mxu0 0.0
    %3453 = vmatprep.subr.mxu0 0.0
    %3454 = vmatpush2.msra.mxu0 0.0
    %3455 = vmatprep.subr.mxu0 0.0
    %3456 = vmatpush2.msra.mxu0 0.0
    %3457 = vmatprep.subr.mxu0 0.0
    %3458 = vmatpush2.msra.mxu0 0.0
    %3459 = vmatprep.subr.mxu0 0.0
    %3460 = vmatpush2.msra.mxu0 0.0
    %3461 = vmatprep.subr.mxu0 0.0
    %3462 = vmatpush2.msra.mxu0 0.0
    %3463 = vmatprep.subr.mxu0 0.0
    %3464 = vmatpush2.msra.mxu0 0.0
    %3465 = vmatprep.mubr.f32.mxu0 0.0
    %3466 = vmatmul.mubr.f32.gmra.mxu0 %v3399
    %v3467 = vpop.f32.mrf.mxu0
    %v3468 = vadd.f32 %v587, %v3467
    %v3469 = vpop.f32.mrf.mxu0
    %3470 = vdwg.mxu0
    %3471 = vmatprep.subr.mxu0 0.0
    %3472 = vmatpush1.msra.mxu0 0.0
    %3473 = vmatprep.subr.mxu0 0.0
    %3474 = vmatpush1.msra.mxu0 0.0
    %3475 = vmatprep.subr.mxu0 0.0
    %3476 = vmatpush1.msra.mxu0 0.0
    %3477 = vmatprep.subr.mxu0 0.0
    %3478 = vmatpush1.msra.mxu0 0.0
    %3479 = vmatprep.subr.mxu0 0.0
    %3480 = vmatpush1.msra.mxu0 0.0
    %3481 = vmatprep.subr.mxu0 0.0
    %3482 = vmatpush1.msra.mxu0 0.0
    %3483 = vmatprep.subr.mxu0 0.0
    %3484 = vmatpush1.msra.mxu0 0.0
    %3485 = vmatprep.subr.mxu0 0.0
    %3486 = vmatpush1.msra.mxu0 0.0
    %3487 = vmatprep.subr.mxu0 0.0
    %3488 = vmatpush1.msra.mxu0 0.0
    %3489 = vmatprep.subr.mxu0 0.0
    %3490 = vmatpush1.msra.mxu0 0.0
    %3491 = vmatprep.subr.mxu0 0.0
    %3492 = vmatpush1.msra.mxu0 0.0
    %3493 = vmatprep.subr.mxu0 0.0
    %3494 = vmatpush1.msra.mxu0 0.0
    %3495 = vmatprep.subr.mxu0 0.0
    %3496 = vmatpush1.msra.mxu0 0.0
    %3497 = vmatprep.subr.mxu0 0.0
    %3498 = vmatpush1.msra.mxu0 0.0
    %3499 = vmatprep.subr.mxu0 0.0
    %3500 = vmatpush1.msra.mxu0 %v184
    %3501 = vmatprep.subr.mxu0 0.0
    %3502 = vmatpush1.msra.mxu0 %v183
    %3503 = vmatprep.subr.mxu0 0.0
    %3504 = vmatpush2.msra.mxu0 0.0
    %3505 = vmatprep.subr.mxu0 0.0
    %3506 = vmatpush2.msra.mxu0 0.0
    %3507 = vmatprep.subr.mxu0 0.0
    %3508 = vmatpush2.msra.mxu0 0.0
    %3509 = vmatprep.subr.mxu0 0.0
    %3510 = vmatpush2.msra.mxu0 0.0
    %3511 = vmatprep.subr.mxu0 0.0
    %3512 = vmatpush2.msra.mxu0 0.0
    %3513 = vmatprep.subr.mxu0 0.0
    %3514 = vmatpush2.msra.mxu0 0.0
    %3515 = vmatprep.subr.mxu0 0.0
    %3516 = vmatpush2.msra.mxu0 0.0
    %3517 = vmatprep.subr.mxu0 0.0
    %3518 = vmatpush2.msra.mxu0 0.0
    %3519 = vmatprep.subr.mxu0 0.0
    %3520 = vmatpush2.msra.mxu0 0.0
    %3521 = vmatprep.subr.mxu0 0.0
    %3522 = vmatpush2.msra.mxu0 0.0
    %3523 = vmatprep.subr.mxu0 0.0
    %3524 = vmatpush2.msra.mxu0 0.0
    %3525 = vmatprep.subr.mxu0 0.0
    %3526 = vmatpush2.msra.mxu0 0.0
    %3527 = vmatprep.subr.mxu0 0.0
    %3528 = vmatpush2.msra.mxu0 0.0
    %3529 = vmatprep.subr.mxu0 0.0
    %3530 = vmatpush2.msra.mxu0 0.0
    %3531 = vmatprep.subr.mxu0 0.0
    %3532 = vmatpush2.msra.mxu0 0.0
    %3533 = vmatprep.subr.mxu0 0.0
    %3534 = vmatpush2.msra.mxu0 0.0
    %3535 = vmatprep.mubr.f32.mxu0 0.0
    %3536 = vmatmul.mubr.f32.gmra.mxu0 %v2881
    %v3537 = vpop.f32.mrf.mxu0
    %v3538 = vadd.f32 0.0, %v3537
    %v3539 = vpop.f32.mrf.mxu0
    %3540 = vdwg.mxu0
    %v3541 = vadd.f32 %v3468, %v3538
    %v3542 = vxor.u32 %v3541, 2147483648
    %v3543 = vmul.f32 %v3542, 1.442695
    %v3544 = vpow.pop %v3543
    %v3545 = vadd.f32 %v3544, 1.0
    %v3546 = vrcp.pop %v3545
    %v3547 = vmul.f32 1.0, %v3546
    %v3548 = vadd.f32 %v3538, %v747
    %3550 = vrot.lane.b32.xlu0 %v3548, 96
    %v3551 = vpop.permute.xlu0 %3550
    %v3553 = vmul.f32 %v3547, %v3551
    %3555 = vrot.lane.b32.xlu0 %v3553, 32
    %v3556 = vpop.permute.xlu0 %3555
    %v3558 = vadd.f32 %v3468, %v3556
    %v3559 = vtanh.pop %v3558
    %v3560 = vsub.f32 1.0, %v3547
    %3562 = vrot.lane.b32.xlu0 %v3559, 112
    %v3563 = vpop.permute.xlu0 %3562
    %v3565 = vmul.f32 %v3560, %v3563
    %v3566 = vmul.f32 %v3547, %v2877
    %v3567 = vadd.f32 %v3565, %v3566
    %3569 = vrot.lane.b32.xlu0 %v3567, 112
    %v3570 = vpop.permute.xlu0 %3569
    %v3571 = vsel %vm288, %v3570, 0
    %3573 = vmatprep.subr.mxu0 0.0
    %3574 = vmatpush1.msra.mxu0 0.0
    %3575 = vmatprep.subr.mxu0 0.0
    %3576 = vmatpush1.msra.mxu0 0.0
    %3577 = vmatprep.subr.mxu0 0.0
    %3578 = vmatpush1.msra.mxu0 0.0
    %3579 = vmatprep.subr.mxu0 0.0
    %3580 = vmatpush1.msra.mxu0 0.0
    %3581 = vmatprep.subr.mxu0 0.0
    %3582 = vmatpush1.msra.mxu0 0.0
    %3583 = vmatprep.subr.mxu0 0.0
    %3584 = vmatpush1.msra.mxu0 0.0
    %3585 = vmatprep.subr.mxu0 0.0
    %3586 = vmatpush1.msra.mxu0 0.0
    %3587 = vmatprep.subr.mxu0 0.0
    %3588 = vmatpush1.msra.mxu0 0.0
    %3589 = vmatprep.subr.mxu0 0.0
    %3590 = vmatpush1.msra.mxu0 0.0
    %3591 = vmatprep.subr.mxu0 0.0
    %3592 = vmatpush1.msra.mxu0 0.0
    %3593 = vmatprep.subr.mxu0 0.0
    %3594 = vmatpush1.msra.mxu0 0.0
    %3595 = vmatprep.subr.mxu0 0.0
    %3596 = vmatpush1.msra.mxu0 0.0
    %3597 = vmatprep.subr.mxu0 0.0
    %3598 = vmatpush1.msra.mxu0 0.0
    %3599 = vmatprep.subr.mxu0 0.0
    %3600 = vmatpush1.msra.mxu0 0.0
    %3601 = vmatprep.subr.mxu0 0.0
    %3602 = vmatpush1.msra.mxu0 %v178
    %3603 = vmatprep.subr.mxu0 0.0
    %3604 = vmatpush1.msra.mxu0 %v177
    %3605 = vmatprep.subr.mxu0 0.0
    %3606 = vmatpush2.msra.mxu0 0.0
    %3607 = vmatprep.subr.mxu0 0.0
    %3608 = vmatpush2.msra.mxu0 0.0
    %3609 = vmatprep.subr.mxu0 0.0
    %3610 = vmatpush2.msra.mxu0 0.0
    %3611 = vmatprep.subr.mxu0 0.0
    %3612 = vmatpush2.msra.mxu0 0.0
    %3613 = vmatprep.subr.mxu0 0.0
    %3614 = vmatpush2.msra.mxu0 0.0
    %3615 = vmatprep.subr.mxu0 0.0
    %3616 = vmatpush2.msra.mxu0 0.0
    %3617 = vmatprep.subr.mxu0 0.0
    %3618 = vmatpush2.msra.mxu0 0.0
    %3619 = vmatprep.subr.mxu0 0.0
    %3620 = vmatpush2.msra.mxu0 0.0
    %3621 = vmatprep.subr.mxu0 0.0
    %3622 = vmatpush2.msra.mxu0 0.0
    %3623 = vmatprep.subr.mxu0 0.0
    %3624 = vmatpush2.msra.mxu0 0.0
    %3625 = vmatprep.subr.mxu0 0.0
    %3626 = vmatpush2.msra.mxu0 0.0
    %3627 = vmatprep.subr.mxu0 0.0
    %3628 = vmatpush2.msra.mxu0 0.0
    %3629 = vmatprep.subr.mxu0 0.0
    %3630 = vmatpush2.msra.mxu0 0.0
    %3631 = vmatprep.subr.mxu0 0.0
    %3632 = vmatpush2.msra.mxu0 0.0
    %3633 = vmatprep.subr.mxu0 0.0
    %3634 = vmatpush2.msra.mxu0 0.0
    %3635 = vmatprep.subr.mxu0 0.0
    %3636 = vmatpush2.msra.mxu0 0.0
    %3637 = vmatprep.mubr.f32.mxu0 0.0
    %3638 = vmatmul.mubr.f32.gmra.mxu0 %v3571
    %v3639 = vpop.f32.mrf.mxu0
    %v3640 = vadd.f32 %v773, %v3639
    %v3641 = vpop.f32.mrf.mxu0
    %3642 = vdwg.mxu0
    %3643 = vmatprep.subr.mxu0 0.0
    %3644 = vmatpush1.msra.mxu0 0.0
    %3645 = vmatprep.subr.mxu0 0.0
    %3646 = vmatpush1.msra.mxu0 0.0
    %3647 = vmatprep.subr.mxu0 0.0
    %3648 = vmatpush1.msra.mxu0 0.0
    %3649 = vmatprep.subr.mxu0 0.0
    %3650 = vmatpush1.msra.mxu0 0.0
    %3651 = vmatprep.subr.mxu0 0.0
    %3652 = vmatpush1.msra.mxu0 0.0
    %3653 = vmatprep.subr.mxu0 0.0
    %3654 = vmatpush1.msra.mxu0 0.0
    %3655 = vmatprep.subr.mxu0 0.0
    %3656 = vmatpush1.msra.mxu0 0.0
    %3657 = vmatprep.subr.mxu0 0.0
    %3658 = vmatpush1.msra.mxu0 0.0
    %3659 = vmatprep.subr.mxu0 0.0
    %3660 = vmatpush1.msra.mxu0 0.0
    %3661 = vmatprep.subr.mxu0 0.0
    %3662 = vmatpush1.msra.mxu0 0.0
    %3663 = vmatprep.subr.mxu0 0.0
    %3664 = vmatpush1.msra.mxu0 0.0
    %3665 = vmatprep.subr.mxu0 0.0
    %3666 = vmatpush1.msra.mxu0 0.0
    %3667 = vmatprep.subr.mxu0 0.0
    %3668 = vmatpush1.msra.mxu0 0.0
    %3669 = vmatprep.subr.mxu0 0.0
    %3670 = vmatpush1.msra.mxu0 0.0
    %3671 = vmatprep.subr.mxu0 0.0
    %3672 = vmatpush1.msra.mxu0 %v186
    %3673 = vmatprep.subr.mxu0 0.0
    %3674 = vmatpush1.msra.mxu0 %v185
    %3675 = vmatprep.subr.mxu0 0.0
    %3676 = vmatpush2.msra.mxu0 0.0
    %3677 = vmatprep.subr.mxu0 0.0
    %3678 = vmatpush2.msra.mxu0 0.0
    %3679 = vmatprep.subr.mxu0 0.0
    %3680 = vmatpush2.msra.mxu0 0.0
    %3681 = vmatprep.subr.mxu0 0.0
    %3682 = vmatpush2.msra.mxu0 0.0
    %3683 = vmatprep.subr.mxu0 0.0
    %3684 = vmatpush2.msra.mxu0 0.0
    %3685 = vmatprep.subr.mxu0 0.0
    %3686 = vmatpush2.msra.mxu0 0.0
    %3687 = vmatprep.subr.mxu0 0.0
    %3688 = vmatpush2.msra.mxu0 0.0
    %3689 = vmatprep.subr.mxu0 0.0
    %3690 = vmatpush2.msra.mxu0 0.0
    %3691 = vmatprep.subr.mxu0 0.0
    %3692 = vmatpush2.msra.mxu0 0.0
    %3693 = vmatprep.subr.mxu0 0.0
    %3694 = vmatpush2.msra.mxu0 0.0
    %3695 = vmatprep.subr.mxu0 0.0
    %3696 = vmatpush2.msra.mxu0 0.0
    %3697 = vmatprep.subr.mxu0 0.0
    %3698 = vmatpush2.msra.mxu0 0.0
    %3699 = vmatprep.subr.mxu0 0.0
    %3700 = vmatpush2.msra.mxu0 0.0
    %3701 = vmatprep.subr.mxu0 0.0
    %3702 = vmatpush2.msra.mxu0 0.0
    %3703 = vmatprep.subr.mxu0 0.0
    %3704 = vmatpush2.msra.mxu0 0.0
    %3705 = vmatprep.subr.mxu0 0.0
    %3706 = vmatpush2.msra.mxu0 0.0
    %3707 = vmatprep.mubr.f32.mxu0 0.0
    %3708 = vmatmul.mubr.f32.gmra.mxu0 %v3053
    %v3709 = vpop.f32.mrf.mxu0
    %v3710 = vadd.f32 0.0, %v3709
    %v3711 = vpop.f32.mrf.mxu0
    %3712 = vdwg.mxu0
    %v3713 = vadd.f32 %v3640, %v3710
    %v3714 = vxor.u32 %v3713, 2147483648
    %v3715 = vmul.f32 %v3714, 1.442695
    %v3716 = vpow.pop %v3715
    %v3717 = vadd.f32 %v3716, 1.0
    %v3718 = vrcp.pop %v3717
    %v3719 = vmul.f32 1.0, %v3718
    %v3720 = vadd.f32 %v3710, %v933
    %3722 = vrot.lane.b32.xlu0 %v3720, 96
    %v3723 = vpop.permute.xlu0 %3722
    %v3725 = vmul.f32 %v3719, %v3723
    %3727 = vrot.lane.b32.xlu0 %v3725, 32
    %v3728 = vpop.permute.xlu0 %3727
    %v3730 = vadd.f32 %v3640, %v3728
    %v3731 = vtanh.pop %v3730
    %v3732 = vsub.f32 1.0, %v3719
    %3734 = vrot.lane.b32.xlu0 %v3731, 112
    %v3735 = vpop.permute.xlu0 %3734
    %v3737 = vmul.f32 %v3732, %v3735
    %v3738 = vmul.f32 %v3719, %v3049
    %v3739 = vadd.f32 %v3737, %v3738
    %3741 = vrot.lane.b32.xlu0 %v3739, 112
    %v3742 = vpop.permute.xlu0 %3741
    %v3743 = vsel %vm288, %v3742, 0
    %3745 = vmatprep.subr.mxu0 0.0
    %3746 = vmatpush1.msra.mxu0 0.0
    %3747 = vmatprep.subr.mxu0 0.0
    %3748 = vmatpush1.msra.mxu0 0.0
    %3749 = vmatprep.subr.mxu0 0.0
    %3750 = vmatpush1.msra.mxu0 0.0
    %3751 = vmatprep.subr.mxu0 0.0
    %3752 = vmatpush1.msra.mxu0 0.0
    %3753 = vmatprep.subr.mxu0 0.0
    %3754 = vmatpush1.msra.mxu0 0.0
    %3755 = vmatprep.subr.mxu0 0.0
    %3756 = vmatpush1.msra.mxu0 0.0
    %3757 = vmatprep.subr.mxu0 0.0
    %3758 = vmatpush1.msra.mxu0 0.0
    %3759 = vmatprep.subr.mxu0 0.0
    %3760 = vmatpush1.msra.mxu0 0.0
    %3761 = vmatprep.subr.mxu0 0.0
    %3762 = vmatpush1.msra.mxu0 0.0
    %3763 = vmatprep.subr.mxu0 0.0
    %3764 = vmatpush1.msra.mxu0 0.0
    %3765 = vmatprep.subr.mxu0 0.0
    %3766 = vmatpush1.msra.mxu0 0.0
    %3767 = vmatprep.subr.mxu0 0.0
    %3768 = vmatpush1.msra.mxu0 0.0
    %3769 = vmatprep.subr.mxu0 0.0
    %3770 = vmatpush1.msra.mxu0 0.0
    %3771 = vmatprep.subr.mxu0 0.0
    %3772 = vmatpush1.msra.mxu0 0.0
    %3773 = vmatprep.subr.mxu0 0.0
    %3774 = vmatpush1.msra.mxu0 %v196
    %3775 = vmatprep.subr.mxu0 0.0
    %3776 = vmatpush1.msra.mxu0 %v195
    %3777 = vmatprep.subr.mxu0 0.0
    %3778 = vmatpush2.msra.mxu0 0.0
    %3779 = vmatprep.subr.mxu0 0.0
    %3780 = vmatpush2.msra.mxu0 0.0
    %3781 = vmatprep.subr.mxu0 0.0
    %3782 = vmatpush2.msra.mxu0 0.0
    %3783 = vmatprep.subr.mxu0 0.0
    %3784 = vmatpush2.msra.mxu0 0.0
    %3785 = vmatprep.subr.mxu0 0.0
    %3786 = vmatpush2.msra.mxu0 0.0
    %3787 = vmatprep.subr.mxu0 0.0
    %3788 = vmatpush2.msra.mxu0 0.0
    %3789 = vmatprep.subr.mxu0 0.0
    %3790 = vmatpush2.msra.mxu0 0.0
    %3791 = vmatprep.subr.mxu0 0.0
    %3792 = vmatpush2.msra.mxu0 0.0
    %3793 = vmatprep.subr.mxu0 0.0
    %3794 = vmatpush2.msra.mxu0 0.0
    %3795 = vmatprep.subr.mxu0 0.0
    %3796 = vmatpush2.msra.mxu0 0.0
    %3797 = vmatprep.subr.mxu0 0.0
    %3798 = vmatpush2.msra.mxu0 0.0
    %3799 = vmatprep.subr.mxu0 0.0
    %3800 = vmatpush2.msra.mxu0 0.0
    %3801 = vmatprep.subr.mxu0 0.0
    %3802 = vmatpush2.msra.mxu0 0.0
    %3803 = vmatprep.subr.mxu0 0.0
    %3804 = vmatpush2.msra.mxu0 0.0
    %3805 = vmatprep.subr.mxu0 0.0
    %3806 = vmatpush2.msra.mxu0 0.0
    %3807 = vmatprep.subr.mxu0 0.0
    %3808 = vmatpush2.msra.mxu0 0.0
    %3809 = vmatprep.mubr.f32.mxu0 0.0
    %3810 = vmatmul.mubr.f32.gmra.mxu0 %v3743
    %v3811 = vpop.f32.mrf.mxu0
    %v3812 = vadd.f32 %v959, %v3811
    %v3813 = vpop.f32.mrf.mxu0
    %3814 = vdwg.mxu0
    %3815 = vst.msk [vmem:[%s19 + $0x8] sm:$0x3] %vm1036, %v3812
    %3816 = vmatprep.subr.mxu0 0.0
    %3817 = vmatpush1.msra.mxu0 0.0
    %3818 = vmatprep.subr.mxu0 0.0
    %3819 = vmatpush1.msra.mxu0 0.0
    %3820 = vmatprep.subr.mxu0 0.0
    %3821 = vmatpush1.msra.mxu0 0.0
    %3822 = vmatprep.subr.mxu0 0.0
    %3823 = vmatpush1.msra.mxu0 0.0
    %3824 = vmatprep.subr.mxu0 0.0
    %3825 = vmatpush1.msra.mxu0 0.0
    %3826 = vmatprep.subr.mxu0 0.0
    %3827 = vmatpush1.msra.mxu0 0.0
    %3828 = vmatprep.subr.mxu0 0.0
    %3829 = vmatpush1.msra.mxu0 0.0
    %3830 = vmatprep.subr.mxu0 0.0
    %3831 = vmatpush1.msra.mxu0 0.0
    %3832 = vmatprep.subr.mxu0 0.0
    %3833 = vmatpush1.msra.mxu0 0.0
    %3834 = vmatprep.subr.mxu0 0.0
    %3835 = vmatpush1.msra.mxu0 0.0
    %3836 = vmatprep.subr.mxu0 0.0
    %3837 = vmatpush1.msra.mxu0 0.0
    %3838 = vmatprep.subr.mxu0 0.0
    %3839 = vmatpush1.msra.mxu0 0.0
    %3840 = vmatprep.subr.mxu0 0.0
    %3841 = vmatpush1.msra.mxu0 0.0
    %3842 = vmatprep.subr.mxu0 0.0
    %3843 = vmatpush1.msra.mxu0 0.0
    %3844 = vmatprep.subr.mxu0 0.0
    %3845 = vmatpush1.msra.mxu0 %v180
    %3846 = vmatprep.subr.mxu0 0.0
    %3847 = vmatpush1.msra.mxu0 %v179
    %3848 = vmatprep.subr.mxu0 0.0
    %3849 = vmatpush2.msra.mxu0 0.0
    %3850 = vmatprep.subr.mxu0 0.0
    %3851 = vmatpush2.msra.mxu0 0.0
    %3852 = vmatprep.subr.mxu0 0.0
    %3853 = vmatpush2.msra.mxu0 0.0
    %3854 = vmatprep.subr.mxu0 0.0
    %3855 = vmatpush2.msra.mxu0 0.0
    %3856 = vmatprep.subr.mxu0 0.0
    %3857 = vmatpush2.msra.mxu0 0.0
    %3858 = vmatprep.subr.mxu0 0.0
    %3859 = vmatpush2.msra.mxu0 0.0
    %3860 = vmatprep.subr.mxu0 0.0
    %3861 = vmatpush2.msra.mxu0 0.0
    %3862 = vmatprep.subr.mxu0 0.0
    %3863 = vmatpush2.msra.mxu0 0.0
    %3864 = vmatprep.subr.mxu0 0.0
    %3865 = vmatpush2.msra.mxu0 0.0
    %3866 = vmatprep.subr.mxu0 0.0
    %3867 = vmatpush2.msra.mxu0 0.0
    %3868 = vmatprep.subr.mxu0 0.0
    %3869 = vmatpush2.msra.mxu0 0.0
    %3870 = vmatprep.subr.mxu0 0.0
    %3871 = vmatpush2.msra.mxu0 0.0
    %3872 = vmatprep.subr.mxu0 0.0
    %3873 = vmatpush2.msra.mxu0 0.0
    %3874 = vmatprep.subr.mxu0 0.0
    %3875 = vmatpush2.msra.mxu0 0.0
    %3876 = vmatprep.subr.mxu0 0.0
    %3877 = vmatpush2.msra.mxu0 0.0
    %3878 = vmatprep.subr.mxu0 0.0
    %3879 = vmatpush2.msra.mxu0 0.0
    %3880 = vmatprep.mubr.f32.mxu0 0.0
    %3881 = vmatmul.mubr.f32.gmra.mxu0 %v3227
    %v3882 = vpop.f32.mrf.mxu0
    %v3883 = vadd.f32 0.0, %v3882
    %v3884 = vpop.f32.mrf.mxu0
    %3885 = vdwg.mxu0
    %v3887 = vrot.slane %v3883, 6
    %v3889 = vadd.f32 %v285, %v3887
    %v3890 = vxor.u32 %v3889, 2147483648
    %v3891 = vmul.f32 %v3890, 1.442695
    %v3892 = vpow.pop %v3891
    %v3893 = vadd.f32 %v3892, 1.0
    %v3894 = vrcp.pop %v3893
    %v3895 = vmul.f32 1.0, %v3894
    %v3896 = vadd.f32 %v3883, %v375
    %v3898 = vrot.slane %v3896, 6
    %3899 = vrot.lane.b32.xlu0 %v3898, 96
    %v3900 = vpop.permute.xlu0 %3899
    %v3902 = vmul.f32 %v3895, %v3900
    %3904 = vrot.lane.b32.xlu0 %v3902, 32
    %v3905 = vpop.permute.xlu0 %3904
    %v3907 = vadd.f32 %v285, %v3905
    %v3908 = vtanh.pop %v3907
    %v3909 = vsub.f32 1.0, %v3895
    %3911 = vrot.lane.b32.xlu0 %v3908, 112
    %v3912 = vpop.permute.xlu0 %3911
    %v3914 = vmul.f32 %v3909, %v3912
    %v3915 = vrot.slane %v3223, 6
    %v3917 = vmul.f32 %v3895, %v3915
    %v3918 = vadd.f32 %v3914, %v3917
    %v3920 = vrot.slane %v3918, 2
    %3921 = vrot.lane.b32.xlu0 %v3920, 112
    %v3922 = vpop.permute.xlu0 %3921
    %v3923 = vsel %vm288, %v3922, 0
    %3925 = vmatprep.subr.mxu0 0.0
    %3926 = vmatpush1.msra.mxu0 0.0
    %3927 = vmatprep.subr.mxu0 0.0
    %3928 = vmatpush1.msra.mxu0 0.0
    %3929 = vmatprep.subr.mxu0 0.0
    %3930 = vmatpush1.msra.mxu0 0.0
    %3931 = vmatprep.subr.mxu0 0.0
    %3932 = vmatpush1.msra.mxu0 0.0
    %3933 = vmatprep.subr.mxu0 0.0
    %3934 = vmatpush1.msra.mxu0 0.0
    %3935 = vmatprep.subr.mxu0 0.0
    %3936 = vmatpush1.msra.mxu0 0.0
    %3937 = vmatprep.subr.mxu0 0.0
    %3938 = vmatpush1.msra.mxu0 0.0
    %3939 = vmatprep.subr.mxu0 0.0
    %3940 = vmatpush1.msra.mxu0 0.0
    %3941 = vmatprep.subr.mxu0 0.0
    %3942 = vmatpush1.msra.mxu0 0.0
    %3943 = vmatprep.subr.mxu0 0.0
    %3944 = vmatpush1.msra.mxu0 0.0
    %3945 = vmatprep.subr.mxu0 0.0
    %3946 = vmatpush1.msra.mxu0 0.0
    %3947 = vmatprep.subr.mxu0 0.0
    %3948 = vmatpush1.msra.mxu0 0.0
    %3949 = vmatprep.subr.mxu0 0.0
    %3950 = vmatpush1.msra.mxu0 0.0
    %3951 = vmatprep.subr.mxu0 0.0
    %3952 = vmatpush1.msra.mxu0 0.0
    %3953 = vmatprep.subr.mxu0 0.0
    %3954 = vmatpush1.msra.mxu0 %v174
    %3955 = vmatprep.subr.mxu0 0.0
    %3956 = vmatpush1.msra.mxu0 %v173
    %3957 = vmatprep.subr.mxu0 0.0
    %3958 = vmatpush2.msra.mxu0 0.0
    %3959 = vmatprep.subr.mxu0 0.0
    %3960 = vmatpush2.msra.mxu0 0.0
    %3961 = vmatprep.subr.mxu0 0.0
    %3962 = vmatpush2.msra.mxu0 0.0
    %3963 = vmatprep.subr.mxu0 0.0
    %3964 = vmatpush2.msra.mxu0 0.0
    %3965 = vmatprep.subr.mxu0 0.0
    %3966 = vmatpush2.msra.mxu0 0.0
    %3967 = vmatprep.subr.mxu0 0.0
    %3968 = vmatpush2.msra.mxu0 0.0
    %3969 = vmatprep.subr.mxu0 0.0
    %3970 = vmatpush2.msra.mxu0 0.0
    %3971 = vmatprep.subr.mxu0 0.0
    %3972 = vmatpush2.msra.mxu0 0.0
    %3973 = vmatprep.subr.mxu0 0.0
    %3974 = vmatpush2.msra.mxu0 0.0
    %3975 = vmatprep.subr.mxu0 0.0
    %3976 = vmatpush2.msra.mxu0 0.0
    %3977 = vmatprep.subr.mxu0 0.0
    %3978 = vmatpush2.msra.mxu0 0.0
    %3979 = vmatprep.subr.mxu0 0.0
    %3980 = vmatpush2.msra.mxu0 0.0
    %3981 = vmatprep.subr.mxu0 0.0
    %3982 = vmatpush2.msra.mxu0 0.0
    %3983 = vmatprep.subr.mxu0 0.0
    %3984 = vmatpush2.msra.mxu0 0.0
    %3985 = vmatprep.subr.mxu0 0.0
    %3986 = vmatpush2.msra.mxu0 0.0
    %3987 = vmatprep.subr.mxu0 0.0
    %3988 = vmatpush2.msra.mxu0 0.0
    %3989 = vmatprep.mubr.f32.mxu0 0.0
    %3990 = vmatmul.mubr.f32.gmra.mxu0 %v3923
    %v3991 = vpop.f32.mrf.mxu0
    %v3992 = vadd.f32 %v401, %v3991
    %v3993 = vpop.f32.mrf.mxu0
    %3994 = vdwg.mxu0
    %3995 = vmatprep.subr.mxu0 0.0
    %3996 = vmatpush1.msra.mxu0 0.0
    %3997 = vmatprep.subr.mxu0 0.0
    %3998 = vmatpush1.msra.mxu0 0.0
    %3999 = vmatprep.subr.mxu0 0.0
    %4000 = vmatpush1.msra.mxu0 0.0
    %4001 = vmatprep.subr.mxu0 0.0
    %4002 = vmatpush1.msra.mxu0 0.0
    %4003 = vmatprep.subr.mxu0 0.0
    %4004 = vmatpush1.msra.mxu0 0.0
    %4005 = vmatprep.subr.mxu0 0.0
    %4006 = vmatpush1.msra.mxu0 0.0
    %4007 = vmatprep.subr.mxu0 0.0
    %4008 = vmatpush1.msra.mxu0 0.0
    %4009 = vmatprep.subr.mxu0 0.0
    %4010 = vmatpush1.msra.mxu0 0.0
    %4011 = vmatprep.subr.mxu0 0.0
    %4012 = vmatpush1.msra.mxu0 0.0
    %4013 = vmatprep.subr.mxu0 0.0
    %4014 = vmatpush1.msra.mxu0 0.0
    %4015 = vmatprep.subr.mxu0 0.0
    %4016 = vmatpush1.msra.mxu0 0.0
    %4017 = vmatprep.subr.mxu0 0.0
    %4018 = vmatpush1.msra.mxu0 0.0
    %4019 = vmatprep.subr.mxu0 0.0
    %4020 = vmatpush1.msra.mxu0 0.0
    %4021 = vmatprep.subr.mxu0 0.0
    %4022 = vmatpush1.msra.mxu0 0.0
    %4023 = vmatprep.subr.mxu0 0.0
    %4024 = vmatpush1.msra.mxu0 %v182
    %4025 = vmatprep.subr.mxu0 0.0
    %4026 = vmatpush1.msra.mxu0 %v181
    %4027 = vmatprep.subr.mxu0 0.0
    %4028 = vmatpush2.msra.mxu0 0.0
    %4029 = vmatprep.subr.mxu0 0.0
    %4030 = vmatpush2.msra.mxu0 0.0
    %4031 = vmatprep.subr.mxu0 0.0
    %4032 = vmatpush2.msra.mxu0 0.0
    %4033 = vmatprep.subr.mxu0 0.0
    %4034 = vmatpush2.msra.mxu0 0.0
    %4035 = vmatprep.subr.mxu0 0.0
    %4036 = vmatpush2.msra.mxu0 0.0
    %4037 = vmatprep.subr.mxu0 0.0
    %4038 = vmatpush2.msra.mxu0 0.0
    %4039 = vmatprep.subr.mxu0 0.0
    %4040 = vmatpush2.msra.mxu0 0.0
    %4041 = vmatprep.subr.mxu0 0.0
    %4042 = vmatpush2.msra.mxu0 0.0
    %4043 = vmatprep.subr.mxu0 0.0
    %4044 = vmatpush2.msra.mxu0 0.0
    %4045 = vmatprep.subr.mxu0 0.0
    %4046 = vmatpush2.msra.mxu0 0.0
    %4047 = vmatprep.subr.mxu0 0.0
    %4048 = vmatpush2.msra.mxu0 0.0
    %4049 = vmatprep.subr.mxu0 0.0
    %4050 = vmatpush2.msra.mxu0 0.0
    %4051 = vmatprep.subr.mxu0 0.0
    %4052 = vmatpush2.msra.mxu0 0.0
    %4053 = vmatprep.subr.mxu0 0.0
    %4054 = vmatpush2.msra.mxu0 0.0
    %4055 = vmatprep.subr.mxu0 0.0
    %4056 = vmatpush2.msra.mxu0 0.0
    %4057 = vmatprep.subr.mxu0 0.0
    %4058 = vmatpush2.msra.mxu0 0.0
    %4059 = vmatprep.mubr.f32.mxu0 0.0
    %4060 = vmatmul.mubr.f32.gmra.mxu0 %v3399
    %v4061 = vpop.f32.mrf.mxu0
    %v4062 = vadd.f32 0.0, %v4061
    %v4063 = vpop.f32.mrf.mxu0
    %4064 = vdwg.mxu0
    %v4065 = vadd.f32 %v3992, %v4062
    %v4066 = vxor.u32 %v4065, 2147483648
    %v4067 = vmul.f32 %v4066, 1.442695
    %v4068 = vpow.pop %v4067
    %v4069 = vadd.f32 %v4068, 1.0
    %v4070 = vrcp.pop %v4069
    %v4071 = vmul.f32 1.0, %v4070
    %v4072 = vadd.f32 %v4062, %v561
    %4074 = vrot.lane.b32.xlu0 %v4072, 96
    %v4075 = vpop.permute.xlu0 %4074
    %v4077 = vmul.f32 %v4071, %v4075
    %4079 = vrot.lane.b32.xlu0 %v4077, 32
    %v4080 = vpop.permute.xlu0 %4079
    %v4082 = vadd.f32 %v3992, %v4080
    %v4083 = vtanh.pop %v4082
    %v4084 = vsub.f32 1.0, %v4071
    %4086 = vrot.lane.b32.xlu0 %v4083, 112
    %v4087 = vpop.permute.xlu0 %4086
    %v4089 = vmul.f32 %v4084, %v4087
    %v4090 = vmul.f32 %v4071, %v3395
    %v4091 = vadd.f32 %v4089, %v4090
    %4093 = vrot.lane.b32.xlu0 %v4091, 112
    %v4094 = vpop.permute.xlu0 %4093
    %v4095 = vsel %vm288, %v4094, 0
    %4097 = vmatprep.subr.mxu0 0.0
    %4098 = vmatpush1.msra.mxu0 0.0
    %4099 = vmatprep.subr.mxu0 0.0
    %4100 = vmatpush1.msra.mxu0 0.0
    %4101 = vmatprep.subr.mxu0 0.0
    %4102 = vmatpush1.msra.mxu0 0.0
    %4103 = vmatprep.subr.mxu0 0.0
    %4104 = vmatpush1.msra.mxu0 0.0
    %4105 = vmatprep.subr.mxu0 0.0
    %4106 = vmatpush1.msra.mxu0 0.0
    %4107 = vmatprep.subr.mxu0 0.0
    %4108 = vmatpush1.msra.mxu0 0.0
    %4109 = vmatprep.subr.mxu0 0.0
    %4110 = vmatpush1.msra.mxu0 0.0
    %4111 = vmatprep.subr.mxu0 0.0
    %4112 = vmatpush1.msra.mxu0 0.0
    %4113 = vmatprep.subr.mxu0 0.0
    %4114 = vmatpush1.msra.mxu0 0.0
    %4115 = vmatprep.subr.mxu0 0.0
    %4116 = vmatpush1.msra.mxu0 0.0
    %4117 = vmatprep.subr.mxu0 0.0
    %4118 = vmatpush1.msra.mxu0 0.0
    %4119 = vmatprep.subr.mxu0 0.0
    %4120 = vmatpush1.msra.mxu0 0.0
    %4121 = vmatprep.subr.mxu0 0.0
    %4122 = vmatpush1.msra.mxu0 0.0
    %4123 = vmatprep.subr.mxu0 0.0
    %4124 = vmatpush1.msra.mxu0 0.0
    %4125 = vmatprep.subr.mxu0 0.0
    %4126 = vmatpush1.msra.mxu0 %v176
    %4127 = vmatprep.subr.mxu0 0.0
    %4128 = vmatpush1.msra.mxu0 %v175
    %4129 = vmatprep.subr.mxu0 0.0
    %4130 = vmatpush2.msra.mxu0 0.0
    %4131 = vmatprep.subr.mxu0 0.0
    %4132 = vmatpush2.msra.mxu0 0.0
    %4133 = vmatprep.subr.mxu0 0.0
    %4134 = vmatpush2.msra.mxu0 0.0
    %4135 = vmatprep.subr.mxu0 0.0
    %4136 = vmatpush2.msra.mxu0 0.0
    %4137 = vmatprep.subr.mxu0 0.0
    %4138 = vmatpush2.msra.mxu0 0.0
    %4139 = vmatprep.subr.mxu0 0.0
    %4140 = vmatpush2.msra.mxu0 0.0
    %4141 = vmatprep.subr.mxu0 0.0
    %4142 = vmatpush2.msra.mxu0 0.0
    %4143 = vmatprep.subr.mxu0 0.0
    %4144 = vmatpush2.msra.mxu0 0.0
    %4145 = vmatprep.subr.mxu0 0.0
    %4146 = vmatpush2.msra.mxu0 0.0
    %4147 = vmatprep.subr.mxu0 0.0
    %4148 = vmatpush2.msra.mxu0 0.0
    %4149 = vmatprep.subr.mxu0 0.0
    %4150 = vmatpush2.msra.mxu0 0.0
    %4151 = vmatprep.subr.mxu0 0.0
    %4152 = vmatpush2.msra.mxu0 0.0
    %4153 = vmatprep.subr.mxu0 0.0
    %4154 = vmatpush2.msra.mxu0 0.0
    %4155 = vmatprep.subr.mxu0 0.0
    %4156 = vmatpush2.msra.mxu0 0.0
    %4157 = vmatprep.subr.mxu0 0.0
    %4158 = vmatpush2.msra.mxu0 0.0
    %4159 = vmatprep.subr.mxu0 0.0
    %4160 = vmatpush2.msra.mxu0 0.0
    %4161 = vmatprep.mubr.f32.mxu0 0.0
    %4162 = vmatmul.mubr.f32.gmra.mxu0 %v4095
    %v4163 = vpop.f32.mrf.mxu0
    %v4164 = vadd.f32 %v587, %v4163
    %v4165 = vpop.f32.mrf.mxu0
    %4166 = vdwg.mxu0
    %4167 = vmatprep.subr.mxu0 0.0
    %4168 = vmatpush1.msra.mxu0 0.0
    %4169 = vmatprep.subr.mxu0 0.0
    %4170 = vmatpush1.msra.mxu0 0.0
    %4171 = vmatprep.subr.mxu0 0.0
    %4172 = vmatpush1.msra.mxu0 0.0
    %4173 = vmatprep.subr.mxu0 0.0
    %4174 = vmatpush1.msra.mxu0 0.0
    %4175 = vmatprep.subr.mxu0 0.0
    %4176 = vmatpush1.msra.mxu0 0.0
    %4177 = vmatprep.subr.mxu0 0.0
    %4178 = vmatpush1.msra.mxu0 0.0
    %4179 = vmatprep.subr.mxu0 0.0
    %4180 = vmatpush1.msra.mxu0 0.0
    %4181 = vmatprep.subr.mxu0 0.0
    %4182 = vmatpush1.msra.mxu0 0.0
    %4183 = vmatprep.subr.mxu0 0.0
    %4184 = vmatpush1.msra.mxu0 0.0
    %4185 = vmatprep.subr.mxu0 0.0
    %4186 = vmatpush1.msra.mxu0 0.0
    %4187 = vmatprep.subr.mxu0 0.0
    %4188 = vmatpush1.msra.mxu0 0.0
    %4189 = vmatprep.subr.mxu0 0.0
    %4190 = vmatpush1.msra.mxu0 0.0
    %4191 = vmatprep.subr.mxu0 0.0
    %4192 = vmatpush1.msra.mxu0 0.0
    %4193 = vmatprep.subr.mxu0 0.0
    %4194 = vmatpush1.msra.mxu0 0.0
    %4195 = vmatprep.subr.mxu0 0.0
    %4196 = vmatpush1.msra.mxu0 %v184
    %4197 = vmatprep.subr.mxu0 0.0
    %4198 = vmatpush1.msra.mxu0 %v183
    %4199 = vmatprep.subr.mxu0 0.0
    %4200 = vmatpush2.msra.mxu0 0.0
    %4201 = vmatprep.subr.mxu0 0.0
    %4202 = vmatpush2.msra.mxu0 0.0
    %4203 = vmatprep.subr.mxu0 0.0
    %4204 = vmatpush2.msra.mxu0 0.0
    %4205 = vmatprep.subr.mxu0 0.0
    %4206 = vmatpush2.msra.mxu0 0.0
    %4207 = vmatprep.subr.mxu0 0.0
    %4208 = vmatpush2.msra.mxu0 0.0
    %4209 = vmatprep.subr.mxu0 0.0
    %4210 = vmatpush2.msra.mxu0 0.0
    %4211 = vmatprep.subr.mxu0 0.0
    %4212 = vmatpush2.msra.mxu0 0.0
    %4213 = vmatprep.subr.mxu0 0.0
    %4214 = vmatpush2.msra.mxu0 0.0
    %4215 = vmatprep.subr.mxu0 0.0
    %4216 = vmatpush2.msra.mxu0 0.0
    %4217 = vmatprep.subr.mxu0 0.0
    %4218 = vmatpush2.msra.mxu0 0.0
    %4219 = vmatprep.subr.mxu0 0.0
    %4220 = vmatpush2.msra.mxu0 0.0
    %4221 = vmatprep.subr.mxu0 0.0
    %4222 = vmatpush2.msra.mxu0 0.0
    %4223 = vmatprep.subr.mxu0 0.0
    %4224 = vmatpush2.msra.mxu0 0.0
    %4225 = vmatprep.subr.mxu0 0.0
    %4226 = vmatpush2.msra.mxu0 0.0
    %4227 = vmatprep.subr.mxu0 0.0
    %4228 = vmatpush2.msra.mxu0 0.0
    %4229 = vmatprep.subr.mxu0 0.0
    %4230 = vmatpush2.msra.mxu0 0.0
    %4231 = vmatprep.mubr.f32.mxu0 0.0
    %4232 = vmatmul.mubr.f32.gmra.mxu0 %v3571
    %v4233 = vpop.f32.mrf.mxu0
    %v4234 = vadd.f32 0.0, %v4233
    %v4235 = vpop.f32.mrf.mxu0
    %4236 = vdwg.mxu0
    %v4237 = vadd.f32 %v4164, %v4234
    %v4238 = vxor.u32 %v4237, 2147483648
    %v4239 = vmul.f32 %v4238, 1.442695
    %v4240 = vpow.pop %v4239
    %v4241 = vadd.f32 %v4240, 1.0
    %v4242 = vrcp.pop %v4241
    %v4243 = vmul.f32 1.0, %v4242
    %v4244 = vadd.f32 %v4234, %v747
    %4246 = vrot.lane.b32.xlu0 %v4244, 96
    %v4247 = vpop.permute.xlu0 %4246
    %v4249 = vmul.f32 %v4243, %v4247
    %4251 = vrot.lane.b32.xlu0 %v4249, 32
    %v4252 = vpop.permute.xlu0 %4251
    %v4254 = vadd.f32 %v4164, %v4252
    %v4255 = vtanh.pop %v4254
    %v4256 = vsub.f32 1.0, %v4243
    %4258 = vrot.lane.b32.xlu0 %v4255, 112
    %v4259 = vpop.permute.xlu0 %4258
    %v4261 = vmul.f32 %v4256, %v4259
    %v4262 = vmul.f32 %v4243, %v3567
    %v4263 = vadd.f32 %v4261, %v4262
    %4265 = vrot.lane.b32.xlu0 %v4263, 112
    %v4266 = vpop.permute.xlu0 %4265
    %v4267 = vsel %vm288, %v4266, 0
    %4269 = vmatprep.subr.mxu0 0.0
    %4270 = vmatpush1.msra.mxu0 0.0
    %4271 = vmatprep.subr.mxu0 0.0
    %4272 = vmatpush1.msra.mxu0 0.0
    %4273 = vmatprep.subr.mxu0 0.0
    %4274 = vmatpush1.msra.mxu0 0.0
    %4275 = vmatprep.subr.mxu0 0.0
    %4276 = vmatpush1.msra.mxu0 0.0
    %4277 = vmatprep.subr.mxu0 0.0
    %4278 = vmatpush1.msra.mxu0 0.0
    %4279 = vmatprep.subr.mxu0 0.0
    %4280 = vmatpush1.msra.mxu0 0.0
    %4281 = vmatprep.subr.mxu0 0.0
    %4282 = vmatpush1.msra.mxu0 0.0
    %4283 = vmatprep.subr.mxu0 0.0
    %4284 = vmatpush1.msra.mxu0 0.0
    %4285 = vmatprep.subr.mxu0 0.0
    %4286 = vmatpush1.msra.mxu0 0.0
    %4287 = vmatprep.subr.mxu0 0.0
    %4288 = vmatpush1.msra.mxu0 0.0
    %4289 = vmatprep.subr.mxu0 0.0
    %4290 = vmatpush1.msra.mxu0 0.0
    %4291 = vmatprep.subr.mxu0 0.0
    %4292 = vmatpush1.msra.mxu0 0.0
    %4293 = vmatprep.subr.mxu0 0.0
    %4294 = vmatpush1.msra.mxu0 0.0
    %4295 = vmatprep.subr.mxu0 0.0
    %4296 = vmatpush1.msra.mxu0 0.0
    %4297 = vmatprep.subr.mxu0 0.0
    %4298 = vmatpush1.msra.mxu0 %v178
    %4299 = vmatprep.subr.mxu0 0.0
    %4300 = vmatpush1.msra.mxu0 %v177
    %4301 = vmatprep.subr.mxu0 0.0
    %4302 = vmatpush2.msra.mxu0 0.0
    %4303 = vmatprep.subr.mxu0 0.0
    %4304 = vmatpush2.msra.mxu0 0.0
    %4305 = vmatprep.subr.mxu0 0.0
    %4306 = vmatpush2.msra.mxu0 0.0
    %4307 = vmatprep.subr.mxu0 0.0
    %4308 = vmatpush2.msra.mxu0 0.0
    %4309 = vmatprep.subr.mxu0 0.0
    %4310 = vmatpush2.msra.mxu0 0.0
    %4311 = vmatprep.subr.mxu0 0.0
    %4312 = vmatpush2.msra.mxu0 0.0
    %4313 = vmatprep.subr.mxu0 0.0
    %4314 = vmatpush2.msra.mxu0 0.0
    %4315 = vmatprep.subr.mxu0 0.0
    %4316 = vmatpush2.msra.mxu0 0.0
    %4317 = vmatprep.subr.mxu0 0.0
    %4318 = vmatpush2.msra.mxu0 0.0
    %4319 = vmatprep.subr.mxu0 0.0
    %4320 = vmatpush2.msra.mxu0 0.0
    %4321 = vmatprep.subr.mxu0 0.0
    %4322 = vmatpush2.msra.mxu0 0.0
    %4323 = vmatprep.subr.mxu0 0.0
    %4324 = vmatpush2.msra.mxu0 0.0
    %4325 = vmatprep.subr.mxu0 0.0
    %4326 = vmatpush2.msra.mxu0 0.0
    %4327 = vmatprep.subr.mxu0 0.0
    %4328 = vmatpush2.msra.mxu0 0.0
    %4329 = vmatprep.subr.mxu0 0.0
    %4330 = vmatpush2.msra.mxu0 0.0
    %4331 = vmatprep.subr.mxu0 0.0
    %4332 = vmatpush2.msra.mxu0 0.0
    %4333 = vmatprep.mubr.f32.mxu0 0.0
    %4334 = vmatmul.mubr.f32.gmra.mxu0 %v4267
    %v4335 = vpop.f32.mrf.mxu0
    %v4336 = vadd.f32 %v773, %v4335
    %v4337 = vpop.f32.mrf.mxu0
    %4338 = vdwg.mxu0
    %4339 = vmatprep.subr.mxu0 0.0
    %4340 = vmatpush1.msra.mxu0 0.0
    %4341 = vmatprep.subr.mxu0 0.0
    %4342 = vmatpush1.msra.mxu0 0.0
    %4343 = vmatprep.subr.mxu0 0.0
    %4344 = vmatpush1.msra.mxu0 0.0
    %4345 = vmatprep.subr.mxu0 0.0
    %4346 = vmatpush1.msra.mxu0 0.0
    %4347 = vmatprep.subr.mxu0 0.0
    %4348 = vmatpush1.msra.mxu0 0.0
    %4349 = vmatprep.subr.mxu0 0.0
    %4350 = vmatpush1.msra.mxu0 0.0
    %4351 = vmatprep.subr.mxu0 0.0
    %4352 = vmatpush1.msra.mxu0 0.0
    %4353 = vmatprep.subr.mxu0 0.0
    %4354 = vmatpush1.msra.mxu0 0.0
    %4355 = vmatprep.subr.mxu0 0.0
    %4356 = vmatpush1.msra.mxu0 0.0
    %4357 = vmatprep.subr.mxu0 0.0
    %4358 = vmatpush1.msra.mxu0 0.0
    %4359 = vmatprep.subr.mxu0 0.0
    %4360 = vmatpush1.msra.mxu0 0.0
    %4361 = vmatprep.subr.mxu0 0.0
    %4362 = vmatpush1.msra.mxu0 0.0
    %4363 = vmatprep.subr.mxu0 0.0
    %4364 = vmatpush1.msra.mxu0 0.0
    %4365 = vmatprep.subr.mxu0 0.0
    %4366 = vmatpush1.msra.mxu0 0.0
    %4367 = vmatprep.subr.mxu0 0.0
    %4368 = vmatpush1.msra.mxu0 %v186
    %4369 = vmatprep.subr.mxu0 0.0
    %4370 = vmatpush1.msra.mxu0 %v185
    %4371 = vmatprep.subr.mxu0 0.0
    %4372 = vmatpush2.msra.mxu0 0.0
    %4373 = vmatprep.subr.mxu0 0.0
    %4374 = vmatpush2.msra.mxu0 0.0
    %4375 = vmatprep.subr.mxu0 0.0
    %4376 = vmatpush2.msra.mxu0 0.0
    %4377 = vmatprep.subr.mxu0 0.0
    %4378 = vmatpush2.msra.mxu0 0.0
    %4379 = vmatprep.subr.mxu0 0.0
    %4380 = vmatpush2.msra.mxu0 0.0
    %4381 = vmatprep.subr.mxu0 0.0
    %4382 = vmatpush2.msra.mxu0 0.0
    %4383 = vmatprep.subr.mxu0 0.0
    %4384 = vmatpush2.msra.mxu0 0.0
    %4385 = vmatprep.subr.mxu0 0.0
    %4386 = vmatpush2.msra.mxu0 0.0
    %4387 = vmatprep.subr.mxu0 0.0
    %4388 = vmatpush2.msra.mxu0 0.0
    %4389 = vmatprep.subr.mxu0 0.0
    %4390 = vmatpush2.msra.mxu0 0.0
    %4391 = vmatprep.subr.mxu0 0.0
    %4392 = vmatpush2.msra.mxu0 0.0
    %4393 = vmatprep.subr.mxu0 0.0
    %4394 = vmatpush2.msra.mxu0 0.0
    %4395 = vmatprep.subr.mxu0 0.0
    %4396 = vmatpush2.msra.mxu0 0.0
    %4397 = vmatprep.subr.mxu0 0.0
    %4398 = vmatpush2.msra.mxu0 0.0
    %4399 = vmatprep.subr.mxu0 0.0
    %4400 = vmatpush2.msra.mxu0 0.0
    %4401 = vmatprep.subr.mxu0 0.0
    %4402 = vmatpush2.msra.mxu0 0.0
    %4403 = vmatprep.mubr.f32.mxu0 0.0
    %4404 = vmatmul.mubr.f32.gmra.mxu0 %v3743
    %v4405 = vpop.f32.mrf.mxu0
    %v4406 = vadd.f32 0.0, %v4405
    %v4407 = vpop.f32.mrf.mxu0
    %4408 = vdwg.mxu0
    %v4409 = vadd.f32 %v4336, %v4406
    %v4410 = vxor.u32 %v4409, 2147483648
    %v4411 = vmul.f32 %v4410, 1.442695
    %v4412 = vpow.pop %v4411
    %v4413 = vadd.f32 %v4412, 1.0
    %v4414 = vrcp.pop %v4413
    %v4415 = vmul.f32 1.0, %v4414
    %v4416 = vadd.f32 %v4406, %v933
    %4418 = vrot.lane.b32.xlu0 %v4416, 96
    %v4419 = vpop.permute.xlu0 %4418
    %v4421 = vmul.f32 %v4415, %v4419
    %4423 = vrot.lane.b32.xlu0 %v4421, 32
    %v4424 = vpop.permute.xlu0 %4423
    %v4426 = vadd.f32 %v4336, %v4424
    %v4427 = vtanh.pop %v4426
    %v4428 = vsub.f32 1.0, %v4415
    %4430 = vrot.lane.b32.xlu0 %v4427, 112
    %v4431 = vpop.permute.xlu0 %4430
    %v4433 = vmul.f32 %v4428, %v4431
    %v4434 = vmul.f32 %v4415, %v3739
    %v4435 = vadd.f32 %v4433, %v4434
    %4437 = vrot.lane.b32.xlu0 %v4435, 112
    %v4438 = vpop.permute.xlu0 %4437
    %v4439 = vsel %vm288, %v4438, 0
    %4441 = vmatprep.subr.mxu0 0.0
    %4442 = vmatpush1.msra.mxu0 0.0
    %4443 = vmatprep.subr.mxu0 0.0
    %4444 = vmatpush1.msra.mxu0 0.0
    %4445 = vmatprep.subr.mxu0 0.0
    %4446 = vmatpush1.msra.mxu0 0.0
    %4447 = vmatprep.subr.mxu0 0.0
    %4448 = vmatpush1.msra.mxu0 0.0
    %4449 = vmatprep.subr.mxu0 0.0
    %4450 = vmatpush1.msra.mxu0 0.0
    %4451 = vmatprep.subr.mxu0 0.0
    %4452 = vmatpush1.msra.mxu0 0.0
    %4453 = vmatprep.subr.mxu0 0.0
    %4454 = vmatpush1.msra.mxu0 0.0
    %4455 = vmatprep.subr.mxu0 0.0
    %4456 = vmatpush1.msra.mxu0 0.0
    %4457 = vmatprep.subr.mxu0 0.0
    %4458 = vmatpush1.msra.mxu0 0.0
    %4459 = vmatprep.subr.mxu0 0.0
    %4460 = vmatpush1.msra.mxu0 0.0
    %4461 = vmatprep.subr.mxu0 0.0
    %4462 = vmatpush1.msra.mxu0 0.0
    %4463 = vmatprep.subr.mxu0 0.0
    %4464 = vmatpush1.msra.mxu0 0.0
    %4465 = vmatprep.subr.mxu0 0.0
    %4466 = vmatpush1.msra.mxu0 0.0
    %4467 = vmatprep.subr.mxu0 0.0
    %4468 = vmatpush1.msra.mxu0 0.0
    %4469 = vmatprep.subr.mxu0 0.0
    %4470 = vmatpush1.msra.mxu0 %v196
    %4471 = vmatprep.subr.mxu0 0.0
    %4472 = vmatpush1.msra.mxu0 %v195
    %4473 = vmatprep.subr.mxu0 0.0
    %4474 = vmatpush2.msra.mxu0 0.0
    %4475 = vmatprep.subr.mxu0 0.0
    %4476 = vmatpush2.msra.mxu0 0.0
    %4477 = vmatprep.subr.mxu0 0.0
    %4478 = vmatpush2.msra.mxu0 0.0
    %4479 = vmatprep.subr.mxu0 0.0
    %4480 = vmatpush2.msra.mxu0 0.0
    %4481 = vmatprep.subr.mxu0 0.0
    %4482 = vmatpush2.msra.mxu0 0.0
    %4483 = vmatprep.subr.mxu0 0.0
    %4484 = vmatpush2.msra.mxu0 0.0
    %4485 = vmatprep.subr.mxu0 0.0
    %4486 = vmatpush2.msra.mxu0 0.0
    %4487 = vmatprep.subr.mxu0 0.0
    %4488 = vmatpush2.msra.mxu0 0.0
    %4489 = vmatprep.subr.mxu0 0.0
    %4490 = vmatpush2.msra.mxu0 0.0
    %4491 = vmatprep.subr.mxu0 0.0
    %4492 = vmatpush2.msra.mxu0 0.0
    %4493 = vmatprep.subr.mxu0 0.0
    %4494 = vmatpush2.msra.mxu0 0.0
    %4495 = vmatprep.subr.mxu0 0.0
    %4496 = vmatpush2.msra.mxu0 0.0
    %4497 = vmatprep.subr.mxu0 0.0
    %4498 = vmatpush2.msra.mxu0 0.0
    %4499 = vmatprep.subr.mxu0 0.0
    %4500 = vmatpush2.msra.mxu0 0.0
    %4501 = vmatprep.subr.mxu0 0.0
    %4502 = vmatpush2.msra.mxu0 0.0
    %4503 = vmatprep.subr.mxu0 0.0
    %4504 = vmatpush2.msra.mxu0 0.0
    %4505 = vmatprep.mubr.f32.mxu0 0.0
    %4506 = vmatmul.mubr.f32.gmra.mxu0 %v4439
    %v4507 = vpop.f32.mrf.mxu0
    %v4508 = vadd.f32 %v959, %v4507
    %v4509 = vpop.f32.mrf.mxu0
    %4510 = vdwg.mxu0
    %4511 = vst.msk [vmem:[%s19 + $0xa] sm:$0x3] %vm1036, %v4508
    %4512 = vmatprep.subr.mxu0 0.0
    %4513 = vmatpush1.msra.mxu0 0.0
    %4514 = vmatprep.subr.mxu0 0.0
    %4515 = vmatpush1.msra.mxu0 0.0
    %4516 = vmatprep.subr.mxu0 0.0
    %4517 = vmatpush1.msra.mxu0 0.0
    %4518 = vmatprep.subr.mxu0 0.0
    %4519 = vmatpush1.msra.mxu0 0.0
    %4520 = vmatprep.subr.mxu0 0.0
    %4521 = vmatpush1.msra.mxu0 0.0
    %4522 = vmatprep.subr.mxu0 0.0
    %4523 = vmatpush1.msra.mxu0 0.0
    %4524 = vmatprep.subr.mxu0 0.0
    %4525 = vmatpush1.msra.mxu0 0.0
    %4526 = vmatprep.subr.mxu0 0.0
    %4527 = vmatpush1.msra.mxu0 0.0
    %4528 = vmatprep.subr.mxu0 0.0
    %4529 = vmatpush1.msra.mxu0 0.0
    %4530 = vmatprep.subr.mxu0 0.0
    %4531 = vmatpush1.msra.mxu0 0.0
    %4532 = vmatprep.subr.mxu0 0.0
    %4533 = vmatpush1.msra.mxu0 0.0
    %4534 = vmatprep.subr.mxu0 0.0
    %4535 = vmatpush1.msra.mxu0 0.0
    %4536 = vmatprep.subr.mxu0 0.0
    %4537 = vmatpush1.msra.mxu0 0.0
    %4538 = vmatprep.subr.mxu0 0.0
    %4539 = vmatpush1.msra.mxu0 0.0
    %4540 = vmatprep.subr.mxu0 0.0
    %4541 = vmatpush1.msra.mxu0 %v180
    %4542 = vmatprep.subr.mxu0 0.0
    %4543 = vmatpush1.msra.mxu0 %v179
    %4544 = vmatprep.subr.mxu0 0.0
    %4545 = vmatpush2.msra.mxu0 0.0
    %4546 = vmatprep.subr.mxu0 0.0
    %4547 = vmatpush2.msra.mxu0 0.0
    %4548 = vmatprep.subr.mxu0 0.0
    %4549 = vmatpush2.msra.mxu0 0.0
    %4550 = vmatprep.subr.mxu0 0.0
    %4551 = vmatpush2.msra.mxu0 0.0
    %4552 = vmatprep.subr.mxu0 0.0
    %4553 = vmatpush2.msra.mxu0 0.0
    %4554 = vmatprep.subr.mxu0 0.0
    %4555 = vmatpush2.msra.mxu0 0.0
    %4556 = vmatprep.subr.mxu0 0.0
    %4557 = vmatpush2.msra.mxu0 0.0
    %4558 = vmatprep.subr.mxu0 0.0
    %4559 = vmatpush2.msra.mxu0 0.0
    %4560 = vmatprep.subr.mxu0 0.0
    %4561 = vmatpush2.msra.mxu0 0.0
    %4562 = vmatprep.subr.mxu0 0.0
    %4563 = vmatpush2.msra.mxu0 0.0
    %4564 = vmatprep.subr.mxu0 0.0
    %4565 = vmatpush2.msra.mxu0 0.0
    %4566 = vmatprep.subr.mxu0 0.0
    %4567 = vmatpush2.msra.mxu0 0.0
    %4568 = vmatprep.subr.mxu0 0.0
    %4569 = vmatpush2.msra.mxu0 0.0
    %4570 = vmatprep.subr.mxu0 0.0
    %4571 = vmatpush2.msra.mxu0 0.0
    %4572 = vmatprep.subr.mxu0 0.0
    %4573 = vmatpush2.msra.mxu0 0.0
    %4574 = vmatprep.subr.mxu0 0.0
    %4575 = vmatpush2.msra.mxu0 0.0
    %4576 = vmatprep.mubr.f32.mxu0 0.0
    %4577 = vmatmul.mubr.f32.gmra.mxu0 %v3923
    %v4578 = vpop.f32.mrf.mxu0
    %v4579 = vadd.f32 0.0, %v4578
    %v4580 = vpop.f32.mrf.mxu0
    %4581 = vdwg.mxu0
    %v4583 = vrot.slane %v4579, 4
    %v4585 = vadd.f32 %v285, %v4583
    %v4586 = vxor.u32 %v4585, 2147483648
    %v4587 = vmul.f32 %v4586, 1.442695
    %v4588 = vpow.pop %v4587
    %v4589 = vadd.f32 %v4588, 1.0
    %v4590 = vrcp.pop %v4589
    %v4591 = vmul.f32 1.0, %v4590
    %v4592 = vadd.f32 %v4579, %v375
    %v4594 = vrot.slane %v4592, 4
    %4595 = vrot.lane.b32.xlu0 %v4594, 96
    %v4596 = vpop.permute.xlu0 %4595
    %v4598 = vmul.f32 %v4591, %v4596
    %4600 = vrot.lane.b32.xlu0 %v4598, 32
    %v4601 = vpop.permute.xlu0 %4600
    %v4603 = vadd.f32 %v285, %v4601
    %v4604 = vtanh.pop %v4603
    %v4605 = vsub.f32 1.0, %v4591
    %4607 = vrot.lane.b32.xlu0 %v4604, 112
    %v4608 = vpop.permute.xlu0 %4607
    %v4610 = vmul.f32 %v4605, %v4608
    %v4611 = vrot.slane %v3918, 6
    %v4613 = vmul.f32 %v4591, %v4611
    %v4614 = vadd.f32 %v4610, %v4613
    %v4616 = vrot.slane %v4614, 4
    %4617 = vrot.lane.b32.xlu0 %v4616, 112
    %v4618 = vpop.permute.xlu0 %4617
    %v4619 = vsel %vm288, %v4618, 0
    %4621 = vmatprep.subr.mxu0 0.0
    %4622 = vmatpush1.msra.mxu0 0.0
    %4623 = vmatprep.subr.mxu0 0.0
    %4624 = vmatpush1.msra.mxu0 0.0
    %4625 = vmatprep.subr.mxu0 0.0
    %4626 = vmatpush1.msra.mxu0 0.0
    %4627 = vmatprep.subr.mxu0 0.0
    %4628 = vmatpush1.msra.mxu0 0.0
    %4629 = vmatprep.subr.mxu0 0.0
    %4630 = vmatpush1.msra.mxu0 0.0
    %4631 = vmatprep.subr.mxu0 0.0
    %4632 = vmatpush1.msra.mxu0 0.0
    %4633 = vmatprep.subr.mxu0 0.0
    %4634 = vmatpush1.msra.mxu0 0.0
    %4635 = vmatprep.subr.mxu0 0.0
    %4636 = vmatpush1.msra.mxu0 0.0
    %4637 = vmatprep.subr.mxu0 0.0
    %4638 = vmatpush1.msra.mxu0 0.0
    %4639 = vmatprep.subr.mxu0 0.0
    %4640 = vmatpush1.msra.mxu0 0.0
    %4641 = vmatprep.subr.mxu0 0.0
    %4642 = vmatpush1.msra.mxu0 0.0
    %4643 = vmatprep.subr.mxu0 0.0
    %4644 = vmatpush1.msra.mxu0 0.0
    %4645 = vmatprep.subr.mxu0 0.0
    %4646 = vmatpush1.msra.mxu0 0.0
    %4647 = vmatprep.subr.mxu0 0.0
    %4648 = vmatpush1.msra.mxu0 0.0
    %4649 = vmatprep.subr.mxu0 0.0
    %4650 = vmatpush1.msra.mxu0 %v174
    %4651 = vmatprep.subr.mxu0 0.0
    %4652 = vmatpush1.msra.mxu0 %v173
    %4653 = vmatprep.subr.mxu0 0.0
    %4654 = vmatpush2.msra.mxu0 0.0
    %4655 = vmatprep.subr.mxu0 0.0
    %4656 = vmatpush2.msra.mxu0 0.0
    %4657 = vmatprep.subr.mxu0 0.0
    %4658 = vmatpush2.msra.mxu0 0.0
    %4659 = vmatprep.subr.mxu0 0.0
    %4660 = vmatpush2.msra.mxu0 0.0
    %4661 = vmatprep.subr.mxu0 0.0
    %4662 = vmatpush2.msra.mxu0 0.0
    %4663 = vmatprep.subr.mxu0 0.0
    %4664 = vmatpush2.msra.mxu0 0.0
    %4665 = vmatprep.subr.mxu0 0.0
    %4666 = vmatpush2.msra.mxu0 0.0
    %4667 = vmatprep.subr.mxu0 0.0
    %4668 = vmatpush2.msra.mxu0 0.0
    %4669 = vmatprep.subr.mxu0 0.0
    %4670 = vmatpush2.msra.mxu0 0.0
    %4671 = vmatprep.subr.mxu0 0.0
    %4672 = vmatpush2.msra.mxu0 0.0
    %4673 = vmatprep.subr.mxu0 0.0
    %4674 = vmatpush2.msra.mxu0 0.0
    %4675 = vmatprep.subr.mxu0 0.0
    %4676 = vmatpush2.msra.mxu0 0.0
    %4677 = vmatprep.subr.mxu0 0.0
    %4678 = vmatpush2.msra.mxu0 0.0
    %4679 = vmatprep.subr.mxu0 0.0
    %4680 = vmatpush2.msra.mxu0 0.0
    %4681 = vmatprep.subr.mxu0 0.0
    %4682 = vmatpush2.msra.mxu0 0.0
    %4683 = vmatprep.subr.mxu0 0.0
    %4684 = vmatpush2.msra.mxu0 0.0
    %4685 = vmatprep.mubr.f32.mxu0 0.0
    %4686 = vmatmul.mubr.f32.gmra.mxu0 %v4619
    %v4687 = vpop.f32.mrf.mxu0
    %v4688 = vadd.f32 %v401, %v4687
    %v4689 = vpop.f32.mrf.mxu0
    %4690 = vdwg.mxu0
    %4691 = vmatprep.subr.mxu0 0.0
    %4692 = vmatpush1.msra.mxu0 0.0
    %4693 = vmatprep.subr.mxu0 0.0
    %4694 = vmatpush1.msra.mxu0 0.0
    %4695 = vmatprep.subr.mxu0 0.0
    %4696 = vmatpush1.msra.mxu0 0.0
    %4697 = vmatprep.subr.mxu0 0.0
    %4698 = vmatpush1.msra.mxu0 0.0
    %4699 = vmatprep.subr.mxu0 0.0
    %4700 = vmatpush1.msra.mxu0 0.0
    %4701 = vmatprep.subr.mxu0 0.0
    %4702 = vmatpush1.msra.mxu0 0.0
    %4703 = vmatprep.subr.mxu0 0.0
    %4704 = vmatpush1.msra.mxu0 0.0
    %4705 = vmatprep.subr.mxu0 0.0
    %4706 = vmatpush1.msra.mxu0 0.0
    %4707 = vmatprep.subr.mxu0 0.0
    %4708 = vmatpush1.msra.mxu0 0.0
    %4709 = vmatprep.subr.mxu0 0.0
    %4710 = vmatpush1.msra.mxu0 0.0
    %4711 = vmatprep.subr.mxu0 0.0
    %4712 = vmatpush1.msra.mxu0 0.0
    %4713 = vmatprep.subr.mxu0 0.0
    %4714 = vmatpush1.msra.mxu0 0.0
    %4715 = vmatprep.subr.mxu0 0.0
    %4716 = vmatpush1.msra.mxu0 0.0
    %4717 = vmatprep.subr.mxu0 0.0
    %4718 = vmatpush1.msra.mxu0 0.0
    %4719 = vmatprep.subr.mxu0 0.0
    %4720 = vmatpush1.msra.mxu0 %v182
    %4721 = vmatprep.subr.mxu0 0.0
    %4722 = vmatpush1.msra.mxu0 %v181
    %4723 = vmatprep.subr.mxu0 0.0
    %4724 = vmatpush2.msra.mxu0 0.0
    %4725 = vmatprep.subr.mxu0 0.0
    %4726 = vmatpush2.msra.mxu0 0.0
    %4727 = vmatprep.subr.mxu0 0.0
    %4728 = vmatpush2.msra.mxu0 0.0
    %4729 = vmatprep.subr.mxu0 0.0
    %4730 = vmatpush2.msra.mxu0 0.0
    %4731 = vmatprep.subr.mxu0 0.0
    %4732 = vmatpush2.msra.mxu0 0.0
    %4733 = vmatprep.subr.mxu0 0.0
    %4734 = vmatpush2.msra.mxu0 0.0
    %4735 = vmatprep.subr.mxu0 0.0
    %4736 = vmatpush2.msra.mxu0 0.0
    %4737 = vmatprep.subr.mxu0 0.0
    %4738 = vmatpush2.msra.mxu0 0.0
    %4739 = vmatprep.subr.mxu0 0.0
    %4740 = vmatpush2.msra.mxu0 0.0
    %4741 = vmatprep.subr.mxu0 0.0
    %4742 = vmatpush2.msra.mxu0 0.0
    %4743 = vmatprep.subr.mxu0 0.0
    %4744 = vmatpush2.msra.mxu0 0.0
    %4745 = vmatprep.subr.mxu0 0.0
    %4746 = vmatpush2.msra.mxu0 0.0
    %4747 = vmatprep.subr.mxu0 0.0
    %4748 = vmatpush2.msra.mxu0 0.0
    %4749 = vmatprep.subr.mxu0 0.0
    %4750 = vmatpush2.msra.mxu0 0.0
    %4751 = vmatprep.subr.mxu0 0.0
    %4752 = vmatpush2.msra.mxu0 0.0
    %4753 = vmatprep.subr.mxu0 0.0
    %4754 = vmatpush2.msra.mxu0 0.0
    %4755 = vmatprep.mubr.f32.mxu0 0.0
    %4756 = vmatmul.mubr.f32.gmra.mxu0 %v4095
    %v4757 = vpop.f32.mrf.mxu0
    %v4758 = vadd.f32 0.0, %v4757
    %v4759 = vpop.f32.mrf.mxu0
    %4760 = vdwg.mxu0
    %v4761 = vadd.f32 %v4688, %v4758
    %v4762 = vxor.u32 %v4761, 2147483648
    %v4763 = vmul.f32 %v4762, 1.442695
    %v4764 = vpow.pop %v4763
    %v4765 = vadd.f32 %v4764, 1.0
    %v4766 = vrcp.pop %v4765
    %v4767 = vmul.f32 1.0, %v4766
    %v4768 = vadd.f32 %v4758, %v561
    %4770 = vrot.lane.b32.xlu0 %v4768, 96
    %v4771 = vpop.permute.xlu0 %4770
    %v4773 = vmul.f32 %v4767, %v4771
    %4775 = vrot.lane.b32.xlu0 %v4773, 32
    %v4776 = vpop.permute.xlu0 %4775
    %v4778 = vadd.f32 %v4688, %v4776
    %v4779 = vtanh.pop %v4778
    %v4780 = vsub.f32 1.0, %v4767
    %4782 = vrot.lane.b32.xlu0 %v4779, 112
    %v4783 = vpop.permute.xlu0 %4782
    %v4785 = vmul.f32 %v4780, %v4783
    %v4786 = vmul.f32 %v4767, %v4091
    %v4787 = vadd.f32 %v4785, %v4786
    %4789 = vrot.lane.b32.xlu0 %v4787, 112
    %v4790 = vpop.permute.xlu0 %4789
    %v4791 = vsel %vm288, %v4790, 0
    %4793 = vmatprep.subr.mxu0 0.0
    %4794 = vmatpush1.msra.mxu0 0.0
    %4795 = vmatprep.subr.mxu0 0.0
    %4796 = vmatpush1.msra.mxu0 0.0
    %4797 = vmatprep.subr.mxu0 0.0
    %4798 = vmatpush1.msra.mxu0 0.0
    %4799 = vmatprep.subr.mxu0 0.0
    %4800 = vmatpush1.msra.mxu0 0.0
    %4801 = vmatprep.subr.mxu0 0.0
    %4802 = vmatpush1.msra.mxu0 0.0
    %4803 = vmatprep.subr.mxu0 0.0
    %4804 = vmatpush1.msra.mxu0 0.0
    %4805 = vmatprep.subr.mxu0 0.0
    %4806 = vmatpush1.msra.mxu0 0.0
    %4807 = vmatprep.subr.mxu0 0.0
    %4808 = vmatpush1.msra.mxu0 0.0
    %4809 = vmatprep.subr.mxu0 0.0
    %4810 = vmatpush1.msra.mxu0 0.0
    %4811 = vmatprep.subr.mxu0 0.0
    %4812 = vmatpush1.msra.mxu0 0.0
    %4813 = vmatprep.subr.mxu0 0.0
    %4814 = vmatpush1.msra.mxu0 0.0
    %4815 = vmatprep.subr.mxu0 0.0
    %4816 = vmatpush1.msra.mxu0 0.0
    %4817 = vmatprep.subr.mxu0 0.0
    %4818 = vmatpush1.msra.mxu0 0.0
    %4819 = vmatprep.subr.mxu0 0.0
    %4820 = vmatpush1.msra.mxu0 0.0
    %4821 = vmatprep.subr.mxu0 0.0
    %4822 = vmatpush1.msra.mxu0 %v176
    %4823 = vmatprep.subr.mxu0 0.0
    %4824 = vmatpush1.msra.mxu0 %v175
    %4825 = vmatprep.subr.mxu0 0.0
    %4826 = vmatpush2.msra.mxu0 0.0
    %4827 = vmatprep.subr.mxu0 0.0
    %4828 = vmatpush2.msra.mxu0 0.0
    %4829 = vmatprep.subr.mxu0 0.0
    %4830 = vmatpush2.msra.mxu0 0.0
    %4831 = vmatprep.subr.mxu0 0.0
    %4832 = vmatpush2.msra.mxu0 0.0
    %4833 = vmatprep.subr.mxu0 0.0
    %4834 = vmatpush2.msra.mxu0 0.0
    %4835 = vmatprep.subr.mxu0 0.0
    %4836 = vmatpush2.msra.mxu0 0.0
    %4837 = vmatprep.subr.mxu0 0.0
    %4838 = vmatpush2.msra.mxu0 0.0
    %4839 = vmatprep.subr.mxu0 0.0
    %4840 = vmatpush2.msra.mxu0 0.0
    %4841 = vmatprep.subr.mxu0 0.0
    %4842 = vmatpush2.msra.mxu0 0.0
    %4843 = vmatprep.subr.mxu0 0.0
    %4844 = vmatpush2.msra.mxu0 0.0
    %4845 = vmatprep.subr.mxu0 0.0
    %4846 = vmatpush2.msra.mxu0 0.0
    %4847 = vmatprep.subr.mxu0 0.0
    %4848 = vmatpush2.msra.mxu0 0.0
    %4849 = vmatprep.subr.mxu0 0.0
    %4850 = vmatpush2.msra.mxu0 0.0
    %4851 = vmatprep.subr.mxu0 0.0
    %4852 = vmatpush2.msra.mxu0 0.0
    %4853 = vmatprep.subr.mxu0 0.0
    %4854 = vmatpush2.msra.mxu0 0.0
    %4855 = vmatprep.subr.mxu0 0.0
    %4856 = vmatpush2.msra.mxu0 0.0
    %4857 = vmatprep.mubr.f32.mxu0 0.0
    %4858 = vmatmul.mubr.f32.gmra.mxu0 %v4791
    %v4859 = vpop.f32.mrf.mxu0
    %v4860 = vadd.f32 %v587, %v4859
    %v4861 = vpop.f32.mrf.mxu0
    %4862 = vdwg.mxu0
    %4863 = vmatprep.subr.mxu0 0.0
    %4864 = vmatpush1.msra.mxu0 0.0
    %4865 = vmatprep.subr.mxu0 0.0
    %4866 = vmatpush1.msra.mxu0 0.0
    %4867 = vmatprep.subr.mxu0 0.0
    %4868 = vmatpush1.msra.mxu0 0.0
    %4869 = vmatprep.subr.mxu0 0.0
    %4870 = vmatpush1.msra.mxu0 0.0
    %4871 = vmatprep.subr.mxu0 0.0
    %4872 = vmatpush1.msra.mxu0 0.0
    %4873 = vmatprep.subr.mxu0 0.0
    %4874 = vmatpush1.msra.mxu0 0.0
    %4875 = vmatprep.subr.mxu0 0.0
    %4876 = vmatpush1.msra.mxu0 0.0
    %4877 = vmatprep.subr.mxu0 0.0
    %4878 = vmatpush1.msra.mxu0 0.0
    %4879 = vmatprep.subr.mxu0 0.0
    %4880 = vmatpush1.msra.mxu0 0.0
    %4881 = vmatprep.subr.mxu0 0.0
    %4882 = vmatpush1.msra.mxu0 0.0
    %4883 = vmatprep.subr.mxu0 0.0
    %4884 = vmatpush1.msra.mxu0 0.0
    %4885 = vmatprep.subr.mxu0 0.0
    %4886 = vmatpush1.msra.mxu0 0.0
    %4887 = vmatprep.subr.mxu0 0.0
    %4888 = vmatpush1.msra.mxu0 0.0
    %4889 = vmatprep.subr.mxu0 0.0
    %4890 = vmatpush1.msra.mxu0 0.0
    %4891 = vmatprep.subr.mxu0 0.0
    %4892 = vmatpush1.msra.mxu0 %v184
    %4893 = vmatprep.subr.mxu0 0.0
    %4894 = vmatpush1.msra.mxu0 %v183
    %4895 = vmatprep.subr.mxu0 0.0
    %4896 = vmatpush2.msra.mxu0 0.0
    %4897 = vmatprep.subr.mxu0 0.0
    %4898 = vmatpush2.msra.mxu0 0.0
    %4899 = vmatprep.subr.mxu0 0.0
    %4900 = vmatpush2.msra.mxu0 0.0
    %4901 = vmatprep.subr.mxu0 0.0
    %4902 = vmatpush2.msra.mxu0 0.0
    %4903 = vmatprep.subr.mxu0 0.0
    %4904 = vmatpush2.msra.mxu0 0.0
    %4905 = vmatprep.subr.mxu0 0.0
    %4906 = vmatpush2.msra.mxu0 0.0
    %4907 = vmatprep.subr.mxu0 0.0
    %4908 = vmatpush2.msra.mxu0 0.0
    %4909 = vmatprep.subr.mxu0 0.0
    %4910 = vmatpush2.msra.mxu0 0.0
    %4911 = vmatprep.subr.mxu0 0.0
    %4912 = vmatpush2.msra.mxu0 0.0
    %4913 = vmatprep.subr.mxu0 0.0
    %4914 = vmatpush2.msra.mxu0 0.0
    %4915 = vmatprep.subr.mxu0 0.0
    %4916 = vmatpush2.msra.mxu0 0.0
    %4917 = vmatprep.subr.mxu0 0.0
    %4918 = vmatpush2.msra.mxu0 0.0
    %4919 = vmatprep.subr.mxu0 0.0
    %4920 = vmatpush2.msra.mxu0 0.0
    %4921 = vmatprep.subr.mxu0 0.0
    %4922 = vmatpush2.msra.mxu0 0.0
    %4923 = vmatprep.subr.mxu0 0.0
    %4924 = vmatpush2.msra.mxu0 0.0
    %4925 = vmatprep.subr.mxu0 0.0
    %4926 = vmatpush2.msra.mxu0 0.0
    %4927 = vmatprep.mubr.f32.mxu0 0.0
    %4928 = vmatmul.mubr.f32.gmra.mxu0 %v4267
    %v4929 = vpop.f32.mrf.mxu0
    %v4930 = vadd.f32 0.0, %v4929
    %v4931 = vpop.f32.mrf.mxu0
    %4932 = vdwg.mxu0
    %v4933 = vadd.f32 %v4860, %v4930
    %v4934 = vxor.u32 %v4933, 2147483648
    %v4935 = vmul.f32 %v4934, 1.442695
    %v4936 = vpow.pop %v4935
    %v4937 = vadd.f32 %v4936, 1.0
    %v4938 = vrcp.pop %v4937
    %v4939 = vmul.f32 1.0, %v4938
    %v4940 = vadd.f32 %v4930, %v747
    %4942 = vrot.lane.b32.xlu0 %v4940, 96
    %v4943 = vpop.permute.xlu0 %4942
    %v4945 = vmul.f32 %v4939, %v4943
    %4947 = vrot.lane.b32.xlu0 %v4945, 32
    %v4948 = vpop.permute.xlu0 %4947
    %v4950 = vadd.f32 %v4860, %v4948
    %v4951 = vtanh.pop %v4950
    %v4952 = vsub.f32 1.0, %v4939
    %4954 = vrot.lane.b32.xlu0 %v4951, 112
    %v4955 = vpop.permute.xlu0 %4954
    %v4957 = vmul.f32 %v4952, %v4955
    %v4958 = vmul.f32 %v4939, %v4263
    %v4959 = vadd.f32 %v4957, %v4958
    %4961 = vrot.lane.b32.xlu0 %v4959, 112
    %v4962 = vpop.permute.xlu0 %4961
    %v4963 = vsel %vm288, %v4962, 0
    %4965 = vmatprep.subr.mxu0 0.0
    %4966 = vmatpush1.msra.mxu0 0.0
    %4967 = vmatprep.subr.mxu0 0.0
    %4968 = vmatpush1.msra.mxu0 0.0
    %4969 = vmatprep.subr.mxu0 0.0
    %4970 = vmatpush1.msra.mxu0 0.0
    %4971 = vmatprep.subr.mxu0 0.0
    %4972 = vmatpush1.msra.mxu0 0.0
    %4973 = vmatprep.subr.mxu0 0.0
    %4974 = vmatpush1.msra.mxu0 0.0
    %4975 = vmatprep.subr.mxu0 0.0
    %4976 = vmatpush1.msra.mxu0 0.0
    %4977 = vmatprep.subr.mxu0 0.0
    %4978 = vmatpush1.msra.mxu0 0.0
    %4979 = vmatprep.subr.mxu0 0.0
    %4980 = vmatpush1.msra.mxu0 0.0
    %4981 = vmatprep.subr.mxu0 0.0
    %4982 = vmatpush1.msra.mxu0 0.0
    %4983 = vmatprep.subr.mxu0 0.0
    %4984 = vmatpush1.msra.mxu0 0.0
    %4985 = vmatprep.subr.mxu0 0.0
    %4986 = vmatpush1.msra.mxu0 0.0
    %4987 = vmatprep.subr.mxu0 0.0
    %4988 = vmatpush1.msra.mxu0 0.0
    %4989 = vmatprep.subr.mxu0 0.0
    %4990 = vmatpush1.msra.mxu0 0.0
    %4991 = vmatprep.subr.mxu0 0.0
    %4992 = vmatpush1.msra.mxu0 0.0
    %4993 = vmatprep.subr.mxu0 0.0
    %4994 = vmatpush1.msra.mxu0 %v178
    %4995 = vmatprep.subr.mxu0 0.0
    %4996 = vmatpush1.msra.mxu0 %v177
    %4997 = vmatprep.subr.mxu0 0.0
    %4998 = vmatpush2.msra.mxu0 0.0
    %4999 = vmatprep.subr.mxu0 0.0
    %5000 = vmatpush2.msra.mxu0 0.0
    %5001 = vmatprep.subr.mxu0 0.0
    %5002 = vmatpush2.msra.mxu0 0.0
    %5003 = vmatprep.subr.mxu0 0.0
    %5004 = vmatpush2.msra.mxu0 0.0
    %5005 = vmatprep.subr.mxu0 0.0
    %5006 = vmatpush2.msra.mxu0 0.0
    %5007 = vmatprep.subr.mxu0 0.0
    %5008 = vmatpush2.msra.mxu0 0.0
    %5009 = vmatprep.subr.mxu0 0.0
    %5010 = vmatpush2.msra.mxu0 0.0
    %5011 = vmatprep.subr.mxu0 0.0
    %5012 = vmatpush2.msra.mxu0 0.0
    %5013 = vmatprep.subr.mxu0 0.0
    %5014 = vmatpush2.msra.mxu0 0.0
    %5015 = vmatprep.subr.mxu0 0.0
    %5016 = vmatpush2.msra.mxu0 0.0
    %5017 = vmatprep.subr.mxu0 0.0
    %5018 = vmatpush2.msra.mxu0 0.0
    %5019 = vmatprep.subr.mxu0 0.0
    %5020 = vmatpush2.msra.mxu0 0.0
    %5021 = vmatprep.subr.mxu0 0.0
    %5022 = vmatpush2.msra.mxu0 0.0
    %5023 = vmatprep.subr.mxu0 0.0
    %5024 = vmatpush2.msra.mxu0 0.0
    %5025 = vmatprep.subr.mxu0 0.0
    %5026 = vmatpush2.msra.mxu0 0.0
    %5027 = vmatprep.subr.mxu0 0.0
    %5028 = vmatpush2.msra.mxu0 0.0
    %5029 = vmatprep.mubr.f32.mxu0 0.0
    %5030 = vmatmul.mubr.f32.gmra.mxu0 %v4963
    %v5031 = vpop.f32.mrf.mxu0
    %v5032 = vadd.f32 %v773, %v5031
    %v5033 = vpop.f32.mrf.mxu0
    %5034 = vdwg.mxu0
    %5035 = vmatprep.subr.mxu0 0.0
    %5036 = vmatpush1.msra.mxu0 0.0
    %5037 = vmatprep.subr.mxu0 0.0
    %5038 = vmatpush1.msra.mxu0 0.0
    %5039 = vmatprep.subr.mxu0 0.0
    %5040 = vmatpush1.msra.mxu0 0.0
    %5041 = vmatprep.subr.mxu0 0.0
    %5042 = vmatpush1.msra.mxu0 0.0
    %5043 = vmatprep.subr.mxu0 0.0
    %5044 = vmatpush1.msra.mxu0 0.0
    %5045 = vmatprep.subr.mxu0 0.0
    %5046 = vmatpush1.msra.mxu0 0.0
    %5047 = vmatprep.subr.mxu0 0.0
    %5048 = vmatpush1.msra.mxu0 0.0
    %5049 = vmatprep.subr.mxu0 0.0
    %5050 = vmatpush1.msra.mxu0 0.0
    %5051 = vmatprep.subr.mxu0 0.0
    %5052 = vmatpush1.msra.mxu0 0.0
    %5053 = vmatprep.subr.mxu0 0.0
    %5054 = vmatpush1.msra.mxu0 0.0
    %5055 = vmatprep.subr.mxu0 0.0
    %5056 = vmatpush1.msra.mxu0 0.0
    %5057 = vmatprep.subr.mxu0 0.0
    %5058 = vmatpush1.msra.mxu0 0.0
    %5059 = vmatprep.subr.mxu0 0.0
    %5060 = vmatpush1.msra.mxu0 0.0
    %5061 = vmatprep.subr.mxu0 0.0
    %5062 = vmatpush1.msra.mxu0 0.0
    %5063 = vmatprep.subr.mxu0 0.0
    %5064 = vmatpush1.msra.mxu0 %v186
    %5065 = vmatprep.subr.mxu0 0.0
    %5066 = vmatpush1.msra.mxu0 %v185
    %5067 = vmatprep.subr.mxu0 0.0
    %5068 = vmatpush2.msra.mxu0 0.0
    %5069 = vmatprep.subr.mxu0 0.0
    %5070 = vmatpush2.msra.mxu0 0.0
    %5071 = vmatprep.subr.mxu0 0.0
    %5072 = vmatpush2.msra.mxu0 0.0
    %5073 = vmatprep.subr.mxu0 0.0
    %5074 = vmatpush2.msra.mxu0 0.0
    %5075 = vmatprep.subr.mxu0 0.0
    %5076 = vmatpush2.msra.mxu0 0.0
    %5077 = vmatprep.subr.mxu0 0.0
    %5078 = vmatpush2.msra.mxu0 0.0
    %5079 = vmatprep.subr.mxu0 0.0
    %5080 = vmatpush2.msra.mxu0 0.0
    %5081 = vmatprep.subr.mxu0 0.0
    %5082 = vmatpush2.msra.mxu0 0.0
    %5083 = vmatprep.subr.mxu0 0.0
    %5084 = vmatpush2.msra.mxu0 0.0
    %5085 = vmatprep.subr.mxu0 0.0
    %5086 = vmatpush2.msra.mxu0 0.0
    %5087 = vmatprep.subr.mxu0 0.0
    %5088 = vmatpush2.msra.mxu0 0.0
    %5089 = vmatprep.subr.mxu0 0.0
    %5090 = vmatpush2.msra.mxu0 0.0
    %5091 = vmatprep.subr.mxu0 0.0
    %5092 = vmatpush2.msra.mxu0 0.0
    %5093 = vmatprep.subr.mxu0 0.0
    %5094 = vmatpush2.msra.mxu0 0.0
    %5095 = vmatprep.subr.mxu0 0.0
    %5096 = vmatpush2.msra.mxu0 0.0
    %5097 = vmatprep.subr.mxu0 0.0
    %5098 = vmatpush2.msra.mxu0 0.0
    %5099 = vmatprep.mubr.f32.mxu0 0.0
    %5100 = vmatmul.mubr.f32.gmra.mxu0 %v4439
    %v5101 = vpop.f32.mrf.mxu0
    %v5102 = vadd.f32 0.0, %v5101
    %v5103 = vpop.f32.mrf.mxu0
    %5104 = vdwg.mxu0
    %v5105 = vadd.f32 %v5032, %v5102
    %v5106 = vxor.u32 %v5105, 2147483648
    %v5107 = vmul.f32 %v5106, 1.442695
    %v5108 = vpow.pop %v5107
    %v5109 = vadd.f32 %v5108, 1.0
    %v5110 = vrcp.pop %v5109
    %v5111 = vmul.f32 1.0, %v5110
    %v5112 = vadd.f32 %v5102, %v933
    %5114 = vrot.lane.b32.xlu0 %v5112, 96
    %v5115 = vpop.permute.xlu0 %5114
    %v5117 = vmul.f32 %v5111, %v5115
    %5119 = vrot.lane.b32.xlu0 %v5117, 32
    %v5120 = vpop.permute.xlu0 %5119
    %v5122 = vadd.f32 %v5032, %v5120
    %v5123 = vtanh.pop %v5122
    %v5124 = vsub.f32 1.0, %v5111
    %5126 = vrot.lane.b32.xlu0 %v5123, 112
    %v5127 = vpop.permute.xlu0 %5126
    %v5129 = vmul.f32 %v5124, %v5127
    %v5130 = vmul.f32 %v5111, %v4435
    %v5131 = vadd.f32 %v5129, %v5130
    %5133 = vrot.lane.b32.xlu0 %v5131, 112
    %v5134 = vpop.permute.xlu0 %5133
    %v5135 = vsel %vm288, %v5134, 0
    %5137 = vmatprep.subr.mxu0 0.0
    %5138 = vmatpush1.msra.mxu0 0.0
    %5139 = vmatprep.subr.mxu0 0.0
    %5140 = vmatpush1.msra.mxu0 0.0
    %5141 = vmatprep.subr.mxu0 0.0
    %5142 = vmatpush1.msra.mxu0 0.0
    %5143 = vmatprep.subr.mxu0 0.0
    %5144 = vmatpush1.msra.mxu0 0.0
    %5145 = vmatprep.subr.mxu0 0.0
    %5146 = vmatpush1.msra.mxu0 0.0
    %5147 = vmatprep.subr.mxu0 0.0
    %5148 = vmatpush1.msra.mxu0 0.0
    %5149 = vmatprep.subr.mxu0 0.0
    %5150 = vmatpush1.msra.mxu0 0.0
    %5151 = vmatprep.subr.mxu0 0.0
    %5152 = vmatpush1.msra.mxu0 0.0
    %5153 = vmatprep.subr.mxu0 0.0
    %5154 = vmatpush1.msra.mxu0 0.0
    %5155 = vmatprep.subr.mxu0 0.0
    %5156 = vmatpush1.msra.mxu0 0.0
    %5157 = vmatprep.subr.mxu0 0.0
    %5158 = vmatpush1.msra.mxu0 0.0
    %5159 = vmatprep.subr.mxu0 0.0
    %5160 = vmatpush1.msra.mxu0 0.0
    %5161 = vmatprep.subr.mxu0 0.0
    %5162 = vmatpush1.msra.mxu0 0.0
    %5163 = vmatprep.subr.mxu0 0.0
    %5164 = vmatpush1.msra.mxu0 0.0
    %5165 = vmatprep.subr.mxu0 0.0
    %5166 = vmatpush1.msra.mxu0 %v196
    %5167 = vmatprep.subr.mxu0 0.0
    %5168 = vmatpush1.msra.mxu0 %v195
    %5169 = vmatprep.subr.mxu0 0.0
    %5170 = vmatpush2.msra.mxu0 0.0
    %5171 = vmatprep.subr.mxu0 0.0
    %5172 = vmatpush2.msra.mxu0 0.0
    %5173 = vmatprep.subr.mxu0 0.0
    %5174 = vmatpush2.msra.mxu0 0.0
    %5175 = vmatprep.subr.mxu0 0.0
    %5176 = vmatpush2.msra.mxu0 0.0
    %5177 = vmatprep.subr.mxu0 0.0
    %5178 = vmatpush2.msra.mxu0 0.0
    %5179 = vmatprep.subr.mxu0 0.0
    %5180 = vmatpush2.msra.mxu0 0.0
    %5181 = vmatprep.subr.mxu0 0.0
    %5182 = vmatpush2.msra.mxu0 0.0
    %5183 = vmatprep.subr.mxu0 0.0
    %5184 = vmatpush2.msra.mxu0 0.0
    %5185 = vmatprep.subr.mxu0 0.0
    %5186 = vmatpush2.msra.mxu0 0.0
    %5187 = vmatprep.subr.mxu0 0.0
    %5188 = vmatpush2.msra.mxu0 0.0
    %5189 = vmatprep.subr.mxu0 0.0
    %5190 = vmatpush2.msra.mxu0 0.0
    %5191 = vmatprep.subr.mxu0 0.0
    %5192 = vmatpush2.msra.mxu0 0.0
    %5193 = vmatprep.subr.mxu0 0.0
    %5194 = vmatpush2.msra.mxu0 0.0
    %5195 = vmatprep.subr.mxu0 0.0
    %5196 = vmatpush2.msra.mxu0 0.0
    %5197 = vmatprep.subr.mxu0 0.0
    %5198 = vmatpush2.msra.mxu0 0.0
    %5199 = vmatprep.subr.mxu0 0.0
    %5200 = vmatpush2.msra.mxu0 0.0
    %5201 = vmatprep.mubr.f32.mxu0 0.0
    %5202 = vmatmul.mubr.f32.gmra.mxu0 %v5135
    %v5203 = vpop.f32.mrf.mxu0
    %v5204 = vadd.f32 %v959, %v5203
    %v5205 = vpop.f32.mrf.mxu0
    %5206 = vdwg.mxu0
    %5207 = vst.msk [vmem:[%s19 + $0xc] sm:$0x3] %vm1036, %v5204
    %5208 = vmatprep.subr.mxu0 0.0
    %5209 = vmatpush1.msra.mxu0 0.0
    %5210 = vmatprep.subr.mxu0 0.0
    %5211 = vmatpush1.msra.mxu0 0.0
    %5212 = vmatprep.subr.mxu0 0.0
    %5213 = vmatpush1.msra.mxu0 0.0
    %5214 = vmatprep.subr.mxu0 0.0
    %5215 = vmatpush1.msra.mxu0 0.0
    %5216 = vmatprep.subr.mxu0 0.0
    %5217 = vmatpush1.msra.mxu0 0.0
    %5218 = vmatprep.subr.mxu0 0.0
    %5219 = vmatpush1.msra.mxu0 0.0
    %5220 = vmatprep.subr.mxu0 0.0
    %5221 = vmatpush1.msra.mxu0 0.0
    %5222 = vmatprep.subr.mxu0 0.0
    %5223 = vmatpush1.msra.mxu0 0.0
    %5224 = vmatprep.subr.mxu0 0.0
    %5225 = vmatpush1.msra.mxu0 0.0
    %5226 = vmatprep.subr.mxu0 0.0
    %5227 = vmatpush1.msra.mxu0 0.0
    %5228 = vmatprep.subr.mxu0 0.0
    %5229 = vmatpush1.msra.mxu0 0.0
    %5230 = vmatprep.subr.mxu0 0.0
    %5231 = vmatpush1.msra.mxu0 0.0
    %5232 = vmatprep.subr.mxu0 0.0
    %5233 = vmatpush1.msra.mxu0 0.0
    %5234 = vmatprep.subr.mxu0 0.0
    %5235 = vmatpush1.msra.mxu0 0.0
    %5236 = vmatprep.subr.mxu0 0.0
    %5237 = vmatpush1.msra.mxu0 %v180
    %5238 = vmatprep.subr.mxu0 0.0
    %5239 = vmatpush1.msra.mxu0 %v179
    %5240 = vmatprep.subr.mxu0 0.0
    %5241 = vmatpush2.msra.mxu0 0.0
    %5242 = vmatprep.subr.mxu0 0.0
    %5243 = vmatpush2.msra.mxu0 0.0
    %5244 = vmatprep.subr.mxu0 0.0
    %5245 = vmatpush2.msra.mxu0 0.0
    %5246 = vmatprep.subr.mxu0 0.0
    %5247 = vmatpush2.msra.mxu0 0.0
    %5248 = vmatprep.subr.mxu0 0.0
    %5249 = vmatpush2.msra.mxu0 0.0
    %5250 = vmatprep.subr.mxu0 0.0
    %5251 = vmatpush2.msra.mxu0 0.0
    %5252 = vmatprep.subr.mxu0 0.0
    %5253 = vmatpush2.msra.mxu0 0.0
    %5254 = vmatprep.subr.mxu0 0.0
    %5255 = vmatpush2.msra.mxu0 0.0
    %5256 = vmatprep.subr.mxu0 0.0
    %5257 = vmatpush2.msra.mxu0 0.0
    %5258 = vmatprep.subr.mxu0 0.0
    %5259 = vmatpush2.msra.mxu0 0.0
    %5260 = vmatprep.subr.mxu0 0.0
    %5261 = vmatpush2.msra.mxu0 0.0
    %5262 = vmatprep.subr.mxu0 0.0
    %5263 = vmatpush2.msra.mxu0 0.0
    %5264 = vmatprep.subr.mxu0 0.0
    %5265 = vmatpush2.msra.mxu0 0.0
    %5266 = vmatprep.subr.mxu0 0.0
    %5267 = vmatpush2.msra.mxu0 0.0
    %5268 = vmatprep.subr.mxu0 0.0
    %5269 = vmatpush2.msra.mxu0 0.0
    %5270 = vmatprep.subr.mxu0 0.0
    %5271 = vmatpush2.msra.mxu0 0.0
    %5272 = vmatprep.mubr.f32.mxu0 0.0
    %5273 = vmatmul.mubr.f32.gmra.mxu0 %v4619
    %v5274 = vpop.f32.mrf.mxu0
    %v5275 = vadd.f32 0.0, %v5274
    %v5276 = vpop.f32.mrf.mxu0
    %5277 = vdwg.mxu0
    %v5279 = vrot.slane %v5275, 2
    %v5281 = vadd.f32 %v285, %v5279
    %v5282 = vxor.u32 %v5281, 2147483648
    %v5283 = vmul.f32 %v5282, 1.442695
    %v5284 = vpow.pop %v5283
    %v5285 = vadd.f32 %v5284, 1.0
    %v5286 = vrcp.pop %v5285
    %v5287 = vmul.f32 1.0, %v5286
    %v5288 = vadd.f32 %v5275, %v375
    %v5290 = vrot.slane %v5288, 2
    %5291 = vrot.lane.b32.xlu0 %v5290, 96
    %v5292 = vpop.permute.xlu0 %5291
    %v5294 = vmul.f32 %v5287, %v5292
    %5296 = vrot.lane.b32.xlu0 %v5294, 32
    %v5297 = vpop.permute.xlu0 %5296
    %v5299 = vadd.f32 %v285, %v5297
    %v5300 = vtanh.pop %v5299
    %v5301 = vsub.f32 1.0, %v5287
    %5303 = vrot.lane.b32.xlu0 %v5300, 112
    %v5304 = vpop.permute.xlu0 %5303
    %v5306 = vmul.f32 %v5301, %v5304
    %v5307 = vrot.slane %v4614, 6
    %v5309 = vmul.f32 %v5287, %v5307
    %v5310 = vadd.f32 %v5306, %v5309
    %v5312 = vrot.slane %v5310, 6
    %5313 = vrot.lane.b32.xlu0 %v5312, 112
    %v5314 = vpop.permute.xlu0 %5313
    %v5315 = vsel %vm288, %v5314, 0
    %5317 = vmatprep.subr.mxu0 0.0
    %5318 = vmatpush1.msra.mxu0 0.0
    %5319 = vmatprep.subr.mxu0 0.0
    %5320 = vmatpush1.msra.mxu0 0.0
    %5321 = vmatprep.subr.mxu0 0.0
    %5322 = vmatpush1.msra.mxu0 0.0
    %5323 = vmatprep.subr.mxu0 0.0
    %5324 = vmatpush1.msra.mxu0 0.0
    %5325 = vmatprep.subr.mxu0 0.0
    %5326 = vmatpush1.msra.mxu0 0.0
    %5327 = vmatprep.subr.mxu0 0.0
    %5328 = vmatpush1.msra.mxu0 0.0
    %5329 = vmatprep.subr.mxu0 0.0
    %5330 = vmatpush1.msra.mxu0 0.0
    %5331 = vmatprep.subr.mxu0 0.0
    %5332 = vmatpush1.msra.mxu0 0.0
    %5333 = vmatprep.subr.mxu0 0.0
    %5334 = vmatpush1.msra.mxu0 0.0
    %5335 = vmatprep.subr.mxu0 0.0
    %5336 = vmatpush1.msra.mxu0 0.0
    %5337 = vmatprep.subr.mxu0 0.0
    %5338 = vmatpush1.msra.mxu0 0.0
    %5339 = vmatprep.subr.mxu0 0.0
    %5340 = vmatpush1.msra.mxu0 0.0
    %5341 = vmatprep.subr.mxu0 0.0
    %5342 = vmatpush1.msra.mxu0 0.0
    %5343 = vmatprep.subr.mxu0 0.0
    %5344 = vmatpush1.msra.mxu0 0.0
    %5345 = vmatprep.subr.mxu0 0.0
    %5346 = vmatpush1.msra.mxu0 %v174
    %5347 = vmatprep.subr.mxu0 0.0
    %5348 = vmatpush1.msra.mxu0 %v173
    %5349 = vmatprep.subr.mxu0 0.0
    %5350 = vmatpush2.msra.mxu0 0.0
    %5351 = vmatprep.subr.mxu0 0.0
    %5352 = vmatpush2.msra.mxu0 0.0
    %5353 = vmatprep.subr.mxu0 0.0
    %5354 = vmatpush2.msra.mxu0 0.0
    %5355 = vmatprep.subr.mxu0 0.0
    %5356 = vmatpush2.msra.mxu0 0.0
    %5357 = vmatprep.subr.mxu0 0.0
    %5358 = vmatpush2.msra.mxu0 0.0
    %5359 = vmatprep.subr.mxu0 0.0
    %5360 = vmatpush2.msra.mxu0 0.0
    %5361 = vmatprep.subr.mxu0 0.0
    %5362 = vmatpush2.msra.mxu0 0.0
    %5363 = vmatprep.subr.mxu0 0.0
    %5364 = vmatpush2.msra.mxu0 0.0
    %5365 = vmatprep.subr.mxu0 0.0
    %5366 = vmatpush2.msra.mxu0 0.0
    %5367 = vmatprep.subr.mxu0 0.0
    %5368 = vmatpush2.msra.mxu0 0.0
    %5369 = vmatprep.subr.mxu0 0.0
    %5370 = vmatpush2.msra.mxu0 0.0
    %5371 = vmatprep.subr.mxu0 0.0
    %5372 = vmatpush2.msra.mxu0 0.0
    %5373 = vmatprep.subr.mxu0 0.0
    %5374 = vmatpush2.msra.mxu0 0.0
    %5375 = vmatprep.subr.mxu0 0.0
    %5376 = vmatpush2.msra.mxu0 0.0
    %5377 = vmatprep.subr.mxu0 0.0
    %5378 = vmatpush2.msra.mxu0 0.0
    %5379 = vmatprep.subr.mxu0 0.0
    %5380 = vmatpush2.msra.mxu0 0.0
    %5381 = vmatprep.mubr.f32.mxu0 0.0
    %5382 = vmatmul.mubr.f32.gmra.mxu0 %v5315
    %v5383 = vpop.f32.mrf.mxu0
    %v5384 = vadd.f32 %v401, %v5383
    %v5385 = vpop.f32.mrf.mxu0
    %5386 = vdwg.mxu0
    %5387 = vmatprep.subr.mxu0 0.0
    %5388 = vmatpush1.msra.mxu0 0.0
    %5389 = vmatprep.subr.mxu0 0.0
    %5390 = vmatpush1.msra.mxu0 0.0
    %5391 = vmatprep.subr.mxu0 0.0
    %5392 = vmatpush1.msra.mxu0 0.0
    %5393 = vmatprep.subr.mxu0 0.0
    %5394 = vmatpush1.msra.mxu0 0.0
    %5395 = vmatprep.subr.mxu0 0.0
    %5396 = vmatpush1.msra.mxu0 0.0
    %5397 = vmatprep.subr.mxu0 0.0
    %5398 = vmatpush1.msra.mxu0 0.0
    %5399 = vmatprep.subr.mxu0 0.0
    %5400 = vmatpush1.msra.mxu0 0.0
    %5401 = vmatprep.subr.mxu0 0.0
    %5402 = vmatpush1.msra.mxu0 0.0
    %5403 = vmatprep.subr.mxu0 0.0
    %5404 = vmatpush1.msra.mxu0 0.0
    %5405 = vmatprep.subr.mxu0 0.0
    %5406 = vmatpush1.msra.mxu0 0.0
    %5407 = vmatprep.subr.mxu0 0.0
    %5408 = vmatpush1.msra.mxu0 0.0
    %5409 = vmatprep.subr.mxu0 0.0
    %5410 = vmatpush1.msra.mxu0 0.0
    %5411 = vmatprep.subr.mxu0 0.0
    %5412 = vmatpush1.msra.mxu0 0.0
    %5413 = vmatprep.subr.mxu0 0.0
    %5414 = vmatpush1.msra.mxu0 0.0
    %5415 = vmatprep.subr.mxu0 0.0
    %5416 = vmatpush1.msra.mxu0 %v182
    %5417 = vmatprep.subr.mxu0 0.0
    %5418 = vmatpush1.msra.mxu0 %v181
    %5419 = vmatprep.subr.mxu0 0.0
    %5420 = vmatpush2.msra.mxu0 0.0
    %5421 = vmatprep.subr.mxu0 0.0
    %5422 = vmatpush2.msra.mxu0 0.0
    %5423 = vmatprep.subr.mxu0 0.0
    %5424 = vmatpush2.msra.mxu0 0.0
    %5425 = vmatprep.subr.mxu0 0.0
    %5426 = vmatpush2.msra.mxu0 0.0
    %5427 = vmatprep.subr.mxu0 0.0
    %5428 = vmatpush2.msra.mxu0 0.0
    %5429 = vmatprep.subr.mxu0 0.0
    %5430 = vmatpush2.msra.mxu0 0.0
    %5431 = vmatprep.subr.mxu0 0.0
    %5432 = vmatpush2.msra.mxu0 0.0
    %5433 = vmatprep.subr.mxu0 0.0
    %5434 = vmatpush2.msra.mxu0 0.0
    %5435 = vmatprep.subr.mxu0 0.0
    %5436 = vmatpush2.msra.mxu0 0.0
    %5437 = vmatprep.subr.mxu0 0.0
    %5438 = vmatpush2.msra.mxu0 0.0
    %5439 = vmatprep.subr.mxu0 0.0
    %5440 = vmatpush2.msra.mxu0 0.0
    %5441 = vmatprep.subr.mxu0 0.0
    %5442 = vmatpush2.msra.mxu0 0.0
    %5443 = vmatprep.subr.mxu0 0.0
    %5444 = vmatpush2.msra.mxu0 0.0
    %5445 = vmatprep.subr.mxu0 0.0
    %5446 = vmatpush2.msra.mxu0 0.0
    %5447 = vmatprep.subr.mxu0 0.0
    %5448 = vmatpush2.msra.mxu0 0.0
    %5449 = vmatprep.subr.mxu0 0.0
    %5450 = vmatpush2.msra.mxu0 0.0
    %5451 = vmatprep.mubr.f32.mxu0 0.0
    %5452 = vmatmul.mubr.f32.gmra.mxu0 %v4791
    %v5453 = vpop.f32.mrf.mxu0
    %v5454 = vadd.f32 0.0, %v5453
    %v5455 = vpop.f32.mrf.mxu0
    %5456 = vdwg.mxu0
    %v5457 = vadd.f32 %v5384, %v5454
    %v5458 = vxor.u32 %v5457, 2147483648
    %v5459 = vmul.f32 %v5458, 1.442695
    %v5460 = vpow.pop %v5459
    %v5461 = vadd.f32 %v5460, 1.0
    %v5462 = vrcp.pop %v5461
    %v5463 = vmul.f32 1.0, %v5462
    %v5464 = vadd.f32 %v5454, %v561
    %5466 = vrot.lane.b32.xlu0 %v5464, 96
    %v5467 = vpop.permute.xlu0 %5466
    %v5469 = vmul.f32 %v5463, %v5467
    %5471 = vrot.lane.b32.xlu0 %v5469, 32
    %v5472 = vpop.permute.xlu0 %5471
    %v5474 = vadd.f32 %v5384, %v5472
    %v5475 = vtanh.pop %v5474
    %v5476 = vsub.f32 1.0, %v5463
    %5478 = vrot.lane.b32.xlu0 %v5475, 112
    %v5479 = vpop.permute.xlu0 %5478
    %v5481 = vmul.f32 %v5476, %v5479
    %v5482 = vmul.f32 %v5463, %v4787
    %v5483 = vadd.f32 %v5481, %v5482
    %5485 = vrot.lane.b32.xlu0 %v5483, 112
    %v5486 = vpop.permute.xlu0 %5485
    %v5487 = vsel %vm288, %v5486, 0
    %5489 = vmatprep.subr.mxu0 0.0
    %5490 = vmatpush1.msra.mxu0 0.0
    %5491 = vmatprep.subr.mxu0 0.0
    %5492 = vmatpush1.msra.mxu0 0.0
    %5493 = vmatprep.subr.mxu0 0.0
    %5494 = vmatpush1.msra.mxu0 0.0
    %5495 = vmatprep.subr.mxu0 0.0
    %5496 = vmatpush1.msra.mxu0 0.0
    %5497 = vmatprep.subr.mxu0 0.0
    %5498 = vmatpush1.msra.mxu0 0.0
    %5499 = vmatprep.subr.mxu0 0.0
    %5500 = vmatpush1.msra.mxu0 0.0
    %5501 = vmatprep.subr.mxu0 0.0
    %5502 = vmatpush1.msra.mxu0 0.0
    %5503 = vmatprep.subr.mxu0 0.0
    %5504 = vmatpush1.msra.mxu0 0.0
    %5505 = vmatprep.subr.mxu0 0.0
    %5506 = vmatpush1.msra.mxu0 0.0
    %5507 = vmatprep.subr.mxu0 0.0
    %5508 = vmatpush1.msra.mxu0 0.0
    %5509 = vmatprep.subr.mxu0 0.0
    %5510 = vmatpush1.msra.mxu0 0.0
    %5511 = vmatprep.subr.mxu0 0.0
    %5512 = vmatpush1.msra.mxu0 0.0
    %5513 = vmatprep.subr.mxu0 0.0
    %5514 = vmatpush1.msra.mxu0 0.0
    %5515 = vmatprep.subr.mxu0 0.0
    %5516 = vmatpush1.msra.mxu0 0.0
    %5517 = vmatprep.subr.mxu0 0.0
    %5518 = vmatpush1.msra.mxu0 %v176
    %5519 = vmatprep.subr.mxu0 0.0
    %5520 = vmatpush1.msra.mxu0 %v175
    %5521 = vmatprep.subr.mxu0 0.0
    %5522 = vmatpush2.msra.mxu0 0.0
    %5523 = vmatprep.subr.mxu0 0.0
    %5524 = vmatpush2.msra.mxu0 0.0
    %5525 = vmatprep.subr.mxu0 0.0
    %5526 = vmatpush2.msra.mxu0 0.0
    %5527 = vmatprep.subr.mxu0 0.0
    %5528 = vmatpush2.msra.mxu0 0.0
    %5529 = vmatprep.subr.mxu0 0.0
    %5530 = vmatpush2.msra.mxu0 0.0
    %5531 = vmatprep.subr.mxu0 0.0
    %5532 = vmatpush2.msra.mxu0 0.0
    %5533 = vmatprep.subr.mxu0 0.0
    %5534 = vmatpush2.msra.mxu0 0.0
    %5535 = vmatprep.subr.mxu0 0.0
    %5536 = vmatpush2.msra.mxu0 0.0
    %5537 = vmatprep.subr.mxu0 0.0
    %5538 = vmatpush2.msra.mxu0 0.0
    %5539 = vmatprep.subr.mxu0 0.0
    %5540 = vmatpush2.msra.mxu0 0.0
    %5541 = vmatprep.subr.mxu0 0.0
    %5542 = vmatpush2.msra.mxu0 0.0
    %5543 = vmatprep.subr.mxu0 0.0
    %5544 = vmatpush2.msra.mxu0 0.0
    %5545 = vmatprep.subr.mxu0 0.0
    %5546 = vmatpush2.msra.mxu0 0.0
    %5547 = vmatprep.subr.mxu0 0.0
    %5548 = vmatpush2.msra.mxu0 0.0
    %5549 = vmatprep.subr.mxu0 0.0
    %5550 = vmatpush2.msra.mxu0 0.0
    %5551 = vmatprep.subr.mxu0 0.0
    %5552 = vmatpush2.msra.mxu0 0.0
    %5553 = vmatprep.mubr.f32.mxu0 0.0
    %5554 = vmatmul.mubr.f32.gmra.mxu0 %v5487
    %v5555 = vpop.f32.mrf.mxu0
    %v5556 = vadd.f32 %v587, %v5555
    %v5557 = vpop.f32.mrf.mxu0
    %5558 = vdwg.mxu0
    %5559 = vmatprep.subr.mxu0 0.0
    %5560 = vmatpush1.msra.mxu0 0.0
    %5561 = vmatprep.subr.mxu0 0.0
    %5562 = vmatpush1.msra.mxu0 0.0
    %5563 = vmatprep.subr.mxu0 0.0
    %5564 = vmatpush1.msra.mxu0 0.0
    %5565 = vmatprep.subr.mxu0 0.0
    %5566 = vmatpush1.msra.mxu0 0.0
    %5567 = vmatprep.subr.mxu0 0.0
    %5568 = vmatpush1.msra.mxu0 0.0
    %5569 = vmatprep.subr.mxu0 0.0
    %5570 = vmatpush1.msra.mxu0 0.0
    %5571 = vmatprep.subr.mxu0 0.0
    %5572 = vmatpush1.msra.mxu0 0.0
    %5573 = vmatprep.subr.mxu0 0.0
    %5574 = vmatpush1.msra.mxu0 0.0
    %5575 = vmatprep.subr.mxu0 0.0
    %5576 = vmatpush1.msra.mxu0 0.0
    %5577 = vmatprep.subr.mxu0 0.0
    %5578 = vmatpush1.msra.mxu0 0.0
    %5579 = vmatprep.subr.mxu0 0.0
    %5580 = vmatpush1.msra.mxu0 0.0
    %5581 = vmatprep.subr.mxu0 0.0
    %5582 = vmatpush1.msra.mxu0 0.0
    %5583 = vmatprep.subr.mxu0 0.0
    %5584 = vmatpush1.msra.mxu0 0.0
    %5585 = vmatprep.subr.mxu0 0.0
    %5586 = vmatpush1.msra.mxu0 0.0
    %5587 = vmatprep.subr.mxu0 0.0
    %5588 = vmatpush1.msra.mxu0 %v184
    %5589 = vmatprep.subr.mxu0 0.0
    %5590 = vmatpush1.msra.mxu0 %v183
    %5591 = vmatprep.subr.mxu0 0.0
    %5592 = vmatpush2.msra.mxu0 0.0
    %5593 = vmatprep.subr.mxu0 0.0
    %5594 = vmatpush2.msra.mxu0 0.0
    %5595 = vmatprep.subr.mxu0 0.0
    %5596 = vmatpush2.msra.mxu0 0.0
    %5597 = vmatprep.subr.mxu0 0.0
    %5598 = vmatpush2.msra.mxu0 0.0
    %5599 = vmatprep.subr.mxu0 0.0
    %5600 = vmatpush2.msra.mxu0 0.0
    %5601 = vmatprep.subr.mxu0 0.0
    %5602 = vmatpush2.msra.mxu0 0.0
    %5603 = vmatprep.subr.mxu0 0.0
    %5604 = vmatpush2.msra.mxu0 0.0
    %5605 = vmatprep.subr.mxu0 0.0
    %5606 = vmatpush2.msra.mxu0 0.0
    %5607 = vmatprep.subr.mxu0 0.0
    %5608 = vmatpush2.msra.mxu0 0.0
    %5609 = vmatprep.subr.mxu0 0.0
    %5610 = vmatpush2.msra.mxu0 0.0
    %5611 = vmatprep.subr.mxu0 0.0
    %5612 = vmatpush2.msra.mxu0 0.0
    %5613 = vmatprep.subr.mxu0 0.0
    %5614 = vmatpush2.msra.mxu0 0.0
    %5615 = vmatprep.subr.mxu0 0.0
    %5616 = vmatpush2.msra.mxu0 0.0
    %5617 = vmatprep.subr.mxu0 0.0
    %5618 = vmatpush2.msra.mxu0 0.0
    %5619 = vmatprep.subr.mxu0 0.0
    %5620 = vmatpush2.msra.mxu0 0.0
    %5621 = vmatprep.subr.mxu0 0.0
    %5622 = vmatpush2.msra.mxu0 0.0
    %5623 = vmatprep.mubr.f32.mxu0 0.0
    %5624 = vmatmul.mubr.f32.gmra.mxu0 %v4963
    %v5625 = vpop.f32.mrf.mxu0
    %v5626 = vadd.f32 0.0, %v5625
    %v5627 = vpop.f32.mrf.mxu0
    %5628 = vdwg.mxu0
    %v5629 = vadd.f32 %v5556, %v5626
    %v5630 = vxor.u32 %v5629, 2147483648
    %v5631 = vmul.f32 %v5630, 1.442695
    %v5632 = vpow.pop %v5631
    %v5633 = vadd.f32 %v5632, 1.0
    %v5634 = vrcp.pop %v5633
    %v5635 = vmul.f32 1.0, %v5634
    %v5636 = vadd.f32 %v5626, %v747
    %5638 = vrot.lane.b32.xlu0 %v5636, 96
    %v5639 = vpop.permute.xlu0 %5638
    %v5641 = vmul.f32 %v5635, %v5639
    %5643 = vrot.lane.b32.xlu0 %v5641, 32
    %v5644 = vpop.permute.xlu0 %5643
    %v5646 = vadd.f32 %v5556, %v5644
    %v5647 = vtanh.pop %v5646
    %v5648 = vsub.f32 1.0, %v5635
    %5650 = vrot.lane.b32.xlu0 %v5647, 112
    %v5651 = vpop.permute.xlu0 %5650
    %v5653 = vmul.f32 %v5648, %v5651
    %v5654 = vmul.f32 %v5635, %v4959
    %v5655 = vadd.f32 %v5653, %v5654
    %5657 = vrot.lane.b32.xlu0 %v5655, 112
    %v5658 = vpop.permute.xlu0 %5657
    %v5659 = vsel %vm288, %v5658, 0
    %5661 = vmatprep.subr.mxu0 0.0
    %5662 = vmatpush1.msra.mxu0 0.0
    %5663 = vmatprep.subr.mxu0 0.0
    %5664 = vmatpush1.msra.mxu0 0.0
    %5665 = vmatprep.subr.mxu0 0.0
    %5666 = vmatpush1.msra.mxu0 0.0
    %5667 = vmatprep.subr.mxu0 0.0
    %5668 = vmatpush1.msra.mxu0 0.0
    %5669 = vmatprep.subr.mxu0 0.0
    %5670 = vmatpush1.msra.mxu0 0.0
    %5671 = vmatprep.subr.mxu0 0.0
    %5672 = vmatpush1.msra.mxu0 0.0
    %5673 = vmatprep.subr.mxu0 0.0
    %5674 = vmatpush1.msra.mxu0 0.0
    %5675 = vmatprep.subr.mxu0 0.0
    %5676 = vmatpush1.msra.mxu0 0.0
    %5677 = vmatprep.subr.mxu0 0.0
    %5678 = vmatpush1.msra.mxu0 0.0
    %5679 = vmatprep.subr.mxu0 0.0
    %5680 = vmatpush1.msra.mxu0 0.0
    %5681 = vmatprep.subr.mxu0 0.0
    %5682 = vmatpush1.msra.mxu0 0.0
    %5683 = vmatprep.subr.mxu0 0.0
    %5684 = vmatpush1.msra.mxu0 0.0
    %5685 = vmatprep.subr.mxu0 0.0
    %5686 = vmatpush1.msra.mxu0 0.0
    %5687 = vmatprep.subr.mxu0 0.0
    %5688 = vmatpush1.msra.mxu0 0.0
    %5689 = vmatprep.subr.mxu0 0.0
    %5690 = vmatpush1.msra.mxu0 %v178
    %5691 = vmatprep.subr.mxu0 0.0
    %5692 = vmatpush1.msra.mxu0 %v177
    %5693 = vmatprep.subr.mxu0 0.0
    %5694 = vmatpush2.msra.mxu0 0.0
    %5695 = vmatprep.subr.mxu0 0.0
    %5696 = vmatpush2.msra.mxu0 0.0
    %5697 = vmatprep.subr.mxu0 0.0
    %5698 = vmatpush2.msra.mxu0 0.0
    %5699 = vmatprep.subr.mxu0 0.0
    %5700 = vmatpush2.msra.mxu0 0.0
    %5701 = vmatprep.subr.mxu0 0.0
    %5702 = vmatpush2.msra.mxu0 0.0
    %5703 = vmatprep.subr.mxu0 0.0
    %5704 = vmatpush2.msra.mxu0 0.0
    %5705 = vmatprep.subr.mxu0 0.0
    %5706 = vmatpush2.msra.mxu0 0.0
    %5707 = vmatprep.subr.mxu0 0.0
    %5708 = vmatpush2.msra.mxu0 0.0
    %5709 = vmatprep.subr.mxu0 0.0
    %5710 = vmatpush2.msra.mxu0 0.0
    %5711 = vmatprep.subr.mxu0 0.0
    %5712 = vmatpush2.msra.mxu0 0.0
    %5713 = vmatprep.subr.mxu0 0.0
    %5714 = vmatpush2.msra.mxu0 0.0
    %5715 = vmatprep.subr.mxu0 0.0
    %5716 = vmatpush2.msra.mxu0 0.0
    %5717 = vmatprep.subr.mxu0 0.0
    %5718 = vmatpush2.msra.mxu0 0.0
    %5719 = vmatprep.subr.mxu0 0.0
    %5720 = vmatpush2.msra.mxu0 0.0
    %5721 = vmatprep.subr.mxu0 0.0
    %5722 = vmatpush2.msra.mxu0 0.0
    %5723 = vmatprep.subr.mxu0 0.0
    %5724 = vmatpush2.msra.mxu0 0.0
    %5725 = vmatprep.mubr.f32.mxu0 0.0
    %5726 = vmatmul.mubr.f32.gmra.mxu0 %v5659
    %v5727 = vpop.f32.mrf.mxu0
    %v5728 = vadd.f32 %v773, %v5727
    %v5729 = vpop.f32.mrf.mxu0
    %5730 = vdwg.mxu0
    %5731 = vmatprep.subr.mxu0 0.0
    %5732 = vmatpush1.msra.mxu0 0.0
    %5733 = vmatprep.subr.mxu0 0.0
    %5734 = vmatpush1.msra.mxu0 0.0
    %5735 = vmatprep.subr.mxu0 0.0
    %5736 = vmatpush1.msra.mxu0 0.0
    %5737 = vmatprep.subr.mxu0 0.0
    %5738 = vmatpush1.msra.mxu0 0.0
    %5739 = vmatprep.subr.mxu0 0.0
    %5740 = vmatpush1.msra.mxu0 0.0
    %5741 = vmatprep.subr.mxu0 0.0
    %5742 = vmatpush1.msra.mxu0 0.0
    %5743 = vmatprep.subr.mxu0 0.0
    %5744 = vmatpush1.msra.mxu0 0.0
    %5745 = vmatprep.subr.mxu0 0.0
    %5746 = vmatpush1.msra.mxu0 0.0
    %5747 = vmatprep.subr.mxu0 0.0
    %5748 = vmatpush1.msra.mxu0 0.0
    %5749 = vmatprep.subr.mxu0 0.0
    %5750 = vmatpush1.msra.mxu0 0.0
    %5751 = vmatprep.subr.mxu0 0.0
    %5752 = vmatpush1.msra.mxu0 0.0
    %5753 = vmatprep.subr.mxu0 0.0
    %5754 = vmatpush1.msra.mxu0 0.0
    %5755 = vmatprep.subr.mxu0 0.0
    %5756 = vmatpush1.msra.mxu0 0.0
    %5757 = vmatprep.subr.mxu0 0.0
    %5758 = vmatpush1.msra.mxu0 0.0
    %5759 = vmatprep.subr.mxu0 0.0
    %5760 = vmatpush1.msra.mxu0 %v186
    %5761 = vmatprep.subr.mxu0 0.0
    %5762 = vmatpush1.msra.mxu0 %v185
    %5763 = vmatprep.subr.mxu0 0.0
    %5764 = vmatpush2.msra.mxu0 0.0
    %5765 = vmatprep.subr.mxu0 0.0
    %5766 = vmatpush2.msra.mxu0 0.0
    %5767 = vmatprep.subr.mxu0 0.0
    %5768 = vmatpush2.msra.mxu0 0.0
    %5769 = vmatprep.subr.mxu0 0.0
    %5770 = vmatpush2.msra.mxu0 0.0
    %5771 = vmatprep.subr.mxu0 0.0
    %5772 = vmatpush2.msra.mxu0 0.0
    %5773 = vmatprep.subr.mxu0 0.0
    %5774 = vmatpush2.msra.mxu0 0.0
    %5775 = vmatprep.subr.mxu0 0.0
    %5776 = vmatpush2.msra.mxu0 0.0
    %5777 = vmatprep.subr.mxu0 0.0
    %5778 = vmatpush2.msra.mxu0 0.0
    %5779 = vmatprep.subr.mxu0 0.0
    %5780 = vmatpush2.msra.mxu0 0.0
    %5781 = vmatprep.subr.mxu0 0.0
    %5782 = vmatpush2.msra.mxu0 0.0
    %5783 = vmatprep.subr.mxu0 0.0
    %5784 = vmatpush2.msra.mxu0 0.0
    %5785 = vmatprep.subr.mxu0 0.0
    %5786 = vmatpush2.msra.mxu0 0.0
    %5787 = vmatprep.subr.mxu0 0.0
    %5788 = vmatpush2.msra.mxu0 0.0
    %5789 = vmatprep.subr.mxu0 0.0
    %5790 = vmatpush2.msra.mxu0 0.0
    %5791 = vmatprep.subr.mxu0 0.0
    %5792 = vmatpush2.msra.mxu0 0.0
    %5793 = vmatprep.subr.mxu0 0.0
    %5794 = vmatpush2.msra.mxu0 0.0
    %5795 = vmatprep.mubr.f32.mxu0 0.0
    %5796 = vmatmul.mubr.f32.gmra.mxu0 %v5135
    %v5797 = vpop.f32.mrf.mxu0
    %v5798 = vadd.f32 0.0, %v5797
    %v5799 = vpop.f32.mrf.mxu0
    %5800 = vdwg.mxu0
    %v5801 = vadd.f32 %v5728, %v5798
    %v5802 = vxor.u32 %v5801, 2147483648
    %v5803 = vmul.f32 %v5802, 1.442695
    %v5804 = vpow.pop %v5803
    %v5805 = vadd.f32 %v5804, 1.0
    %v5806 = vrcp.pop %v5805
    %v5807 = vmul.f32 1.0, %v5806
    %v5808 = vadd.f32 %v5798, %v933
    %5810 = vrot.lane.b32.xlu0 %v5808, 96
    %v5811 = vpop.permute.xlu0 %5810
    %v5813 = vmul.f32 %v5807, %v5811
    %5815 = vrot.lane.b32.xlu0 %v5813, 32
    %v5816 = vpop.permute.xlu0 %5815
    %v5818 = vadd.f32 %v5728, %v5816
    %v5819 = vtanh.pop %v5818
    %v5820 = vsub.f32 1.0, %v5807
    %5822 = vrot.lane.b32.xlu0 %v5819, 112
    %v5823 = vpop.permute.xlu0 %5822
    %v5825 = vmul.f32 %v5820, %v5823
    %v5826 = vmul.f32 %v5807, %v5131
    %v5827 = vadd.f32 %v5825, %v5826
    %5829 = vrot.lane.b32.xlu0 %v5827, 112
    %v5830 = vpop.permute.xlu0 %5829
    %v5831 = vsel %vm288, %v5830, 0
    %5833 = vmatprep.subr.mxu0 0.0
    %5834 = vmatpush1.msra.mxu0 0.0
    %5835 = vmatprep.subr.mxu0 0.0
    %5836 = vmatpush1.msra.mxu0 0.0
    %5837 = vmatprep.subr.mxu0 0.0
    %5838 = vmatpush1.msra.mxu0 0.0
    %5839 = vmatprep.subr.mxu0 0.0
    %5840 = vmatpush1.msra.mxu0 0.0
    %5841 = vmatprep.subr.mxu0 0.0
    %5842 = vmatpush1.msra.mxu0 0.0
    %5843 = vmatprep.subr.mxu0 0.0
    %5844 = vmatpush1.msra.mxu0 0.0
    %5845 = vmatprep.subr.mxu0 0.0
    %5846 = vmatpush1.msra.mxu0 0.0
    %5847 = vmatprep.subr.mxu0 0.0
    %5848 = vmatpush1.msra.mxu0 0.0
    %5849 = vmatprep.subr.mxu0 0.0
    %5850 = vmatpush1.msra.mxu0 0.0
    %5851 = vmatprep.subr.mxu0 0.0
    %5852 = vmatpush1.msra.mxu0 0.0
    %5853 = vmatprep.subr.mxu0 0.0
    %5854 = vmatpush1.msra.mxu0 0.0
    %5855 = vmatprep.subr.mxu0 0.0
    %5856 = vmatpush1.msra.mxu0 0.0
    %5857 = vmatprep.subr.mxu0 0.0
    %5858 = vmatpush1.msra.mxu0 0.0
    %5859 = vmatprep.subr.mxu0 0.0
    %5860 = vmatpush1.msra.mxu0 0.0
    %5861 = vmatprep.subr.mxu0 0.0
    %5862 = vmatpush1.msra.mxu0 %v196
    %5863 = vmatprep.subr.mxu0 0.0
    %5864 = vmatpush1.msra.mxu0 %v195
    %5865 = vmatprep.subr.mxu0 0.0
    %5866 = vmatpush2.msra.mxu0 0.0
    %5867 = vmatprep.subr.mxu0 0.0
    %5868 = vmatpush2.msra.mxu0 0.0
    %5869 = vmatprep.subr.mxu0 0.0
    %5870 = vmatpush2.msra.mxu0 0.0
    %5871 = vmatprep.subr.mxu0 0.0
    %5872 = vmatpush2.msra.mxu0 0.0
    %5873 = vmatprep.subr.mxu0 0.0
    %5874 = vmatpush2.msra.mxu0 0.0
    %5875 = vmatprep.subr.mxu0 0.0
    %5876 = vmatpush2.msra.mxu0 0.0
    %5877 = vmatprep.subr.mxu0 0.0
    %5878 = vmatpush2.msra.mxu0 0.0
    %5879 = vmatprep.subr.mxu0 0.0
    %5880 = vmatpush2.msra.mxu0 0.0
    %5881 = vmatprep.subr.mxu0 0.0
    %5882 = vmatpush2.msra.mxu0 0.0
    %5883 = vmatprep.subr.mxu0 0.0
    %5884 = vmatpush2.msra.mxu0 0.0
    %5885 = vmatprep.subr.mxu0 0.0
    %5886 = vmatpush2.msra.mxu0 0.0
    %5887 = vmatprep.subr.mxu0 0.0
    %5888 = vmatpush2.msra.mxu0 0.0
    %5889 = vmatprep.subr.mxu0 0.0
    %5890 = vmatpush2.msra.mxu0 0.0
    %5891 = vmatprep.subr.mxu0 0.0
    %5892 = vmatpush2.msra.mxu0 0.0
    %5893 = vmatprep.subr.mxu0 0.0
    %5894 = vmatpush2.msra.mxu0 0.0
    %5895 = vmatprep.subr.mxu0 0.0
    %5896 = vmatpush2.msra.mxu0 0.0
    %5897 = vmatprep.mubr.f32.mxu0 0.0
    %5898 = vmatmul.mubr.f32.gmra.mxu0 %v5831
    %v5899 = vpop.f32.mrf.mxu0
    %v5900 = vadd.f32 %v959, %v5899
    %v5901 = vpop.f32.mrf.mxu0
    %5902 = vdwg.mxu0
    %5903 = vst.msk [vmem:[%s19 + $0xe] sm:$0x3] %vm1036, %v5900
    // Predicated region
    $region114: #{tpu_custom_call.1} parent=1 // pred_check
      _
    $region115: #{tpu_custom_call.1} parent=1 // pred_check_branch
      %5905 = sbr.rel (0) target = $region117
    $region116: #{tpu_custom_call.1} parent=1 // pred_region
      _
    $region117: #{tpu_custom_call.1} parent=1 // pred_fallthru
      _
    // Predicated region
    $region118: #{tpu_custom_call.1} parent=1 // pred_check
      _
    $region119: #{tpu_custom_call.1} parent=1 // pred_check_branch
      %5907 = sbr.rel (0) target = $region121
    $region120: #{tpu_custom_call.1} parent=1 // pred_region
      _
    $region121: #{tpu_custom_call.1} parent=1 // pred_fallthru
      _
    %5908 = vsyncpa [#allocation3], 1
    %5909 = vsyncpa [#allocation5], 1
    %5910 = vsyncpa [#allocation8], 1
    %5911 = vsyncpa [#allocation11], 1
    %5912 = vsyncpa [#allocation14], 1

</llo_original>
